<compile_context>
chip_gen: v6e
topology: v6e:2x2x1
jax: 0.10.0
libtpu: 0.0.40
codegen_flags: <defaults>
</compile_context>

<pallas_src>
import functools

import jax
import jax.numpy as jnp
from jax.experimental import pallas as pl
from jax.experimental.pallas import tpu as pltpu

_SQRT2 = 1.4142135623730951
_VMEM_LIMIT = 48 * 1024 * 1024      # < v7x 64 MiB physical, < v5e/v6e 128 MiB
_TM = 512                           # token-tile rows (~85% of HBM roofline)


def _cparams(*sem):
    return pltpu.CompilerParams(dimension_semantics=sem,
                                vmem_limit_bytes=_VMEM_LIMIT)


# --------------------------- small tiling helpers --------------------------- #

def _round_up(x, m):
    return (x + m - 1) // m * m


def _tile_for(size, max_tile, align):
    """(padded_size, tile). A single tile equal to the full dim is always legal;
    otherwise tiles are `align`-aligned and tile the padded dim exactly."""
    if size <= max_tile:
        return size, size
    nt = -(-size // max_tile)
    t = _round_up(-(-size // nt), align)
    return t * nt, t


def _pad_dim(x, axis, new_size):
    if x.shape[axis] == new_size:
        return x
    pads = [(0, 0)] * x.ndim
    pads[axis] = (0, new_size - x.shape[axis])
    return jnp.pad(x, pads)


def _pick_rows(H, W, bytes_per_px, budget=6 << 20):
    """Rows per conv block. Prefers the whole image (-> no HBM halo copy);
    falls back to 8-aligned row tiles only for very large images."""
    if (H + 2) * (W + 2) * bytes_per_px <= budget:
        return H
    th = (budget // ((W + 2) * bytes_per_px) - 2) // 8 * 8
    return int(min(max(th, 8), H))


def _row_tiles_with_halo(xp, H, th):
    """xp: (B, H+2, W+2, C) spatially zero-padded by 1. When th == H this is a
    no-op (no gather). Otherwise returns (B*n_rt, th+2, W+2, C) row tiles with
    a 1-row halo (large-image fallback only)."""
    B, _, Wp2, C = xp.shape
    n_rt = -(-H // th)
    if n_rt == 1:
        return xp, 1
    need = n_rt * th + 2
    if need > xp.shape[1]:
        xp = jnp.pad(xp, ((0, 0), (0, need - xp.shape[1]), (0, 0), (0, 0)))
    idx = jnp.arange(n_rt)[:, None] * th + jnp.arange(th + 2)[None, :]
    xt = xp[:, idx]                      # (B, n_rt, th+2, W+2, C)
    return xt.reshape(B * n_rt, th + 2, Wp2, C), n_rt


# ------------------------------ matmul kernels ------------------------------ #
# All 1x1-conv weights of this module are <= a few MiB in bf16, so K and N are
# kept in single full-extent blocks: the weight is fetched once and stays
# resident while only M is tiled (weights index_map is constant).

def _mm_kernel(x_ref, w_ref, b_ref, o_ref):
    o_ref[...] = (jnp.dot(x_ref[...], w_ref[...],
                          preferred_element_type=jnp.float32)
                  + b_ref[...]).astype(o_ref.dtype)


def _mm_ln_kernel(x_ref, lw_ref, lb_ref, w_ref, b_ref, o_ref):
    # WithBias LayerNorm fused into the matmul prologue (computed once per
    # M tile; x kept f32 so LN statistics match the PyTorch reference).
    x = x_ref[...].astype(jnp.float32)                   # (tm, K)
    mu = jnp.mean(x, axis=-1, keepdims=True)
    var = jnp.mean(jnp.square(x - mu), axis=-1, keepdims=True)
    y = (x - mu) * jax.lax.rsqrt(var + 1e-5) * lw_ref[...] + lb_ref[...]
    o_ref[...] = (jnp.dot(y.astype(jnp.bfloat16), w_ref[...],
                          preferred_element_type=jnp.float32)
                  + b_ref[...]).astype(o_ref.dtype)


def _make_geglu_kernel(hid):
    def kern(x12_ref, w_ref, b_ref, o_ref):
        x12 = x12_ref[...].astype(jnp.float32)            # (tm, 2*hid)
        x1 = x12[:, :hid]
        x2 = x12[:, hid:]
        g = 0.5 * x1 * (1.0 + jax.lax.erf(x1 / _SQRT2)) * x2   # exact GELU gate
        o_ref[...] = (jnp.dot(g.astype(jnp.bfloat16), w_ref[...],
                              preferred_element_type=jnp.float32)
                      + b_ref[...]).astype(o_ref.dtype)
    return kern


def matmul_bias(x, w, b, out_dtype=jnp.float32):
    """out = x @ w + b with the full (K, N) weight VMEM-resident."""
    M, K = x.shape
    N = w.shape[1]
    Mp, tm = _tile_for(M, _TM, 8)
    xb = _pad_dim(x.astype(jnp.bfloat16), 0, Mp)
    out = pl.pallas_call(
        _mm_kernel,
        out_shape=jax.ShapeDtypeStruct((Mp, N), out_dtype),
        grid=(Mp // tm,),
        in_specs=[pl.BlockSpec((tm, K), lambda i: (i, 0)),
                  pl.BlockSpec((K, N), lambda i: (0, 0)),
                  pl.BlockSpec((1, N), lambda i: (0, 0))],
        out_specs=pl.BlockSpec((tm, N), lambda i: (i, 0)),
        compiler_params=_cparams("parallel"),
    )(xb, w.astype(jnp.bfloat16), b.astype(jnp.float32).reshape(1, N))
    return out[:M]


def matmul_ln_bias(x, ln_w, ln_b, w, b, out_dtype=jnp.bfloat16):
    """out = WithBias_LayerNorm(x) @ w + b (LN fused, weight resident)."""
    M, K = x.shape
    N = w.shape[1]
    Mp, tm = _tile_for(M, _TM, 8)
    xb = _pad_dim(x.astype(jnp.float32), 0, Mp)
    out = pl.pallas_call(
        _mm_ln_kernel,
        out_shape=jax.ShapeDtypeStruct((Mp, N), out_dtype),
        grid=(Mp // tm,),
        in_specs=[pl.BlockSpec((tm, K), lambda i: (i, 0)),
                  pl.BlockSpec((1, K), lambda i: (0, 0)),
                  pl.BlockSpec((1, K), lambda i: (0, 0)),
                  pl.BlockSpec((K, N), lambda i: (0, 0)),
                  pl.BlockSpec((1, N), lambda i: (0, 0))],
        out_specs=pl.BlockSpec((tm, N), lambda i: (i, 0)),
        compiler_params=_cparams("parallel"),
    )(xb, ln_w.reshape(1, K).astype(jnp.float32),
      ln_b.reshape(1, K).astype(jnp.float32),
      w.astype(jnp.bfloat16), b.astype(jnp.float32).reshape(1, N))
    return out[:M]


def matmul_geglu_bias(x12, w, b, out_dtype=jnp.float32):
    """out = (gelu(x1) * x2) @ w + b with x12 = concat([x1, x2], -1); the x1/x2
    split happens in-kernel so the dwconv output is read from HBM only once."""
    M, K2 = x12.shape
    hid = K2 // 2
    N = w.shape[1]
    Mp, tm = _tile_for(M, _TM, 8)
    xb = _pad_dim(x12.astype(jnp.bfloat16), 0, Mp)
    out = pl.pallas_call(
        _make_geglu_kernel(hid),
        out_shape=jax.ShapeDtypeStruct((Mp, N), out_dtype),
        grid=(Mp // tm,),
        in_specs=[pl.BlockSpec((tm, K2), lambda i: (i, 0)),
                  pl.BlockSpec((hid, N), lambda i: (0, 0)),
                  pl.BlockSpec((1, N), lambda i: (0, 0))],
        out_specs=pl.BlockSpec((tm, N), lambda i: (i, 0)),
        compiler_params=_cparams("parallel"),
    )(xb, w.astype(jnp.bfloat16), b.astype(jnp.float32).reshape(1, N))
    return out[:M]


# ---------------------------- depthwise 3x3 conv ----------------------------- #

def _make_dw_kernel(th, W):
    def kern(x_ref, w_ref, b_ref, o_ref):
        w = w_ref[...]                                    # (3, 3, tc) f32
        acc = x_ref[0, 0:th, 0:W, :].astype(jnp.float32) * w[0, 0]
        for dy in range(3):
            for dx in range(3):
                if dy == 0 and dx == 0:
                    continue
                acc = acc + x_ref[0, dy:dy + th, dx:dx + W, :].astype(
                    jnp.float32) * w[dy, dx]
        o_ref[0] = (acc + b_ref[...]).astype(o_ref.dtype)
    return kern


def dwconv3x3(x_nhwc, w_33c, b_c):
    """Depthwise 3x3 conv (Conv2d groups=C). The whole (H+2, W+2) spatial
    extent stays in one block when it fits VMEM (no halo'd HBM copy); channels
    are tiled to bound the block size."""
    B, H, W, C = x_nhwc.shape
    Cp, tc = _tile_for(C, 640, 128)
    th = _pick_rows(H, W, tc * 2)
    xp = jnp.pad(x_nhwc.astype(jnp.bfloat16), ((0, 0), (1, 1), (1, 1), (0, 0)))
    xt, n_rt = _row_tiles_with_halo(xp, H, th)            # no-op when th == H
    xt = _pad_dim(xt, 3, Cp)
    wk = _pad_dim(w_33c.astype(jnp.float32), 2, Cp)
    bk = _pad_dim(b_c.astype(jnp.float32).reshape(1, 1, C), 2, Cp)
    out = pl.pallas_call(
        _make_dw_kernel(th, W),
        out_shape=jax.ShapeDtypeStruct((B * n_rt, th, W, Cp), jnp.bfloat16),
        grid=(B * n_rt, Cp // tc),
        in_specs=[pl.BlockSpec((1, th + 2, W + 2, tc),
                               lambda m, c: (m, 0, 0, c)),
                  pl.BlockSpec((3, 3, tc), lambda m, c: (0, 0, c)),
                  pl.BlockSpec((1, 1, tc), lambda m, c: (0, 0, c))],
        out_specs=pl.BlockSpec((1, th, W, tc), lambda m, c: (m, 0, 0, c)),
        compiler_params=_cparams("parallel", "parallel"),
    )(xt, wk, bk)
    return out.reshape(B, n_rt * th, W, Cp)[:, :H, :, :C]


# ---------------------- full 3x3 conv (Mask.qkv_dwconv) ---------------------- #

def _make_conv3x3_kernel(th, W):
    def kern(x_ref, w_ref, b_ref, o_ref, acc_ref):
        @pl.when(pl.program_id(2) == 0)
        def _():
            acc_ref[...] = jnp.zeros_like(acc_ref)

        tci = x_ref.shape[-1]
        for dy in range(3):
            for dx in range(3):
                patch = x_ref[0, dy:dy + th, dx:dx + W, :].reshape(th * W, tci)
                # accumulate per tap straight into the f32 VMEM scratch
                acc_ref[...] += jnp.dot(patch, w_ref[dy, dx],
                                        preferred_element_type=jnp.float32)

        @pl.when(pl.program_id(2) == pl.num_programs(2) - 1)
        def _():
            tco = o_ref.shape[-1]
            o_ref[0] = (acc_ref[...] + b_ref[...]).reshape(
                th, W, tco).astype(o_ref.dtype)
    return kern


def conv3x3_full(x_nhwc, w_33io, b_o):
    """Full (non-grouped) 3x3 conv as an in-kernel 9-tap MXU loop with a
    Cin-tiled reduction (no im2col, no HBM halo copy in the common case)."""
    B, H, W, Cin = x_nhwc.shape
    Cout = w_33io.shape[-1]
    Cip, tci = _tile_for(Cin, 640, 128)
    Cop, tco = _tile_for(Cout, 512, 128)
    th = _pick_rows(H, W, tci * 2)
    while th > 8 and th * W * tco * 4 > (8 << 20):        # bound f32 accumulator
        th = max(8, th // 2 // 8 * 8)
    xp = jnp.pad(x_nhwc.astype(jnp.bfloat16), ((0, 0), (1, 1), (1, 1), (0, 0)))
    xt, n_rt = _row_tiles_with_halo(xp, H, th)
    xt = _pad_dim(xt, 3, Cip)
    wk = _pad_dim(_pad_dim(w_33io.astype(jnp.bfloat16), 2, Cip), 3, Cop)
    bk = _pad_dim(b_o.astype(jnp.float32).reshape(1, Cout), 1, Cop)
    out = pl.pallas_call(
        _make_conv3x3_kernel(th, W),
        out_shape=jax.ShapeDtypeStruct((B * n_rt, th, W, Cop), jnp.bfloat16),
        grid=(B * n_rt, Cop // tco, Cip // tci),
        in_specs=[pl.BlockSpec((1, th + 2, W + 2, tci),
                               lambda m, co, ci: (m, 0, 0, ci)),
                  pl.BlockSpec((3, 3, tci, tco),
                               lambda m, co, ci: (0, 0, ci, co)),
                  pl.BlockSpec((1, tco), lambda m, co, ci: (0, co))],
        out_specs=pl.BlockSpec((1, th, W, tco),
                               lambda m, co, ci: (m, 0, 0, co)),
        scratch_shapes=[pltpu.VMEM((th * W, tco), jnp.float32)],
        compiler_params=_cparams("parallel", "parallel", "arbitrary"),
    )(xt, wk, bk)
    return out.reshape(B, n_rt * th, W, Cop)[:, :H, :, :Cout]


# ------------------ Restormer channel attention (Attention) ------------------ #

def _make_chan_scores_kernel(heads, cp):
    def kern(temp_ref, q_ref, k_ref, att_ref, a_acc, sq_acc, sk_acc):
        s = pl.program_id(1)

        @pl.when(s == 0)
        def _():
            a_acc[...] = jnp.zeros_like(a_acc)
            sq_acc[...] = jnp.zeros_like(sq_acc)
            sk_acc[...] = jnp.zeros_like(sk_acc)

        q = q_ref[0]                                       # (ts, D) bf16
        k = k_ref[0]
        qf = q.astype(jnp.float32)
        kf = k.astype(jnp.float32)
        sq_acc[...] += jnp.sum(qf * qf, axis=0, keepdims=True)
        sk_acc[...] += jnp.sum(kf * kf, axis=0, keepdims=True)
        qT = q.T                                           # one transpose / tile
        for h in range(heads):
            a_acc[h] += jnp.dot(qT[h * cp:(h + 1) * cp, :],
                                k[:, h * cp:(h + 1) * cp],
                                preferred_element_type=jnp.float32)

        @pl.when(s == pl.num_programs(1) - 1)
        def _():
            for h in range(heads):
                nq = jnp.maximum(
                    jnp.sqrt(sq_acc[:, h * cp:(h + 1) * cp]), 1e-12)
                nk = jnp.maximum(
                    jnp.sqrt(sk_acc[:, h * cp:(h + 1) * cp]), 1e-12)
                a = a_acc[h] / (jnp.transpose(nq) * nk) * temp_ref[h]
                a = a - jnp.max(a, axis=-1, keepdims=True)
                e = jnp.exp(a)
                p = e / jnp.sum(e, axis=-1, keepdims=True)
                # store A^T so the apply pass is a plain (ts,cp)@(cp,cp) matmul
                att_ref[0, h] = p.T.astype(att_ref.dtype)
    return kern


def _make_chan_apply_kernel(heads, cp):
    def kern(att_ref, v_ref, o_ref):
        v = v_ref[0]                                       # (ts, D) bf16
        outs = []
        for h in range(heads):
            outs.append(jnp.dot(v[:, h * cp:(h + 1) * cp], att_ref[0, h],
                                preferred_element_type=jnp.float32))
        o_ref[0] = jnp.concatenate(outs, axis=-1).astype(o_ref.dtype)
    return kern


def channel_attention(q_tok, k_tok, v_tok, temp, heads, *, ts=2048):
    """Channel attention on token-major (B, S, D) q/k/v (no HBM head
    transposes). Pass 1 accumulates per-head (cp x cp) scores + q/k norms over
    S tiles and softmaxes once; pass 2 streams att^T @ v over S tiles."""
    B, S, D = q_tok.shape
    cp = D // heads
    Sp, ts_ = _tile_for(S, ts, 8)
    q = _pad_dim(q_tok.astype(jnp.bfloat16), 1, Sp)
    k = _pad_dim(k_tok.astype(jnp.bfloat16), 1, Sp)
    v = _pad_dim(v_tok.astype(jnp.bfloat16), 1, Sp)
    n_s = Sp // ts_
    # TODO(synk): for v7x at B=1 also shard the scores kernel over heads
    # (needs a head-major layout) so the second TensorCore has work.
    att = pl.pallas_call(
        _make_chan_scores_kernel(heads, cp),
        out_shape=jax.ShapeDtypeStruct((B, heads, cp, cp), jnp.bfloat16),
        grid=(B, n_s),
        in_specs=[pl.BlockSpec(memory_space=pltpu.MemorySpace.SMEM),
                  pl.BlockSpec((1, ts_, D), lambda b, s: (b, s, 0)),
                  pl.BlockSpec((1, ts_, D), lambda b, s: (b, s, 0))],
        out_specs=pl.BlockSpec((1, heads, cp, cp), lambda b, s: (b, 0, 0, 0)),
        scratch_shapes=[pltpu.VMEM((heads, cp, cp), jnp.float32),
                        pltpu.VMEM((1, D), jnp.float32),
                        pltpu.VMEM((1, D), jnp.float32)],
        compiler_params=_cparams("parallel", "arbitrary"),
    )(temp.astype(jnp.float32), q, k)
    out = pl.pallas_call(
        _make_chan_apply_kernel(heads, cp),
        out_shape=jax.ShapeDtypeStruct((B, Sp, D), jnp.bfloat16),
        grid=(B, n_s),
        in_specs=[pl.BlockSpec((1, heads, cp, cp), lambda b, s: (b, 0, 0, 0)),
                  pl.BlockSpec((1, ts_, D), lambda b, s: (b, s, 0))],
        out_specs=pl.BlockSpec((1, ts_, D), lambda b, s: (b, s, 0)),
        compiler_params=_cparams("parallel", "parallel"),
    )(att, v)
    return out[:, :S]


# ---------------------------- Mask window attention -------------------------- #

def _mask_att_kernel(m_ref, att_ref):
    m = m_ref[0]                                           # (P, S) f32
    nm = jnp.maximum(jnp.sqrt(jnp.sum(m * m, axis=-1, keepdims=True)), 1e-12)
    mn = m / nm
    a = jax.lax.dot_general(mn, mn, (((1,), (1,)), ((), ())),
                            preferred_element_type=jnp.float32)
    # forward-time Mask temperature is torch.ones -> the *1.0 is folded away
    a = a - jnp.max(a, axis=-1, keepdims=True)
    e = jnp.exp(a)
    att_ref[0] = e / jnp.sum(e, axis=-1, keepdims=True)


def _mask_apply_kernel(att_ref, v_ref, o_ref):
    o_ref[0] = jnp.dot(att_ref[0].astype(jnp.bfloat16), v_ref[0],
                       preferred_element_type=jnp.float32).astype(o_ref.dtype)


def mask_attention(m_r, v2, *, tds=4096):
    """m_r: (B, P, S) window-grouped mask rows; v2: (B, P, D*S) values.
    A tiny per-batch kernel builds the (P, P) softmax attention, then an apply
    kernel streams att @ v over lane-dense D*S tiles with BOTH grid axes
    parallel (keeps the second TensorCore busy on v7x even when B == 1)."""
    B, P, S = m_r.shape
    DS = v2.shape[-1]
    att = pl.pallas_call(
        _mask_att_kernel,
        out_shape=jax.ShapeDtypeStruct((B, P, P), jnp.float32),
        grid=(B,),
        in_specs=[pl.BlockSpec((1, P, S), lambda b: (b, 0, 0))],
        out_specs=pl.BlockSpec((1, P, P), lambda b: (b, 0, 0)),
        compiler_params=_cparams("parallel"),
    )(m_r.astype(jnp.float32))
    DSp, tds_ = _tile_for(DS, tds, 128)
    v2p = _pad_dim(v2.astype(jnp.bfloat16), 2, DSp)
    out = pl.pallas_call(
        _mask_apply_kernel,
        out_shape=jax.ShapeDtypeStruct((B, P, DSp), jnp.bfloat16),
        grid=(B, DSp // tds_),
        in_specs=[pl.BlockSpec((1, P, P), lambda b, d: (b, 0, 0)),
                  pl.BlockSpec((1, P, tds_), lambda b, d: (b, 0, d))],
        out_specs=pl.BlockSpec((1, P, tds_), lambda b, d: (b, 0, d)),
        compiler_params=_cparams("parallel", "parallel"),
    )(att, v2p)
    return out[:, :, :DS]


# ------------------------------ module forward ------------------------------- #

def mask_forward(p, x_nhwc, mask_nchw, N):
    """Mask(norm1(x), mask, N) branch."""
    B, H0, W0, D = x_nhwc.shape
    h_pad = (N - H0 % N) % N
    w_pad = (N - W0 % N) % N
    if h_pad or w_pad:
        x_nhwc = jnp.pad(x_nhwc, ((0, 0), (0, h_pad), (0, w_pad), (0, 0)),
                         mode="reflect")
        # PyTorch leaves the mask unpadded (shape-errors when H,W % N != 0);
        # pad it identically so the window grouping matches x.
        mask_nchw = jnp.pad(mask_nchw, ((0, 0), (0, 0), (0, h_pad), (0, w_pad)),
                            mode="reflect")
    B, H, W, D = x_nhwc.shape
    T = B * H * W
    d3 = 3 * D
    # norm1 fused into the 1x1 qkv conv (Mask convs are bias=False)
    qkv = matmul_ln_bias(x_nhwc.reshape(T, D), p["norm1_w"], p["norm1_b"],
                         p["mask_qkv_w"], jnp.zeros((d3,), jnp.float32),
                         out_dtype=jnp.bfloat16).reshape(B, H, W, d3)
    # Full 3x3 conv; forward() only consumes the `v` third of its outputs, so
    # only that slice of the weight is applied (exact, 1/3 of the work).
    v = conv3x3_full(qkv, p["mask_dw_v_w"], jnp.zeros((D,), jnp.float32))
    hs, ws = H // N, W // N
    S, P = hs * ws, N * N
    # TODO(synk): fold these window-grouping transposes into the kernels via
    # scalar-prefetched offsets instead of XLA HBM passes.
    # 'b (h1 h) (w1 w) d -> b (h1 w1) (d h w)'
    v2 = (v.reshape(B, N, hs, N, ws, D)
           .transpose(0, 1, 3, 5, 2, 4)
           .reshape(B, P, D * S))
    # mask: 'b 1 (h1 h) (w1 w) -> b (h1 w1) (h w)'
    m_r = (mask_nchw[:, 0].reshape(B, N, hs, N, ws)
                          .transpose(0, 1, 3, 2, 4)
                          .reshape(B, P, S))
    out2 = mask_attention(m_r, v2)                               # (B, P, D*S)
    out_nhwc = (out2.reshape(B, N, N, D, hs, ws)
                    .transpose(0, 1, 4, 2, 5, 3)
                    .reshape(B, H, W, D))
    y = matmul_bias(out_nhwc.reshape(T, D), p["mask_proj_w"],
                    jnp.zeros((D,), jnp.float32), out_dtype=jnp.float32)
    return y.reshape(B, H, W, D)[:, :H0, :W0, :]


def attn_forward(p, x_nhwc, heads):
    """Attention(norm1(x)) branch: one fused LN+qkv matmul, one fused dwconv,
    then channel attention on token-major q/k/v."""
    B, H, W, D = x_nhwc.shape
    T = B * H * W
    qkv = matmul_ln_bias(x_nhwc.reshape(T, D), p["norm1_w"], p["norm1_b"],
                         p["attn_qkv_w"], p["attn_qkv_b"],
                         out_dtype=jnp.bfloat16).reshape(B, H, W, 3 * D)
    qkv = dwconv3x3(qkv, p["attn_qkv_dw_w"], p["attn_qkv_dw_b"])
    qkv = qkv.reshape(B, H * W, 3 * D)
    q, k, v = qkv[..., :D], qkv[..., D:2 * D], qkv[..., 2 * D:]
    out_tok = channel_attention(q, k, v, p["attn_temp"], heads)
    y = matmul_bias(out_tok.reshape(T, D), p["attn_proj_w"], p["attn_proj_b"],
                    out_dtype=jnp.float32)
    return y.reshape(B, H, W, D)


def ffn_forward(p, x_nhwc):
    """FeedForward(norm2(x)) branch: fused project_in (both halves), fused
    dwconv over 2*hid channels, gated-GELU fused into project_out."""
    B, H, W, D = x_nhwc.shape
    T = B * H * W
    hid2 = p["ffn_pi_w"].shape[1]
    h12 = matmul_ln_bias(x_nhwc.reshape(T, D), p["norm2_w"], p["norm2_b"],
                         p["ffn_pi_w"], p["ffn_pi_b"],
                         out_dtype=jnp.bfloat16).reshape(B, H, W, hid2)
    h12 = dwconv3x3(h12, p["ffn_dw_w"], p["ffn_dw_b"])
    y = matmul_geglu_bias(h12.reshape(T, hid2), p["ffn_po_w"], p["ffn_po_b"],
                          out_dtype=jnp.float32)
    return y.reshape(B, H, W, D)


def block_forward(p, x, mask, N, heads):
    # Matches PyTorch: the SAME norm1 feeds both the mask and attention branches.
    x = x + mask_forward(p, x, mask, N)
    x = x + attn_forward(p, x, heads)
    x = x + ffn_forward(p, x)
    return x


def transformer_block_1(params_list, x_nchw, mask_nchw, *, N, heads):
    x = jnp.transpose(x_nchw, (0, 2, 3, 1))           # NCHW -> NHWC (C on lanes)
    for p in params_list:
        x = block_forward(p, x, mask_nchw, N, heads)
    return jnp.transpose(x, (0, 3, 1, 2))             # back to NCHW


# ---------------------------- parameter construction ------------------------- #

def init_layer_params(key, dim, heads, ffn_factor):
    """Weights stored pre-transposed / pre-fused / pre-cast for the kernels:
       * 1x1 conv weights as (Cin, Cout) bf16 (q|k|v and x1|x2 concatenated)
       * depthwise 3x3 weights as (3, 3, C) f32 (q|k|v / x1|x2 concatenated)
       * Mask's full 3x3 conv weight reduced to its `v` output slice,
         laid out (3, 3, Cin, Cout) bf16
    """
    hid = int(dim * ffn_factor)
    d3 = 3 * dim
    ks = jax.random.split(key, 24)

    def w(k, shape, dtype=jnp.bfloat16):
        return (jax.random.normal(k, shape, jnp.float32) * 0.05).astype(dtype)

    return {
        # Shared WithBias LayerNorms: PyTorch init weight=1, bias=0
        "norm1_w": jnp.ones((dim,), jnp.float32),
        "norm1_b": jnp.zeros((dim,), jnp.float32),
        "norm2_w": jnp.ones((dim,), jnp.float32),
        "norm2_b": jnp.zeros((dim,), jnp.float32),
        # Mask (all convs bias=False); only the `v` slice of qkv_dwconv kept
        "mask_qkv_w": w(ks[0], (dim, d3)),
        "mask_dw_v_w": w(ks[1], (3, 3, d3, dim)),
        "mask_proj_w": w(ks[2], (dim, dim)),
        # Attention (bias=True); temperature init = ones(num_heads, 1, 1)
        "attn_temp": jnp.ones((heads,), jnp.float32),
        "attn_qkv_w": w(ks[3], (dim, d3)),
        "attn_qkv_b": w(ks[4], (d3,), jnp.float32),
        "attn_qkv_dw_w": w(ks[5], (3, 3, d3), jnp.float32),
        "attn_qkv_dw_b": w(ks[6], (d3,), jnp.float32),
        "attn_proj_w": w(ks[7], (dim, dim)),
        "attn_proj_b": w(ks[8], (dim,), jnp.float32),
        # FeedForward (bias=True): project_in x1|x2 halves fused -> (dim, 2*hid)
        "ffn_pi_w": w(ks[9], (dim, 2 * hid)),
        "ffn_pi_b": w(ks[10], (2 * hid,), jnp.float32),
        "ffn_dw_w": w(ks[11], (3, 3, 2 * hid), jnp.float32),
        "ffn_dw_b": w(ks[12], (2 * hid,), jnp.float32),
        "ffn_po_w": w(ks[13], (hid, dim)),
        "ffn_po_b": w(ks[14], (dim,), jnp.float32),
    }


# ------------------------------------ main ------------------------------------ #

if __name__ == "__main__":
    B, DIM, H, W = 2, 16, 8, 8          # small demo shapes (module default dim=576)
    HEADS, N_LAYERS, N_WIN = 4, 2, 4
    FFN_FACTOR = 2.66

    key = jax.random.PRNGKey(0)
    kx, km, kp = jax.random.split(key, 3)
    x = jax.random.normal(kx, (B, DIM, H, W), jnp.float32)      # NCHW like PyTorch
    mask = jax.random.normal(km, (B, 1, H, W), jnp.float32)     # 1-channel mask
    params = [init_layer_params(k, DIM, HEADS, FFN_FACTOR)
              for k in jax.random.split(kp, N_LAYERS)]

    fwd = jax.jit(functools.partial(transformer_block_1, N=N_WIN, heads=HEADS))
    out = fwd(params, x, mask)
    jax.block_until_ready(out)
    assert out.shape == (B, DIM, H, W) and out.dtype == jnp.float32
    print("KERNEL_OK")
</pallas_src>

<mosaic_0001>
module attributes {stable_mosaic.version = 11 : i64} {
  func.func @_mm_ln_kernel(%arg0: i32, %arg1: memref<128x16xf32, #tpu.memory_space<vmem>>, %arg2: memref<1x16xf32, #tpu.memory_space<vmem>>, %arg3: memref<1x16xf32, #tpu.memory_space<vmem>>, %arg4: memref<16x48xbf16, #tpu.memory_space<vmem>>, %arg5: memref<1x48xf32, #tpu.memory_space<vmem>>, %arg6: memref<128x48xbf16, #tpu.memory_space<vmem>>) attributes {dimension_semantics = [#tpu.dimension_semantics<parallel>], iteration_bounds = array<i64: 1>, scalar_prefetch = 0 : i64, scratch_operands = 0 : i64, tpu.core_type = #tpu.core_type<tc>, window_params = [{transform_indices = @transform_0, window_bounds = array<i64: 128, 16>}, {pipeline_mode = #tpu.pipeline_mode<synchronous>, transform_indices = @transform_1, window_bounds = array<i64: 1, 16>}, {pipeline_mode = #tpu.pipeline_mode<synchronous>, transform_indices = @transform_2, window_bounds = array<i64: 1, 16>}, {pipeline_mode = #tpu.pipeline_mode<synchronous>, transform_indices = @transform_3, window_bounds = array<i64: 16, 48>}, {pipeline_mode = #tpu.pipeline_mode<synchronous>, transform_indices = @transform_4, window_bounds = array<i64: 1, 48>}, {transform_indices = @transform_5, window_bounds = array<i64: 128, 48>}]} {
    %c0 = arith.constant 0 : index
    %c0_0 = arith.constant 0 : index
    %0 = vector.load %arg1[%c0, %c0_0] : memref<128x16xf32, #tpu.memory_space<vmem>>, vector<128x16xf32>
    %cst = arith.constant dense<0.000000e+00> : vector<128xf32>
    %1 = vector.multi_reduction <add>, %0, %cst [1] : vector<128x16xf32> to vector<128xf32>
    %2 = vector.shape_cast %1 : vector<128xf32> to vector<128x1xf32>
    %cst_1 = arith.constant 1.600000e+01 : f32
    %3 = vector.broadcast %cst_1 : f32 to vector<128x1xf32>
    %4 = arith.divf %2, %3 : vector<128x1xf32>
    %5 = vector.broadcast %4 : vector<128x1xf32> to vector<128x16xf32>
    %6 = arith.subf %0, %5 : vector<128x16xf32>
    %7 = arith.mulf %6, %6 : vector<128x16xf32>
    %cst_2 = arith.constant dense<0.000000e+00> : vector<128xf32>
    %8 = vector.multi_reduction <add>, %7, %cst_2 [1] : vector<128x16xf32> to vector<128xf32>
    %9 = vector.shape_cast %8 : vector<128xf32> to vector<128x1xf32>
    %cst_3 = arith.constant 1.600000e+01 : f32
    %10 = vector.broadcast %cst_3 : f32 to vector<128x1xf32>
    %11 = arith.divf %9, %10 : vector<128x1xf32>
    %12 = vector.broadcast %4 : vector<128x1xf32> to vector<128x16xf32>
    %13 = arith.subf %0, %12 : vector<128x16xf32>
    %cst_4 = arith.constant 9.99999974E-6 : f32
    %14 = vector.broadcast %cst_4 : f32 to vector<128x1xf32>
    %15 = arith.addf %11, %14 : vector<128x1xf32>
    %16 = math.rsqrt %15 : vector<128x1xf32>
    %17 = vector.broadcast %16 : vector<128x1xf32> to vector<128x16xf32>
    %18 = arith.mulf %13, %17 : vector<128x16xf32>
    %c0_5 = arith.constant 0 : index
    %c0_6 = arith.constant 0 : index
    %19 = vector.load %arg2[%c0_5, %c0_6] : memref<1x16xf32, #tpu.memory_space<vmem>>, vector<1x16xf32>
    %20 = vector.broadcast %19 : vector<1x16xf32> to vector<128x16xf32>
    %21 = arith.mulf %18, %20 : vector<128x16xf32>
    %c0_7 = arith.constant 0 : index
    %c0_8 = arith.constant 0 : index
    %22 = vector.load %arg3[%c0_7, %c0_8] : memref<1x16xf32, #tpu.memory_space<vmem>>, vector<1x16xf32>
    %23 = vector.broadcast %22 : vector<1x16xf32> to vector<128x16xf32>
    %24 = arith.addf %21, %23 : vector<128x16xf32>
    %25 = arith.truncf %24 : vector<128x16xf32> to vector<128x16xbf16>
    %c0_9 = arith.constant 0 : index
    %c0_10 = arith.constant 0 : index
    %26 = vector.load %arg4[%c0_9, %c0_10] : memref<16x48xbf16, #tpu.memory_space<vmem>>, vector<16x48xbf16>
    %cst_11 = arith.constant dense<0.000000e+00> : vector<128x48xf32>
    %27 = tpu.matmul %25, %26, %cst_11 {dimension_numbers = #tpu.dot_dimension_numbers<[1], [0], [0], [1], [0, 0, 1, 1], [], []>} : vector<128x16xbf16>, vector<16x48xbf16>, vector<128x48xf32> -> vector<128x48xf32>
    %c0_12 = arith.constant 0 : index
    %c0_13 = arith.constant 0 : index
    %28 = vector.load %arg5[%c0_12, %c0_13] : memref<1x48xf32, #tpu.memory_space<vmem>>, vector<1x48xf32>
    %29 = vector.broadcast %28 : vector<1x48xf32> to vector<128x48xf32>
    %30 = arith.addf %27, %29 : vector<128x48xf32>
    %31 = arith.truncf %30 : vector<128x48xf32> to vector<128x48xbf16>
    %c0_14 = arith.constant 0 : index
    %c0_15 = arith.constant 0 : index
    %32 = vector.load %arg6[%c0_14, %c0_15] : memref<128x48xbf16, #tpu.memory_space<vmem>>, vector<128x48xbf16>
    tpu.vector_store %arg6[%c0_14, %c0_15], %31 {strides = array<i32>} : memref<128x48xbf16, #tpu.memory_space<vmem>>, vector<128x48xbf16>,
    return
  }
  func.func @transform_0(%arg0: i32) -> (i32, i32) {
    %c0_i32 = arith.constant 0 : i32
    %c0_i32_0 = arith.constant 0 : i32
    return %arg0, %c0_i32 : i32, i32
  }
  func.func @transform_1(%arg0: i32) -> (i32, i32) {
    %c0_i32 = arith.constant 0 : i32
    %c0_i32_0 = arith.constant 0 : i32
    %c0_i32_1 = arith.constant 0 : i32
    return %c0_i32, %c0_i32_0 : i32, i32
  }
  func.func @transform_2(%arg0: i32) -> (i32, i32) {
    %c0_i32 = arith.constant 0 : i32
    %c0_i32_0 = arith.constant 0 : i32
    %c0_i32_1 = arith.constant 0 : i32
    return %c0_i32, %c0_i32_0 : i32, i32
  }
  func.func @transform_3(%arg0: i32) -> (i32, i32) {
    %c0_i32 = arith.constant 0 : i32
    %c0_i32_0 = arith.constant 0 : i32
    %c0_i32_1 = arith.constant 0 : i32
    return %c0_i32, %c0_i32_0 : i32, i32
  }
  func.func @transform_4(%arg0: i32) -> (i32, i32) {
    %c0_i32 = arith.constant 0 : i32
    %c0_i32_0 = arith.constant 0 : i32
    %c0_i32_1 = arith.constant 0 : i32
    return %c0_i32, %c0_i32_0 : i32, i32
  }
  func.func @transform_5(%arg0: i32) -> (i32, i32) {
    %c0_i32 = arith.constant 0 : i32
    %c0_i32_0 = arith.constant 0 : i32
    return %arg0, %c0_i32 : i32, i32
  }
}

module attributes {stable_mosaic.version = 11 : i64} {
  func.func @kern(%arg0: i32, %arg1: i32, %arg2: i32, %arg3: memref<1x10x10x48xbf16, #tpu.memory_space<vmem>>, %arg4: memref<3x3x48x16xbf16, #tpu.memory_space<vmem>>, %arg5: memref<1x16xf32, #tpu.memory_space<vmem>>, %arg6: memref<1x8x8x16xbf16, #tpu.memory_space<vmem>>, %arg7: memref<64x16xf32, #tpu.memory_space<vmem>>) attributes {dimension_semantics = [#tpu.dimension_semantics<parallel>, #tpu.dimension_semantics<parallel>, #tpu.dimension_semantics<arbitrary>], iteration_bounds = array<i64: 2, 1, 1>, scalar_prefetch = 0 : i64, scratch_operands = 1 : i64, tpu.core_type = #tpu.core_type<tc>, window_params = [{transform_indices = @transform_0, window_bounds = array<i64: 1, 10, 10, 48>}, {transform_indices = @transform_1, window_bounds = array<i64: 3, 3, 48, 16>}, {transform_indices = @transform_2, window_bounds = array<i64: 1, 16>}, {transform_indices = @transform_3, window_bounds = array<i64: 1, 8, 8, 16>}]} {
    %c0_i32 = arith.constant 0 : i32
    %0 = arith.cmpi eq, %arg2, %c0_i32 : i32
    %1 = arith.extui %0 : i1 to i32
    %c0_i32_0 = arith.constant 0 : i32
    %2 = arith.cmpi ne, %1, %c0_i32_0 : i32
    scf.if %2 {
      %cst_116 = arith.constant 0.000000e+00 : f32
      %87 = vector.broadcast %cst_116 : f32 to vector<64x16xf32>
      %c0_117 = arith.constant 0 : index
      %c0_118 = arith.constant 0 : index
      %88 = vector.load %arg7[%c0_117, %c0_118] : memref<64x16xf32, #tpu.memory_space<vmem>>, vector<64x16xf32>
      tpu.vector_store %arg7[%c0_117, %c0_118], %87 {strides = array<i32>} : memref<64x16xf32, #tpu.memory_space<vmem>>, vector<64x16xf32>,
    } else {
    }
    %c0 = arith.constant 0 : index
    %c0_1 = arith.constant 0 : index
    %c0_2 = arith.constant 0 : index
    %c0_3 = arith.constant 0 : index
    %3 = vector.load %arg3[%c0, %c0_1, %c0_2, %c0_3] : memref<1x10x10x48xbf16, #tpu.memory_space<vmem>>, vector<1x8x8x48xbf16>
    %4 = vector.shape_cast %3 : vector<1x8x8x48xbf16> to vector<8x8x48xbf16>
    %5 = vector.shape_cast %4 : vector<8x8x48xbf16> to vector<64x48xbf16>
    %c0_4 = arith.constant 0 : index
    %c0_5 = arith.constant 0 : index
    %6 = vector.load %arg7[%c0_4, %c0_5] : memref<64x16xf32, #tpu.memory_space<vmem>>, vector<64x16xf32>
    %c0_6 = arith.constant 0 : index
    %c0_7 = arith.constant 0 : index
    %c0_8 = arith.constant 0 : index
    %c0_9 = arith.constant 0 : index
    %7 = vector.load %arg4[%c0_6, %c0_7, %c0_8, %c0_9] : memref<3x3x48x16xbf16, #tpu.memory_space<vmem>>, vector<1x1x48x16xbf16>
    %8 = vector.shape_cast %7 : vector<1x1x48x16xbf16> to vector<48x16xbf16>
    %cst = arith.constant dense<0.000000e+00> : vector<64x16xf32>
    %9 = tpu.matmul %5, %8, %cst {dimension_numbers = #tpu.dot_dimension_numbers<[1], [0], [0], [1], [0, 0, 1, 1], [], []>} : vector<64x48xbf16>, vector<48x16xbf16>, vector<64x16xf32> -> vector<64x16xf32>
    %10 = arith.addf %6, %9 : vector<64x16xf32>
    %c0_10 = arith.constant 0 : index
    %c0_11 = arith.constant 0 : index
    %11 = vector.load %arg7[%c0_10, %c0_11] : memref<64x16xf32, #tpu.memory_space<vmem>>, vector<64x16xf32>
    tpu.vector_store %arg7[%c0_10, %c0_11], %10 {strides = array<i32>} : memref<64x16xf32, #tpu.memory_space<vmem>>, vector<64x16xf32>,
    %c0_12 = arith.constant 0 : index
    %c0_13 = arith.constant 0 : index
    %c1 = arith.constant 1 : index
    %c0_14 = arith.constant 0 : index
    %12 = vector.load %arg3[%c0_12, %c0_13, %c1, %c0_14] : memref<1x10x10x48xbf16, #tpu.memory_space<vmem>>, vector<1x8x8x48xbf16>
    %13 = vector.shape_cast %12 : vector<1x8x8x48xbf16> to vector<8x8x48xbf16>
    %14 = vector.shape_cast %13 : vector<8x8x48xbf16> to vector<64x48xbf16>
    %c0_15 = arith.constant 0 : index
    %c0_16 = arith.constant 0 : index
    %15 = vector.load %arg7[%c0_15, %c0_16] : memref<64x16xf32, #tpu.memory_space<vmem>>, vector<64x16xf32>
    %c0_17 = arith.constant 0 : index
    %c1_18 = arith.constant 1 : index
    %c0_19 = arith.constant 0 : index
    %c0_20 = arith.constant 0 : index
    %16 = vector.load %arg4[%c0_17, %c1_18, %c0_19, %c0_20] : memref<3x3x48x16xbf16, #tpu.memory_space<vmem>>, vector<1x1x48x16xbf16>
    %17 = vector.shape_cast %16 : vector<1x1x48x16xbf16> to vector<48x16xbf16>
    %cst_21 = arith.constant dense<0.000000e+00> : vector<64x16xf32>
    %18 = tpu.matmul %14, %17, %cst_21 {dimension_numbers = #tpu.dot_dimension_numbers<[1], [0], [0], [1], [0, 0, 1, 1], [], []>} : vector<64x48xbf16>, vector<48x16xbf16>, vector<64x16xf32> -> vector<64x16xf32>
    %19 = arith.addf %15, %18 : vector<64x16xf32>
    %c0_22 = arith.constant 0 : index
    %c0_23 = arith.constant 0 : index
    %20 = vector.load %arg7[%c0_22, %c0_23] : memref<64x16xf32, #tpu.memory_space<vmem>>, vector<64x16xf32>
    tpu.vector_store %arg7[%c0_22, %c0_23], %19 {strides = array<i32>} : memref<64x16xf32, #tpu.memory_space<vmem>>, vector<64x16xf32>,
    %c0_24 = arith.constant 0 : index
    %c0_25 = arith.constant 0 : index
    %c2 = arith.constant 2 : index
    %c0_26 = arith.constant 0 : index
    %21 = vector.load %arg3[%c0_24, %c0_25, %c2, %c0_26] : memref<1x10x10x48xbf16, #tpu.memory_space<vmem>>, vector<1x8x8x48xbf16>
    %22 = vector.shape_cast %21 : vector<1x8x8x48xbf16> to vector<8x8x48xbf16>
    %23 = vector.shape_cast %22 : vector<8x8x48xbf16> to vector<64x48xbf16>
    %c0_27 = arith.constant 0 : index
    %c0_28 = arith.constant 0 : index
    %24 = vector.load %arg7[%c0_27, %c0_28] : memref<64x16xf32, #tpu.memory_space<vmem>>, vector<64x16xf32>
    %c0_29 = arith.constant 0 : index
    %c2_30 = arith.constant 2 : index
    %c0_31 = arith.constant 0 : index
    %c0_32 = arith.constant 0 : index
    %25 = vector.load %arg4[%c0_29, %c2_30, %c0_31, %c0_32] : memref<3x3x48x16xbf16, #tpu.memory_space<vmem>>, vector<1x1x48x16xbf16>
    %26 = vector.shape_cast %25 : vector<1x1x48x16xbf16> to vector<48x16xbf16>
    %cst_33 = arith.constant dense<0.000000e+00> : vector<64x16xf32>
    %27 = tpu.matmul %23, %26, %cst_33 {dimension_numbers = #tpu.dot_dimension_numbers<[1], [0], [0], [1], [0, 0, 1, 1], [], []>} : vector<64x48xbf16>, vector<48x16xbf16>, vector<64x16xf32> -> vector<64x16xf32>
    %28 = arith.addf %24, %27 : vector<64x16xf32>
    %c0_34 = arith.constant 0 : index
    %c0_35 = arith.constant 0 : index
    %29 = vector.load %arg7[%c0_34, %c0_35] : memref<64x16xf32, #tpu.memory_space<vmem>>, vector<64x16xf32>
    tpu.vector_store %arg7[%c0_34, %c0_35], %28 {strides = array<i32>} : memref<64x16xf32, #tpu.memory_space<vmem>>, vector<64x16xf32>,
    %c0_36 = arith.constant 0 : index
    %c1_37 = arith.constant 1 : index
    %c0_38 = arith.constant 0 : index
    %c0_39 = arith.constant 0 : index
    %30 = vector.load %arg3[%c0_36, %c1_37, %c0_38, %c0_39] : memref<1x10x10x48xbf16, #tpu.memory_space<vmem>>, vector<1x8x8x48xbf16>
    %31 = vector.shape_cast %30 : vector<1x8x8x48xbf16> to vector<8x8x48xbf16>
    %32 = vector.shape_cast %31 : vector<8x8x48xbf16> to vector<64x48xbf16>
    %c0_40 = arith.constant 0 : index
    %c0_41 = arith.constant 0 : index
    %33 = vector.load %arg7[%c0_40, %c0_41] : memref<64x16xf32, #tpu.memory_space<vmem>>, vector<64x16xf32>
    %c1_42 = arith.constant 1 : index
    %c0_43 = arith.constant 0 : index
    %c0_44 = arith.constant 0 : index
    %c0_45 = arith.constant 0 : index
    %34 = vector.load %arg4[%c1_42, %c0_43, %c0_44, %c0_45] : memref<3x3x48x16xbf16, #tpu.memory_space<vmem>>, vector<1x1x48x16xbf16>
    %35 = vector.shape_cast %34 : vector<1x1x48x16xbf16> to vector<48x16xbf16>
    %cst_46 = arith.constant dense<0.000000e+00> : vector<64x16xf32>
    %36 = tpu.matmul %32, %35, %cst_46 {dimension_numbers = #tpu.dot_dimension_numbers<[1], [0], [0], [1], [0, 0, 1, 1], [], []>} : vector<64x48xbf16>, vector<48x16xbf16>, vector<64x16xf32> -> vector<64x16xf32>
    %37 = arith.addf %33, %36 : vector<64x16xf32>
    %c0_47 = arith.constant 0 : index
    %c0_48 = arith.constant 0 : index
    %38 = vector.load %arg7[%c0_47, %c0_48] : memref<64x16xf32, #tpu.memory_space<vmem>>, vector<64x16xf32>
    tpu.vector_store %arg7[%c0_47, %c0_48], %37 {strides = array<i32>} : memref<64x16xf32, #tpu.memory_space<vmem>>, vector<64x16xf32>,
    %c0_49 = arith.constant 0 : index
    %c1_50 = arith.constant 1 : index
    %c1_51 = arith.constant 1 : index
    %c0_52 = arith.constant 0 : index
    %39 = vector.load %arg3[%c0_49, %c1_50, %c1_51, %c0_52] : memref<1x10x10x48xbf16, #tpu.memory_space<vmem>>, vector<1x8x8x48xbf16>
    %40 = vector.shape_cast %39 : vector<1x8x8x48xbf16> to vector<8x8x48xbf16>
    %41 = vector.shape_cast %40 : vector<8x8x48xbf16> to vector<64x48xbf16>
    %c0_53 = arith.constant 0 : index
    %c0_54 = arith.constant 0 : index
    %42 = vector.load %arg7[%c0_53, %c0_54] : memref<64x16xf32, #tpu.memory_space<vmem>>, vector<64x16xf32>
    %c1_55 = arith.constant 1 : index
    %c1_56 = arith.constant 1 : index
    %c0_57 = arith.constant 0 : index
    %c0_58 = arith.constant 0 : index
    %43 = vector.load %arg4[%c1_55, %c1_56, %c0_57, %c0_58] : memref<3x3x48x16xbf16, #tpu.memory_space<vmem>>, vector<1x1x48x16xbf16>
    %44 = vector.shape_cast %43 : vector<1x1x48x16xbf16> to vector<48x16xbf16>
    %cst_59 = arith.constant dense<0.000000e+00> : vector<64x16xf32>
    %45 = tpu.matmul %41, %44, %cst_59 {dimension_numbers = #tpu.dot_dimension_numbers<[1], [0], [0], [1], [0, 0, 1, 1], [], []>} : vector<64x48xbf16>, vector<48x16xbf16>, vector<64x16xf32> -> vector<64x16xf32>
    %46 = arith.addf %42, %45 : vector<64x16xf32>
    %c0_60 = arith.constant 0 : index
    %c0_61 = arith.constant 0 : index
    %47 = vector.load %arg7[%c0_60, %c0_61] : memref<64x16xf32, #tpu.memory_space<vmem>>, vector<64x16xf32>
    tpu.vector_store %arg7[%c0_60, %c0_61], %46 {strides = array<i32>} : memref<64x16xf32, #tpu.memory_space<vmem>>, vector<64x16xf32>,
    %c0_62 = arith.constant 0 : index
    %c1_63 = arith.constant 1 : index
    %c2_64 = arith.constant 2 : index
    %c0_65 = arith.constant 0 : index
    %48 = vector.load %arg3[%c0_62, %c1_63, %c2_64, %c0_65] : memref<1x10x10x48xbf16, #tpu.memory_space<vmem>>, vector<1x8x8x48xbf16>
    %49 = vector.shape_cast %48 : vector<1x8x8x48xbf16> to vector<8x8x48xbf16>
    %50 = vector.shape_cast %49 : vector<8x8x48xbf16> to vector<64x48xbf16>
    %c0_66 = arith.constant 0 : index
    %c0_67 = arith.constant 0 : index
    %51 = vector.load %arg7[%c0_66, %c0_67] : memref<64x16xf32, #tpu.memory_space<vmem>>, vector<64x16xf32>
    %c1_68 = arith.constant 1 : index
    %c2_69 = arith.constant 2 : index
    %c0_70 = arith.constant 0 : index
    %c0_71 = arith.constant 0 : index
    %52 = vector.load %arg4[%c1_68, %c2_69, %c0_70, %c0_71] : memref<3x3x48x16xbf16, #tpu.memory_space<vmem>>, vector<1x1x48x16xbf16>
    %53 = vector.shape_cast %52 : vector<1x1x48x16xbf16> to vector<48x16xbf16>
    %cst_72 = arith.constant dense<0.000000e+00> : vector<64x16xf32>
    %54 = tpu.matmul %50, %53, %cst_72 {dimension_numbers = #tpu.dot_dimension_numbers<[1], [0], [0], [1], [0, 0, 1, 1], [], []>} : vector<64x48xbf16>, vector<48x16xbf16>, vector<64x16xf32> -> vector<64x16xf32>
    %55 = arith.addf %51, %54 : vector<64x16xf32>
    %c0_73 = arith.constant 0 : index
    %c0_74 = arith.constant 0 : index
    %56 = vector.load %arg7[%c0_73, %c0_74] : memref<64x16xf32, #tpu.memory_space<vmem>>, vector<64x16xf32>
    tpu.vector_store %arg7[%c0_73, %c0_74], %55 {strides = array<i32>} : memref<64x16xf32, #tpu.memory_space<vmem>>, vector<64x16xf32>,
    %c0_75 = arith.constant 0 : index
    %c2_76 = arith.constant 2 : index
    %c0_77 = arith.constant 0 : index
    %c0_78 = arith.constant 0 : index
    %57 = vector.load %arg3[%c0_75, %c2_76, %c0_77, %c0_78] : memref<1x10x10x48xbf16, #tpu.memory_space<vmem>>, vector<1x8x8x48xbf16>
    %58 = vector.shape_cast %57 : vector<1x8x8x48xbf16> to vector<8x8x48xbf16>
    %59 = vector.shape_cast %58 : vector<8x8x48xbf16> to vector<64x48xbf16>
    %c0_79 = arith.constant 0 : index
    %c0_80 = arith.constant 0 : index
    %60 = vector.load %arg7[%c0_79, %c0_80] : memref<64x16xf32, #tpu.memory_space<vmem>>, vector<64x16xf32>
    %c2_81 = arith.constant 2 : index
    %c0_82 = arith.constant 0 : index
    %c0_83 = arith.constant 0 : index
    %c0_84 = arith.constant 0 : index
    %61 = vector.load %arg4[%c2_81, %c0_82, %c0_83, %c0_84] : memref<3x3x48x16xbf16, #tpu.memory_space<vmem>>, vector<1x1x48x16xbf16>
    %62 = vector.shape_cast %61 : vector<1x1x48x16xbf16> to vector<48x16xbf16>
    %cst_85 = arith.constant dense<0.000000e+00> : vector<64x16xf32>
    %63 = tpu.matmul %59, %62, %cst_85 {dimension_numbers = #tpu.dot_dimension_numbers<[1], [0], [0], [1], [0, 0, 1, 1], [], []>} : vector<64x48xbf16>, vector<48x16xbf16>, vector<64x16xf32> -> vector<64x16xf32>
    %64 = arith.addf %60, %63 : vector<64x16xf32>
    %c0_86 = arith.constant 0 : index
    %c0_87 = arith.constant 0 : index
    %65 = vector.load %arg7[%c0_86, %c0_87] : memref<64x16xf32, #tpu.memory_space<vmem>>, vector<64x16xf32>
    tpu.vector_store %arg7[%c0_86, %c0_87], %64 {strides = array<i32>} : memref<64x16xf32, #tpu.memory_space<vmem>>, vector<64x16xf32>,
    %c0_88 = arith.constant 0 : index
    %c2_89 = arith.constant 2 : index
    %c1_90 = arith.constant 1 : index
    %c0_91 = arith.constant 0 : index
    %66 = vector.load %arg3[%c0_88, %c2_89, %c1_90, %c0_91] : memref<1x10x10x48xbf16, #tpu.memory_space<vmem>>, vector<1x8x8x48xbf16>
    %67 = vector.shape_cast %66 : vector<1x8x8x48xbf16> to vector<8x8x48xbf16>
    %68 = vector.shape_cast %67 : vector<8x8x48xbf16> to vector<64x48xbf16>
    %c0_92 = arith.constant 0 : index
    %c0_93 = arith.constant 0 : index
    %69 = vector.load %arg7[%c0_92, %c0_93] : memref<64x16xf32, #tpu.memory_space<vmem>>, vector<64x16xf32>
    %c2_94 = arith.constant 2 : index
    %c1_95 = arith.constant 1 : index
    %c0_96 = arith.constant 0 : index
    %c0_97 = arith.constant 0 : index
    %70 = vector.load %arg4[%c2_94, %c1_95, %c0_96, %c0_97] : memref<3x3x48x16xbf16, #tpu.memory_space<vmem>>, vector<1x1x48x16xbf16>
    %71 = vector.shape_cast %70 : vector<1x1x48x16xbf16> to vector<48x16xbf16>
    %cst_98 = arith.constant dense<0.000000e+00> : vector<64x16xf32>
    %72 = tpu.matmul %68, %71, %cst_98 {dimension_numbers = #tpu.dot_dimension_numbers<[1], [0], [0], [1], [0, 0, 1, 1], [], []>} : vector<64x48xbf16>, vector<48x16xbf16>, vector<64x16xf32> -> vector<64x16xf32>
    %73 = arith.addf %69, %72 : vector<64x16xf32>
    %c0_99 = arith.constant 0 : index
    %c0_100 = arith.constant 0 : index
    %74 = vector.load %arg7[%c0_99, %c0_100] : memref<64x16xf32, #tpu.memory_space<vmem>>, vector<64x16xf32>
    tpu.vector_store %arg7[%c0_99, %c0_100], %73 {strides = array<i32>} : memref<64x16xf32, #tpu.memory_space<vmem>>, vector<64x16xf32>,
    %c0_101 = arith.constant 0 : index
    %c2_102 = arith.constant 2 : index
    %c2_103 = arith.constant 2 : index
    %c0_104 = arith.constant 0 : index
    %75 = vector.load %arg3[%c0_101, %c2_102, %c2_103, %c0_104] : memref<1x10x10x48xbf16, #tpu.memory_space<vmem>>, vector<1x8x8x48xbf16>
    %76 = vector.shape_cast %75 : vector<1x8x8x48xbf16> to vector<8x8x48xbf16>
    %77 = vector.shape_cast %76 : vector<8x8x48xbf16> to vector<64x48xbf16>
    %c0_105 = arith.constant 0 : index
    %c0_106 = arith.constant 0 : index
    %78 = vector.load %arg7[%c0_105, %c0_106] : memref<64x16xf32, #tpu.memory_space<vmem>>, vector<64x16xf32>
    %c2_107 = arith.constant 2 : index
    %c2_108 = arith.constant 2 : index
    %c0_109 = arith.constant 0 : index
    %c0_110 = arith.constant 0 : index
    %79 = vector.load %arg4[%c2_107, %c2_108, %c0_109, %c0_110] : memref<3x3x48x16xbf16, #tpu.memory_space<vmem>>, vector<1x1x48x16xbf16>
    %80 = vector.shape_cast %79 : vector<1x1x48x16xbf16> to vector<48x16xbf16>
    %cst_111 = arith.constant dense<0.000000e+00> : vector<64x16xf32>
    %81 = tpu.matmul %77, %80, %cst_111 {dimension_numbers = #tpu.dot_dimension_numbers<[1], [0], [0], [1], [0, 0, 1, 1], [], []>} : vector<64x48xbf16>, vector<48x16xbf16>, vector<64x16xf32> -> vector<64x16xf32>
    %82 = arith.addf %78, %81 : vector<64x16xf32>
    %c0_112 = arith.constant 0 : index
    %c0_113 = arith.constant 0 : index
    %83 = vector.load %arg7[%c0_112, %c0_113] : memref<64x16xf32, #tpu.memory_space<vmem>>, vector<64x16xf32>
    tpu.vector_store %arg7[%c0_112, %c0_113], %82 {strides = array<i32>} : memref<64x16xf32, #tpu.memory_space<vmem>>, vector<64x16xf32>,
    %c0_i32_114 = arith.constant 0 : i32
    %84 = arith.cmpi eq, %arg2, %c0_i32_114 : i32
    %85 = arith.extui %84 : i1 to i32
    %c0_i32_115 = arith.constant 0 : i32
    %86 = arith.cmpi ne, %85, %c0_i32_115 : i32
    scf.if %86 {
      %c0_116 = arith.constant 0 : index
      %c0_117 = arith.constant 0 : index
      %87 = vector.load %arg7[%c0_116, %c0_117] : memref<64x16xf32, #tpu.memory_space<vmem>>, vector<64x16xf32>
      %c0_118 = arith.constant 0 : index
      %c0_119 = arith.constant 0 : index
      %88 = vector.load %arg5[%c0_118, %c0_119] : memref<1x16xf32, #tpu.memory_space<vmem>>, vector<1x16xf32>
      %89 = vector.broadcast %88 : vector<1x16xf32> to vector<64x16xf32>
      %90 = arith.addf %87, %89 : vector<64x16xf32>
      %91 = vector.shape_cast %90 : vector<64x16xf32> to vector<8x8x16xf32>
      %92 = arith.truncf %91 : vector<8x8x16xf32> to vector<8x8x16xbf16>
      %c0_120 = arith.constant 0 : index
      %c0_121 = arith.constant 0 : index
      %c0_122 = arith.constant 0 : index
      %c0_123 = arith.constant 0 : index
      %93 = vector.load %arg6[%c0_120, %c0_121, %c0_122, %c0_123] : memref<1x8x8x16xbf16, #tpu.memory_space<vmem>>, vector<1x8x8x16xbf16>
      %94 = vector.shape_cast %93 : vector<1x8x8x16xbf16> to vector<8x8x16xbf16>
      %95 = vector.shape_cast %92 : vector<8x8x16xbf16> to vector<1x8x8x16xbf16>
      tpu.vector_store %arg6[%c0_120, %c0_121, %c0_122, %c0_123], %95 {strides = array<i32>} : memref<1x8x8x16xbf16, #tpu.memory_space<vmem>>, vector<1x8x8x16xbf16>,
    } else {
    }
    return
  }
  func.func @transform_0(%arg0: i32, %arg1: i32, %arg2: i32) -> (i32, i32, i32, i32) {
    %c0_i32 = arith.constant 0 : i32
    %c0_i32_0 = arith.constant 0 : i32
    %c0_i32_1 = arith.constant 0 : i32
    return %arg0, %c0_i32, %c0_i32_0, %arg2 : i32, i32, i32, i32
  }
  func.func @transform_1(%arg0: i32, %arg1: i32, %arg2: i32) -> (i32, i32, i32, i32) {
    %c0_i32 = arith.constant 0 : i32
    %c0_i32_0 = arith.constant 0 : i32
    %c0_i32_1 = arith.constant 0 : i32
    return %c0_i32, %c0_i32_0, %arg2, %arg1 : i32, i32, i32, i32
  }
  func.func @transform_2(%arg0: i32, %arg1: i32, %arg2: i32) -> (i32, i32) {
    %c0_i32 = arith.constant 0 : i32
    %c0_i32_0 = arith.constant 0 : i32
    return %c0_i32, %arg1 : i32, i32
  }
  func.func @transform_3(%arg0: i32, %arg1: i32, %arg2: i32) -> (i32, i32, i32, i32) {
    %c0_i32 = arith.constant 0 : i32
    %c0_i32_0 = arith.constant 0 : i32
    %c0_i32_1 = arith.constant 0 : i32
    return %arg0, %c0_i32, %c0_i32_0, %arg1 : i32, i32, i32, i32
  }
}

module attributes {stable_mosaic.version = 11 : i64} {
  func.func @_mask_apply_kernel(%arg0: i32, %arg1: i32, %arg2: memref<1x16x16xf32, #tpu.memory_space<vmem>>, %arg3: memref<1x16x64xbf16, #tpu.memory_space<vmem>>, %arg4: memref<1x16x64xbf16, #tpu.memory_space<vmem>>) attributes {dimension_semantics = [#tpu.dimension_semantics<parallel>, #tpu.dimension_semantics<parallel>], iteration_bounds = array<i64: 2, 1>, scalar_prefetch = 0 : i64, scratch_operands = 0 : i64, tpu.core_type = #tpu.core_type<tc>, window_params = [{transform_indices = @transform_0, window_bounds = array<i64: 1, 16, 16>}, {transform_indices = @transform_1, window_bounds = array<i64: 1, 16, 64>}, {transform_indices = @transform_2, window_bounds = array<i64: 1, 16, 64>}]} {
    %c0 = arith.constant 0 : index
    %c0_0 = arith.constant 0 : index
    %c0_1 = arith.constant 0 : index
    %0 = vector.load %arg2[%c0, %c0_0, %c0_1] : memref<1x16x16xf32, #tpu.memory_space<vmem>>, vector<1x16x16xf32>
    %1 = vector.shape_cast %0 : vector<1x16x16xf32> to vector<16x16xf32>
    %2 = arith.truncf %1 : vector<16x16xf32> to vector<16x16xbf16>
    %c0_2 = arith.constant 0 : index
    %c0_3 = arith.constant 0 : index
    %c0_4 = arith.constant 0 : index
    %3 = vector.load %arg3[%c0_2, %c0_3, %c0_4] : memref<1x16x64xbf16, #tpu.memory_space<vmem>>, vector<1x16x64xbf16>
    %4 = vector.shape_cast %3 : vector<1x16x64xbf16> to vector<16x64xbf16>
    %cst = arith.constant dense<0.000000e+00> : vector<16x64xf32>
    %5 = tpu.matmul %2, %4, %cst {dimension_numbers = #tpu.dot_dimension_numbers<[1], [0], [0], [1], [0, 0, 1, 1], [], []>} : vector<16x16xbf16>, vector<16x64xbf16>, vector<16x64xf32> -> vector<16x64xf32>
    %6 = arith.truncf %5 : vector<16x64xf32> to vector<16x64xbf16>
    %c0_5 = arith.constant 0 : index
    %c0_6 = arith.constant 0 : index
    %c0_7 = arith.constant 0 : index
    %7 = vector.load %arg4[%c0_5, %c0_6, %c0_7] : memref<1x16x64xbf16, #tpu.memory_space<vmem>>, vector<1x16x64xbf16>
    %8 = vector.shape_cast %7 : vector<1x16x64xbf16> to vector<16x64xbf16>
    %9 = vector.shape_cast %6 : vector<16x64xbf16> to vector<1x16x64xbf16>
    tpu.vector_store %arg4[%c0_5, %c0_6, %c0_7], %9 {strides = array<i32>} : memref<1x16x64xbf16, #tpu.memory_space<vmem>>, vector<1x16x64xbf16>,
    return
  }
  func.func @transform_0(%arg0: i32, %arg1: i32) -> (i32, i32, i32) {
    %c0_i32 = arith.constant 0 : i32
    %c0_i32_0 = arith.constant 0 : i32
    %c0_i32_1 = arith.constant 0 : i32
    return %arg0, %c0_i32, %c0_i32_0 : i32, i32, i32
  }
  func.func @transform_1(%arg0: i32, %arg1: i32) -> (i32, i32, i32) {
    %c0_i32 = arith.constant 0 : i32
    %c0_i32_0 = arith.constant 0 : i32
    return %arg0, %c0_i32, %arg1 : i32, i32, i32
  }
  func.func @transform_2(%arg0: i32, %arg1: i32) -> (i32, i32, i32) {
    %c0_i32 = arith.constant 0 : i32
    %c0_i32_0 = arith.constant 0 : i32
    return %arg0, %c0_i32, %arg1 : i32, i32, i32
  }
}

module attributes {stable_mosaic.version = 11 : i64} {
  func.func @_mask_att_kernel(%arg0: i32, %arg1: memref<1x16x4xf32, #tpu.memory_space<vmem>>, %arg2: memref<1x16x16xf32, #tpu.memory_space<vmem>>) attributes {dimension_semantics = [#tpu.dimension_semantics<parallel>], iteration_bounds = array<i64: 2>, scalar_prefetch = 0 : i64, scratch_operands = 0 : i64, tpu.core_type = #tpu.core_type<tc>, window_params = [{transform_indices = @transform_0, window_bounds = array<i64: 1, 16, 4>}, {transform_indices = @transform_1, window_bounds = array<i64: 1, 16, 16>}]} {
    %c0 = arith.constant 0 : index
    %c0_0 = arith.constant 0 : index
    %c0_1 = arith.constant 0 : index
    %0 = vector.load %arg1[%c0, %c0_0, %c0_1] : memref<1x16x4xf32, #tpu.memory_space<vmem>>, vector<1x16x4xf32>
    %1 = vector.shape_cast %0 : vector<1x16x4xf32> to vector<16x4xf32>
    %2 = arith.mulf %1, %1 : vector<16x4xf32>
    %cst = arith.constant dense<0.000000e+00> : vector<16xf32>
    %3 = vector.multi_reduction <add>, %2, %cst [1] : vector<16x4xf32> to vector<16xf32>
    %4 = vector.shape_cast %3 : vector<16xf32> to vector<16x1xf32>
    %5 = math.sqrt %4 : vector<16x1xf32>
    %cst_2 = arith.constant 9.99999996E-13 : f32
    %6 = vector.broadcast %cst_2 : f32 to vector<16x1xf32>
    %7 = arith.maximumf %5, %6 : vector<16x1xf32>
    %8 = vector.broadcast %7 : vector<16x1xf32> to vector<16x4xf32>
    %9 = arith.divf %1, %8 : vector<16x4xf32>
    %cst_3 = arith.constant dense<0.000000e+00> : vector<16x16xf32>
    %10 = tpu.matmul %9, %9, %cst_3 {dimension_numbers = #tpu.dot_dimension_numbers<[1], [1], [0], [0], [0, 0, 1, 0], [], []>} : vector<16x4xf32>, vector<16x4xf32>, vector<16x16xf32> -> vector<16x16xf32>
    %cst_4 = arith.constant dense<0xFF800000> : vector<16xf32>
    %11 = vector.multi_reduction <maximumf>, %10, %cst_4 [1] : vector<16x16xf32> to vector<16xf32>
    %12 = vector.shape_cast %11 : vector<16xf32> to vector<16x1xf32>
    %13 = vector.broadcast %12 : vector<16x1xf32> to vector<16x16xf32>
    %14 = arith.subf %10, %13 : vector<16x16xf32>
    %15 = math.exp %14 : vector<16x16xf32>
    %cst_5 = arith.constant dense<0.000000e+00> : vector<16xf32>
    %16 = vector.multi_reduction <add>, %15, %cst_5 [1] : vector<16x16xf32> to vector<16xf32>
    %17 = vector.shape_cast %16 : vector<16xf32> to vector<16x1xf32>
    %18 = vector.broadcast %17 : vector<16x1xf32> to vector<16x16xf32>
    %19 = arith.divf %15, %18 : vector<16x16xf32>
    %c0_6 = arith.constant 0 : index
    %c0_7 = arith.constant 0 : index
    %c0_8 = arith.constant 0 : index
    %20 = vector.load %arg2[%c0_6, %c0_7, %c0_8] : memref<1x16x16xf32, #tpu.memory_space<vmem>>, vector<1x16x16xf32>
    %21 = vector.shape_cast %20 : vector<1x16x16xf32> to vector<16x16xf32>
    %22 = vector.shape_cast %19 : vector<16x16xf32> to vector<1x16x16xf32>
    tpu.vector_store %arg2[%c0_6, %c0_7, %c0_8], %22 {strides = array<i32>} : memref<1x16x16xf32, #tpu.memory_space<vmem>>, vector<1x16x16xf32>,
    return
  }
  func.func @transform_0(%arg0: i32) -> (i32, i32, i32) {
    %c0_i32 = arith.constant 0 : i32
    %c0_i32_0 = arith.constant 0 : i32
    %c0_i32_1 = arith.constant 0 : i32
    return %arg0, %c0_i32, %c0_i32_0 : i32, i32, i32
  }
  func.func @transform_1(%arg0: i32) -> (i32, i32, i32) {
    %c0_i32 = arith.constant 0 : i32
    %c0_i32_0 = arith.constant 0 : i32
    %c0_i32_1 = arith.constant 0 : i32
    return %arg0, %c0_i32, %c0_i32_0 : i32, i32, i32
  }
}

module attributes {stable_mosaic.version = 11 : i64} {
  func.func @_mm_kernel(%arg0: i32, %arg1: memref<128x16xbf16, #tpu.memory_space<vmem>>, %arg2: memref<16x16xbf16, #tpu.memory_space<vmem>>, %arg3: memref<1x16xf32, #tpu.memory_space<vmem>>, %arg4: memref<128x16xf32, #tpu.memory_space<vmem>>) attributes {dimension_semantics = [#tpu.dimension_semantics<parallel>], iteration_bounds = array<i64: 1>, scalar_prefetch = 0 : i64, scratch_operands = 0 : i64, tpu.core_type = #tpu.core_type<tc>, window_params = [{transform_indices = @transform_0, window_bounds = array<i64: 128, 16>}, {pipeline_mode = #tpu.pipeline_mode<synchronous>, transform_indices = @transform_1, window_bounds = array<i64: 16, 16>}, {pipeline_mode = #tpu.pipeline_mode<synchronous>, transform_indices = @transform_2, window_bounds = array<i64: 1, 16>}, {transform_indices = @transform_3, window_bounds = array<i64: 128, 16>}]} {
    %c0 = arith.constant 0 : index
    %c0_0 = arith.constant 0 : index
    %0 = vector.load %arg1[%c0, %c0_0] : memref<128x16xbf16, #tpu.memory_space<vmem>>, vector<128x16xbf16>
    %c0_1 = arith.constant 0 : index
    %c0_2 = arith.constant 0 : index
    %1 = vector.load %arg2[%c0_1, %c0_2] : memref<16x16xbf16, #tpu.memory_space<vmem>>, vector<16x16xbf16>
    %cst = arith.constant dense<0.000000e+00> : vector<128x16xf32>
    %2 = tpu.matmul %0, %1, %cst {dimension_numbers = #tpu.dot_dimension_numbers<[1], [0], [0], [1], [0, 0, 1, 1], [], []>} : vector<128x16xbf16>, vector<16x16xbf16>, vector<128x16xf32> -> vector<128x16xf32>
    %c0_3 = arith.constant 0 : index
    %c0_4 = arith.constant 0 : index
    %3 = vector.load %arg3[%c0_3, %c0_4] : memref<1x16xf32, #tpu.memory_space<vmem>>, vector<1x16xf32>
    %4 = vector.broadcast %3 : vector<1x16xf32> to vector<128x16xf32>
    %5 = arith.addf %2, %4 : vector<128x16xf32>
    %c0_5 = arith.constant 0 : index
    %c0_6 = arith.constant 0 : index
    %6 = vector.load %arg4[%c0_5, %c0_6] : memref<128x16xf32, #tpu.memory_space<vmem>>, vector<128x16xf32>
    tpu.vector_store %arg4[%c0_5, %c0_6], %5 {strides = array<i32>} : memref<128x16xf32, #tpu.memory_space<vmem>>, vector<128x16xf32>,
    return
  }
  func.func @transform_0(%arg0: i32) -> (i32, i32) {
    %c0_i32 = arith.constant 0 : i32
    %c0_i32_0 = arith.constant 0 : i32
    return %arg0, %c0_i32 : i32, i32
  }
  func.func @transform_1(%arg0: i32) -> (i32, i32) {
    %c0_i32 = arith.constant 0 : i32
    %c0_i32_0 = arith.constant 0 : i32
    %c0_i32_1 = arith.constant 0 : i32
    return %c0_i32, %c0_i32_0 : i32, i32
  }
  func.func @transform_2(%arg0: i32) -> (i32, i32) {
    %c0_i32 = arith.constant 0 : i32
    %c0_i32_0 = arith.constant 0 : i32
    %c0_i32_1 = arith.constant 0 : i32
    return %c0_i32, %c0_i32_0 : i32, i32
  }
  func.func @transform_3(%arg0: i32) -> (i32, i32) {
    %c0_i32 = arith.constant 0 : i32
    %c0_i32_0 = arith.constant 0 : i32
    return %arg0, %c0_i32 : i32, i32
  }
}

module attributes {stable_mosaic.version = 11 : i64} {
  func.func @_mm_ln_kernel(%arg0: i32, %arg1: memref<128x16xf32, #tpu.memory_space<vmem>>, %arg2: memref<1x16xf32, #tpu.memory_space<vmem>>, %arg3: memref<1x16xf32, #tpu.memory_space<vmem>>, %arg4: memref<16x48xbf16, #tpu.memory_space<vmem>>, %arg5: memref<1x48xf32, #tpu.memory_space<vmem>>, %arg6: memref<128x48xbf16, #tpu.memory_space<vmem>>) attributes {dimension_semantics = [#tpu.dimension_semantics<parallel>], iteration_bounds = array<i64: 1>, scalar_prefetch = 0 : i64, scratch_operands = 0 : i64, tpu.core_type = #tpu.core_type<tc>, window_params = [{transform_indices = @transform_0, window_bounds = array<i64: 128, 16>}, {pipeline_mode = #tpu.pipeline_mode<synchronous>, transform_indices = @transform_1, window_bounds = array<i64: 1, 16>}, {pipeline_mode = #tpu.pipeline_mode<synchronous>, transform_indices = @transform_2, window_bounds = array<i64: 1, 16>}, {pipeline_mode = #tpu.pipeline_mode<synchronous>, transform_indices = @transform_3, window_bounds = array<i64: 16, 48>}, {pipeline_mode = #tpu.pipeline_mode<synchronous>, transform_indices = @transform_4, window_bounds = array<i64: 1, 48>}, {transform_indices = @transform_5, window_bounds = array<i64: 128, 48>}]} {
    %c0 = arith.constant 0 : index
    %c0_0 = arith.constant 0 : index
    %0 = vector.load %arg1[%c0, %c0_0] : memref<128x16xf32, #tpu.memory_space<vmem>>, vector<128x16xf32>
    %cst = arith.constant dense<0.000000e+00> : vector<128xf32>
    %1 = vector.multi_reduction <add>, %0, %cst [1] : vector<128x16xf32> to vector<128xf32>
    %2 = vector.shape_cast %1 : vector<128xf32> to vector<128x1xf32>
    %cst_1 = arith.constant 1.600000e+01 : f32
    %3 = vector.broadcast %cst_1 : f32 to vector<128x1xf32>
    %4 = arith.divf %2, %3 : vector<128x1xf32>
    %5 = vector.broadcast %4 : vector<128x1xf32> to vector<128x16xf32>
    %6 = arith.subf %0, %5 : vector<128x16xf32>
    %7 = arith.mulf %6, %6 : vector<128x16xf32>
    %cst_2 = arith.constant dense<0.000000e+00> : vector<128xf32>
    %8 = vector.multi_reduction <add>, %7, %cst_2 [1] : vector<128x16xf32> to vector<128xf32>
    %9 = vector.shape_cast %8 : vector<128xf32> to vector<128x1xf32>
    %cst_3 = arith.constant 1.600000e+01 : f32
    %10 = vector.broadcast %cst_3 : f32 to vector<128x1xf32>
    %11 = arith.divf %9, %10 : vector<128x1xf32>
    %12 = vector.broadcast %4 : vector<128x1xf32> to vector<128x16xf32>
    %13 = arith.subf %0, %12 : vector<128x16xf32>
    %cst_4 = arith.constant 9.99999974E-6 : f32
    %14 = vector.broadcast %cst_4 : f32 to vector<128x1xf32>
    %15 = arith.addf %11, %14 : vector<128x1xf32>
    %16 = math.rsqrt %15 : vector<128x1xf32>
    %17 = vector.broadcast %16 : vector<128x1xf32> to vector<128x16xf32>
    %18 = arith.mulf %13, %17 : vector<128x16xf32>
    %c0_5 = arith.constant 0 : index
    %c0_6 = arith.constant 0 : index
    %19 = vector.load %arg2[%c0_5, %c0_6] : memref<1x16xf32, #tpu.memory_space<vmem>>, vector<1x16xf32>
    %20 = vector.broadcast %19 : vector<1x16xf32> to vector<128x16xf32>
    %21 = arith.mulf %18, %20 : vector<128x16xf32>
    %c0_7 = arith.constant 0 : index
    %c0_8 = arith.constant 0 : index
    %22 = vector.load %arg3[%c0_7, %c0_8] : memref<1x16xf32, #tpu.memory_space<vmem>>, vector<1x16xf32>
    %23 = vector.broadcast %22 : vector<1x16xf32> to vector<128x16xf32>
    %24 = arith.addf %21, %23 : vector<128x16xf32>
    %25 = arith.truncf %24 : vector<128x16xf32> to vector<128x16xbf16>
    %c0_9 = arith.constant 0 : index
    %c0_10 = arith.constant 0 : index
    %26 = vector.load %arg4[%c0_9, %c0_10] : memref<16x48xbf16, #tpu.memory_space<vmem>>, vector<16x48xbf16>
    %cst_11 = arith.constant dense<0.000000e+00> : vector<128x48xf32>
    %27 = tpu.matmul %25, %26, %cst_11 {dimension_numbers = #tpu.dot_dimension_numbers<[1], [0], [0], [1], [0, 0, 1, 1], [], []>} : vector<128x16xbf16>, vector<16x48xbf16>, vector<128x48xf32> -> vector<128x48xf32>
    %c0_12 = arith.constant 0 : index
    %c0_13 = arith.constant 0 : index
    %28 = vector.load %arg5[%c0_12, %c0_13] : memref<1x48xf32, #tpu.memory_space<vmem>>, vector<1x48xf32>
    %29 = vector.broadcast %28 : vector<1x48xf32> to vector<128x48xf32>
    %30 = arith.addf %27, %29 : vector<128x48xf32>
    %31 = arith.truncf %30 : vector<128x48xf32> to vector<128x48xbf16>
    %c0_14 = arith.constant 0 : index
    %c0_15 = arith.constant 0 : index
    %32 = vector.load %arg6[%c0_14, %c0_15] : memref<128x48xbf16, #tpu.memory_space<vmem>>, vector<128x48xbf16>
    tpu.vector_store %arg6[%c0_14, %c0_15], %31 {strides = array<i32>} : memref<128x48xbf16, #tpu.memory_space<vmem>>, vector<128x48xbf16>,
    return
  }
  func.func @transform_0(%arg0: i32) -> (i32, i32) {
    %c0_i32 = arith.constant 0 : i32
    %c0_i32_0 = arith.constant 0 : i32
    return %arg0, %c0_i32 : i32, i32
  }
  func.func @transform_1(%arg0: i32) -> (i32, i32) {
    %c0_i32 = arith.constant 0 : i32
    %c0_i32_0 = arith.constant 0 : i32
    %c0_i32_1 = arith.constant 0 : i32
    return %c0_i32, %c0_i32_0 : i32, i32
  }
  func.func @transform_2(%arg0: i32) -> (i32, i32) {
    %c0_i32 = arith.constant 0 : i32
    %c0_i32_0 = arith.constant 0 : i32
    %c0_i32_1 = arith.constant 0 : i32
    return %c0_i32, %c0_i32_0 : i32, i32
  }
  func.func @transform_3(%arg0: i32) -> (i32, i32) {
    %c0_i32 = arith.constant 0 : i32
    %c0_i32_0 = arith.constant 0 : i32
    %c0_i32_1 = arith.constant 0 : i32
    return %c0_i32, %c0_i32_0 : i32, i32
  }
  func.func @transform_4(%arg0: i32) -> (i32, i32) {
    %c0_i32 = arith.constant 0 : i32
    %c0_i32_0 = arith.constant 0 : i32
    %c0_i32_1 = arith.constant 0 : i32
    return %c0_i32, %c0_i32_0 : i32, i32
  }
  func.func @transform_5(%arg0: i32) -> (i32, i32) {
    %c0_i32 = arith.constant 0 : i32
    %c0_i32_0 = arith.constant 0 : i32
    return %arg0, %c0_i32 : i32, i32
  }
}

module attributes {stable_mosaic.version = 11 : i64} {
  func.func @kern(%arg0: i32, %arg1: i32, %arg2: memref<1x10x10x48xbf16, #tpu.memory_space<vmem>>, %arg3: memref<3x3x48xf32, #tpu.memory_space<vmem>>, %arg4: memref<1x1x48xf32, #tpu.memory_space<vmem>>, %arg5: memref<1x8x8x48xbf16, #tpu.memory_space<vmem>>) attributes {dimension_semantics = [#tpu.dimension_semantics<parallel>, #tpu.dimension_semantics<parallel>], iteration_bounds = array<i64: 2, 1>, scalar_prefetch = 0 : i64, scratch_operands = 0 : i64, tpu.core_type = #tpu.core_type<tc>, window_params = [{transform_indices = @transform_0, window_bounds = array<i64: 1, 10, 10, 48>}, {transform_indices = @transform_1, window_bounds = array<i64: 3, 3, 48>}, {transform_indices = @transform_2, window_bounds = array<i64: 1, 1, 48>}, {transform_indices = @transform_3, window_bounds = array<i64: 1, 8, 8, 48>}]} {
    %c0 = arith.constant 0 : index
    %c0_0 = arith.constant 0 : index
    %c0_1 = arith.constant 0 : index
    %0 = vector.load %arg3[%c0, %c0_0, %c0_1] : memref<3x3x48xf32, #tpu.memory_space<vmem>>, vector<3x3x48xf32>
    %c0_2 = arith.constant 0 : index
    %c0_3 = arith.constant 0 : index
    %c0_4 = arith.constant 0 : index
    %c0_5 = arith.constant 0 : index
    %1 = vector.load %arg2[%c0_2, %c0_3, %c0_4, %c0_5] : memref<1x10x10x48xbf16, #tpu.memory_space<vmem>>, vector<1x8x8x48xbf16>
    %2 = vector.shape_cast %1 : vector<1x8x8x48xbf16> to vector<8x8x48xbf16>
    %3 = arith.extf %2 : vector<8x8x48xbf16> to vector<8x8x48xf32>
    %4 = vector.extract_strided_slice %0 {offsets = [0, 0, 0], sizes = [1, 1, 48], strides = [1, 1, 1]} : vector<3x3x48xf32> to vector<1x1x48xf32>
    %5 = vector.shape_cast %4 : vector<1x1x48xf32> to vector<48xf32>
    %6 = vector.shape_cast %5 : vector<48xf32> to vector<1x1x48xf32>
    %7 = vector.broadcast %6 : vector<1x1x48xf32> to vector<8x8x48xf32>
    %8 = arith.mulf %3, %7 : vector<8x8x48xf32>
    %c0_6 = arith.constant 0 : index
    %c0_7 = arith.constant 0 : index
    %c1 = arith.constant 1 : index
    %c0_8 = arith.constant 0 : index
    %9 = vector.load %arg2[%c0_6, %c0_7, %c1, %c0_8] : memref<1x10x10x48xbf16, #tpu.memory_space<vmem>>, vector<1x8x8x48xbf16>
    %10 = vector.shape_cast %9 : vector<1x8x8x48xbf16> to vector<8x8x48xbf16>
    %11 = arith.extf %10 : vector<8x8x48xbf16> to vector<8x8x48xf32>
    %12 = vector.extract_strided_slice %0 {offsets = [0, 1, 0], sizes = [1, 1, 48], strides = [1, 1, 1]} : vector<3x3x48xf32> to vector<1x1x48xf32>
    %13 = vector.shape_cast %12 : vector<1x1x48xf32> to vector<48xf32>
    %14 = vector.shape_cast %13 : vector<48xf32> to vector<1x1x48xf32>
    %15 = vector.broadcast %14 : vector<1x1x48xf32> to vector<8x8x48xf32>
    %16 = arith.mulf %11, %15 : vector<8x8x48xf32>
    %17 = arith.addf %8, %16 : vector<8x8x48xf32>
    %c0_9 = arith.constant 0 : index
    %c0_10 = arith.constant 0 : index
    %c2 = arith.constant 2 : index
    %c0_11 = arith.constant 0 : index
    %18 = vector.load %arg2[%c0_9, %c0_10, %c2, %c0_11] : memref<1x10x10x48xbf16, #tpu.memory_space<vmem>>, vector<1x8x8x48xbf16>
    %19 = vector.shape_cast %18 : vector<1x8x8x48xbf16> to vector<8x8x48xbf16>
    %20 = arith.extf %19 : vector<8x8x48xbf16> to vector<8x8x48xf32>
    %21 = vector.extract_strided_slice %0 {offsets = [0, 2, 0], sizes = [1, 1, 48], strides = [1, 1, 1]} : vector<3x3x48xf32> to vector<1x1x48xf32>
    %22 = vector.shape_cast %21 : vector<1x1x48xf32> to vector<48xf32>
    %23 = vector.shape_cast %22 : vector<48xf32> to vector<1x1x48xf32>
    %24 = vector.broadcast %23 : vector<1x1x48xf32> to vector<8x8x48xf32>
    %25 = arith.mulf %20, %24 : vector<8x8x48xf32>
    %26 = arith.addf %17, %25 : vector<8x8x48xf32>
    %c0_12 = arith.constant 0 : index
    %c1_13 = arith.constant 1 : index
    %c0_14 = arith.constant 0 : index
    %c0_15 = arith.constant 0 : index
    %27 = vector.load %arg2[%c0_12, %c1_13, %c0_14, %c0_15] : memref<1x10x10x48xbf16, #tpu.memory_space<vmem>>, vector<1x8x8x48xbf16>
    %28 = vector.shape_cast %27 : vector<1x8x8x48xbf16> to vector<8x8x48xbf16>
    %29 = arith.extf %28 : vector<8x8x48xbf16> to vector<8x8x48xf32>
    %30 = vector.extract_strided_slice %0 {offsets = [1, 0, 0], sizes = [1, 1, 48], strides = [1, 1, 1]} : vector<3x3x48xf32> to vector<1x1x48xf32>
    %31 = vector.shape_cast %30 : vector<1x1x48xf32> to vector<48xf32>
    %32 = vector.shape_cast %31 : vector<48xf32> to vector<1x1x48xf32>
    %33 = vector.broadcast %32 : vector<1x1x48xf32> to vector<8x8x48xf32>
    %34 = arith.mulf %29, %33 : vector<8x8x48xf32>
    %35 = arith.addf %26, %34 : vector<8x8x48xf32>
    %c0_16 = arith.constant 0 : index
    %c1_17 = arith.constant 1 : index
    %c1_18 = arith.constant 1 : index
    %c0_19 = arith.constant 0 : index
    %36 = vector.load %arg2[%c0_16, %c1_17, %c1_18, %c0_19] : memref<1x10x10x48xbf16, #tpu.memory_space<vmem>>, vector<1x8x8x48xbf16>
    %37 = vector.shape_cast %36 : vector<1x8x8x48xbf16> to vector<8x8x48xbf16>
    %38 = arith.extf %37 : vector<8x8x48xbf16> to vector<8x8x48xf32>
    %39 = vector.extract_strided_slice %0 {offsets = [1, 1, 0], sizes = [1, 1, 48], strides = [1, 1, 1]} : vector<3x3x48xf32> to vector<1x1x48xf32>
    %40 = vector.shape_cast %39 : vector<1x1x48xf32> to vector<48xf32>
    %41 = vector.shape_cast %40 : vector<48xf32> to vector<1x1x48xf32>
    %42 = vector.broadcast %41 : vector<1x1x48xf32> to vector<8x8x48xf32>
    %43 = arith.mulf %38, %42 : vector<8x8x48xf32>
    %44 = arith.addf %35, %43 : vector<8x8x48xf32>
    %c0_20 = arith.constant 0 : index
    %c1_21 = arith.constant 1 : index
    %c2_22 = arith.constant 2 : index
    %c0_23 = arith.constant 0 : index
    %45 = vector.load %arg2[%c0_20, %c1_21, %c2_22, %c0_23] : memref<1x10x10x48xbf16, #tpu.memory_space<vmem>>, vector<1x8x8x48xbf16>
    %46 = vector.shape_cast %45 : vector<1x8x8x48xbf16> to vector<8x8x48xbf16>
    %47 = arith.extf %46 : vector<8x8x48xbf16> to vector<8x8x48xf32>
    %48 = vector.extract_strided_slice %0 {offsets = [1, 2, 0], sizes = [1, 1, 48], strides = [1, 1, 1]} : vector<3x3x48xf32> to vector<1x1x48xf32>
    %49 = vector.shape_cast %48 : vector<1x1x48xf32> to vector<48xf32>
    %50 = vector.shape_cast %49 : vector<48xf32> to vector<1x1x48xf32>
    %51 = vector.broadcast %50 : vector<1x1x48xf32> to vector<8x8x48xf32>
    %52 = arith.mulf %47, %51 : vector<8x8x48xf32>
    %53 = arith.addf %44, %52 : vector<8x8x48xf32>
    %c0_24 = arith.constant 0 : index
    %c2_25 = arith.constant 2 : index
    %c0_26 = arith.constant 0 : index
    %c0_27 = arith.constant 0 : index
    %54 = vector.load %arg2[%c0_24, %c2_25, %c0_26, %c0_27] : memref<1x10x10x48xbf16, #tpu.memory_space<vmem>>, vector<1x8x8x48xbf16>
    %55 = vector.shape_cast %54 : vector<1x8x8x48xbf16> to vector<8x8x48xbf16>
    %56 = arith.extf %55 : vector<8x8x48xbf16> to vector<8x8x48xf32>
    %57 = vector.extract_strided_slice %0 {offsets = [2, 0, 0], sizes = [1, 1, 48], strides = [1, 1, 1]} : vector<3x3x48xf32> to vector<1x1x48xf32>
    %58 = vector.shape_cast %57 : vector<1x1x48xf32> to vector<48xf32>
    %59 = vector.shape_cast %58 : vector<48xf32> to vector<1x1x48xf32>
    %60 = vector.broadcast %59 : vector<1x1x48xf32> to vector<8x8x48xf32>
    %61 = arith.mulf %56, %60 : vector<8x8x48xf32>
    %62 = arith.addf %53, %61 : vector<8x8x48xf32>
    %c0_28 = arith.constant 0 : index
    %c2_29 = arith.constant 2 : index
    %c1_30 = arith.constant 1 : index
    %c0_31 = arith.constant 0 : index
    %63 = vector.load %arg2[%c0_28, %c2_29, %c1_30, %c0_31] : memref<1x10x10x48xbf16, #tpu.memory_space<vmem>>, vector<1x8x8x48xbf16>
    %64 = vector.shape_cast %63 : vector<1x8x8x48xbf16> to vector<8x8x48xbf16>
    %65 = arith.extf %64 : vector<8x8x48xbf16> to vector<8x8x48xf32>
    %66 = vector.extract_strided_slice %0 {offsets = [2, 1, 0], sizes = [1, 1, 48], strides = [1, 1, 1]} : vector<3x3x48xf32> to vector<1x1x48xf32>
    %67 = vector.shape_cast %66 : vector<1x1x48xf32> to vector<48xf32>
    %68 = vector.shape_cast %67 : vector<48xf32> to vector<1x1x48xf32>
    %69 = vector.broadcast %68 : vector<1x1x48xf32> to vector<8x8x48xf32>
    %70 = arith.mulf %65, %69 : vector<8x8x48xf32>
    %71 = arith.addf %62, %70 : vector<8x8x48xf32>
    %c0_32 = arith.constant 0 : index
    %c2_33 = arith.constant 2 : index
    %c2_34 = arith.constant 2 : index
    %c0_35 = arith.constant 0 : index
    %72 = vector.load %arg2[%c0_32, %c2_33, %c2_34, %c0_35] : memref<1x10x10x48xbf16, #tpu.memory_space<vmem>>, vector<1x8x8x48xbf16>
    %73 = vector.shape_cast %72 : vector<1x8x8x48xbf16> to vector<8x8x48xbf16>
    %74 = arith.extf %73 : vector<8x8x48xbf16> to vector<8x8x48xf32>
    %75 = vector.extract_strided_slice %0 {offsets = [2, 2, 0], sizes = [1, 1, 48], strides = [1, 1, 1]} : vector<3x3x48xf32> to vector<1x1x48xf32>
    %76 = vector.shape_cast %75 : vector<1x1x48xf32> to vector<48xf32>
    %77 = vector.shape_cast %76 : vector<48xf32> to vector<1x1x48xf32>
    %78 = vector.broadcast %77 : vector<1x1x48xf32> to vector<8x8x48xf32>
    %79 = arith.mulf %74, %78 : vector<8x8x48xf32>
    %80 = arith.addf %71, %79 : vector<8x8x48xf32>
    %c0_36 = arith.constant 0 : index
    %c0_37 = arith.constant 0 : index
    %c0_38 = arith.constant 0 : index
    %81 = vector.load %arg4[%c0_36, %c0_37, %c0_38] : memref<1x1x48xf32, #tpu.memory_space<vmem>>, vector<1x1x48xf32>
    %82 = vector.broadcast %81 : vector<1x1x48xf32> to vector<8x8x48xf32>
    %83 = arith.addf %80, %82 : vector<8x8x48xf32>
    %84 = arith.truncf %83 : vector<8x8x48xf32> to vector<8x8x48xbf16>
    %c0_39 = arith.constant 0 : index
    %c0_40 = arith.constant 0 : index
    %c0_41 = arith.constant 0 : index
    %c0_42 = arith.constant 0 : index
    %85 = vector.load %arg5[%c0_39, %c0_40, %c0_41, %c0_42] : memref<1x8x8x48xbf16, #tpu.memory_space<vmem>>, vector<1x8x8x48xbf16>
    %86 = vector.shape_cast %85 : vector<1x8x8x48xbf16> to vector<8x8x48xbf16>
    %87 = vector.shape_cast %84 : vector<8x8x48xbf16> to vector<1x8x8x48xbf16>
    tpu.vector_store %arg5[%c0_39, %c0_40, %c0_41, %c0_42], %87 {strides = array<i32>} : memref<1x8x8x48xbf16, #tpu.memory_space<vmem>>, vector<1x8x8x48xbf16>,
    return
  }
  func.func @transform_0(%arg0: i32, %arg1: i32) -> (i32, i32, i32, i32) {
    %c0_i32 = arith.constant 0 : i32
    %c0_i32_0 = arith.constant 0 : i32
    %c0_i32_1 = arith.constant 0 : i32
    return %arg0, %c0_i32, %c0_i32_0, %arg1 : i32, i32, i32, i32
  }
  func.func @transform_1(%arg0: i32, %arg1: i32) -> (i32, i32, i32) {
    %c0_i32 = arith.constant 0 : i32
    %c0_i32_0 = arith.constant 0 : i32
    %c0_i32_1 = arith.constant 0 : i32
    return %c0_i32, %c0_i32_0, %arg1 : i32, i32, i32
  }
  func.func @transform_2(%arg0: i32, %arg1: i32) -> (i32, i32, i32) {
    %c0_i32 = arith.constant 0 : i32
    %c0_i32_0 = arith.constant 0 : i32
    %c0_i32_1 = arith.constant 0 : i32
    return %c0_i32, %c0_i32_0, %arg1 : i32, i32, i32
  }
  func.func @transform_3(%arg0: i32, %arg1: i32) -> (i32, i32, i32, i32) {
    %c0_i32 = arith.constant 0 : i32
    %c0_i32_0 = arith.constant 0 : i32
    %c0_i32_1 = arith.constant 0 : i32
    return %arg0, %c0_i32, %c0_i32_0, %arg1 : i32, i32, i32, i32
  }
}

module attributes {stable_mosaic.version = 11 : i64} {
  func.func @kern(%arg0: i32, %arg1: i32, %arg2: memref<1x4x4x4xbf16, #tpu.memory_space<vmem>>, %arg3: memref<1x64x16xbf16, #tpu.memory_space<vmem>>, %arg4: memref<1x64x16xbf16, #tpu.memory_space<vmem>>) attributes {dimension_semantics = [#tpu.dimension_semantics<parallel>, #tpu.dimension_semantics<parallel>], iteration_bounds = array<i64: 2, 1>, scalar_prefetch = 0 : i64, scratch_operands = 0 : i64, tpu.core_type = #tpu.core_type<tc>, window_params = [{transform_indices = @transform_0, window_bounds = array<i64: 1, 4, 4, 4>}, {transform_indices = @transform_1, window_bounds = array<i64: 1, 64, 16>}, {transform_indices = @transform_2, window_bounds = array<i64: 1, 64, 16>}]} {
    %c0 = arith.constant 0 : index
    %c0_0 = arith.constant 0 : index
    %c0_1 = arith.constant 0 : index
    %0 = vector.load %arg3[%c0, %c0_0, %c0_1] : memref<1x64x16xbf16, #tpu.memory_space<vmem>>, vector<1x64x16xbf16>
    %1 = vector.shape_cast %0 : vector<1x64x16xbf16> to vector<64x16xbf16>
    %2 = vector.extract_strided_slice %1 {offsets = [0, 0], sizes = [64, 4], strides = [1, 1]} : vector<64x16xbf16> to vector<64x4xbf16>
    %c0_2 = arith.constant 0 : index
    %c0_3 = arith.constant 0 : index
    %c0_4 = arith.constant 0 : index
    %c0_5 = arith.constant 0 : index
    %3 = vector.load %arg2[%c0_2, %c0_3, %c0_4, %c0_5] : memref<1x4x4x4xbf16, #tpu.memory_space<vmem>>, vector<1x1x4x4xbf16>
    %4 = vector.shape_cast %3 : vector<1x1x4x4xbf16> to vector<4x4xbf16>
    %cst = arith.constant dense<0.000000e+00> : vector<64x4xf32>
    %5 = tpu.matmul %2, %4, %cst {dimension_numbers = #tpu.dot_dimension_numbers<[1], [0], [0], [1], [0, 0, 1, 1], [], []>} : vector<64x4xbf16>, vector<4x4xbf16>, vector<64x4xf32> -> vector<64x4xf32>
    %6 = vector.extract_strided_slice %1 {offsets = [0, 4], sizes = [64, 4], strides = [1, 1]} : vector<64x16xbf16> to vector<64x4xbf16>
    %c0_6 = arith.constant 0 : index
    %c1 = arith.constant 1 : index
    %c0_7 = arith.constant 0 : index
    %c0_8 = arith.constant 0 : index
    %7 = vector.load %arg2[%c0_6, %c1, %c0_7, %c0_8] : memref<1x4x4x4xbf16, #tpu.memory_space<vmem>>, vector<1x1x4x4xbf16>
    %8 = vector.shape_cast %7 : vector<1x1x4x4xbf16> to vector<4x4xbf16>
    %cst_9 = arith.constant dense<0.000000e+00> : vector<64x4xf32>
    %9 = tpu.matmul %6, %8, %cst_9 {dimension_numbers = #tpu.dot_dimension_numbers<[1], [0], [0], [1], [0, 0, 1, 1], [], []>} : vector<64x4xbf16>, vector<4x4xbf16>, vector<64x4xf32> -> vector<64x4xf32>
    %10 = vector.extract_strided_slice %1 {offsets = [0, 8], sizes = [64, 4], strides = [1, 1]} : vector<64x16xbf16> to vector<64x4xbf16>
    %c0_10 = arith.constant 0 : index
    %c2 = arith.constant 2 : index
    %c0_11 = arith.constant 0 : index
    %c0_12 = arith.constant 0 : index
    %11 = vector.load %arg2[%c0_10, %c2, %c0_11, %c0_12] : memref<1x4x4x4xbf16, #tpu.memory_space<vmem>>, vector<1x1x4x4xbf16>
    %12 = vector.shape_cast %11 : vector<1x1x4x4xbf16> to vector<4x4xbf16>
    %cst_13 = arith.constant dense<0.000000e+00> : vector<64x4xf32>
    %13 = tpu.matmul %10, %12, %cst_13 {dimension_numbers = #tpu.dot_dimension_numbers<[1], [0], [0], [1], [0, 0, 1, 1], [], []>} : vector<64x4xbf16>, vector<4x4xbf16>, vector<64x4xf32> -> vector<64x4xf32>
    %14 = vector.extract_strided_slice %1 {offsets = [0, 12], sizes = [64, 4], strides = [1, 1]} : vector<64x16xbf16> to vector<64x4xbf16>
    %c0_14 = arith.constant 0 : index
    %c3 = arith.constant 3 : index
    %c0_15 = arith.constant 0 : index
    %c0_16 = arith.constant 0 : index
    %15 = vector.load %arg2[%c0_14, %c3, %c0_15, %c0_16] : memref<1x4x4x4xbf16, #tpu.memory_space<vmem>>, vector<1x1x4x4xbf16>
    %16 = vector.shape_cast %15 : vector<1x1x4x4xbf16> to vector<4x4xbf16>
    %cst_17 = arith.constant dense<0.000000e+00> : vector<64x4xf32>
    %17 = tpu.matmul %14, %16, %cst_17 {dimension_numbers = #tpu.dot_dimension_numbers<[1], [0], [0], [1], [0, 0, 1, 1], [], []>} : vector<64x4xbf16>, vector<4x4xbf16>, vector<64x4xf32> -> vector<64x4xf32>
    %18 = tpu.concatenate %5, %9, %13, %17 in 1 : vector<64x4xf32>, vector<64x4xf32>, vector<64x4xf32>, vector<64x4xf32> -> vector<64x16xf32>
    %19 = arith.truncf %18 : vector<64x16xf32> to vector<64x16xbf16>
    %c0_18 = arith.constant 0 : index
    %c0_19 = arith.constant 0 : index
    %c0_20 = arith.constant 0 : index
    %20 = vector.load %arg4[%c0_18, %c0_19, %c0_20] : memref<1x64x16xbf16, #tpu.memory_space<vmem>>, vector<1x64x16xbf16>
    %21 = vector.shape_cast %20 : vector<1x64x16xbf16> to vector<64x16xbf16>
    %22 = vector.shape_cast %19 : vector<64x16xbf16> to vector<1x64x16xbf16>
    tpu.vector_store %arg4[%c0_18, %c0_19, %c0_20], %22 {strides = array<i32>} : memref<1x64x16xbf16, #tpu.memory_space<vmem>>, vector<1x64x16xbf16>,
    return
  }
  func.func @transform_0(%arg0: i32, %arg1: i32) -> (i32, i32, i32, i32) {
    %c0_i32 = arith.constant 0 : i32
    %c0_i32_0 = arith.constant 0 : i32
    %c0_i32_1 = arith.constant 0 : i32
    %c0_i32_2 = arith.constant 0 : i32
    return %arg0, %c0_i32, %c0_i32_0, %c0_i32_1 : i32, i32, i32, i32
  }
  func.func @transform_1(%arg0: i32, %arg1: i32) -> (i32, i32, i32) {
    %c0_i32 = arith.constant 0 : i32
    %c0_i32_0 = arith.constant 0 : i32
    return %arg0, %arg1, %c0_i32 : i32, i32, i32
  }
  func.func @transform_2(%arg0: i32, %arg1: i32) -> (i32, i32, i32) {
    %c0_i32 = arith.constant 0 : i32
    %c0_i32_0 = arith.constant 0 : i32
    return %arg0, %arg1, %c0_i32 : i32, i32, i32
  }
}

module attributes {stable_mosaic.version = 11 : i64} {
  func.func @kern(%arg0: i32, %arg1: i32, %arg2: memref<4xf32, #tpu.memory_space<smem>>, %arg3: memref<1x64x16xbf16, #tpu.memory_space<vmem>>, %arg4: memref<1x64x16xbf16, #tpu.memory_space<vmem>>, %arg5: memref<1x4x4x4xbf16, #tpu.memory_space<vmem>>, %arg6: memref<4x4x4xf32, #tpu.memory_space<vmem>>, %arg7: memref<1x16xf32, #tpu.memory_space<vmem>>, %arg8: memref<1x16xf32, #tpu.memory_space<vmem>>) attributes {dimension_semantics = [#tpu.dimension_semantics<parallel>, #tpu.dimension_semantics<arbitrary>], iteration_bounds = array<i64: 2, 1>, scalar_prefetch = 0 : i64, scratch_operands = 3 : i64, tpu.core_type = #tpu.core_type<tc>, window_params = [{transform_indices = @transform_0, window_bounds = array<i64: 4>}, {transform_indices = @transform_1, window_bounds = array<i64: 1, 64, 16>}, {transform_indices = @transform_2, window_bounds = array<i64: 1, 64, 16>}, {transform_indices = @transform_3, window_bounds = array<i64: 1, 4, 4, 4>}]} {
    %c0_i32 = arith.constant 0 : i32
    %0 = arith.cmpi eq, %arg1, %c0_i32 : i32
    %1 = arith.extui %0 : i1 to i32
    %c0_i32_0 = arith.constant 0 : i32
    %2 = arith.cmpi ne, %1, %c0_i32_0 : i32
    scf.if %2 {
      %cst_42 = arith.constant 0.000000e+00 : f32
      %61 = vector.broadcast %cst_42 : f32 to vector<4x4x4xf32>
      %c0_43 = arith.constant 0 : index
      %c0_44 = arith.constant 0 : index
      %c0_45 = arith.constant 0 : index
      %62 = vector.load %arg6[%c0_43, %c0_44, %c0_45] : memref<4x4x4xf32, #tpu.memory_space<vmem>>, vector<4x4x4xf32>
      tpu.vector_store %arg6[%c0_43, %c0_44, %c0_45], %61 {strides = array<i32>} : memref<4x4x4xf32, #tpu.memory_space<vmem>>, vector<4x4x4xf32>,
      %cst_46 = arith.constant 0.000000e+00 : f32
      %63 = vector.broadcast %cst_46 : f32 to vector<1x16xf32>
      %c0_47 = arith.constant 0 : index
      %c0_48 = arith.constant 0 : index
      %64 = vector.load %arg7[%c0_47, %c0_48] : memref<1x16xf32, #tpu.memory_space<vmem>>, vector<1x16xf32>
      tpu.vector_store %arg7[%c0_47, %c0_48], %63 {strides = array<i32>} : memref<1x16xf32, #tpu.memory_space<vmem>>, vector<1x16xf32>,
      %cst_49 = arith.constant 0.000000e+00 : f32
      %65 = vector.broadcast %cst_49 : f32 to vector<1x16xf32>
      %c0_50 = arith.constant 0 : index
      %c0_51 = arith.constant 0 : index
      %66 = vector.load %arg8[%c0_50, %c0_51] : memref<1x16xf32, #tpu.memory_space<vmem>>, vector<1x16xf32>
      tpu.vector_store %arg8[%c0_50, %c0_51], %65 {strides = array<i32>} : memref<1x16xf32, #tpu.memory_space<vmem>>, vector<1x16xf32>,
    } else {
    }
    %c0 = arith.constant 0 : index
    %c0_1 = arith.constant 0 : index
    %c0_2 = arith.constant 0 : index
    %3 = vector.load %arg3[%c0, %c0_1, %c0_2] : memref<1x64x16xbf16, #tpu.memory_space<vmem>>, vector<1x64x16xbf16>
    %4 = vector.shape_cast %3 : vector<1x64x16xbf16> to vector<64x16xbf16>
    %c0_3 = arith.constant 0 : index
    %c0_4 = arith.constant 0 : index
    %c0_5 = arith.constant 0 : index
    %5 = vector.load %arg4[%c0_3, %c0_4, %c0_5] : memref<1x64x16xbf16, #tpu.memory_space<vmem>>, vector<1x64x16xbf16>
    %6 = vector.shape_cast %5 : vector<1x64x16xbf16> to vector<64x16xbf16>
    %7 = arith.extf %4 : vector<64x16xbf16> to vector<64x16xf32>
    %8 = arith.extf %6 : vector<64x16xbf16> to vector<64x16xf32>
    %c0_6 = arith.constant 0 : index
    %c0_7 = arith.constant 0 : index
    %9 = vector.load %arg7[%c0_6, %c0_7] : memref<1x16xf32, #tpu.memory_space<vmem>>, vector<1x16xf32>
    %10 = arith.mulf %7, %7 : vector<64x16xf32>
    %cst = arith.constant dense<0.000000e+00> : vector<16xf32>
    %11 = vector.multi_reduction <add>, %10, %cst [0] : vector<64x16xf32> to vector<16xf32>
    %12 = vector.shape_cast %11 : vector<16xf32> to vector<1x16xf32>
    %13 = arith.addf %9, %12 : vector<1x16xf32>
    %c0_8 = arith.constant 0 : index
    %c0_9 = arith.constant 0 : index
    %14 = vector.load %arg7[%c0_8, %c0_9] : memref<1x16xf32, #tpu.memory_space<vmem>>, vector<1x16xf32>
    tpu.vector_store %arg7[%c0_8, %c0_9], %13 {strides = array<i32>} : memref<1x16xf32, #tpu.memory_space<vmem>>, vector<1x16xf32>,
    %c0_10 = arith.constant 0 : index
    %c0_11 = arith.constant 0 : index
    %15 = vector.load %arg8[%c0_10, %c0_11] : memref<1x16xf32, #tpu.memory_space<vmem>>, vector<1x16xf32>
    %16 = arith.mulf %8, %8 : vector<64x16xf32>
    %cst_12 = arith.constant dense<0.000000e+00> : vector<16xf32>
    %17 = vector.multi_reduction <add>, %16, %cst_12 [0] : vector<64x16xf32> to vector<16xf32>
    %18 = vector.shape_cast %17 : vector<16xf32> to vector<1x16xf32>
    %19 = arith.addf %15, %18 : vector<1x16xf32>
    %c0_13 = arith.constant 0 : index
    %c0_14 = arith.constant 0 : index
    %20 = vector.load %arg8[%c0_13, %c0_14] : memref<1x16xf32, #tpu.memory_space<vmem>>, vector<1x16xf32>
    tpu.vector_store %arg8[%c0_13, %c0_14], %19 {strides = array<i32>} : memref<1x16xf32, #tpu.memory_space<vmem>>, vector<1x16xf32>,
    %21 = tpu.transpose %4, [1, 0] : vector<64x16xbf16> -> vector<16x64xbf16>
    %c0_15 = arith.constant 0 : index
    %c0_16 = arith.constant 0 : index
    %c0_17 = arith.constant 0 : index
    %22 = vector.load %arg6[%c0_15, %c0_16, %c0_17] : memref<4x4x4xf32, #tpu.memory_space<vmem>>, vector<1x4x4xf32>
    %23 = vector.shape_cast %22 : vector<1x4x4xf32> to vector<4x4xf32>
    %24 = vector.extract_strided_slice %21 {offsets = [0, 0], sizes = [4, 64], strides = [1, 1]} : vector<16x64xbf16> to vector<4x64xbf16>
    %25 = vector.extract_strided_slice %6 {offsets = [0, 0], sizes = [64, 4], strides = [1, 1]} : vector<64x16xbf16> to vector<64x4xbf16>
    %cst_18 = arith.constant dense<0.000000e+00> : vector<4x4xf32>
    %26 = tpu.matmul %24, %25, %cst_18 {dimension_numbers = #tpu.dot_dimension_numbers<[1], [0], [0], [1], [0, 0, 1, 1], [], []>} : vector<4x64xbf16>, vector<64x4xbf16>, vector<4x4xf32> -> vector<4x4xf32>
    %27 = arith.addf %23, %26 : vector<4x4xf32>
    %c0_19 = arith.constant 0 : index
    %c0_20 = arith.constant 0 : index
    %c0_21 = arith.constant 0 : index
    %28 = vector.load %arg6[%c0_19, %c0_20, %c0_21] : memref<4x4x4xf32, #tpu.memory_space<vmem>>, vector<1x4x4xf32>
    %29 = vector.shape_cast %28 : vector<1x4x4xf32> to vector<4x4xf32>
    %30 = vector.shape_cast %27 : vector<4x4xf32> to vector<1x4x4xf32>
    tpu.vector_store %arg6[%c0_19, %c0_20, %c0_21], %30 {strides = array<i32>} : memref<4x4x4xf32, #tpu.memory_space<vmem>>, vector<1x4x4xf32>,
    %c1 = arith.constant 1 : index
    %c0_22 = arith.constant 0 : index
    %c0_23 = arith.constant 0 : index
    %31 = vector.load %arg6[%c1, %c0_22, %c0_23] : memref<4x4x4xf32, #tpu.memory_space<vmem>>, vector<1x4x4xf32>
    %32 = vector.shape_cast %31 : vector<1x4x4xf32> to vector<4x4xf32>
    %33 = vector.extract_strided_slice %21 {offsets = [4, 0], sizes = [4, 64], strides = [1, 1]} : vector<16x64xbf16> to vector<4x64xbf16>
    %34 = vector.extract_strided_slice %6 {offsets = [0, 4], sizes = [64, 4], strides = [1, 1]} : vector<64x16xbf16> to vector<64x4xbf16>
    %cst_24 = arith.constant dense<0.000000e+00> : vector<4x4xf32>
    %35 = tpu.matmul %33, %34, %cst_24 {dimension_numbers = #tpu.dot_dimension_numbers<[1], [0], [0], [1], [0, 0, 1, 1], [], []>} : vector<4x64xbf16>, vector<64x4xbf16>, vector<4x4xf32> -> vector<4x4xf32>
    %36 = arith.addf %32, %35 : vector<4x4xf32>
    %c1_25 = arith.constant 1 : index
    %c0_26 = arith.constant 0 : index
    %c0_27 = arith.constant 0 : index
    %37 = vector.load %arg6[%c1_25, %c0_26, %c0_27] : memref<4x4x4xf32, #tpu.memory_space<vmem>>, vector<1x4x4xf32>
    %38 = vector.shape_cast %37 : vector<1x4x4xf32> to vector<4x4xf32>
    %39 = vector.shape_cast %36 : vector<4x4xf32> to vector<1x4x4xf32>
    tpu.vector_store %arg6[%c1_25, %c0_26, %c0_27], %39 {strides = array<i32>} : memref<4x4x4xf32, #tpu.memory_space<vmem>>, vector<1x4x4xf32>,
    %c2 = arith.constant 2 : index
    %c0_28 = arith.constant 0 : index
    %c0_29 = arith.constant 0 : index
    %40 = vector.load %arg6[%c2, %c0_28, %c0_29] : memref<4x4x4xf32, #tpu.memory_space<vmem>>, vector<1x4x4xf32>
    %41 = vector.shape_cast %40 : vector<1x4x4xf32> to vector<4x4xf32>
    %42 = vector.extract_strided_slice %21 {offsets = [8, 0], sizes = [4, 64], strides = [1, 1]} : vector<16x64xbf16> to vector<4x64xbf16>
    %43 = vector.extract_strided_slice %6 {offsets = [0, 8], sizes = [64, 4], strides = [1, 1]} : vector<64x16xbf16> to vector<64x4xbf16>
    %cst_30 = arith.constant dense<0.000000e+00> : vector<4x4xf32>
    %44 = tpu.matmul %42, %43, %cst_30 {dimension_numbers = #tpu.dot_dimension_numbers<[1], [0], [0], [1], [0, 0, 1, 1], [], []>} : vector<4x64xbf16>, vector<64x4xbf16>, vector<4x4xf32> -> vector<4x4xf32>
    %45 = arith.addf %41, %44 : vector<4x4xf32>
    %c2_31 = arith.constant 2 : index
    %c0_32 = arith.constant 0 : index
    %c0_33 = arith.constant 0 : index
    %46 = vector.load %arg6[%c2_31, %c0_32, %c0_33] : memref<4x4x4xf32, #tpu.memory_space<vmem>>, vector<1x4x4xf32>
    %47 = vector.shape_cast %46 : vector<1x4x4xf32> to vector<4x4xf32>
    %48 = vector.shape_cast %45 : vector<4x4xf32> to vector<1x4x4xf32>
    tpu.vector_store %arg6[%c2_31, %c0_32, %c0_33], %48 {strides = array<i32>} : memref<4x4x4xf32, #tpu.memory_space<vmem>>, vector<1x4x4xf32>,
    %c3 = arith.constant 3 : index
    %c0_34 = arith.constant 0 : index
    %c0_35 = arith.constant 0 : index
    %49 = vector.load %arg6[%c3, %c0_34, %c0_35] : memref<4x4x4xf32, #tpu.memory_space<vmem>>, vector<1x4x4xf32>
    %50 = vector.shape_cast %49 : vector<1x4x4xf32> to vector<4x4xf32>
    %51 = vector.extract_strided_slice %21 {offsets = [12, 0], sizes = [4, 64], strides = [1, 1]} : vector<16x64xbf16> to vector<4x64xbf16>
    %52 = vector.extract_strided_slice %6 {offsets = [0, 12], sizes = [64, 4], strides = [1, 1]} : vector<64x16xbf16> to vector<64x4xbf16>
    %cst_36 = arith.constant dense<0.000000e+00> : vector<4x4xf32>
    %53 = tpu.matmul %51, %52, %cst_36 {dimension_numbers = #tpu.dot_dimension_numbers<[1], [0], [0], [1], [0, 0, 1, 1], [], []>} : vector<4x64xbf16>, vector<64x4xbf16>, vector<4x4xf32> -> vector<4x4xf32>
    %54 = arith.addf %50, %53 : vector<4x4xf32>
    %c3_37 = arith.constant 3 : index
    %c0_38 = arith.constant 0 : index
    %c0_39 = arith.constant 0 : index
    %55 = vector.load %arg6[%c3_37, %c0_38, %c0_39] : memref<4x4x4xf32, #tpu.memory_space<vmem>>, vector<1x4x4xf32>
    %56 = vector.shape_cast %55 : vector<1x4x4xf32> to vector<4x4xf32>
    %57 = vector.shape_cast %54 : vector<4x4xf32> to vector<1x4x4xf32>
    tpu.vector_store %arg6[%c3_37, %c0_38, %c0_39], %57 {strides = array<i32>} : memref<4x4x4xf32, #tpu.memory_space<vmem>>, vector<1x4x4xf32>,
    %c0_i32_40 = arith.constant 0 : i32
    %58 = arith.cmpi eq, %arg1, %c0_i32_40 : i32
    %59 = arith.extui %58 : i1 to i32
    %c0_i32_41 = arith.constant 0 : i32
    %60 = arith.cmpi ne, %59, %c0_i32_41 : i32
    scf.if %60 {
      %c0_42 = arith.constant 0 : index
      %c0_43 = arith.constant 0 : index
      %61 = vector.load %arg7[%c0_42, %c0_43] : memref<1x16xf32, #tpu.memory_space<vmem>>, vector<1x4xf32>
      %62 = math.sqrt %61 : vector<1x4xf32>
      %cst_44 = arith.constant 9.99999996E-13 : f32
      %63 = vector.broadcast %cst_44 : f32 to vector<1x4xf32>
      %64 = arith.maximumf %62, %63 : vector<1x4xf32>
      %c0_45 = arith.constant 0 : index
      %c0_46 = arith.constant 0 : index
      %65 = vector.load %arg8[%c0_45, %c0_46] : memref<1x16xf32, #tpu.memory_space<vmem>>, vector<1x4xf32>
      %66 = math.sqrt %65 : vector<1x4xf32>
      %cst_47 = arith.constant 9.99999996E-13 : f32
      %67 = vector.broadcast %cst_47 : f32 to vector<1x4xf32>
      %68 = arith.maximumf %66, %67 : vector<1x4xf32>
      %c0_48 = arith.constant 0 : index
      %c0_49 = arith.constant 0 : index
      %c0_50 = arith.constant 0 : index
      %69 = vector.load %arg6[%c0_48, %c0_49, %c0_50] : memref<4x4x4xf32, #tpu.memory_space<vmem>>, vector<1x4x4xf32>
      %70 = vector.shape_cast %69 : vector<1x4x4xf32> to vector<4x4xf32>
      %71 = tpu.transpose %64, [1, 0] : vector<1x4xf32> -> vector<4x1xf32>
      %72 = vector.broadcast %71 : vector<4x1xf32> to vector<4x4xf32>
      %73 = vector.broadcast %68 : vector<1x4xf32> to vector<4x4xf32>
      %74 = arith.mulf %72, %73 : vector<4x4xf32>
      %75 = arith.divf %70, %74 : vector<4x4xf32>
      %c0_51 = arith.constant 0 : index
      %76 = memref.load %arg2[%c0_51] : memref<4xf32, #tpu.memory_space<smem>>
      %77 = vector.broadcast %76 : f32 to vector<4x4xf32>
      %78 = arith.mulf %75, %77 : vector<4x4xf32>
      %cst_52 = arith.constant dense<0xFF800000> : vector<4xf32>
      %79 = vector.multi_reduction <maximumf>, %78, %cst_52 [1] : vector<4x4xf32> to vector<4xf32>
      %80 = vector.shape_cast %79 : vector<4xf32> to vector<4x1xf32>
      %81 = vector.broadcast %80 : vector<4x1xf32> to vector<4x4xf32>
      %82 = arith.subf %78, %81 : vector<4x4xf32>
      %83 = math.exp %82 : vector<4x4xf32>
      %cst_53 = arith.constant dense<0.000000e+00> : vector<4xf32>
      %84 = vector.multi_reduction <add>, %83, %cst_53 [1] : vector<4x4xf32> to vector<4xf32>
      %85 = vector.shape_cast %84 : vector<4xf32> to vector<4x1xf32>
      %86 = vector.broadcast %85 : vector<4x1xf32> to vector<4x4xf32>
      %87 = arith.divf %83, %86 : vector<4x4xf32>
      %88 = tpu.transpose %87, [1, 0] : vector<4x4xf32> -> vector<4x4xf32>
      %89 = arith.truncf %88 : vector<4x4xf32> to vector<4x4xbf16>
      %c0_54 = arith.constant 0 : index
      %c0_55 = arith.constant 0 : index
      %c0_56 = arith.constant 0 : index
      %c0_57 = arith.constant 0 : index
      %90 = vector.load %arg5[%c0_54, %c0_55, %c0_56, %c0_57] : memref<1x4x4x4xbf16, #tpu.memory_space<vmem>>, vector<1x1x4x4xbf16>
      %91 = vector.shape_cast %90 : vector<1x1x4x4xbf16> to vector<4x4xbf16>
      %92 = vector.shape_cast %89 : vector<4x4xbf16> to vector<1x1x4x4xbf16>
      tpu.vector_store %arg5[%c0_54, %c0_55, %c0_56, %c0_57], %92 {strides = array<i32>} : memref<1x4x4x4xbf16, #tpu.memory_space<vmem>>, vector<1x1x4x4xbf16>,
      %c0_58 = arith.constant 0 : index
      %c4 = arith.constant 4 : index
      %93 = vector.load %arg7[%c0_58, %c4] : memref<1x16xf32, #tpu.memory_space<vmem>>, vector<1x4xf32>
      %94 = math.sqrt %93 : vector<1x4xf32>
      %cst_59 = arith.constant 9.99999996E-13 : f32
      %95 = vector.broadcast %cst_59 : f32 to vector<1x4xf32>
      %96 = arith.maximumf %94, %95 : vector<1x4xf32>
      %c0_60 = arith.constant 0 : index
      %c4_61 = arith.constant 4 : index
      %97 = vector.load %arg8[%c0_60, %c4_61] : memref<1x16xf32, #tpu.memory_space<vmem>>, vector<1x4xf32>
      %98 = math.sqrt %97 : vector<1x4xf32>
      %cst_62 = arith.constant 9.99999996E-13 : f32
      %99 = vector.broadcast %cst_62 : f32 to vector<1x4xf32>
      %100 = arith.maximumf %98, %99 : vector<1x4xf32>
      %c1_63 = arith.constant 1 : index
      %c0_64 = arith.constant 0 : index
      %c0_65 = arith.constant 0 : index
      %101 = vector.load %arg6[%c1_63, %c0_64, %c0_65] : memref<4x4x4xf32, #tpu.memory_space<vmem>>, vector<1x4x4xf32>
      %102 = vector.shape_cast %101 : vector<1x4x4xf32> to vector<4x4xf32>
      %103 = tpu.transpose %96, [1, 0] : vector<1x4xf32> -> vector<4x1xf32>
      %104 = vector.broadcast %103 : vector<4x1xf32> to vector<4x4xf32>
      %105 = vector.broadcast %100 : vector<1x4xf32> to vector<4x4xf32>
      %106 = arith.mulf %104, %105 : vector<4x4xf32>
      %107 = arith.divf %102, %106 : vector<4x4xf32>
      %c1_66 = arith.constant 1 : index
      %108 = memref.load %arg2[%c1_66] : memref<4xf32, #tpu.memory_space<smem>>
      %109 = vector.broadcast %108 : f32 to vector<4x4xf32>
      %110 = arith.mulf %107, %109 : vector<4x4xf32>
      %cst_67 = arith.constant dense<0xFF800000> : vector<4xf32>
      %111 = vector.multi_reduction <maximumf>, %110, %cst_67 [1] : vector<4x4xf32> to vector<4xf32>
      %112 = vector.shape_cast %111 : vector<4xf32> to vector<4x1xf32>
      %113 = vector.broadcast %112 : vector<4x1xf32> to vector<4x4xf32>
      %114 = arith.subf %110, %113 : vector<4x4xf32>
      %115 = math.exp %114 : vector<4x4xf32>
      %cst_68 = arith.constant dense<0.000000e+00> : vector<4xf32>
      %116 = vector.multi_reduction <add>, %115, %cst_68 [1] : vector<4x4xf32> to vector<4xf32>
      %117 = vector.shape_cast %116 : vector<4xf32> to vector<4x1xf32>
      %118 = vector.broadcast %117 : vector<4x1xf32> to vector<4x4xf32>
      %119 = arith.divf %115, %118 : vector<4x4xf32>
      %120 = tpu.transpose %119, [1, 0] : vector<4x4xf32> -> vector<4x4xf32>
      %121 = arith.truncf %120 : vector<4x4xf32> to vector<4x4xbf16>
      %c0_69 = arith.constant 0 : index
      %c1_70 = arith.constant 1 : index
      %c0_71 = arith.constant 0 : index
      %c0_72 = arith.constant 0 : index
      %122 = vector.load %arg5[%c0_69, %c1_70, %c0_71, %c0_72] : memref<1x4x4x4xbf16, #tpu.memory_space<vmem>>, vector<1x1x4x4xbf16>
      %123 = vector.shape_cast %122 : vector<1x1x4x4xbf16> to vector<4x4xbf16>
      %124 = vector.shape_cast %121 : vector<4x4xbf16> to vector<1x1x4x4xbf16>
      tpu.vector_store %arg5[%c0_69, %c1_70, %c0_71, %c0_72], %124 {strides = array<i32>} : memref<1x4x4x4xbf16, #tpu.memory_space<vmem>>, vector<1x1x4x4xbf16>,
      %c0_73 = arith.constant 0 : index
      %c8 = arith.constant 8 : index
      %125 = vector.load %arg7[%c0_73, %c8] : memref<1x16xf32, #tpu.memory_space<vmem>>, vector<1x4xf32>
      %126 = math.sqrt %125 : vector<1x4xf32>
      %cst_74 = arith.constant 9.99999996E-13 : f32
      %127 = vector.broadcast %cst_74 : f32 to vector<1x4xf32>
      %128 = arith.maximumf %126, %127 : vector<1x4xf32>
      %c0_75 = arith.constant 0 : index
      %c8_76 = arith.constant 8 : index
      %129 = vector.load %arg8[%c0_75, %c8_76] : memref<1x16xf32, #tpu.memory_space<vmem>>, vector<1x4xf32>
      %130 = math.sqrt %129 : vector<1x4xf32>
      %cst_77 = arith.constant 9.99999996E-13 : f32
      %131 = vector.broadcast %cst_77 : f32 to vector<1x4xf32>
      %132 = arith.maximumf %130, %131 : vector<1x4xf32>
      %c2_78 = arith.constant 2 : index
      %c0_79 = arith.constant 0 : index
      %c0_80 = arith.constant 0 : index
      %133 = vector.load %arg6[%c2_78, %c0_79, %c0_80] : memref<4x4x4xf32, #tpu.memory_space<vmem>>, vector<1x4x4xf32>
      %134 = vector.shape_cast %133 : vector<1x4x4xf32> to vector<4x4xf32>
      %135 = tpu.transpose %128, [1, 0] : vector<1x4xf32> -> vector<4x1xf32>
      %136 = vector.broadcast %135 : vector<4x1xf32> to vector<4x4xf32>
      %137 = vector.broadcast %132 : vector<1x4xf32> to vector<4x4xf32>
      %138 = arith.mulf %136, %137 : vector<4x4xf32>
      %139 = arith.divf %134, %138 : vector<4x4xf32>
      %c2_81 = arith.constant 2 : index
      %140 = memref.load %arg2[%c2_81] : memref<4xf32, #tpu.memory_space<smem>>
      %141 = vector.broadcast %140 : f32 to vector<4x4xf32>
      %142 = arith.mulf %139, %141 : vector<4x4xf32>
      %cst_82 = arith.constant dense<0xFF800000> : vector<4xf32>
      %143 = vector.multi_reduction <maximumf>, %142, %cst_82 [1] : vector<4x4xf32> to vector<4xf32>
      %144 = vector.shape_cast %143 : vector<4xf32> to vector<4x1xf32>
      %145 = vector.broadcast %144 : vector<4x1xf32> to vector<4x4xf32>
      %146 = arith.subf %142, %145 : vector<4x4xf32>
      %147 = math.exp %146 : vector<4x4xf32>
      %cst_83 = arith.constant dense<0.000000e+00> : vector<4xf32>
      %148 = vector.multi_reduction <add>, %147, %cst_83 [1] : vector<4x4xf32> to vector<4xf32>
      %149 = vector.shape_cast %148 : vector<4xf32> to vector<4x1xf32>
      %150 = vector.broadcast %149 : vector<4x1xf32> to vector<4x4xf32>
      %151 = arith.divf %147, %150 : vector<4x4xf32>
      %152 = tpu.transpose %151, [1, 0] : vector<4x4xf32> -> vector<4x4xf32>
      %153 = arith.truncf %152 : vector<4x4xf32> to vector<4x4xbf16>
      %c0_84 = arith.constant 0 : index
      %c2_85 = arith.constant 2 : index
      %c0_86 = arith.constant 0 : index
      %c0_87 = arith.constant 0 : index
      %154 = vector.load %arg5[%c0_84, %c2_85, %c0_86, %c0_87] : memref<1x4x4x4xbf16, #tpu.memory_space<vmem>>, vector<1x1x4x4xbf16>
      %155 = vector.shape_cast %154 : vector<1x1x4x4xbf16> to vector<4x4xbf16>
      %156 = vector.shape_cast %153 : vector<4x4xbf16> to vector<1x1x4x4xbf16>
      tpu.vector_store %arg5[%c0_84, %c2_85, %c0_86, %c0_87], %156 {strides = array<i32>} : memref<1x4x4x4xbf16, #tpu.memory_space<vmem>>, vector<1x1x4x4xbf16>,
      %c0_88 = arith.constant 0 : index
      %c12 = arith.constant 12 : index
      %157 = vector.load %arg7[%c0_88, %c12] : memref<1x16xf32, #tpu.memory_space<vmem>>, vector<1x4xf32>
      %158 = math.sqrt %157 : vector<1x4xf32>
      %cst_89 = arith.constant 9.99999996E-13 : f32
      %159 = vector.broadcast %cst_89 : f32 to vector<1x4xf32>
      %160 = arith.maximumf %158, %159 : vector<1x4xf32>
      %c0_90 = arith.constant 0 : index
      %c12_91 = arith.constant 12 : index
      %161 = vector.load %arg8[%c0_90, %c12_91] : memref<1x16xf32, #tpu.memory_space<vmem>>, vector<1x4xf32>
      %162 = math.sqrt %161 : vector<1x4xf32>
      %cst_92 = arith.constant 9.99999996E-13 : f32
      %163 = vector.broadcast %cst_92 : f32 to vector<1x4xf32>
      %164 = arith.maximumf %162, %163 : vector<1x4xf32>
      %c3_93 = arith.constant 3 : index
      %c0_94 = arith.constant 0 : index
      %c0_95 = arith.constant 0 : index
      %165 = vector.load %arg6[%c3_93, %c0_94, %c0_95] : memref<4x4x4xf32, #tpu.memory_space<vmem>>, vector<1x4x4xf32>
      %166 = vector.shape_cast %165 : vector<1x4x4xf32> to vector<4x4xf32>
      %167 = tpu.transpose %160, [1, 0] : vector<1x4xf32> -> vector<4x1xf32>
      %168 = vector.broadcast %167 : vector<4x1xf32> to vector<4x4xf32>
      %169 = vector.broadcast %164 : vector<1x4xf32> to vector<4x4xf32>
      %170 = arith.mulf %168, %169 : vector<4x4xf32>
      %171 = arith.divf %166, %170 : vector<4x4xf32>
      %c3_96 = arith.constant 3 : index
      %172 = memref.load %arg2[%c3_96] : memref<4xf32, #tpu.memory_space<smem>>
      %173 = vector.broadcast %172 : f32 to vector<4x4xf32>
      %174 = arith.mulf %171, %173 : vector<4x4xf32>
      %cst_97 = arith.constant dense<0xFF800000> : vector<4xf32>
      %175 = vector.multi_reduction <maximumf>, %174, %cst_97 [1] : vector<4x4xf32> to vector<4xf32>
      %176 = vector.shape_cast %175 : vector<4xf32> to vector<4x1xf32>
      %177 = vector.broadcast %176 : vector<4x1xf32> to vector<4x4xf32>
      %178 = arith.subf %174, %177 : vector<4x4xf32>
      %179 = math.exp %178 : vector<4x4xf32>
      %cst_98 = arith.constant dense<0.000000e+00> : vector<4xf32>
      %180 = vector.multi_reduction <add>, %179, %cst_98 [1] : vector<4x4xf32> to vector<4xf32>
      %181 = vector.shape_cast %180 : vector<4xf32> to vector<4x1xf32>
      %182 = vector.broadcast %181 : vector<4x1xf32> to vector<4x4xf32>
      %183 = arith.divf %179, %182 : vector<4x4xf32>
      %184 = tpu.transpose %183, [1, 0] : vector<4x4xf32> -> vector<4x4xf32>
      %185 = arith.truncf %184 : vector<4x4xf32> to vector<4x4xbf16>
      %c0_99 = arith.constant 0 : index
      %c3_100 = arith.constant 3 : index
      %c0_101 = arith.constant 0 : index
      %c0_102 = arith.constant 0 : index
      %186 = vector.load %arg5[%c0_99, %c3_100, %c0_101, %c0_102] : memref<1x4x4x4xbf16, #tpu.memory_space<vmem>>, vector<1x1x4x4xbf16>
      %187 = vector.shape_cast %186 : vector<1x1x4x4xbf16> to vector<4x4xbf16>
      %188 = vector.shape_cast %185 : vector<4x4xbf16> to vector<1x1x4x4xbf16>
      tpu.vector_store %arg5[%c0_99, %c3_100, %c0_101, %c0_102], %188 {strides = array<i32>} : memref<1x4x4x4xbf16, #tpu.memory_space<vmem>>, vector<1x1x4x4xbf16>,
    } else {
    }
    return
  }
  func.func @transform_0(%arg0: i32, %arg1: i32) -> i32 {
    %c0_i32 = arith.constant 0 : i32
    %c0_i32_0 = arith.constant 0 : i32
    return %c0_i32 : i32
  }
  func.func @transform_1(%arg0: i32, %arg1: i32) -> (i32, i32, i32) {
    %c0_i32 = arith.constant 0 : i32
    %c0_i32_0 = arith.constant 0 : i32
    return %arg0, %arg1, %c0_i32 : i32, i32, i32
  }
  func.func @transform_2(%arg0: i32, %arg1: i32) -> (i32, i32, i32) {
    %c0_i32 = arith.constant 0 : i32
    %c0_i32_0 = arith.constant 0 : i32
    return %arg0, %arg1, %c0_i32 : i32, i32, i32
  }
  func.func @transform_3(%arg0: i32, %arg1: i32) -> (i32, i32, i32, i32) {
    %c0_i32 = arith.constant 0 : i32
    %c0_i32_0 = arith.constant 0 : i32
    %c0_i32_1 = arith.constant 0 : i32
    %c0_i32_2 = arith.constant 0 : i32
    return %arg0, %c0_i32, %c0_i32_0, %c0_i32_1 : i32, i32, i32, i32
  }
}

module attributes {stable_mosaic.version = 11 : i64} {
  func.func @_mm_ln_kernel(%arg0: i32, %arg1: memref<128x16xf32, #tpu.memory_space<vmem>>, %arg2: memref<1x16xf32, #tpu.memory_space<vmem>>, %arg3: memref<1x16xf32, #tpu.memory_space<vmem>>, %arg4: memref<16x84xbf16, #tpu.memory_space<vmem>>, %arg5: memref<1x84xf32, #tpu.memory_space<vmem>>, %arg6: memref<128x84xbf16, #tpu.memory_space<vmem>>) attributes {dimension_semantics = [#tpu.dimension_semantics<parallel>], iteration_bounds = array<i64: 1>, scalar_prefetch = 0 : i64, scratch_operands = 0 : i64, tpu.core_type = #tpu.core_type<tc>, window_params = [{transform_indices = @transform_0, window_bounds = array<i64: 128, 16>}, {pipeline_mode = #tpu.pipeline_mode<synchronous>, transform_indices = @transform_1, window_bounds = array<i64: 1, 16>}, {pipeline_mode = #tpu.pipeline_mode<synchronous>, transform_indices = @transform_2, window_bounds = array<i64: 1, 16>}, {pipeline_mode = #tpu.pipeline_mode<synchronous>, transform_indices = @transform_3, window_bounds = array<i64: 16, 84>}, {pipeline_mode = #tpu.pipeline_mode<synchronous>, transform_indices = @transform_4, window_bounds = array<i64: 1, 84>}, {transform_indices = @transform_5, window_bounds = array<i64: 128, 84>}]} {
    %c0 = arith.constant 0 : index
    %c0_0 = arith.constant 0 : index
    %0 = vector.load %arg1[%c0, %c0_0] : memref<128x16xf32, #tpu.memory_space<vmem>>, vector<128x16xf32>
    %cst = arith.constant dense<0.000000e+00> : vector<128xf32>
    %1 = vector.multi_reduction <add>, %0, %cst [1] : vector<128x16xf32> to vector<128xf32>
    %2 = vector.shape_cast %1 : vector<128xf32> to vector<128x1xf32>
    %cst_1 = arith.constant 1.600000e+01 : f32
    %3 = vector.broadcast %cst_1 : f32 to vector<128x1xf32>
    %4 = arith.divf %2, %3 : vector<128x1xf32>
    %5 = vector.broadcast %4 : vector<128x1xf32> to vector<128x16xf32>
    %6 = arith.subf %0, %5 : vector<128x16xf32>
    %7 = arith.mulf %6, %6 : vector<128x16xf32>
    %cst_2 = arith.constant dense<0.000000e+00> : vector<128xf32>
    %8 = vector.multi_reduction <add>, %7, %cst_2 [1] : vector<128x16xf32> to vector<128xf32>
    %9 = vector.shape_cast %8 : vector<128xf32> to vector<128x1xf32>
    %cst_3 = arith.constant 1.600000e+01 : f32
    %10 = vector.broadcast %cst_3 : f32 to vector<128x1xf32>
    %11 = arith.divf %9, %10 : vector<128x1xf32>
    %12 = vector.broadcast %4 : vector<128x1xf32> to vector<128x16xf32>
    %13 = arith.subf %0, %12 : vector<128x16xf32>
    %cst_4 = arith.constant 9.99999974E-6 : f32
    %14 = vector.broadcast %cst_4 : f32 to vector<128x1xf32>
    %15 = arith.addf %11, %14 : vector<128x1xf32>
    %16 = math.rsqrt %15 : vector<128x1xf32>
    %17 = vector.broadcast %16 : vector<128x1xf32> to vector<128x16xf32>
    %18 = arith.mulf %13, %17 : vector<128x16xf32>
    %c0_5 = arith.constant 0 : index
    %c0_6 = arith.constant 0 : index
    %19 = vector.load %arg2[%c0_5, %c0_6] : memref<1x16xf32, #tpu.memory_space<vmem>>, vector<1x16xf32>
    %20 = vector.broadcast %19 : vector<1x16xf32> to vector<128x16xf32>
    %21 = arith.mulf %18, %20 : vector<128x16xf32>
    %c0_7 = arith.constant 0 : index
    %c0_8 = arith.constant 0 : index
    %22 = vector.load %arg3[%c0_7, %c0_8] : memref<1x16xf32, #tpu.memory_space<vmem>>, vector<1x16xf32>
    %23 = vector.broadcast %22 : vector<1x16xf32> to vector<128x16xf32>
    %24 = arith.addf %21, %23 : vector<128x16xf32>
    %25 = arith.truncf %24 : vector<128x16xf32> to vector<128x16xbf16>
    %c0_9 = arith.constant 0 : index
    %c0_10 = arith.constant 0 : index
    %26 = vector.load %arg4[%c0_9, %c0_10] : memref<16x84xbf16, #tpu.memory_space<vmem>>, vector<16x84xbf16>
    %cst_11 = arith.constant dense<0.000000e+00> : vector<128x84xf32>
    %27 = tpu.matmul %25, %26, %cst_11 {dimension_numbers = #tpu.dot_dimension_numbers<[1], [0], [0], [1], [0, 0, 1, 1], [], []>} : vector<128x16xbf16>, vector<16x84xbf16>, vector<128x84xf32> -> vector<128x84xf32>
    %c0_12 = arith.constant 0 : index
    %c0_13 = arith.constant 0 : index
    %28 = vector.load %arg5[%c0_12, %c0_13] : memref<1x84xf32, #tpu.memory_space<vmem>>, vector<1x84xf32>
    %29 = vector.broadcast %28 : vector<1x84xf32> to vector<128x84xf32>
    %30 = arith.addf %27, %29 : vector<128x84xf32>
    %31 = arith.truncf %30 : vector<128x84xf32> to vector<128x84xbf16>
    %c0_14 = arith.constant 0 : index
    %c0_15 = arith.constant 0 : index
    %32 = vector.load %arg6[%c0_14, %c0_15] : memref<128x84xbf16, #tpu.memory_space<vmem>>, vector<128x84xbf16>
    tpu.vector_store %arg6[%c0_14, %c0_15], %31 {strides = array<i32>} : memref<128x84xbf16, #tpu.memory_space<vmem>>, vector<128x84xbf16>,
    return
  }
  func.func @transform_0(%arg0: i32) -> (i32, i32) {
    %c0_i32 = arith.constant 0 : i32
    %c0_i32_0 = arith.constant 0 : i32
    return %arg0, %c0_i32 : i32, i32
  }
  func.func @transform_1(%arg0: i32) -> (i32, i32) {
    %c0_i32 = arith.constant 0 : i32
    %c0_i32_0 = arith.constant 0 : i32
    %c0_i32_1 = arith.constant 0 : i32
    return %c0_i32, %c0_i32_0 : i32, i32
  }
  func.func @transform_2(%arg0: i32) -> (i32, i32) {
    %c0_i32 = arith.constant 0 : i32
    %c0_i32_0 = arith.constant 0 : i32
    %c0_i32_1 = arith.constant 0 : i32
    return %c0_i32, %c0_i32_0 : i32, i32
  }
  func.func @transform_3(%arg0: i32) -> (i32, i32) {
    %c0_i32 = arith.constant 0 : i32
    %c0_i32_0 = arith.constant 0 : i32
    %c0_i32_1 = arith.constant 0 : i32
    return %c0_i32, %c0_i32_0 : i32, i32
  }
  func.func @transform_4(%arg0: i32) -> (i32, i32) {
    %c0_i32 = arith.constant 0 : i32
    %c0_i32_0 = arith.constant 0 : i32
    %c0_i32_1 = arith.constant 0 : i32
    return %c0_i32, %c0_i32_0 : i32, i32
  }
  func.func @transform_5(%arg0: i32) -> (i32, i32) {
    %c0_i32 = arith.constant 0 : i32
    %c0_i32_0 = arith.constant 0 : i32
    return %arg0, %c0_i32 : i32, i32
  }
}

module attributes {stable_mosaic.version = 11 : i64} {
  func.func @kern(%arg0: i32, %arg1: memref<128x84xbf16, #tpu.memory_space<vmem>>, %arg2: memref<42x16xbf16, #tpu.memory_space<vmem>>, %arg3: memref<1x16xf32, #tpu.memory_space<vmem>>, %arg4: memref<128x16xf32, #tpu.memory_space<vmem>>) attributes {dimension_semantics = [#tpu.dimension_semantics<parallel>], iteration_bounds = array<i64: 1>, scalar_prefetch = 0 : i64, scratch_operands = 0 : i64, tpu.core_type = #tpu.core_type<tc>, window_params = [{transform_indices = @transform_0, window_bounds = array<i64: 128, 84>}, {pipeline_mode = #tpu.pipeline_mode<synchronous>, transform_indices = @transform_1, window_bounds = array<i64: 42, 16>}, {pipeline_mode = #tpu.pipeline_mode<synchronous>, transform_indices = @transform_2, window_bounds = array<i64: 1, 16>}, {transform_indices = @transform_3, window_bounds = array<i64: 128, 16>}]} {
    %c0 = arith.constant 0 : index
    %c0_0 = arith.constant 0 : index
    %0 = vector.load %arg1[%c0, %c0_0] : memref<128x84xbf16, #tpu.memory_space<vmem>>, vector<128x84xbf16>
    %1 = arith.extf %0 : vector<128x84xbf16> to vector<128x84xf32>
    %2 = vector.extract_strided_slice %1 {offsets = [0, 0], sizes = [128, 42], strides = [1, 1]} : vector<128x84xf32> to vector<128x42xf32>
    %3 = vector.extract_strided_slice %1 {offsets = [0, 42], sizes = [128, 42], strides = [1, 1]} : vector<128x84xf32> to vector<128x42xf32>
    %cst = arith.constant 5.000000e-01 : f32
    %4 = vector.broadcast %cst : f32 to vector<128x42xf32>
    %5 = arith.mulf %4, %2 : vector<128x42xf32>
    %cst_1 = arith.constant 1.41421354 : f32
    %6 = vector.broadcast %cst_1 : f32 to vector<128x42xf32>
    %7 = arith.divf %2, %6 : vector<128x42xf32>
    %8 = math.erf %7 : vector<128x42xf32>
    %cst_2 = arith.constant 1.000000e+00 : f32
    %9 = vector.broadcast %cst_2 : f32 to vector<128x42xf32>
    %10 = arith.addf %9, %8 : vector<128x42xf32>
    %11 = arith.mulf %5, %10 : vector<128x42xf32>
    %12 = arith.mulf %11, %3 : vector<128x42xf32>
    %13 = arith.truncf %12 : vector<128x42xf32> to vector<128x42xbf16>
    %c0_3 = arith.constant 0 : index
    %c0_4 = arith.constant 0 : index
    %14 = vector.load %arg2[%c0_3, %c0_4] : memref<42x16xbf16, #tpu.memory_space<vmem>>, vector<42x16xbf16>
    %cst_5 = arith.constant dense<0.000000e+00> : vector<128x16xf32>
    %15 = tpu.matmul %13, %14, %cst_5 {dimension_numbers = #tpu.dot_dimension_numbers<[1], [0], [0], [1], [0, 0, 1, 1], [], []>} : vector<128x42xbf16>, vector<42x16xbf16>, vector<128x16xf32> -> vector<128x16xf32>
    %c0_6 = arith.constant 0 : index
    %c0_7 = arith.constant 0 : index
    %16 = vector.load %arg3[%c0_6, %c0_7] : memref<1x16xf32, #tpu.memory_space<vmem>>, vector<1x16xf32>
    %17 = vector.broadcast %16 : vector<1x16xf32> to vector<128x16xf32>
    %18 = arith.addf %15, %17 : vector<128x16xf32>
    %c0_8 = arith.constant 0 : index
    %c0_9 = arith.constant 0 : index
    %19 = vector.load %arg4[%c0_8, %c0_9] : memref<128x16xf32, #tpu.memory_space<vmem>>, vector<128x16xf32>
    tpu.vector_store %arg4[%c0_8, %c0_9], %18 {strides = array<i32>} : memref<128x16xf32, #tpu.memory_space<vmem>>, vector<128x16xf32>,
    return
  }
  func.func @transform_0(%arg0: i32) -> (i32, i32) {
    %c0_i32 = arith.constant 0 : i32
    %c0_i32_0 = arith.constant 0 : i32
    return %arg0, %c0_i32 : i32, i32
  }
  func.func @transform_1(%arg0: i32) -> (i32, i32) {
    %c0_i32 = arith.constant 0 : i32
    %c0_i32_0 = arith.constant 0 : i32
    %c0_i32_1 = arith.constant 0 : i32
    return %c0_i32, %c0_i32_0 : i32, i32
  }
  func.func @transform_2(%arg0: i32) -> (i32, i32) {
    %c0_i32 = arith.constant 0 : i32
    %c0_i32_0 = arith.constant 0 : i32
    %c0_i32_1 = arith.constant 0 : i32
    return %c0_i32, %c0_i32_0 : i32, i32
  }
  func.func @transform_3(%arg0: i32) -> (i32, i32) {
    %c0_i32 = arith.constant 0 : i32
    %c0_i32_0 = arith.constant 0 : i32
    return %arg0, %c0_i32 : i32, i32
  }
}

module attributes {stable_mosaic.version = 11 : i64} {
  func.func @kern(%arg0: i32, %arg1: i32, %arg2: memref<1x10x10x84xbf16, #tpu.memory_space<vmem>>, %arg3: memref<3x3x84xf32, #tpu.memory_space<vmem>>, %arg4: memref<1x1x84xf32, #tpu.memory_space<vmem>>, %arg5: memref<1x8x8x84xbf16, #tpu.memory_space<vmem>>) attributes {dimension_semantics = [#tpu.dimension_semantics<parallel>, #tpu.dimension_semantics<parallel>], iteration_bounds = array<i64: 2, 1>, scalar_prefetch = 0 : i64, scratch_operands = 0 : i64, tpu.core_type = #tpu.core_type<tc>, window_params = [{transform_indices = @transform_0, window_bounds = array<i64: 1, 10, 10, 84>}, {transform_indices = @transform_1, window_bounds = array<i64: 3, 3, 84>}, {transform_indices = @transform_2, window_bounds = array<i64: 1, 1, 84>}, {transform_indices = @transform_3, window_bounds = array<i64: 1, 8, 8, 84>}]} {
    %c0 = arith.constant 0 : index
    %c0_0 = arith.constant 0 : index
    %c0_1 = arith.constant 0 : index
    %0 = vector.load %arg3[%c0, %c0_0, %c0_1] : memref<3x3x84xf32, #tpu.memory_space<vmem>>, vector<3x3x84xf32>
    %c0_2 = arith.constant 0 : index
    %c0_3 = arith.constant 0 : index
    %c0_4 = arith.constant 0 : index
    %c0_5 = arith.constant 0 : index
    %1 = vector.load %arg2[%c0_2, %c0_3, %c0_4, %c0_5] : memref<1x10x10x84xbf16, #tpu.memory_space<vmem>>, vector<1x8x8x84xbf16>
    %2 = vector.shape_cast %1 : vector<1x8x8x84xbf16> to vector<8x8x84xbf16>
    %3 = arith.extf %2 : vector<8x8x84xbf16> to vector<8x8x84xf32>
    %4 = vector.extract_strided_slice %0 {offsets = [0, 0, 0], sizes = [1, 1, 84], strides = [1, 1, 1]} : vector<3x3x84xf32> to vector<1x1x84xf32>
    %5 = vector.shape_cast %4 : vector<1x1x84xf32> to vector<84xf32>
    %6 = vector.shape_cast %5 : vector<84xf32> to vector<1x1x84xf32>
    %7 = vector.broadcast %6 : vector<1x1x84xf32> to vector<8x8x84xf32>
    %8 = arith.mulf %3, %7 : vector<8x8x84xf32>
    %c0_6 = arith.constant 0 : index
    %c0_7 = arith.constant 0 : index
    %c1 = arith.constant 1 : index
    %c0_8 = arith.constant 0 : index
    %9 = vector.load %arg2[%c0_6, %c0_7, %c1, %c0_8] : memref<1x10x10x84xbf16, #tpu.memory_space<vmem>>, vector<1x8x8x84xbf16>
    %10 = vector.shape_cast %9 : vector<1x8x8x84xbf16> to vector<8x8x84xbf16>
    %11 = arith.extf %10 : vector<8x8x84xbf16> to vector<8x8x84xf32>
    %12 = vector.extract_strided_slice %0 {offsets = [0, 1, 0], sizes = [1, 1, 84], strides = [1, 1, 1]} : vector<3x3x84xf32> to vector<1x1x84xf32>
    %13 = vector.shape_cast %12 : vector<1x1x84xf32> to vector<84xf32>
    %14 = vector.shape_cast %13 : vector<84xf32> to vector<1x1x84xf32>
    %15 = vector.broadcast %14 : vector<1x1x84xf32> to vector<8x8x84xf32>
    %16 = arith.mulf %11, %15 : vector<8x8x84xf32>
    %17 = arith.addf %8, %16 : vector<8x8x84xf32>
    %c0_9 = arith.constant 0 : index
    %c0_10 = arith.constant 0 : index
    %c2 = arith.constant 2 : index
    %c0_11 = arith.constant 0 : index
    %18 = vector.load %arg2[%c0_9, %c0_10, %c2, %c0_11] : memref<1x10x10x84xbf16, #tpu.memory_space<vmem>>, vector<1x8x8x84xbf16>
    %19 = vector.shape_cast %18 : vector<1x8x8x84xbf16> to vector<8x8x84xbf16>
    %20 = arith.extf %19 : vector<8x8x84xbf16> to vector<8x8x84xf32>
    %21 = vector.extract_strided_slice %0 {offsets = [0, 2, 0], sizes = [1, 1, 84], strides = [1, 1, 1]} : vector<3x3x84xf32> to vector<1x1x84xf32>
    %22 = vector.shape_cast %21 : vector<1x1x84xf32> to vector<84xf32>
    %23 = vector.shape_cast %22 : vector<84xf32> to vector<1x1x84xf32>
    %24 = vector.broadcast %23 : vector<1x1x84xf32> to vector<8x8x84xf32>
    %25 = arith.mulf %20, %24 : vector<8x8x84xf32>
    %26 = arith.addf %17, %25 : vector<8x8x84xf32>
    %c0_12 = arith.constant 0 : index
    %c1_13 = arith.constant 1 : index
    %c0_14 = arith.constant 0 : index
    %c0_15 = arith.constant 0 : index
    %27 = vector.load %arg2[%c0_12, %c1_13, %c0_14, %c0_15] : memref<1x10x10x84xbf16, #tpu.memory_space<vmem>>, vector<1x8x8x84xbf16>
    %28 = vector.shape_cast %27 : vector<1x8x8x84xbf16> to vector<8x8x84xbf16>
    %29 = arith.extf %28 : vector<8x8x84xbf16> to vector<8x8x84xf32>
    %30 = vector.extract_strided_slice %0 {offsets = [1, 0, 0], sizes = [1, 1, 84], strides = [1, 1, 1]} : vector<3x3x84xf32> to vector<1x1x84xf32>
    %31 = vector.shape_cast %30 : vector<1x1x84xf32> to vector<84xf32>
    %32 = vector.shape_cast %31 : vector<84xf32> to vector<1x1x84xf32>
    %33 = vector.broadcast %32 : vector<1x1x84xf32> to vector<8x8x84xf32>
    %34 = arith.mulf %29, %33 : vector<8x8x84xf32>
    %35 = arith.addf %26, %34 : vector<8x8x84xf32>
    %c0_16 = arith.constant 0 : index
    %c1_17 = arith.constant 1 : index
    %c1_18 = arith.constant 1 : index
    %c0_19 = arith.constant 0 : index
    %36 = vector.load %arg2[%c0_16, %c1_17, %c1_18, %c0_19] : memref<1x10x10x84xbf16, #tpu.memory_space<vmem>>, vector<1x8x8x84xbf16>
    %37 = vector.shape_cast %36 : vector<1x8x8x84xbf16> to vector<8x8x84xbf16>
    %38 = arith.extf %37 : vector<8x8x84xbf16> to vector<8x8x84xf32>
    %39 = vector.extract_strided_slice %0 {offsets = [1, 1, 0], sizes = [1, 1, 84], strides = [1, 1, 1]} : vector<3x3x84xf32> to vector<1x1x84xf32>
    %40 = vector.shape_cast %39 : vector<1x1x84xf32> to vector<84xf32>
    %41 = vector.shape_cast %40 : vector<84xf32> to vector<1x1x84xf32>
    %42 = vector.broadcast %41 : vector<1x1x84xf32> to vector<8x8x84xf32>
    %43 = arith.mulf %38, %42 : vector<8x8x84xf32>
    %44 = arith.addf %35, %43 : vector<8x8x84xf32>
    %c0_20 = arith.constant 0 : index
    %c1_21 = arith.constant 1 : index
    %c2_22 = arith.constant 2 : index
    %c0_23 = arith.constant 0 : index
    %45 = vector.load %arg2[%c0_20, %c1_21, %c2_22, %c0_23] : memref<1x10x10x84xbf16, #tpu.memory_space<vmem>>, vector<1x8x8x84xbf16>
    %46 = vector.shape_cast %45 : vector<1x8x8x84xbf16> to vector<8x8x84xbf16>
    %47 = arith.extf %46 : vector<8x8x84xbf16> to vector<8x8x84xf32>
    %48 = vector.extract_strided_slice %0 {offsets = [1, 2, 0], sizes = [1, 1, 84], strides = [1, 1, 1]} : vector<3x3x84xf32> to vector<1x1x84xf32>
    %49 = vector.shape_cast %48 : vector<1x1x84xf32> to vector<84xf32>
    %50 = vector.shape_cast %49 : vector<84xf32> to vector<1x1x84xf32>
    %51 = vector.broadcast %50 : vector<1x1x84xf32> to vector<8x8x84xf32>
    %52 = arith.mulf %47, %51 : vector<8x8x84xf32>
    %53 = arith.addf %44, %52 : vector<8x8x84xf32>
    %c0_24 = arith.constant 0 : index
    %c2_25 = arith.constant 2 : index
    %c0_26 = arith.constant 0 : index
    %c0_27 = arith.constant 0 : index
    %54 = vector.load %arg2[%c0_24, %c2_25, %c0_26, %c0_27] : memref<1x10x10x84xbf16, #tpu.memory_space<vmem>>, vector<1x8x8x84xbf16>
    %55 = vector.shape_cast %54 : vector<1x8x8x84xbf16> to vector<8x8x84xbf16>
    %56 = arith.extf %55 : vector<8x8x84xbf16> to vector<8x8x84xf32>
    %57 = vector.extract_strided_slice %0 {offsets = [2, 0, 0], sizes = [1, 1, 84], strides = [1, 1, 1]} : vector<3x3x84xf32> to vector<1x1x84xf32>
    %58 = vector.shape_cast %57 : vector<1x1x84xf32> to vector<84xf32>
    %59 = vector.shape_cast %58 : vector<84xf32> to vector<1x1x84xf32>
    %60 = vector.broadcast %59 : vector<1x1x84xf32> to vector<8x8x84xf32>
    %61 = arith.mulf %56, %60 : vector<8x8x84xf32>
    %62 = arith.addf %53, %61 : vector<8x8x84xf32>
    %c0_28 = arith.constant 0 : index
    %c2_29 = arith.constant 2 : index
    %c1_30 = arith.constant 1 : index
    %c0_31 = arith.constant 0 : index
    %63 = vector.load %arg2[%c0_28, %c2_29, %c1_30, %c0_31] : memref<1x10x10x84xbf16, #tpu.memory_space<vmem>>, vector<1x8x8x84xbf16>
    %64 = vector.shape_cast %63 : vector<1x8x8x84xbf16> to vector<8x8x84xbf16>
    %65 = arith.extf %64 : vector<8x8x84xbf16> to vector<8x8x84xf32>
    %66 = vector.extract_strided_slice %0 {offsets = [2, 1, 0], sizes = [1, 1, 84], strides = [1, 1, 1]} : vector<3x3x84xf32> to vector<1x1x84xf32>
    %67 = vector.shape_cast %66 : vector<1x1x84xf32> to vector<84xf32>
    %68 = vector.shape_cast %67 : vector<84xf32> to vector<1x1x84xf32>
    %69 = vector.broadcast %68 : vector<1x1x84xf32> to vector<8x8x84xf32>
    %70 = arith.mulf %65, %69 : vector<8x8x84xf32>
    %71 = arith.addf %62, %70 : vector<8x8x84xf32>
    %c0_32 = arith.constant 0 : index
    %c2_33 = arith.constant 2 : index
    %c2_34 = arith.constant 2 : index
    %c0_35 = arith.constant 0 : index
    %72 = vector.load %arg2[%c0_32, %c2_33, %c2_34, %c0_35] : memref<1x10x10x84xbf16, #tpu.memory_space<vmem>>, vector<1x8x8x84xbf16>
    %73 = vector.shape_cast %72 : vector<1x8x8x84xbf16> to vector<8x8x84xbf16>
    %74 = arith.extf %73 : vector<8x8x84xbf16> to vector<8x8x84xf32>
    %75 = vector.extract_strided_slice %0 {offsets = [2, 2, 0], sizes = [1, 1, 84], strides = [1, 1, 1]} : vector<3x3x84xf32> to vector<1x1x84xf32>
    %76 = vector.shape_cast %75 : vector<1x1x84xf32> to vector<84xf32>
    %77 = vector.shape_cast %76 : vector<84xf32> to vector<1x1x84xf32>
    %78 = vector.broadcast %77 : vector<1x1x84xf32> to vector<8x8x84xf32>
    %79 = arith.mulf %74, %78 : vector<8x8x84xf32>
    %80 = arith.addf %71, %79 : vector<8x8x84xf32>
    %c0_36 = arith.constant 0 : index
    %c0_37 = arith.constant 0 : index
    %c0_38 = arith.constant 0 : index
    %81 = vector.load %arg4[%c0_36, %c0_37, %c0_38] : memref<1x1x84xf32, #tpu.memory_space<vmem>>, vector<1x1x84xf32>
    %82 = vector.broadcast %81 : vector<1x1x84xf32> to vector<8x8x84xf32>
    %83 = arith.addf %80, %82 : vector<8x8x84xf32>
    %84 = arith.truncf %83 : vector<8x8x84xf32> to vector<8x8x84xbf16>
    %c0_39 = arith.constant 0 : index
    %c0_40 = arith.constant 0 : index
    %c0_41 = arith.constant 0 : index
    %c0_42 = arith.constant 0 : index
    %85 = vector.load %arg5[%c0_39, %c0_40, %c0_41, %c0_42] : memref<1x8x8x84xbf16, #tpu.memory_space<vmem>>, vector<1x8x8x84xbf16>
    %86 = vector.shape_cast %85 : vector<1x8x8x84xbf16> to vector<8x8x84xbf16>
    %87 = vector.shape_cast %84 : vector<8x8x84xbf16> to vector<1x8x8x84xbf16>
    tpu.vector_store %arg5[%c0_39, %c0_40, %c0_41, %c0_42], %87 {strides = array<i32>} : memref<1x8x8x84xbf16, #tpu.memory_space<vmem>>, vector<1x8x8x84xbf16>,
    return
  }
  func.func @transform_0(%arg0: i32, %arg1: i32) -> (i32, i32, i32, i32) {
    %c0_i32 = arith.constant 0 : i32
    %c0_i32_0 = arith.constant 0 : i32
    %c0_i32_1 = arith.constant 0 : i32
    return %arg0, %c0_i32, %c0_i32_0, %arg1 : i32, i32, i32, i32
  }
  func.func @transform_1(%arg0: i32, %arg1: i32) -> (i32, i32, i32) {
    %c0_i32 = arith.constant 0 : i32
    %c0_i32_0 = arith.constant 0 : i32
    %c0_i32_1 = arith.constant 0 : i32
    return %c0_i32, %c0_i32_0, %arg1 : i32, i32, i32
  }
  func.func @transform_2(%arg0: i32, %arg1: i32) -> (i32, i32, i32) {
    %c0_i32 = arith.constant 0 : i32
    %c0_i32_0 = arith.constant 0 : i32
    %c0_i32_1 = arith.constant 0 : i32
    return %c0_i32, %c0_i32_0, %arg1 : i32, i32, i32
  }
  func.func @transform_3(%arg0: i32, %arg1: i32) -> (i32, i32, i32, i32) {
    %c0_i32 = arith.constant 0 : i32
    %c0_i32_0 = arith.constant 0 : i32
    %c0_i32_1 = arith.constant 0 : i32
    return %arg0, %c0_i32, %c0_i32_0, %arg1 : i32, i32, i32, i32
  }
}

</mosaic_0001>

<llo_original>
// kernel: squeeze.2
$region0: #{squeeze.2}
  %s0 = inlined_call_operand.vmem [shape: f32[2,1,8,8], index: 0, kind: input, shape index: {}]
  %s1 = inlined_call_operand.vmem [shape: f32[2,4,2,4,2], index: 1, kind: output, shape index: {}]
  $region1: #{squeeze.2} parent=0
    #allocation0 [shape = 'u8[65536]{0}', space=vmem, size = 0x10000, scoped, tag = 'scoped mem for output reshape']
    %v2 = vld [vmem:[%s0] sm:$0xff]
    %vm3 = vcmask 15360
    %4 = vst.msk [vmem:[#allocation0] ss:$8 sm:$0xf] %vm3, %v2
    %5 = vst.msk [vmem:[#allocation0] ss:$8 sm:$0xf0] %vm3, %v2
    %s6 = scalar_lea.vmem %s0, 8
    %v7 = vld [vmem:[%s6] sm:$0xff]
    %vm8 = vcmask 15360
    %s9 = scalar_lea.vmem [#allocation0], 64
    %10 = vst.msk [vmem:[%s9] ss:$8 sm:$0xf] %vm8, %v7
    %s11 = scalar_lea.vmem [#allocation0], 64
    %12 = vst.msk [vmem:[%s11] ss:$8 sm:$0xf0] %vm8, %v7
    %v13 = vld [vmem:[%s0] sm:$0xff]
    %14 = vrot.lane.b32.xlu0 %v13, 126
    %v15 = vpop.permute.xlu0 %14
    %vm16 = vcmask 15360
    %s17 = scalar_lea.vmem [#allocation0], 1
    %18 = vst.msk [vmem:[%s17] ss:$8 sm:$0xf] %vm16, %v15
    %s19 = scalar_lea.vmem [#allocation0], 1
    %20 = vst.msk [vmem:[%s19] ss:$8 sm:$0xf0] %vm16, %v15
    %s21 = scalar_lea.vmem %s0, 8
    %v22 = vld [vmem:[%s21] sm:$0xff]
    %23 = vrot.lane.b32.xlu0 %v22, 126
    %v24 = vpop.permute.xlu0 %23
    %vm25 = vcmask 15360
    %s26 = scalar_lea.vmem [#allocation0], 65
    %27 = vst.msk [vmem:[%s26] ss:$8 sm:$0xf] %vm25, %v24
    %s28 = scalar_lea.vmem [#allocation0], 65
    %29 = vst.msk [vmem:[%s28] ss:$8 sm:$0xf0] %vm25, %v24
    %v30 = vld [vmem:[%s0] sm:$0xff]
    %31 = vrot.lane.b32.xlu0 %v30, 124
    %v32 = vpop.permute.xlu0 %31
    %vm33 = vcmask 15360
    %s34 = scalar_lea.vmem [#allocation0], 2
    %35 = vst.msk [vmem:[%s34] ss:$8 sm:$0xf] %vm33, %v32
    %s36 = scalar_lea.vmem [#allocation0], 2
    %37 = vst.msk [vmem:[%s36] ss:$8 sm:$0xf0] %vm33, %v32
    %s38 = scalar_lea.vmem %s0, 8
    %v39 = vld [vmem:[%s38] sm:$0xff]
    %40 = vrot.lane.b32.xlu0 %v39, 124
    %v41 = vpop.permute.xlu0 %40
    %vm42 = vcmask 15360
    %s43 = scalar_lea.vmem [#allocation0], 66
    %44 = vst.msk [vmem:[%s43] ss:$8 sm:$0xf] %vm42, %v41
    %s45 = scalar_lea.vmem [#allocation0], 66
    %46 = vst.msk [vmem:[%s45] ss:$8 sm:$0xf0] %vm42, %v41
    %v47 = vld [vmem:[%s0] sm:$0xff]
    %48 = vrot.lane.b32.xlu0 %v47, 122
    %v49 = vpop.permute.xlu0 %48
    %vm50 = vcmask 15360
    %s51 = scalar_lea.vmem [#allocation0], 3
    %52 = vst.msk [vmem:[%s51] ss:$8 sm:$0xf] %vm50, %v49
    %s53 = scalar_lea.vmem [#allocation0], 3
    %54 = vst.msk [vmem:[%s53] ss:$8 sm:$0xf0] %vm50, %v49
    %s55 = scalar_lea.vmem %s0, 8
    %v56 = vld [vmem:[%s55] sm:$0xff]
    %57 = vrot.lane.b32.xlu0 %v56, 122
    %v58 = vpop.permute.xlu0 %57
    %vm59 = vcmask 15360
    %s60 = scalar_lea.vmem [#allocation0], 67
    %61 = vst.msk [vmem:[%s60] ss:$8 sm:$0xf] %vm59, %v58
    %s62 = scalar_lea.vmem [#allocation0], 67
    %63 = vst.msk [vmem:[%s62] ss:$8 sm:$0xf0] %vm59, %v58
    %s65 = sshll.u32 1, 4
    %s66 = ssub.s32 %s65, 1
    %v68 = vld [vmem:[#allocation0] sm:%s66]
    %s69 = sshll.u32 1, 4
    %s70 = ssub.s32 %s69, 1
    %71 = vst [vmem:[%s1] sm:%s70] %v68
    %s72 = scalar_lea.vmem [#allocation0], 8
    %v73 = vld [vmem:[%s72] sm:%s66]
    %s74 = sshll.u32 1, 4
    %s75 = ssub.s32 %s74, 1
    %s76 = scalar_lea.vmem %s1, 4
    %77 = vst [vmem:[%s76] sm:%s75] %v73
    %s78 = scalar_lea.vmem [#allocation0], 16
    %v79 = vld [vmem:[%s78] sm:%s66]
    %s80 = sshll.u32 1, 4
    %s81 = ssub.s32 %s80, 1
    %s82 = smul.addr 4, 2
    %s83 = scalar_lea.vmem %s1, %s82
    %84 = vst [vmem:[%s83] sm:%s81] %v79
    %s85 = scalar_lea.vmem [#allocation0], 24
    %v86 = vld [vmem:[%s85] sm:%s66]
    %s87 = sshll.u32 1, 4
    %s88 = ssub.s32 %s87, 1
    %s89 = smul.addr 4, 3
    %s90 = scalar_lea.vmem %s1, %s89
    %91 = vst [vmem:[%s90] sm:%s88] %v86
    %s92 = scalar_lea.vmem [#allocation0], 32
    %v93 = vld [vmem:[%s92] sm:%s66]
    %s94 = sshll.u32 1, 4
    %s95 = ssub.s32 %s94, 1
    %s96 = smul.addr 4, 4
    %s97 = scalar_lea.vmem %s1, %s96
    %98 = vst [vmem:[%s97] sm:%s95] %v93
    %s99 = scalar_lea.vmem [#allocation0], 40
    %v100 = vld [vmem:[%s99] sm:%s66]
    %s101 = sshll.u32 1, 4
    %s102 = ssub.s32 %s101, 1
    %s103 = smul.addr 4, 5
    %s104 = scalar_lea.vmem %s1, %s103
    %105 = vst [vmem:[%s104] sm:%s102] %v100
    %s106 = scalar_lea.vmem [#allocation0], 48
    %v107 = vld [vmem:[%s106] sm:%s66]
    %s108 = sshll.u32 1, 4
    %s109 = ssub.s32 %s108, 1
    %s110 = smul.addr 4, 6
    %s111 = scalar_lea.vmem %s1, %s110
    %112 = vst [vmem:[%s111] sm:%s109] %v107
    %s113 = scalar_lea.vmem [#allocation0], 56
    %v114 = vld [vmem:[%s113] sm:%s66]
    %s115 = sshll.u32 1, 4
    %s116 = ssub.s32 %s115, 1
    %s117 = smul.addr 4, 7
    %s118 = scalar_lea.vmem %s1, %s117
    %119 = vst [vmem:[%s118] sm:%s116] %v114
    %s120 = scalar_lea.vmem [#allocation0], 64
    %v121 = vld [vmem:[%s120] sm:%s66]
    %s122 = sshll.u32 1, 4
    %s123 = ssub.s32 %s122, 1
    %s124 = smul.addr 4, 8
    %s125 = scalar_lea.vmem %s1, %s124
    %126 = vst [vmem:[%s125] sm:%s123] %v121
    %s127 = scalar_lea.vmem [#allocation0], 72
    %v128 = vld [vmem:[%s127] sm:%s66]
    %s129 = sshll.u32 1, 4
    %s130 = ssub.s32 %s129, 1
    %s131 = smul.addr 4, 9
    %s132 = scalar_lea.vmem %s1, %s131
    %133 = vst [vmem:[%s132] sm:%s130] %v128
    %s134 = scalar_lea.vmem [#allocation0], 80
    %v135 = vld [vmem:[%s134] sm:%s66]
    %s136 = sshll.u32 1, 4
    %s137 = ssub.s32 %s136, 1
    %s138 = smul.addr 4, 10
    %s139 = scalar_lea.vmem %s1, %s138
    %140 = vst [vmem:[%s139] sm:%s137] %v135
    %s141 = scalar_lea.vmem [#allocation0], 88
    %v142 = vld [vmem:[%s141] sm:%s66]
    %s143 = sshll.u32 1, 4
    %s144 = ssub.s32 %s143, 1
    %s145 = smul.addr 4, 11
    %s146 = scalar_lea.vmem %s1, %s145
    %147 = vst [vmem:[%s146] sm:%s144] %v142
    %s148 = scalar_lea.vmem [#allocation0], 96
    %v149 = vld [vmem:[%s148] sm:%s66]
    %s150 = sshll.u32 1, 4
    %s151 = ssub.s32 %s150, 1
    %s152 = smul.addr 4, 12
    %s153 = scalar_lea.vmem %s1, %s152
    %154 = vst [vmem:[%s153] sm:%s151] %v149
    %s155 = scalar_lea.vmem [#allocation0], 104
    %v156 = vld [vmem:[%s155] sm:%s66]
    %s157 = sshll.u32 1, 4
    %s158 = ssub.s32 %s157, 1
    %s159 = smul.addr 4, 13
    %s160 = scalar_lea.vmem %s1, %s159
    %161 = vst [vmem:[%s160] sm:%s158] %v156
    %s162 = scalar_lea.vmem [#allocation0], 112
    %v163 = vld [vmem:[%s162] sm:%s66]
    %s164 = sshll.u32 1, 4
    %s165 = ssub.s32 %s164, 1
    %s166 = smul.addr 4, 14
    %s167 = scalar_lea.vmem %s1, %s166
    %168 = vst [vmem:[%s167] sm:%s165] %v163
    %s169 = scalar_lea.vmem [#allocation0], 120
    %v170 = vld [vmem:[%s169] sm:%s66]
    %s171 = sshll.u32 1, 4
    %s172 = ssub.s32 %s171, 1
    %s173 = smul.addr 4, 15
    %s174 = scalar_lea.vmem %s1, %s173
    %175 = vst [vmem:[%s174] sm:%s172] %v170

// kernel: transformer_block_1.26
$region0: #{transformer_block_1.26}
  #allocation0 [shape = 'u32[]', space=smem, size = 0x4, offset = 0x4, fixed_abs, tag = 'smem constant byte address 0x4 - core index']
  #allocation1 [shape = 'u32[144,128]{1,0:T(1,128)}', space=vmem, size = 0x12000, scoped, tag = 'internal scratch']
  %s0 = inlined_call_operand.hbm [shape: f32[128,16], index: 0, kind: input, shape index: {}]
  %s1 = inlined_call_operand.vmem [shape: f32[1,16], index: 1, kind: input, shape index: {}]
  %s2 = inlined_call_operand.vmem [shape: f32[1,16], index: 2, kind: input, shape index: {}]
  %s3 = inlined_call_operand.vmem [shape: bf16[16,48], index: 3, kind: input, shape index: {}]
  %s4 = inlined_call_operand.vmem [shape: f32[1,48], index: 4, kind: input, shape index: {}]
  %s5 = inlined_call_operand.vmem [shape: bf16[128,48], index: 5, kind: output, shape index: {}]
  %s6 = sld [smem:[#allocation0]]
  $region34: #{transformer_block_1.26} parent=0
    _
  %s8 = ssub.s32 1, %s6
  %s9 = scalar_select 0, %s8, %s6
  $region1: #{transformer_block_1.26} parent=0
    #allocation2 [shape = 'u8[65536]{0}', space=vmem, size = 0x10000, scoped, tag = 'input window, operand 0, single buffered']
    #allocation3 [shape = 's32[1]{0}', space=sflag, size = 0x4, scoped, tag = 'scoped memory for transformer_block_1.26']
    %10 = vsyncpa [#allocation3], 0
    // Predicated region
    $region2: #{transformer_block_1.26} parent=1 // pred_check
      _
    $region3: #{transformer_block_1.26} parent=1 // pred_check_branch
      %12 = sbr.rel (0) target = $region5
    $region4: #{transformer_block_1.26} parent=1 // pred_region
      %s14 = ssub.s32 2048, 2048
      %15 = vsyncadd [#allocation3], %s14
      %s16 = sshll.u32 [#allocation2], 4
      %s17 = int_to_ptr.vmem [resolvable:$true] %s16
      %22 = dma.hbm_to_vmem [thread:$0]  %s0, 2048, %s17, [#allocation3], 128, 128, 8
    $region5: #{transformer_block_1.26} parent=1 // pred_fallthru
      _
    // Predicated region
    $region6: #{transformer_block_1.26} parent=1 // pred_check
      _
    $region7: #{transformer_block_1.26} parent=1 // pred_check_branch
      %24 = sbr.rel (0) target = $region9
    $region8: #{transformer_block_1.26} parent=1 // pred_region
      _
    $region9: #{transformer_block_1.26} parent=1 // pred_fallthru
      _
    // Predicated region
    $region10: #{transformer_block_1.26} parent=1 // pred_check
      _
    $region11: #{transformer_block_1.26} parent=1 // pred_check_branch
      %26 = sbr.rel (0) target = $region13
    $region12: #{transformer_block_1.26} parent=1 // pred_region
      _
    $region13: #{transformer_block_1.26} parent=1 // pred_fallthru
      _
    // Predicated region
    $region14: #{transformer_block_1.26} parent=1 // pred_check
      _
    $region15: #{transformer_block_1.26} parent=1 // pred_check_branch
      %28 = sbr.rel (0) target = $region17
    $region16: #{transformer_block_1.26} parent=1 // pred_region
      _
    $region17: #{transformer_block_1.26} parent=1 // pred_fallthru
      _
    // Predicated region
    $region18: #{transformer_block_1.26} parent=1 // pred_check
      _
    $region19: #{transformer_block_1.26} parent=1 // pred_check_branch
      %30 = sbr.rel (0) target = $region21
    $region20: #{transformer_block_1.26} parent=1 // pred_region
      _
    $region21: #{transformer_block_1.26} parent=1 // pred_fallthru
      _
    // Predicated region
    $region22: #{transformer_block_1.26} parent=1 // pred_check
      _
    $region23: #{transformer_block_1.26} parent=1 // pred_check_branch
      %32 = sbr.rel (0) target = $region25
    $region24: #{transformer_block_1.26} parent=1 // pred_region
      %33 = dma.done [#allocation3], 2048
    $region25: #{transformer_block_1.26} parent=1 // pred_fallthru
      _
    %v35 = vld [vmem:[#allocation2] sm:$0xff]
    %v36 = vld [vmem:[#allocation2 + $0x8] sm:$0xff]
    %v37 = vld [vmem:[#allocation2 + $0x10] sm:$0xff]
    %v38 = vld [vmem:[#allocation2 + $0x18] sm:$0xff]
    %v39 = vld [vmem:[#allocation2 + $0x20] sm:$0xff]
    %v40 = vld [vmem:[#allocation2 + $0x28] sm:$0xff]
    %v41 = vld [vmem:[#allocation2 + $0x30] sm:$0xff]
    %v42 = vld [vmem:[#allocation2 + $0x38] sm:$0xff]
    %v43 = vld [vmem:[#allocation2 + $0x40] sm:$0xff]
    %v44 = vld [vmem:[#allocation2 + $0x48] sm:$0xff]
    %v45 = vld [vmem:[#allocation2 + $0x50] sm:$0xff]
    %v46 = vld [vmem:[#allocation2 + $0x58] sm:$0xff]
    %v47 = vld [vmem:[#allocation2 + $0x60] sm:$0xff]
    %v48 = vld [vmem:[#allocation2 + $0x68] sm:$0xff]
    %v49 = vld [vmem:[#allocation2 + $0x70] sm:$0xff]
    %v50 = vld [vmem:[#allocation2 + $0x78] sm:$0xff]
    %vm51 = vcmask 130048
    %v52 = vsel %vm51, %v35, 0.0
    %53 = vadd.xlane.f32.xlu0 %v52
    %v54 = vpop.xlane.xlu0 %53
    %v55 = vsel %vm51, %v36, 0.0
    %56 = vadd.xlane.f32.xlu0 %v55
    %v57 = vpop.xlane.xlu0 %56
    %v58 = vsel %vm51, %v37, 0.0
    %59 = vadd.xlane.f32.xlu0 %v58
    %v60 = vpop.xlane.xlu0 %59
    %v61 = vsel %vm51, %v38, 0.0
    %62 = vadd.xlane.f32.xlu0 %v61
    %v63 = vpop.xlane.xlu0 %62
    %v64 = vsel %vm51, %v39, 0.0
    %65 = vadd.xlane.f32.xlu0 %v64
    %v66 = vpop.xlane.xlu0 %65
    %v67 = vsel %vm51, %v40, 0.0
    %68 = vadd.xlane.f32.xlu0 %v67
    %v69 = vpop.xlane.xlu0 %68
    %v70 = vsel %vm51, %v41, 0.0
    %71 = vadd.xlane.f32.xlu0 %v70
    %v72 = vpop.xlane.xlu0 %71
    %v73 = vsel %vm51, %v42, 0.0
    %74 = vadd.xlane.f32.xlu0 %v73
    %v75 = vpop.xlane.xlu0 %74
    %v76 = vsel %vm51, %v43, 0.0
    %77 = vadd.xlane.f32.xlu0 %v76
    %v78 = vpop.xlane.xlu0 %77
    %v79 = vsel %vm51, %v44, 0.0
    %80 = vadd.xlane.f32.xlu0 %v79
    %v81 = vpop.xlane.xlu0 %80
    %v82 = vsel %vm51, %v45, 0.0
    %83 = vadd.xlane.f32.xlu0 %v82
    %v84 = vpop.xlane.xlu0 %83
    %v85 = vsel %vm51, %v46, 0.0
    %86 = vadd.xlane.f32.xlu0 %v85
    %v87 = vpop.xlane.xlu0 %86
    %v88 = vsel %vm51, %v47, 0.0
    %89 = vadd.xlane.f32.xlu0 %v88
    %v90 = vpop.xlane.xlu0 %89
    %v91 = vsel %vm51, %v48, 0.0
    %92 = vadd.xlane.f32.xlu0 %v91
    %v93 = vpop.xlane.xlu0 %92
    %v94 = vsel %vm51, %v49, 0.0
    %95 = vadd.xlane.f32.xlu0 %v94
    %v96 = vpop.xlane.xlu0 %95
    %v97 = vsel %vm51, %v50, 0.0
    %98 = vadd.xlane.f32.xlu0 %v97
    %v99 = vpop.xlane.xlu0 %98
    %v100 = vrcp.pop 16.0
    %v101 = vmul.f32 %v54, %v100
    %v102 = vmul.f32 %v57, %v100
    %v103 = vmul.f32 %v60, %v100
    %v104 = vmul.f32 %v63, %v100
    %v105 = vmul.f32 %v66, %v100
    %v106 = vmul.f32 %v69, %v100
    %v107 = vmul.f32 %v72, %v100
    %v108 = vmul.f32 %v75, %v100
    %v109 = vmul.f32 %v78, %v100
    %v110 = vmul.f32 %v81, %v100
    %v111 = vmul.f32 %v84, %v100
    %v112 = vmul.f32 %v87, %v100
    %v113 = vmul.f32 %v90, %v100
    %v114 = vmul.f32 %v93, %v100
    %v115 = vmul.f32 %v96, %v100
    %v116 = vmul.f32 %v99, %v100
    %v117 = vsub.f32 %v35, %v101
    %v118 = vsub.f32 %v36, %v102
    %v119 = vsub.f32 %v37, %v103
    %v120 = vsub.f32 %v38, %v104
    %v121 = vsub.f32 %v39, %v105
    %v122 = vsub.f32 %v40, %v106
    %v123 = vsub.f32 %v41, %v107
    %v124 = vsub.f32 %v42, %v108
    %v125 = vsub.f32 %v43, %v109
    %v126 = vsub.f32 %v44, %v110
    %v127 = vsub.f32 %v45, %v111
    %v128 = vsub.f32 %v46, %v112
    %v129 = vsub.f32 %v47, %v113
    %v130 = vsub.f32 %v48, %v114
    %v131 = vsub.f32 %v49, %v115
    %v132 = vsub.f32 %v50, %v116
    %v133 = vmul.f32 %v117, %v117
    %v134 = vmul.f32 %v118, %v118
    %v135 = vmul.f32 %v119, %v119
    %v136 = vmul.f32 %v120, %v120
    %v137 = vmul.f32 %v121, %v121
    %v138 = vmul.f32 %v122, %v122
    %v139 = vmul.f32 %v123, %v123
    %v140 = vmul.f32 %v124, %v124
    %v141 = vmul.f32 %v125, %v125
    %v142 = vmul.f32 %v126, %v126
    %v143 = vmul.f32 %v127, %v127
    %v144 = vmul.f32 %v128, %v128
    %v145 = vmul.f32 %v129, %v129
    %v146 = vmul.f32 %v130, %v130
    %v147 = vmul.f32 %v131, %v131
    %v148 = vmul.f32 %v132, %v132
    %v149 = vsel %vm51, %v133, 0.0
    %150 = vadd.xlane.f32.xlu0 %v149
    %v151 = vpop.xlane.xlu0 %150
    %v152 = vsel %vm51, %v134, 0.0
    %153 = vadd.xlane.f32.xlu0 %v152
    %v154 = vpop.xlane.xlu0 %153
    %v155 = vsel %vm51, %v135, 0.0
    %156 = vadd.xlane.f32.xlu0 %v155
    %v157 = vpop.xlane.xlu0 %156
    %v158 = vsel %vm51, %v136, 0.0
    %159 = vadd.xlane.f32.xlu0 %v158
    %v160 = vpop.xlane.xlu0 %159
    %v161 = vsel %vm51, %v137, 0.0
    %162 = vadd.xlane.f32.xlu0 %v161
    %v163 = vpop.xlane.xlu0 %162
    %v164 = vsel %vm51, %v138, 0.0
    %165 = vadd.xlane.f32.xlu0 %v164
    %v166 = vpop.xlane.xlu0 %165
    %v167 = vsel %vm51, %v139, 0.0
    %168 = vadd.xlane.f32.xlu0 %v167
    %v169 = vpop.xlane.xlu0 %168
    %v170 = vsel %vm51, %v140, 0.0
    %171 = vadd.xlane.f32.xlu0 %v170
    %v172 = vpop.xlane.xlu0 %171
    %v173 = vsel %vm51, %v141, 0.0
    %174 = vadd.xlane.f32.xlu0 %v173
    %v175 = vpop.xlane.xlu0 %174
    %v176 = vsel %vm51, %v142, 0.0
    %177 = vadd.xlane.f32.xlu0 %v176
    %v178 = vpop.xlane.xlu0 %177
    %v179 = vsel %vm51, %v143, 0.0
    %180 = vadd.xlane.f32.xlu0 %v179
    %v181 = vpop.xlane.xlu0 %180
    %v182 = vsel %vm51, %v144, 0.0
    %183 = vadd.xlane.f32.xlu0 %v182
    %v184 = vpop.xlane.xlu0 %183
    %v185 = vsel %vm51, %v145, 0.0
    %186 = vadd.xlane.f32.xlu0 %v185
    %v187 = vpop.xlane.xlu0 %186
    %v188 = vsel %vm51, %v146, 0.0
    %189 = vadd.xlane.f32.xlu0 %v188
    %v190 = vpop.xlane.xlu0 %189
    %v191 = vsel %vm51, %v147, 0.0
    %192 = vadd.xlane.f32.xlu0 %v191
    %v193 = vpop.xlane.xlu0 %192
    %v194 = vsel %vm51, %v148, 0.0
    %195 = vadd.xlane.f32.xlu0 %v194
    %v196 = vpop.xlane.xlu0 %195
    %v197 = vmul.f32 %v151, %v100
    %v198 = vmul.f32 %v154, %v100
    %v199 = vmul.f32 %v157, %v100
    %v200 = vmul.f32 %v160, %v100
    %v201 = vmul.f32 %v163, %v100
    %v202 = vmul.f32 %v166, %v100
    %v203 = vmul.f32 %v169, %v100
    %v204 = vmul.f32 %v172, %v100
    %v205 = vmul.f32 %v175, %v100
    %v206 = vmul.f32 %v178, %v100
    %v207 = vmul.f32 %v181, %v100
    %v208 = vmul.f32 %v184, %v100
    %v209 = vmul.f32 %v187, %v100
    %v210 = vmul.f32 %v190, %v100
    %v211 = vmul.f32 %v193, %v100
    %v212 = vmul.f32 %v196, %v100
    %v213 = vadd.f32 %v197, 1e-05
    %v214 = vadd.f32 %v198, 1e-05
    %v215 = vadd.f32 %v199, 1e-05
    %v216 = vadd.f32 %v200, 1e-05
    %v217 = vadd.f32 %v201, 1e-05
    %v218 = vadd.f32 %v202, 1e-05
    %v219 = vadd.f32 %v203, 1e-05
    %v220 = vadd.f32 %v204, 1e-05
    %v221 = vadd.f32 %v205, 1e-05
    %v222 = vadd.f32 %v206, 1e-05
    %v223 = vadd.f32 %v207, 1e-05
    %v224 = vadd.f32 %v208, 1e-05
    %v225 = vadd.f32 %v209, 1e-05
    %v226 = vadd.f32 %v210, 1e-05
    %v227 = vadd.f32 %v211, 1e-05
    %v228 = vadd.f32 %v212, 1e-05
    %v229 = vrsqrt.pop %v213
    %v230 = vrsqrt.pop %v214
    %v231 = vrsqrt.pop %v215
    %v232 = vrsqrt.pop %v216
    %v233 = vrsqrt.pop %v217
    %v234 = vrsqrt.pop %v218
    %v235 = vrsqrt.pop %v219
    %v236 = vrsqrt.pop %v220
    %v237 = vrsqrt.pop %v221
    %v238 = vrsqrt.pop %v222
    %v239 = vrsqrt.pop %v223
    %v240 = vrsqrt.pop %v224
    %v241 = vrsqrt.pop %v225
    %v242 = vrsqrt.pop %v226
    %v243 = vrsqrt.pop %v227
    %v244 = vrsqrt.pop %v228
    %v245 = vmul.f32 %v117, %v229
    %v246 = vmul.f32 %v118, %v230
    %v247 = vmul.f32 %v119, %v231
    %v248 = vmul.f32 %v120, %v232
    %v249 = vmul.f32 %v121, %v233
    %v250 = vmul.f32 %v122, %v234
    %v251 = vmul.f32 %v123, %v235
    %v252 = vmul.f32 %v124, %v236
    %v253 = vmul.f32 %v125, %v237
    %v254 = vmul.f32 %v126, %v238
    %v255 = vmul.f32 %v127, %v239
    %v256 = vmul.f32 %v128, %v240
    %v257 = vmul.f32 %v129, %v241
    %v258 = vmul.f32 %v130, %v242
    %v259 = vmul.f32 %v131, %v243
    %v260 = vmul.f32 %v132, %v244
    %v261 = vld [vmem:[%s1] sm:$0x1]
    %v263 = vlaneseq
    %v264 = vshrl.u32 %v263, 7
    %v265 = vsub.s32 0, %v264
    %v266 = vrot.slane %v261, %v265
    %v268 = vmul.f32 %v245, %v266
    %v269 = vmul.f32 %v246, %v266
    %v270 = vmul.f32 %v247, %v266
    %v271 = vmul.f32 %v248, %v266
    %v272 = vmul.f32 %v249, %v266
    %v273 = vmul.f32 %v250, %v266
    %v274 = vmul.f32 %v251, %v266
    %v275 = vmul.f32 %v252, %v266
    %v276 = vmul.f32 %v253, %v266
    %v277 = vmul.f32 %v254, %v266
    %v278 = vmul.f32 %v255, %v266
    %v279 = vmul.f32 %v256, %v266
    %v280 = vmul.f32 %v257, %v266
    %v281 = vmul.f32 %v258, %v266
    %v282 = vmul.f32 %v259, %v266
    %v283 = vmul.f32 %v260, %v266
    %v284 = vld [vmem:[%s2] sm:$0x1]
    %v286 = vlaneseq
    %v287 = vshrl.u32 %v286, 7
    %v288 = vsub.s32 0, %v287
    %v289 = vrot.slane %v284, %v288
    %v291 = vadd.f32 %v268, %v289
    %v292 = vadd.f32 %v269, %v289
    %v293 = vadd.f32 %v270, %v289
    %v294 = vadd.f32 %v271, %v289
    %v295 = vadd.f32 %v272, %v289
    %v296 = vadd.f32 %v273, %v289
    %v297 = vadd.f32 %v274, %v289
    %v298 = vadd.f32 %v275, %v289
    %v299 = vadd.f32 %v276, %v289
    %v300 = vadd.f32 %v277, %v289
    %v301 = vadd.f32 %v278, %v289
    %v302 = vadd.f32 %v279, %v289
    %v303 = vadd.f32 %v280, %v289
    %v304 = vadd.f32 %v281, %v289
    %v305 = vadd.f32 %v282, %v289
    %v306 = vadd.f32 %v283, %v289
    %v307 = vpack.c.bf16 %v292, %v291
    %v308 = vpack.c.bf16 %v294, %v293
    %v309 = vpack.c.bf16 %v296, %v295
    %v310 = vpack.c.bf16 %v298, %v297
    %v311 = vpack.c.bf16 %v300, %v299
    %v312 = vpack.c.bf16 %v302, %v301
    %v313 = vpack.c.bf16 %v304, %v303
    %v314 = vpack.c.bf16 %v306, %v305
    %v315 = vld [vmem:[%s3] sm:$0xf]
    %v316 = vld [vmem:[%s3 + $0x4] sm:$0xf]
    %v317 = vld [vmem:[%s4] sm:$0x1]
    %v319 = vlaneseq
    %v320 = vshrl.u32 %v319, 7
    %v321 = vsub.s32 0, %v320
    %v322 = vrot.slane %v317, %v321
    %v326 = vunpack.c.l.b16 %v315
    %v327 = vunpack.c.l.b16 %v316
    %v328 = vpack.c.b16 %v327, %v326
    %v331 = vsel %vm51, %v307, 0
    %v334 = vsel %vm51, %v308, 0
    %v337 = vsel %vm51, %v309, 0
    %v340 = vsel %vm51, %v310, 0
    %v343 = vsel %vm51, %v311, 0
    %v346 = vsel %vm51, %v312, 0
    %v349 = vsel %vm51, %v313, 0
    %v352 = vsel %vm51, %v314, 0
    %354 = vmatprep.subr.bf16.mxu0 0
    %355 = vmatpush1.bf16.msra.mxu0 0
    %356 = vmatprep.subr.bf16.mxu0 0
    %357 = vmatpush1.bf16.msra.mxu0 0
    %358 = vmatprep.subr.bf16.mxu0 0
    %359 = vmatpush1.bf16.msra.mxu0 0
    %360 = vmatprep.subr.bf16.mxu0 0
    %361 = vmatpush1.bf16.msra.mxu0 0
    %362 = vmatprep.subr.bf16.mxu0 0
    %363 = vmatpush1.bf16.msra.mxu0 0
    %364 = vmatprep.subr.bf16.mxu0 0
    %365 = vmatpush1.bf16.msra.mxu0 0
    %366 = vmatprep.subr.bf16.mxu0 0
    %367 = vmatpush1.bf16.msra.mxu0 0
    %368 = vmatprep.subr.bf16.mxu0 0
    %369 = vmatpush1.bf16.msra.mxu0 %v328
    %370 = vmatprep.subr.bf16.mxu0 0
    %371 = vmatpush2.bf16.msra.mxu0 0
    %372 = vmatprep.subr.bf16.mxu0 0
    %373 = vmatpush2.bf16.msra.mxu0 0
    %374 = vmatprep.subr.bf16.mxu0 0
    %375 = vmatpush2.bf16.msra.mxu0 0
    %376 = vmatprep.subr.bf16.mxu0 0
    %377 = vmatpush2.bf16.msra.mxu0 0
    %378 = vmatprep.subr.bf16.mxu0 0
    %379 = vmatpush2.bf16.msra.mxu0 0
    %380 = vmatprep.subr.bf16.mxu0 0
    %381 = vmatpush2.bf16.msra.mxu0 0
    %382 = vmatprep.subr.bf16.mxu0 0
    %383 = vmatpush2.bf16.msra.mxu0 0
    %384 = vmatprep.subr.bf16.mxu0 0
    %385 = vmatpush2.bf16.msra.mxu0 0
    %386 = vmatprep.mubr.bf16.mxu0 0
    %387 = vmatmul.mubr.bf16.gmra.mxu0 %v331
    %v388 = vpop.f32.mrf.mxu0
    %v389 = vadd.f32 %v322, %v388
    %v390 = vpop.f32.mrf.mxu0
    %v391 = vpop.f32.mrf.mxu0
    %v392 = vadd.f32 %v322, %v391
    %v393 = vpop.f32.mrf.mxu0
    %394 = vmatprep.mubr.bf16.mxu0 0
    %395 = vmatmul.mubr.bf16.gmra.mxu0 %v334
    %v396 = vpop.f32.mrf.mxu0
    %v397 = vadd.f32 %v322, %v396
    %v398 = vpop.f32.mrf.mxu0
    %v399 = vpop.f32.mrf.mxu0
    %v400 = vadd.f32 %v322, %v399
    %v401 = vpop.f32.mrf.mxu0
    %402 = vmatprep.mubr.bf16.mxu0 0
    %403 = vmatmul.mubr.bf16.gmra.mxu0 %v337
    %v404 = vpop.f32.mrf.mxu0
    %v405 = vadd.f32 %v322, %v404
    %v406 = vpop.f32.mrf.mxu0
    %v407 = vpop.f32.mrf.mxu0
    %v408 = vadd.f32 %v322, %v407
    %v409 = vpop.f32.mrf.mxu0
    %410 = vmatprep.mubr.bf16.mxu0 0
    %411 = vmatmul.mubr.bf16.gmra.mxu0 %v340
    %v412 = vpop.f32.mrf.mxu0
    %v413 = vadd.f32 %v322, %v412
    %v414 = vpop.f32.mrf.mxu0
    %v415 = vpop.f32.mrf.mxu0
    %v416 = vadd.f32 %v322, %v415
    %v417 = vpop.f32.mrf.mxu0
    %418 = vmatprep.mubr.bf16.mxu0 0
    %419 = vmatmul.mubr.bf16.gmra.mxu0 %v343
    %v420 = vpop.f32.mrf.mxu0
    %v421 = vadd.f32 %v322, %v420
    %v422 = vpop.f32.mrf.mxu0
    %v423 = vpop.f32.mrf.mxu0
    %v424 = vadd.f32 %v322, %v423
    %v425 = vpop.f32.mrf.mxu0
    %426 = vmatprep.mubr.bf16.mxu0 0
    %427 = vmatmul.mubr.bf16.gmra.mxu0 %v346
    %v428 = vpop.f32.mrf.mxu0
    %v429 = vadd.f32 %v322, %v428
    %v430 = vpop.f32.mrf.mxu0
    %v431 = vpop.f32.mrf.mxu0
    %v432 = vadd.f32 %v322, %v431
    %v433 = vpop.f32.mrf.mxu0
    %434 = vmatprep.mubr.bf16.mxu0 0
    %435 = vmatmul.mubr.bf16.gmra.mxu0 %v349
    %v436 = vpop.f32.mrf.mxu0
    %v437 = vadd.f32 %v322, %v436
    %v438 = vpop.f32.mrf.mxu0
    %v439 = vpop.f32.mrf.mxu0
    %v440 = vadd.f32 %v322, %v439
    %v441 = vpop.f32.mrf.mxu0
    %442 = vmatprep.mubr.bf16.mxu0 0
    %443 = vmatmul.mubr.bf16.gmra.mxu0 %v352
    %v444 = vpop.f32.mrf.mxu0
    %v445 = vadd.f32 %v322, %v444
    %v446 = vpop.f32.mrf.mxu0
    %v447 = vpop.f32.mrf.mxu0
    %v448 = vadd.f32 %v322, %v447
    %v449 = vpop.f32.mrf.mxu0
    %450 = vdwg.mxu0
    %v451 = vpack.c.bf16 %v392, %v389
    %v452 = vpack.c.bf16 %v400, %v397
    %v453 = vpack.c.bf16 %v408, %v405
    %v454 = vpack.c.bf16 %v416, %v413
    %v455 = vpack.c.bf16 %v424, %v421
    %v456 = vpack.c.bf16 %v432, %v429
    %v457 = vpack.c.bf16 %v440, %v437
    %v458 = vpack.c.bf16 %v448, %v445
    %v467 = vunpack.c.l.b16 %v451
    %v468 = vunpack.c.h.b16 %v451
    %v469 = vunpack.c.l.b16 %v452
    %v470 = vunpack.c.h.b16 %v452
    %v471 = vunpack.c.l.b16 %v453
    %v472 = vunpack.c.h.b16 %v453
    %v473 = vunpack.c.l.b16 %v454
    %v474 = vunpack.c.h.b16 %v454
    %v475 = vunpack.c.l.b16 %v455
    %v476 = vunpack.c.h.b16 %v455
    %v477 = vunpack.c.l.b16 %v456
    %v478 = vunpack.c.h.b16 %v456
    %v479 = vunpack.c.l.b16 %v457
    %v480 = vunpack.c.h.b16 %v457
    %v481 = vunpack.c.l.b16 %v458
    %v482 = vunpack.c.h.b16 %v458
    %v483 = vpack.c.b16 %v467, %v467
    %v484 = vpack.c.b16 %v468, %v468
    %v485 = vpack.c.b16 %v469, %v469
    %v486 = vpack.c.b16 %v470, %v470
    %v487 = vpack.c.b16 %v471, %v471
    %v488 = vpack.c.b16 %v472, %v472
    %v489 = vpack.c.b16 %v473, %v473
    %v490 = vpack.c.b16 %v474, %v474
    %v491 = vpack.c.b16 %v475, %v475
    %v492 = vpack.c.b16 %v476, %v476
    %v493 = vpack.c.b16 %v477, %v477
    %v494 = vpack.c.b16 %v478, %v478
    %v495 = vpack.c.b16 %v479, %v479
    %v496 = vpack.c.b16 %v480, %v480
    %v497 = vpack.c.b16 %v481, %v481
    %v498 = vpack.c.b16 %v482, %v482
    %vm515 = vcmask 388096
    %516 = vst.msk [vmem:[%s5] sm:$0xf] %vm515, %v483
    %517 = vst.msk [vmem:[%s5 + $0x4] sm:$0xf] %vm515, %v484
    %518 = vst.msk [vmem:[%s5 + $0x8] sm:$0xf] %vm515, %v485
    %519 = vst.msk [vmem:[%s5 + $0xc] sm:$0xf] %vm515, %v486
    %520 = vst.msk [vmem:[%s5 + $0x10] sm:$0xf] %vm515, %v487
    %521 = vst.msk [vmem:[%s5 + $0x14] sm:$0xf] %vm515, %v488
    %522 = vst.msk [vmem:[%s5 + $0x18] sm:$0xf] %vm515, %v489
    %523 = vst.msk [vmem:[%s5 + $0x1c] sm:$0xf] %vm515, %v490
    %524 = vst.msk [vmem:[%s5 + $0x20] sm:$0xf] %vm515, %v491
    %525 = vst.msk [vmem:[%s5 + $0x24] sm:$0xf] %vm515, %v492
    %526 = vst.msk [vmem:[%s5 + $0x28] sm:$0xf] %vm515, %v493
    %527 = vst.msk [vmem:[%s5 + $0x2c] sm:$0xf] %vm515, %v494
    %528 = vst.msk [vmem:[%s5 + $0x30] sm:$0xf] %vm515, %v495
    %529 = vst.msk [vmem:[%s5 + $0x34] sm:$0xf] %vm515, %v496
    %530 = vst.msk [vmem:[%s5 + $0x38] sm:$0xf] %vm515, %v497
    %531 = vst.msk [vmem:[%s5 + $0x3c] sm:$0xf] %vm515, %v498
    // Predicated region
    $region26: #{transformer_block_1.26} parent=1 // pred_check
      _
    $region27: #{transformer_block_1.26} parent=1 // pred_check_branch
      %533 = sbr.rel (0) target = $region29
    $region28: #{transformer_block_1.26} parent=1 // pred_region
      _
    $region29: #{transformer_block_1.26} parent=1 // pred_fallthru
      _
    // Predicated region
    $region30: #{transformer_block_1.26} parent=1 // pred_check
      _
    $region31: #{transformer_block_1.26} parent=1 // pred_check_branch
      %535 = sbr.rel (0) target = $region33
    $region32: #{transformer_block_1.26} parent=1 // pred_region
      _
    $region33: #{transformer_block_1.26} parent=1 // pred_fallthru
      _
    %536 = vsyncpa [#allocation3], 1

// kernel: transformer_block_1.29
$region0: #{transformer_block_1.29}
  #allocation0 [shape = 'u32[]', space=smem, size = 0x4, offset = 0x4, fixed_abs, tag = 'smem constant byte address 0x4 - core index']
  #allocation1 [shape = 'u32[144,128]{1,0:T(1,128)}', space=vmem, size = 0x12000, scoped, tag = 'internal scratch']
  %s0 = inlined_call_operand.vmem [shape: f32[2,16,16], index: 0, kind: input, shape index: {}]
  %s1 = inlined_call_operand.vmem [shape: bf16[2,16,64], index: 1, kind: input, shape index: {}]
  %s2 = inlined_call_operand.vmem [shape: bf16[2,16,64], index: 2, kind: output, shape index: {}]
  %s3 = sld [smem:[#allocation0]]
  $region41: #{transformer_block_1.29} parent=0
    _
  %s5 = ssub.s32 1, %s3
  %s6 = scalar_select 0, %s5, %s3
  loop: start=0, step=1, limit=4
  $region2: #{transformer_block_1.29} parent=0 // loop_pre_header
    _
  $region3: #{transformer_block_1.29} parent=0 // loop_header
    %s8 = sphi 0, %s12
    %p9 = scmp.ge.s32.totalorder %s8, 4
    %s15 = sphi 0, %s27
    %s16 = sphi 0, %s23
    %s17 = sphi 0, %s15
    %s18 = sphi 0, %s16
    %s19 = sphi 0, %s17
    %s20 = sphi 0, %s18
    %s30 = sphi 0, %s32
    %s33 = sphi 0, %s30
    %s34 = sphi 0, %s33
    %s50 = sphi 0, %s34
    %s58 = sphi 0, %s60
    %s61 = sphi 0, %s58
    %s62 = sphi 0, %s61
    %s78 = sphi 0, %s62
    %s86 = sphi 0, %s88
    %s89 = sphi 0, %s86
    %s90 = sphi 0, %s89
    %s106 = sphi 0, %s90
  $region4: #{transformer_block_1.29} parent=0 // loop_header_branch
    %11 = sbr.rel (%p9) target = $region8
  $region5: #{transformer_block_1.29} parent=0 // loop_body
    %s13 = ssub.s32 %s8, 1
    %s14 = ssub.s32 %s8, 2
    %s21 = sadd.s32 1, %s16
    %p22 = scmp.ge.s32.totalorder %s21, 1
    %s23 = scalar_select %p22, 0, %s21
    %s24 = sadd.s32 1, %s15
    %s25 = scalar_select %p22, %s24, %s15
    %p26 = scmp.ge.s32.totalorder %s25, 2
    %s27 = scalar_select %p26, 0, %s25
    %s28 = ssub.s32 %s15, %s27
    %p29 = scmp.eq.s32.totalorder %s28, 0
    %s31 = sadd.s32 %s30, 1
    %s32 = scalar_select %p29, %s30, %s31
    %p35 = pneg %p29
    %p36 = scmp.eq.s32.totalorder %s8, 1
    %p37 = por %p35, %p36
    %p38 = scmp.ne.s32.totalorder %s30, %s33
    %p39 = scmp.eq.s32.totalorder %s8, 0
    %p40 = por %p38, %p39
    %p41 = scmp.ne.s32.totalorder %s30, %s33
    %p42 = scmp.eq.s32.totalorder %s13, 1
    %p43 = por %p41, %p42
    %p44 = scmp.ne.s32.totalorder %s33, %s34
    %p45 = scmp.eq.s32.totalorder %s13, 0
    %p46 = por %p44, %p45
    %p47 = scmp.ne.s32.totalorder %s33, %s34
    %p48 = scmp.eq.s32.totalorder %s14, 1
    %p49 = por %p47, %p48
    %p51 = scmp.ne.s32.totalorder %s34, %s50
    %p52 = scmp.eq.s32.totalorder %s14, 0
    %p53 = por %p51, %p52
    %s54 = ssub.s32 %s15, %s27
    %s55 = ssub.s32 %s16, %s23
    %s56 = sor.u32 %s54, %s55
    %p57 = scmp.eq.s32.totalorder %s56, 0
    %s59 = sadd.s32 %s58, 1
    %s60 = scalar_select %p57, %s58, %s59
    %p63 = pneg %p57
    %p64 = scmp.eq.s32.totalorder %s8, 1
    %p65 = por %p63, %p64
    %p66 = scmp.ne.s32.totalorder %s58, %s61
    %p67 = scmp.eq.s32.totalorder %s8, 0
    %p68 = por %p66, %p67
    %p69 = scmp.ne.s32.totalorder %s58, %s61
    %p70 = scmp.eq.s32.totalorder %s13, 1
    %p71 = por %p69, %p70
    %p72 = scmp.ne.s32.totalorder %s61, %s62
    %p73 = scmp.eq.s32.totalorder %s13, 0
    %p74 = por %p72, %p73
    %p75 = scmp.ne.s32.totalorder %s61, %s62
    %p76 = scmp.eq.s32.totalorder %s14, 1
    %p77 = por %p75, %p76
    %p79 = scmp.ne.s32.totalorder %s62, %s78
    %p80 = scmp.eq.s32.totalorder %s14, 0
    %p81 = por %p79, %p80
    %s82 = ssub.s32 %s15, %s27
    %s83 = ssub.s32 %s16, %s23
    %s84 = sor.u32 %s82, %s83
    %p85 = scmp.eq.s32.totalorder %s84, 0
    %s87 = sadd.s32 %s86, 1
    %s88 = scalar_select %p85, %s86, %s87
    %p91 = pneg %p85
    %p92 = scmp.eq.s32.totalorder %s8, 1
    %p93 = por %p91, %p92
    %p94 = scmp.ne.s32.totalorder %s86, %s89
    %p95 = scmp.eq.s32.totalorder %s8, 0
    %p96 = por %p94, %p95
    %p97 = scmp.ne.s32.totalorder %s86, %s89
    %p98 = scmp.eq.s32.totalorder %s13, 1
    %p99 = por %p97, %p98
    %p100 = scmp.ne.s32.totalorder %s89, %s90
    %p101 = scmp.eq.s32.totalorder %s13, 0
    %p102 = por %p100, %p101
    %p103 = scmp.ne.s32.totalorder %s89, %s90
    %p104 = scmp.eq.s32.totalorder %s14, 1
    %p105 = por %p103, %p104
    %p107 = scmp.ne.s32.totalorder %s90, %s106
    %p108 = scmp.eq.s32.totalorder %s14, 0
    %p109 = por %p107, %p108
    %p110 = scmp.le.s32.totalorder 1, %s8
    %p111 = scmp.lt.s32.totalorder %s8, 3
    %p112 = pnand %p110, %p111
    %p113 = pneg %p112
    // Predicated region
    $region9: #{transformer_block_1.29} parent=5 // pred_check
      _
    $region10: #{transformer_block_1.29} parent=5 // pred_check_branch
      %115 = sbr.rel (%p112) target = $region12
    $region11: #{transformer_block_1.29} parent=5 // pred_region
      %s116 = ssub.s32 %s8, 1
    $region12: #{transformer_block_1.29} parent=5 // pred_fallthru
      _
    %p117 = scmp.lt.s32.totalorder %s8, 2
    // Predicated region
    $region13: #{transformer_block_1.29} parent=5 // pred_check
      %p118 = pneg %p117
    $region14: #{transformer_block_1.29} parent=5 // pred_check_branch
      %120 = sbr.rel (%p118) target = $region16
    $region15: #{transformer_block_1.29} parent=5 // pred_region
      // Predicated region
      $region17: #{transformer_block_1.29} parent=15 // pred_check
        %p121 = pneg %p40
      $region18: #{transformer_block_1.29} parent=15 // pred_check_branch
        %123 = sbr.rel (%p121) target = $region20
      $region19: #{transformer_block_1.29} parent=15 // pred_region
        %p124 = scmp.lt.s32.totalorder %s15, 1
        %s125 = scalar_select %p124, %s15, 1
        %s126 = smul.addr %s125, 2
        %s127 = smul.addr %s126, 8
        %s128 = scalar_lea.vmem %s0, %s127
      $region20: #{transformer_block_1.29} parent=15 // pred_fallthru
        _
      // Predicated region
      $region21: #{transformer_block_1.29} parent=15 // pred_check
        %p129 = pneg %p68
      $region22: #{transformer_block_1.29} parent=15 // pred_check_branch
        %131 = sbr.rel (%p129) target = $region24
      $region23: #{transformer_block_1.29} parent=15 // pred_region
        %p132 = scmp.lt.s32.totalorder %s15, 1
        %s133 = scalar_select %p132, %s15, 1
        %p134 = scmp.lt.s32.totalorder %s16, 0
        %s135 = scalar_select %p134, %s16, 0
        %s136 = smul.addr %s133, 2
        %s137 = sadd.s32 %s135, %s136
        %s138 = smul.addr %s137, 4
        %s139 = scalar_lea.vmem %s1, %s138
      $region24: #{transformer_block_1.29} parent=15 // pred_fallthru
        _
    $region16: #{transformer_block_1.29} parent=5 // pred_fallthru
      _
    %p140 = scmp.le.s32.totalorder 1, %s8
    %p141 = scmp.lt.s32.totalorder %s8, 3
    %p142 = pnand %p140, %p141
    %p143 = pneg %p142
    // Predicated region
    $region25: #{transformer_block_1.29} parent=5 // pred_check
      _
    $region26: #{transformer_block_1.29} parent=5 // pred_check_branch
      %145 = sbr.rel (%p142) target = $region28
    $region27: #{transformer_block_1.29} parent=5 // pred_region
      %s146 = ssub.s32 %s8, 1
      %p147 = scmp.lt.s32.totalorder %s17, 1
      %s148 = scalar_select %p147, %s17, 1
      %s149 = smul.addr %s148, 2
      %s150 = smul.addr %s149, 8
      %s151 = scalar_lea.vmem %s0, %s150
      %p152 = pneg %p46
      %p153 = pneg %p43
      %p154 = scmp.lt.s32.totalorder %s17, 1
      %s155 = scalar_select %p154, %s17, 1
      %p156 = scmp.lt.s32.totalorder %s18, 0
      %s157 = scalar_select %p156, %s18, 0
      %s158 = smul.addr %s155, 2
      %s159 = sadd.s32 %s157, %s158
      %s160 = smul.addr %s159, 4
      %s161 = scalar_lea.vmem %s1, %s160
      %p162 = pneg %p74
      %p163 = pneg %p71
      %p164 = pneg %p102
      %p165 = pneg %p99
      %p166 = scmp.lt.s32.totalorder %s17, 1
      %s167 = scalar_select %p166, %s17, 1
      %p168 = scmp.lt.s32.totalorder %s18, 0
      %s169 = scalar_select %p168, %s18, 0
      %s170 = smul.addr %s167, 2
      %s171 = sadd.s32 %s169, %s170
      %s172 = smul.addr %s171, 4
      %s173 = scalar_lea.vmem %s2, %s172
      %p174 = scmp.lt.s32.totalorder %s17, 1
      %s175 = scalar_select %p174, %s17, 1
      %s176 = smul.addr %s175, 2
      %s177 = smul.addr %s176, 8
      %s178 = scalar_lea.vmem %s0, %s177
      %p179 = scmp.lt.s32.totalorder %s17, 1
      %s180 = scalar_select %p179, %s17, 1
      %p181 = scmp.lt.s32.totalorder %s18, 0
      %s182 = scalar_select %p181, %s18, 0
      %s183 = smul.addr %s180, 2
      %s184 = sadd.s32 %s182, %s183
      %s185 = smul.addr %s184, 4
      %s186 = scalar_lea.vmem %s1, %s185
      %p187 = scmp.lt.s32.totalorder %s17, 1
      %s188 = scalar_select %p187, %s17, 1
      %p189 = scmp.lt.s32.totalorder %s18, 0
      %s190 = scalar_select %p189, %s18, 0
      %s191 = smul.addr %s188, 2
      %s192 = sadd.s32 %s190, %s191
      %s193 = smul.addr %s192, 4
      %s194 = scalar_lea.vmem %s2, %s193
      %v196 = vld [vmem:[%s178] sm:$0xff]
      %v197 = vld [vmem:[%s178 + $0x8] sm:$0xff]
      %v198 = vpack.c.bf16 %v197, %v196
      %v199 = vld [vmem:[%s186] sm:$0xf]
      %v200 = vld [vmem:[%s186 + $0x4] sm:$0xf]
      %v203 = vunpack.c.l.b16 %v199
      %v204 = vunpack.c.l.b16 %v200
      %v205 = vpack.c.b16 %v204, %v203
      %vm207 = vcmask 130048
      %v209 = vsel %vm207, %v198, 0
      %211 = vmatprep.subr.bf16.mxu0 0
      %212 = vmatpush1.bf16.msra.mxu0 0
      %213 = vmatprep.subr.bf16.mxu0 0
      %214 = vmatpush1.bf16.msra.mxu0 0
      %215 = vmatprep.subr.bf16.mxu0 0
      %216 = vmatpush1.bf16.msra.mxu0 0
      %217 = vmatprep.subr.bf16.mxu0 0
      %218 = vmatpush1.bf16.msra.mxu0 0
      %219 = vmatprep.subr.bf16.mxu0 0
      %220 = vmatpush1.bf16.msra.mxu0 0
      %221 = vmatprep.subr.bf16.mxu0 0
      %222 = vmatpush1.bf16.msra.mxu0 0
      %223 = vmatprep.subr.bf16.mxu0 0
      %224 = vmatpush1.bf16.msra.mxu0 0
      %225 = vmatprep.subr.bf16.mxu0 0
      %226 = vmatpush1.bf16.msra.mxu0 %v205
      %227 = vmatprep.subr.bf16.mxu0 0
      %228 = vmatpush2.bf16.msra.mxu0 0
      %229 = vmatprep.subr.bf16.mxu0 0
      %230 = vmatpush2.bf16.msra.mxu0 0
      %231 = vmatprep.subr.bf16.mxu0 0
      %232 = vmatpush2.bf16.msra.mxu0 0
      %233 = vmatprep.subr.bf16.mxu0 0
      %234 = vmatpush2.bf16.msra.mxu0 0
      %235 = vmatprep.subr.bf16.mxu0 0
      %236 = vmatpush2.bf16.msra.mxu0 0
      %237 = vmatprep.subr.bf16.mxu0 0
      %238 = vmatpush2.bf16.msra.mxu0 0
      %239 = vmatprep.subr.bf16.mxu0 0
      %240 = vmatpush2.bf16.msra.mxu0 0
      %241 = vmatprep.subr.bf16.mxu0 0
      %242 = vmatpush2.bf16.msra.mxu0 0
      %243 = vmatprep.mubr.bf16.mxu0 0
      %244 = vmatmul.mubr.bf16.gmra.mxu0 %v209
      %v245 = vpop.f32.mrf.mxu0
      %v246 = vadd.f32 0.0, %v245
      %v247 = vpop.f32.mrf.mxu0
      %v248 = vpop.f32.mrf.mxu0
      %v249 = vadd.f32 0.0, %v248
      %v250 = vpop.f32.mrf.mxu0
      %251 = vdwg.mxu0
      %v252 = vpack.c.bf16 %v249, %v246
      %v254 = vunpack.c.l.b16 %v252
      %v255 = vunpack.c.h.b16 %v252
      %v256 = vpack.c.b16 %v254, %v254
      %v257 = vpack.c.b16 %v255, %v255
      %vm260 = vcmask 519168
      %261 = vst.msk [vmem:[%s194] sm:$0xf] %vm260, %v256
      %262 = vst.msk [vmem:[%s194 + $0x4] sm:$0xf] %vm260, %v257
      %p263 = scmp.lt.s32.totalorder %s17, 1
      %s264 = scalar_select %p263, %s17, 1
      %p265 = scmp.lt.s32.totalorder %s18, 0
      %s266 = scalar_select %p265, %s18, 0
      %s267 = smul.addr %s264, 2
      %s268 = sadd.s32 %s266, %s267
      %s269 = smul.addr %s268, 4
      %s270 = scalar_lea.vmem %s2, %s269
      // Predicated region
      $region29: #{transformer_block_1.29} parent=27 // pred_check
        %p271 = pneg %p99
      $region30: #{transformer_block_1.29} parent=27 // pred_check_branch
        %273 = sbr.rel (%p271) target = $region32
      $region31: #{transformer_block_1.29} parent=27 // pred_region
        _
      $region32: #{transformer_block_1.29} parent=27 // pred_fallthru
        _
    $region28: #{transformer_block_1.29} parent=5 // pred_fallthru
      _
    %p274 = scmp.le.s32.totalorder 2, %s8
    // Predicated region
    $region33: #{transformer_block_1.29} parent=5 // pred_check
      %p275 = pneg %p274
    $region34: #{transformer_block_1.29} parent=5 // pred_check_branch
      %277 = sbr.rel (%p275) target = $region36
    $region35: #{transformer_block_1.29} parent=5 // pred_region
      %s278 = ssub.s32 %s8, 2
      // Predicated region
      $region37: #{transformer_block_1.29} parent=35 // pred_check
        %p279 = pneg %p105
      $region38: #{transformer_block_1.29} parent=35 // pred_check_branch
        %281 = sbr.rel (%p279) target = $region40
      $region39: #{transformer_block_1.29} parent=35 // pred_region
        %p282 = scmp.lt.s32.totalorder %s19, 1
        %s283 = scalar_select %p282, %s19, 1
        %p284 = scmp.lt.s32.totalorder %s20, 0
        %s285 = scalar_select %p284, %s20, 0
        %s286 = smul.addr %s283, 2
        %s287 = sadd.s32 %s285, %s286
        %s288 = smul.addr %s287, 4
        %s289 = scalar_lea.vmem %s2, %s288
      $region40: #{transformer_block_1.29} parent=35 // pred_fallthru
        _
    $region36: #{transformer_block_1.29} parent=5 // pred_fallthru
      _
  $region6: #{transformer_block_1.29} parent=0 // loop_footer
    %s12 = sadd.s32 1, %s8
  $region7: #{transformer_block_1.29} parent=0 // loop_footer_branch
    %7 = sbr.rel target = $region3
  $region8: #{transformer_block_1.29} parent=0 // loop_exit
    _

// kernel: transformer_block_1.28
$region0: #{transformer_block_1.28}
  #allocation0 [shape = 'u32[]', space=smem, size = 0x4, offset = 0x4, fixed_abs, tag = 'smem constant byte address 0x4 - core index']
  #allocation1 [shape = 'u32[144,128]{1,0:T(1,128)}', space=vmem, size = 0x12000, scoped, tag = 'internal scratch']
  %s0 = inlined_call_operand.vmem [shape: f32[2,16,4], index: 0, kind: input, shape index: {}]
  %s1 = inlined_call_operand.vmem [shape: f32[2,16,16], index: 1, kind: output, shape index: {}]
  %s2 = sld [smem:[#allocation0]]
  $region37: #{transformer_block_1.28} parent=0
    _
  %s4 = ssub.s32 1, %s2
  %s5 = scalar_select 0, %s4, %s2
  loop: start=0, step=1, limit=4
  $region2: #{transformer_block_1.28} parent=0 // loop_pre_header
    _
  $region3: #{transformer_block_1.28} parent=0 // loop_header
    %s7 = sphi 0, %s11
    %p8 = scmp.ge.s32.totalorder %s7, 4
    %s17 = sphi 0, %s19
    %s20 = sphi 0, %s17
    %s21 = sphi 0, %s20
    %s37 = sphi 0, %s21
    %s43 = sphi 0, %s45
    %s46 = sphi 0, %s43
    %s47 = sphi 0, %s46
    %s63 = sphi 0, %s47
  $region4: #{transformer_block_1.28} parent=0 // loop_header_branch
    %10 = sbr.rel (%p8) target = $region8
  $region5: #{transformer_block_1.28} parent=0 // loop_body
    %s12 = ssub.s32 %s7, 1
    %s13 = ssub.s32 %s7, 2
    %s14 = sadd.s32 %s7, 1
    %s15 = ssub.s32 %s7, %s14
    %p16 = scmp.eq.s32.totalorder %s15, 0
    %s18 = sadd.s32 %s17, 1
    %s19 = scalar_select %p16, %s17, %s18
    %p22 = pneg %p16
    %p23 = scmp.eq.s32.totalorder %s7, 1
    %p24 = por %p22, %p23
    %p25 = scmp.ne.s32.totalorder %s17, %s20
    %p26 = scmp.eq.s32.totalorder %s7, 0
    %p27 = por %p25, %p26
    %p28 = scmp.ne.s32.totalorder %s17, %s20
    %p29 = scmp.eq.s32.totalorder %s12, 1
    %p30 = por %p28, %p29
    %p31 = scmp.ne.s32.totalorder %s20, %s21
    %p32 = scmp.eq.s32.totalorder %s12, 0
    %p33 = por %p31, %p32
    %p34 = scmp.ne.s32.totalorder %s20, %s21
    %p35 = scmp.eq.s32.totalorder %s13, 1
    %p36 = por %p34, %p35
    %p38 = scmp.ne.s32.totalorder %s21, %s37
    %p39 = scmp.eq.s32.totalorder %s13, 0
    %p40 = por %p38, %p39
    %s41 = ssub.s32 %s7, %s14
    %p42 = scmp.eq.s32.totalorder %s41, 0
    %s44 = sadd.s32 %s43, 1
    %s45 = scalar_select %p42, %s43, %s44
    %p48 = pneg %p42
    %p49 = scmp.eq.s32.totalorder %s7, 1
    %p50 = por %p48, %p49
    %p51 = scmp.ne.s32.totalorder %s43, %s46
    %p52 = scmp.eq.s32.totalorder %s7, 0
    %p53 = por %p51, %p52
    %p54 = scmp.ne.s32.totalorder %s43, %s46
    %p55 = scmp.eq.s32.totalorder %s12, 1
    %p56 = por %p54, %p55
    %p57 = scmp.ne.s32.totalorder %s46, %s47
    %p58 = scmp.eq.s32.totalorder %s12, 0
    %p59 = por %p57, %p58
    %p60 = scmp.ne.s32.totalorder %s46, %s47
    %p61 = scmp.eq.s32.totalorder %s13, 1
    %p62 = por %p60, %p61
    %p64 = scmp.ne.s32.totalorder %s47, %s63
    %p65 = scmp.eq.s32.totalorder %s13, 0
    %p66 = por %p64, %p65
    %p67 = scmp.le.s32.totalorder 1, %s7
    %p68 = scmp.lt.s32.totalorder %s7, 3
    %p69 = pnand %p67, %p68
    %p70 = pneg %p69
    // Predicated region
    $region9: #{transformer_block_1.28} parent=5 // pred_check
      _
    $region10: #{transformer_block_1.28} parent=5 // pred_check_branch
      %72 = sbr.rel (%p69) target = $region12
    $region11: #{transformer_block_1.28} parent=5 // pred_region
      %s73 = ssub.s32 %s7, 1
    $region12: #{transformer_block_1.28} parent=5 // pred_fallthru
      _
    %p74 = scmp.lt.s32.totalorder %s7, 2
    // Predicated region
    $region13: #{transformer_block_1.28} parent=5 // pred_check
      %p75 = pneg %p74
    $region14: #{transformer_block_1.28} parent=5 // pred_check_branch
      %77 = sbr.rel (%p75) target = $region16
    $region15: #{transformer_block_1.28} parent=5 // pred_region
      // Predicated region
      $region17: #{transformer_block_1.28} parent=15 // pred_check
        %p78 = pneg %p27
      $region18: #{transformer_block_1.28} parent=15 // pred_check_branch
        %80 = sbr.rel (%p78) target = $region20
      $region19: #{transformer_block_1.28} parent=15 // pred_region
        %p81 = scmp.lt.s32.totalorder %s7, 1
        %s82 = scalar_select %p81, %s7, 1
        %s83 = smul.addr %s82, 2
        %s84 = smul.addr %s83, 8
        %s85 = scalar_lea.vmem %s0, %s84
      $region20: #{transformer_block_1.28} parent=15 // pred_fallthru
        _
    $region16: #{transformer_block_1.28} parent=5 // pred_fallthru
      _
    %p86 = scmp.le.s32.totalorder 1, %s7
    %p87 = scmp.lt.s32.totalorder %s7, 3
    %p88 = pnand %p86, %p87
    %p89 = pneg %p88
    // Predicated region
    $region21: #{transformer_block_1.28} parent=5 // pred_check
      _
    $region22: #{transformer_block_1.28} parent=5 // pred_check_branch
      %91 = sbr.rel (%p88) target = $region24
    $region23: #{transformer_block_1.28} parent=5 // pred_region
      %s92 = ssub.s32 %s7, 1
      %p93 = scmp.lt.s32.totalorder %s12, 1
      %s94 = scalar_select %p93, %s12, 1
      %s95 = smul.addr %s94, 2
      %s96 = smul.addr %s95, 8
      %s97 = scalar_lea.vmem %s0, %s96
      %p98 = pneg %p33
      %p99 = pneg %p30
      %p100 = pneg %p59
      %p101 = pneg %p56
      %p102 = scmp.lt.s32.totalorder %s12, 1
      %s103 = scalar_select %p102, %s12, 1
      %s104 = smul.addr %s103, 2
      %s105 = smul.addr %s104, 8
      %s106 = scalar_lea.vmem %s1, %s105
      %p107 = scmp.lt.s32.totalorder %s12, 1
      %s108 = scalar_select %p107, %s12, 1
      %s109 = smul.addr %s108, 2
      %s110 = smul.addr %s109, 8
      %s111 = scalar_lea.vmem %s0, %s110
      %p112 = scmp.lt.s32.totalorder %s12, 1
      %s113 = scalar_select %p112, %s12, 1
      %s114 = smul.addr %s113, 2
      %s115 = smul.addr %s114, 8
      %s116 = scalar_lea.vmem %s1, %s115
      %v117 = vld [vmem:[%s111] sm:$0xff]
      %v118 = vld [vmem:[%s111 + $0x8] sm:$0xff]
      %v119 = vmul.f32 %v117, %v117
      %v120 = vmul.f32 %v118, %v118
      %vm121 = vcmask 31744
      %v122 = vsel %vm121, %v119, 0.0
      %123 = vadd.xlane.f32.xlu0 %v122
      %v124 = vpop.xlane.xlu0 %123
      %v125 = vsel %vm121, %v120, 0.0
      %126 = vadd.xlane.f32.xlu0 %v125
      %v127 = vpop.xlane.xlu0 %126
      %v128 = vrsqrt.pop %v124
      %v129 = vmul.f32 %v124, %v128
      %vm130 = vcmp.eq.f32.partialorder %v124, inf
      %v131 = vsel %vm130, %v124, %v129
      %vm132 = vcmp.eq.f32.partialorder %v124, 0.0
      %v133 = vand.u32 %v124, 2147483648
      %v134 = vsel %vm132, %v133, %v131
      %v135 = vrsqrt.pop %v127
      %v136 = vmul.f32 %v127, %v135
      %vm137 = vcmp.eq.f32.partialorder %v127, inf
      %v138 = vsel %vm137, %v127, %v136
      %vm139 = vcmp.eq.f32.partialorder %v127, 0.0
      %v140 = vand.u32 %v127, 2147483648
      %v141 = vsel %vm139, %v140, %v138
      %v142 = vmax.f32 %v134, 1e-12
      %v143 = vmax.f32 %v141, 1e-12
      %v144 = vrcp.pop %v142
      %v145 = vmul.f32 %v117, %v144
      %v146 = vrcp.pop %v143
      %v147 = vmul.f32 %v118, %v146
      %v149 = vsel %vm121, %v145, 0
      %v152 = vsel %vm121, %v147, 0
      %154 = vmatprep.subr.mxu0 0.0
      %155 = vmatpush1.xpose.msra.mxu0 0.0
      %156 = vmatprep.subr.mxu0 0.0
      %157 = vmatpush1.xpose.msra.mxu0 0.0
      %158 = vmatprep.subr.mxu0 0.0
      %159 = vmatpush1.xpose.msra.mxu0 0.0
      %160 = vmatprep.subr.mxu0 0.0
      %161 = vmatpush1.xpose.msra.mxu0 0.0
      %162 = vmatprep.subr.mxu0 0.0
      %163 = vmatpush1.xpose.msra.mxu0 0.0
      %164 = vmatprep.subr.mxu0 0.0
      %165 = vmatpush1.xpose.msra.mxu0 0.0
      %166 = vmatprep.subr.mxu0 0.0
      %167 = vmatpush1.xpose.msra.mxu0 0.0
      %168 = vmatprep.subr.mxu0 0.0
      %169 = vmatpush1.xpose.msra.mxu0 0.0
      %170 = vmatprep.subr.mxu0 0.0
      %171 = vmatpush1.xpose.msra.mxu0 0.0
      %172 = vmatprep.subr.mxu0 0.0
      %173 = vmatpush1.xpose.msra.mxu0 0.0
      %174 = vmatprep.subr.mxu0 0.0
      %175 = vmatpush1.xpose.msra.mxu0 0.0
      %176 = vmatprep.subr.mxu0 0.0
      %177 = vmatpush1.xpose.msra.mxu0 0.0
      %178 = vmatprep.subr.mxu0 0.0
      %179 = vmatpush1.xpose.msra.mxu0 0.0
      %180 = vmatprep.subr.mxu0 0.0
      %181 = vmatpush1.xpose.msra.mxu0 0.0
      %182 = vmatprep.subr.mxu0 0.0
      %183 = vmatpush1.xpose.msra.mxu0 %v152
      %184 = vmatprep.subr.mxu0 0.0
      %185 = vmatpush1.xpose.msra.mxu0 %v149
      %186 = vmatprep.subr.mxu0 0.0
      %187 = vmatpush2.xpose.msra.mxu0 0.0
      %188 = vmatprep.subr.mxu0 0.0
      %189 = vmatpush2.xpose.msra.mxu0 0.0
      %190 = vmatprep.subr.mxu0 0.0
      %191 = vmatpush2.xpose.msra.mxu0 0.0
      %192 = vmatprep.subr.mxu0 0.0
      %193 = vmatpush2.xpose.msra.mxu0 0.0
      %194 = vmatprep.subr.mxu0 0.0
      %195 = vmatpush2.xpose.msra.mxu0 0.0
      %196 = vmatprep.subr.mxu0 0.0
      %197 = vmatpush2.xpose.msra.mxu0 0.0
      %198 = vmatprep.subr.mxu0 0.0
      %199 = vmatpush2.xpose.msra.mxu0 0.0
      %200 = vmatprep.subr.mxu0 0.0
      %201 = vmatpush2.xpose.msra.mxu0 0.0
      %202 = vmatprep.subr.mxu0 0.0
      %203 = vmatpush2.xpose.msra.mxu0 0.0
      %204 = vmatprep.subr.mxu0 0.0
      %205 = vmatpush2.xpose.msra.mxu0 0.0
      %206 = vmatprep.subr.mxu0 0.0
      %207 = vmatpush2.xpose.msra.mxu0 0.0
      %208 = vmatprep.subr.mxu0 0.0
      %209 = vmatpush2.xpose.msra.mxu0 0.0
      %210 = vmatprep.subr.mxu0 0.0
      %211 = vmatpush2.xpose.msra.mxu0 0.0
      %212 = vmatprep.subr.mxu0 0.0
      %213 = vmatpush2.xpose.msra.mxu0 0.0
      %214 = vmatprep.subr.mxu0 0.0
      %215 = vmatpush2.xpose.msra.mxu0 0.0
      %216 = vmatprep.subr.mxu0 0.0
      %217 = vmatpush2.xpose.msra.mxu0 0.0
      %218 = vmatprep.mubr.f32.mxu0 0.0
      %219 = vmatmul.mubr.f32.gmra.mxu0 %v149
      %v220 = vpop.f32.mrf.mxu0
      %v221 = vadd.f32 0.0, %v220
      %v222 = vpop.f32.mrf.mxu0
      %223 = vmatprep.mubr.f32.mxu0 0.0
      %224 = vmatmul.mubr.f32.gmra.mxu0 %v152
      %v225 = vpop.f32.mrf.mxu0
      %v226 = vadd.f32 0.0, %v225
      %v227 = vpop.f32.mrf.mxu0
      %228 = vdwg.mxu0
      %vm229 = vcmask 130048
      %v230 = vsel %vm229, %v221, -inf
      %231 = vmax.xlane.f32.xlu0 %v230
      %v232 = vpop.xlane.xlu0 %231
      %v233 = vsel %vm229, %v226, -inf
      %234 = vmax.xlane.f32.xlu0 %v233
      %v235 = vpop.xlane.xlu0 %234
      %v236 = vsub.f32 %v221, %v232
      %v237 = vsub.f32 %v226, %v235
      %v238 = vmul.f32 %v236, 1.442695
      %v239 = vpow.pop %v238
      %v240 = vmul.f32 %v237, 1.442695
      %v241 = vpow.pop %v240
      %v242 = vsel %vm229, %v239, 0.0
      %243 = vadd.xlane.f32.xlu0 %v242
      %v244 = vpop.xlane.xlu0 %243
      %v245 = vsel %vm229, %v241, 0.0
      %246 = vadd.xlane.f32.xlu0 %v245
      %v247 = vpop.xlane.xlu0 %246
      %v248 = vrcp.pop %v244
      %v249 = vmul.f32 %v239, %v248
      %v250 = vrcp.pop %v247
      %v251 = vmul.f32 %v241, %v250
      %252 = vst.msk [vmem:[%s116] sm:$0xff] %vm229, %v249
      %253 = vst.msk [vmem:[%s116 + $0x8] sm:$0xff] %vm229, %v251
      %p254 = scmp.lt.s32.totalorder %s12, 1
      %s255 = scalar_select %p254, %s12, 1
      %s256 = smul.addr %s255, 2
      %s257 = smul.addr %s256, 8
      %s258 = scalar_lea.vmem %s1, %s257
      // Predicated region
      $region25: #{transformer_block_1.28} parent=23 // pred_check
        %p259 = pneg %p56
      $region26: #{transformer_block_1.28} parent=23 // pred_check_branch
        %261 = sbr.rel (%p259) target = $region28
      $region27: #{transformer_block_1.28} parent=23 // pred_region
        _
      $region28: #{transformer_block_1.28} parent=23 // pred_fallthru
        _
    $region24: #{transformer_block_1.28} parent=5 // pred_fallthru
      _
    %p262 = scmp.le.s32.totalorder 2, %s7
    // Predicated region
    $region29: #{transformer_block_1.28} parent=5 // pred_check
      %p263 = pneg %p262
    $region30: #{transformer_block_1.28} parent=5 // pred_check_branch
      %265 = sbr.rel (%p263) target = $region32
    $region31: #{transformer_block_1.28} parent=5 // pred_region
      %s266 = ssub.s32 %s7, 2
      // Predicated region
      $region33: #{transformer_block_1.28} parent=31 // pred_check
        %p267 = pneg %p62
      $region34: #{transformer_block_1.28} parent=31 // pred_check_branch
        %269 = sbr.rel (%p267) target = $region36
      $region35: #{transformer_block_1.28} parent=31 // pred_region
        %p270 = scmp.lt.s32.totalorder %s13, 1
        %s271 = scalar_select %p270, %s13, 1
        %s272 = smul.addr %s271, 2
        %s273 = smul.addr %s272, 8
        %s274 = scalar_lea.vmem %s1, %s273
      $region36: #{transformer_block_1.28} parent=31 // pred_fallthru
        _
    $region32: #{transformer_block_1.28} parent=5 // pred_fallthru
      _
  $region6: #{transformer_block_1.28} parent=0 // loop_footer
    %s11 = sadd.s32 1, %s7
  $region7: #{transformer_block_1.28} parent=0 // loop_footer_branch
    %6 = sbr.rel target = $region3
  $region8: #{transformer_block_1.28} parent=0 // loop_exit
    _

// kernel: transformer_block_1.27
$region0: #{transformer_block_1.27}
  #allocation0 [shape = 'u32[]', space=smem, size = 0x4, offset = 0x4, fixed_abs, tag = 'smem constant byte address 0x4 - core index']
  #allocation1 [shape = 'u32[144,128]{1,0:T(1,128)}', space=vmem, size = 0x12000, scoped, tag = 'internal scratch']
  #allocation2 [shape = 'f32[64,16]{1,0:T(8,128)}', space=vmem, size = 0x8000, scoped, tag = 'scratch operand']
  %s0 = inlined_call_operand.vmem [shape: bf16[2,10,10,48], index: 0, kind: input, shape index: {}]
  %s1 = inlined_call_operand.vmem [shape: bf16[3,3,48,16], index: 1, kind: input, shape index: {}]
  %s2 = inlined_call_operand.vmem [shape: f32[1,16], index: 2, kind: input, shape index: {}]
  %s3 = inlined_call_operand.vmem [shape: bf16[2,8,8,16], index: 3, kind: output, shape index: {}]
  %s4 = sld [smem:[#allocation0]]
  $region53: #{transformer_block_1.27} parent=0
    _
  %s6 = ssub.s32 1, %s4
  %s7 = scalar_select 0, %s6, %s4
  loop: start=0, step=1, limit=4
  $region2: #{transformer_block_1.27} parent=0 // loop_pre_header
    _
  $region3: #{transformer_block_1.27} parent=0 // loop_header
    %s9 = sphi 0, %s13
    %p10 = scmp.ge.s32.totalorder %s9, 4
    %s16 = sphi 0, %s35
    %s17 = sphi 0, %s31
    %s18 = sphi 0, %s27
    %s19 = sphi 0, %s16
    %s20 = sphi 0, %s17
    %s21 = sphi 0, %s18
    %s22 = sphi 0, %s19
    %s23 = sphi 0, %s20
    %s24 = sphi 0, %s21
    %s40 = sphi 0, %s42
    %s43 = sphi 0, %s40
    %s44 = sphi 0, %s43
    %s60 = sphi 0, %s44
    %s68 = sphi 0, %s70
    %s71 = sphi 0, %s68
    %s72 = sphi 0, %s71
    %s88 = sphi 0, %s72
    %s94 = sphi 0, %s96
    %s97 = sphi 0, %s94
    %s98 = sphi 0, %s97
    %s114 = sphi 0, %s98
    %s122 = sphi 0, %s124
    %s125 = sphi 0, %s122
    %s126 = sphi 0, %s125
    %s142 = sphi 0, %s126
  $region4: #{transformer_block_1.27} parent=0 // loop_header_branch
    %12 = sbr.rel (%p10) target = $region8
  $region5: #{transformer_block_1.27} parent=0 // loop_body
    %s14 = ssub.s32 %s9, 1
    %s15 = ssub.s32 %s9, 2
    %s25 = sadd.s32 1, %s18
    %p26 = scmp.ge.s32.totalorder %s25, 1
    %s27 = scalar_select %p26, 0, %s25
    %s28 = sadd.s32 1, %s17
    %s29 = scalar_select %p26, %s28, %s17
    %p30 = scmp.ge.s32.totalorder %s29, 1
    %s31 = scalar_select %p30, 0, %s29
    %s32 = sadd.s32 1, %s16
    %s33 = scalar_select %p30, %s32, %s16
    %p34 = scmp.ge.s32.totalorder %s33, 2
    %s35 = scalar_select %p34, 0, %s33
    %s36 = ssub.s32 %s16, %s35
    %s37 = ssub.s32 %s18, %s27
    %s38 = sor.u32 %s36, %s37
    %p39 = scmp.eq.s32.totalorder %s38, 0
    %s41 = sadd.s32 %s40, 1
    %s42 = scalar_select %p39, %s40, %s41
    %p45 = pneg %p39
    %p46 = scmp.eq.s32.totalorder %s9, 1
    %p47 = por %p45, %p46
    %p48 = scmp.ne.s32.totalorder %s40, %s43
    %p49 = scmp.eq.s32.totalorder %s9, 0
    %p50 = por %p48, %p49
    %p51 = scmp.ne.s32.totalorder %s40, %s43
    %p52 = scmp.eq.s32.totalorder %s14, 1
    %p53 = por %p51, %p52
    %p54 = scmp.ne.s32.totalorder %s43, %s44
    %p55 = scmp.eq.s32.totalorder %s14, 0
    %p56 = por %p54, %p55
    %p57 = scmp.ne.s32.totalorder %s43, %s44
    %p58 = scmp.eq.s32.totalorder %s15, 1
    %p59 = por %p57, %p58
    %p61 = scmp.ne.s32.totalorder %s44, %s60
    %p62 = scmp.eq.s32.totalorder %s15, 0
    %p63 = por %p61, %p62
    %s64 = ssub.s32 %s18, %s27
    %s65 = ssub.s32 %s17, %s31
    %s66 = sor.u32 %s64, %s65
    %p67 = scmp.eq.s32.totalorder %s66, 0
    %s69 = sadd.s32 %s68, 1
    %s70 = scalar_select %p67, %s68, %s69
    %p73 = pneg %p67
    %p74 = scmp.eq.s32.totalorder %s9, 1
    %p75 = por %p73, %p74
    %p76 = scmp.ne.s32.totalorder %s68, %s71
    %p77 = scmp.eq.s32.totalorder %s9, 0
    %p78 = por %p76, %p77
    %p79 = scmp.ne.s32.totalorder %s68, %s71
    %p80 = scmp.eq.s32.totalorder %s14, 1
    %p81 = por %p79, %p80
    %p82 = scmp.ne.s32.totalorder %s71, %s72
    %p83 = scmp.eq.s32.totalorder %s14, 0
    %p84 = por %p82, %p83
    %p85 = scmp.ne.s32.totalorder %s71, %s72
    %p86 = scmp.eq.s32.totalorder %s15, 1
    %p87 = por %p85, %p86
    %p89 = scmp.ne.s32.totalorder %s72, %s88
    %p90 = scmp.eq.s32.totalorder %s15, 0
    %p91 = por %p89, %p90
    %s92 = ssub.s32 %s17, %s31
    %p93 = scmp.eq.s32.totalorder %s92, 0
    %s95 = sadd.s32 %s94, 1
    %s96 = scalar_select %p93, %s94, %s95
    %p99 = pneg %p93
    %p100 = scmp.eq.s32.totalorder %s9, 1
    %p101 = por %p99, %p100
    %p102 = scmp.ne.s32.totalorder %s94, %s97
    %p103 = scmp.eq.s32.totalorder %s9, 0
    %p104 = por %p102, %p103
    %p105 = scmp.ne.s32.totalorder %s94, %s97
    %p106 = scmp.eq.s32.totalorder %s14, 1
    %p107 = por %p105, %p106
    %p108 = scmp.ne.s32.totalorder %s97, %s98
    %p109 = scmp.eq.s32.totalorder %s14, 0
    %p110 = por %p108, %p109
    %p111 = scmp.ne.s32.totalorder %s97, %s98
    %p112 = scmp.eq.s32.totalorder %s15, 1
    %p113 = por %p111, %p112
    %p115 = scmp.ne.s32.totalorder %s98, %s114
    %p116 = scmp.eq.s32.totalorder %s15, 0
    %p117 = por %p115, %p116
    %s118 = ssub.s32 %s16, %s35
    %s119 = ssub.s32 %s17, %s31
    %s120 = sor.u32 %s118, %s119
    %p121 = scmp.eq.s32.totalorder %s120, 0
    %s123 = sadd.s32 %s122, 1
    %s124 = scalar_select %p121, %s122, %s123
    %p127 = pneg %p121
    %p128 = scmp.eq.s32.totalorder %s9, 1
    %p129 = por %p127, %p128
    %p130 = scmp.ne.s32.totalorder %s122, %s125
    %p131 = scmp.eq.s32.totalorder %s9, 0
    %p132 = por %p130, %p131
    %p133 = scmp.ne.s32.totalorder %s122, %s125
    %p134 = scmp.eq.s32.totalorder %s14, 1
    %p135 = por %p133, %p134
    %p136 = scmp.ne.s32.totalorder %s125, %s126
    %p137 = scmp.eq.s32.totalorder %s14, 0
    %p138 = por %p136, %p137
    %p139 = scmp.ne.s32.totalorder %s125, %s126
    %p140 = scmp.eq.s32.totalorder %s15, 1
    %p141 = por %p139, %p140
    %p143 = scmp.ne.s32.totalorder %s126, %s142
    %p144 = scmp.eq.s32.totalorder %s15, 0
    %p145 = por %p143, %p144
    %p146 = scmp.le.s32.totalorder 1, %s9
    %p147 = scmp.lt.s32.totalorder %s9, 3
    %p148 = pnand %p146, %p147
    %p149 = pneg %p148
    // Predicated region
    $region9: #{transformer_block_1.27} parent=5 // pred_check
      _
    $region10: #{transformer_block_1.27} parent=5 // pred_check_branch
      %151 = sbr.rel (%p148) target = $region12
    $region11: #{transformer_block_1.27} parent=5 // pred_region
      %s152 = ssub.s32 %s9, 1
      // Predicated region
      $region13: #{transformer_block_1.27} parent=11 // pred_check
        %p153 = pneg %p84
      $region14: #{transformer_block_1.27} parent=11 // pred_check_branch
        %155 = sbr.rel (%p153) target = $region16
      $region15: #{transformer_block_1.27} parent=11 // pred_region
        %s156 = smul.u32 6, %s21
        %p157 = scmp.lt.s32.totalorder %s156, 5
        %s158 = scalar_select %p157, %s156, 5
        %p159 = scmp.lt.s32.totalorder %s20, 0
        %s160 = scalar_select %p159, %s20, 0
        %s161 = sadd.s32 %s160, %s158
        %s162 = smul.addr %s161, 4
        %s163 = scalar_lea.vmem %s1, %s162
        %s164 = smul.u32 6, %s21
      $region16: #{transformer_block_1.27} parent=11 // pred_fallthru
        _
      // Predicated region
      $region17: #{transformer_block_1.27} parent=11 // pred_check
        %p165 = pneg %p110
      $region18: #{transformer_block_1.27} parent=11 // pred_check_branch
        %167 = sbr.rel (%p165) target = $region20
      $region19: #{transformer_block_1.27} parent=11 // pred_region
        %p168 = scmp.lt.s32.totalorder %s20, 0
        %s169 = scalar_select %p168, %s20, 0
        %s170 = scalar_lea.vmem %s2, %s169
      $region20: #{transformer_block_1.27} parent=11 // pred_fallthru
        _
    $region12: #{transformer_block_1.27} parent=5 // pred_fallthru
      _
    %p171 = scmp.lt.s32.totalorder %s9, 2
    // Predicated region
    $region21: #{transformer_block_1.27} parent=5 // pred_check
      %p172 = pneg %p171
    $region22: #{transformer_block_1.27} parent=5 // pred_check_branch
      %174 = sbr.rel (%p172) target = $region24
    $region23: #{transformer_block_1.27} parent=5 // pred_region
      // Predicated region
      $region25: #{transformer_block_1.27} parent=23 // pred_check
        %p175 = pneg %p50
      $region26: #{transformer_block_1.27} parent=23 // pred_check_branch
        %177 = sbr.rel (%p175) target = $region28
      $region27: #{transformer_block_1.27} parent=23 // pred_region
        %p178 = scmp.lt.s32.totalorder %s16, 1
        %s179 = scalar_select %p178, %s16, 1
        %p180 = scmp.lt.s32.totalorder %s18, 0
        %s181 = scalar_select %p180, %s18, 0
        %s182 = smul.addr %s179, 20
        %s183 = sadd.s32 %s181, %s182
        %s184 = smul.addr %s183, 4
        %s185 = scalar_lea.vmem %s0, %s184
      $region28: #{transformer_block_1.27} parent=23 // pred_fallthru
        _
    $region24: #{transformer_block_1.27} parent=5 // pred_fallthru
      _
    %p186 = scmp.le.s32.totalorder 1, %s9
    %p187 = scmp.lt.s32.totalorder %s9, 3
    %p188 = pnand %p186, %p187
    %p189 = pneg %p188
    // Predicated region
    $region29: #{transformer_block_1.27} parent=5 // pred_check
      _
    $region30: #{transformer_block_1.27} parent=5 // pred_check_branch
      %191 = sbr.rel (%p188) target = $region32
    $region31: #{transformer_block_1.27} parent=5 // pred_region
      %s192 = ssub.s32 %s9, 1
      %p193 = scmp.lt.s32.totalorder %s19, 1
      %s194 = scalar_select %p193, %s19, 1
      %p195 = scmp.lt.s32.totalorder %s21, 0
      %s196 = scalar_select %p195, %s21, 0
      %s197 = smul.addr %s194, 20
      %s198 = sadd.s32 %s196, %s197
      %s199 = smul.addr %s198, 4
      %s200 = scalar_lea.vmem %s0, %s199
      %p201 = pneg %p56
      %p202 = pneg %p53
      %s203 = smul.u32 6, %s21
      %p204 = scmp.lt.s32.totalorder %s203, 5
      %s205 = scalar_select %p204, %s203, 5
      %p206 = scmp.lt.s32.totalorder %s20, 0
      %s207 = scalar_select %p206, %s20, 0
      %s208 = sadd.s32 %s207, %s205
      %s209 = smul.addr %s208, 4
      %s210 = scalar_lea.vmem %s1, %s209
      %p211 = pneg %p84
      %p212 = pneg %p81
      %p213 = scmp.lt.s32.totalorder %s20, 0
      %s214 = scalar_select %p213, %s20, 0
      %s215 = scalar_lea.vmem %s2, %s214
      %p216 = pneg %p110
      %p217 = pneg %p107
      %p218 = pneg %p138
      %p219 = pneg %p135
      %p220 = scmp.lt.s32.totalorder %s19, 1
      %s221 = scalar_select %p220, %s19, 1
      %p222 = scmp.lt.s32.totalorder %s20, 0
      %s223 = scalar_select %p222, %s20, 0
      %s224 = smul.addr %s221, 8
      %s225 = sadd.s32 %s223, %s224
      %s226 = smul.addr %s225, 4
      %s227 = scalar_lea.vmem %s3, %s226
      %p228 = scmp.lt.s32.totalorder %s19, 1
      %s229 = scalar_select %p228, %s19, 1
      %p230 = scmp.lt.s32.totalorder %s21, 0
      %s231 = scalar_select %p230, %s21, 0
      %s232 = smul.addr %s229, 20
      %s233 = sadd.s32 %s231, %s232
      %s234 = smul.addr %s233, 4
      %s235 = scalar_lea.vmem %s0, %s234
      %s236 = smul.u32 6, %s21
      %p237 = scmp.lt.s32.totalorder %s236, 5
      %s238 = scalar_select %p237, %s236, 5
      %p239 = scmp.lt.s32.totalorder %s20, 0
      %s240 = scalar_select %p239, %s20, 0
      %s241 = sadd.s32 %s240, %s238
      %s242 = smul.addr %s241, 4
      %s243 = scalar_lea.vmem %s1, %s242
      %s244 = smul.u32 6, %s21
      %p245 = scmp.lt.s32.totalorder %s20, 0
      %s246 = scalar_select %p245, %s20, 0
      %s247 = scalar_lea.vmem %s2, %s246
      %p248 = scmp.lt.s32.totalorder %s19, 1
      %s249 = scalar_select %p248, %s19, 1
      %p250 = scmp.lt.s32.totalorder %s20, 0
      %s251 = scalar_select %p250, %s20, 0
      %s252 = smul.addr %s249, 8
      %s253 = sadd.s32 %s251, %s252
      %s254 = smul.addr %s253, 4
      %s255 = scalar_lea.vmem %s3, %s254
      %p257 = scmp.eq.s32.totalorder %s21, 0
      // Predicated region
      $region33: #{transformer_block_1.27} parent=31 // pred_check
        %p258 = pneg %p257
      $region34: #{transformer_block_1.27} parent=31 // pred_check_branch
        %260 = sbr.rel (%p258) target = $region36
      $region35: #{transformer_block_1.27} parent=31 // pred_region
        %vm261 = vcmask 130048
        %262 = vst.msk [vmem:[#allocation2] sm:$0xff] %vm261, 0.0
        %263 = vst.msk [vmem:[#allocation2 + $0x8] sm:$0xff] %vm261, 0.0
        %264 = vst.msk [vmem:[#allocation2 + $0x10] sm:$0xff] %vm261, 0.0
        %265 = vst.msk [vmem:[#allocation2 + $0x18] sm:$0xff] %vm261, 0.0
        %266 = vst.msk [vmem:[#allocation2 + $0x20] sm:$0xff] %vm261, 0.0
        %267 = vst.msk [vmem:[#allocation2 + $0x28] sm:$0xff] %vm261, 0.0
        %268 = vst.msk [vmem:[#allocation2 + $0x30] sm:$0xff] %vm261, 0.0
        %269 = vst.msk [vmem:[#allocation2 + $0x38] sm:$0xff] %vm261, 0.0
      $region36: #{transformer_block_1.27} parent=31 // pred_fallthru
        _
      %v270 = vld [vmem:[%s235] sm:$0xf]
      %v271 = vld [vmem:[%s235 + $0x8] sm:$0xf]
      %v272 = vld [vmem:[%s235 + $0x10] sm:$0xf]
      %v273 = vld [vmem:[%s235 + $0x18] sm:$0xf]
      %v274 = vld [vmem:[%s235 + $0x20] sm:$0xf]
      %v275 = vld [vmem:[%s235 + $0x28] sm:$0xf]
      %v276 = vld [vmem:[%s235 + $0x30] sm:$0xf]
      %v277 = vld [vmem:[%s235 + $0x38] sm:$0xf]
      %v278 = vld [vmem:[#allocation2] sm:$0xff]
      %v279 = vld [vmem:[#allocation2 + $0x8] sm:$0xff]
      %v280 = vld [vmem:[#allocation2 + $0x10] sm:$0xff]
      %v281 = vld [vmem:[#allocation2 + $0x18] sm:$0xff]
      %v282 = vld [vmem:[#allocation2 + $0x20] sm:$0xff]
      %v283 = vld [vmem:[#allocation2 + $0x28] sm:$0xff]
      %v284 = vld [vmem:[#allocation2 + $0x30] sm:$0xff]
      %v285 = vld [vmem:[#allocation2 + $0x38] sm:$0xff]
      %v286 = vld [vmem:[%s243] sm:$0xf]
      %v287 = vld [vmem:[%s243 + $0x4] sm:$0xf]
      %v288 = vld [vmem:[%s243 + $0x8] sm:$0xf]
      %v289 = vld [vmem:[%s243 + $0xc] sm:$0xf]
      %v290 = vld [vmem:[%s243 + $0x10] sm:$0xf]
      %v291 = vld [vmem:[%s243 + $0x14] sm:$0xf]
      %v300 = vunpack.c.l.b16 %v270
      %v301 = vunpack.c.l.b16 %v271
      %v302 = vunpack.c.l.b16 %v272
      %v303 = vunpack.c.l.b16 %v273
      %v304 = vunpack.c.l.b16 %v274
      %v305 = vunpack.c.l.b16 %v275
      %v306 = vunpack.c.l.b16 %v276
      %v307 = vunpack.c.l.b16 %v277
      %v308 = vpack.c.b16 %v301, %v300
      %v309 = vpack.c.b16 %v303, %v302
      %v310 = vpack.c.b16 %v305, %v304
      %v311 = vpack.c.b16 %v307, %v306
      %v318 = vunpack.c.l.b16 %v286
      %v319 = vunpack.c.l.b16 %v287
      %v320 = vunpack.c.l.b16 %v288
      %v321 = vunpack.c.l.b16 %v289
      %v322 = vunpack.c.l.b16 %v290
      %v323 = vunpack.c.l.b16 %v291
      %v324 = vpack.c.b16 %v319, %v318
      %v325 = vpack.c.b16 %v321, %v320
      %v326 = vpack.c.b16 %v323, %v322
      %vm330 = vcmask 392192
      %v332 = vsel %vm330, %v308, 0
      %v335 = vsel %vm330, %v309, 0
      %v338 = vsel %vm330, %v310, 0
      %v341 = vsel %vm330, %v311, 0
      %343 = vmatprep.subr.bf16.mxu0 0
      %344 = vmatpush1.bf16.msra.mxu0 0
      %345 = vmatprep.subr.bf16.mxu0 0
      %346 = vmatpush1.bf16.msra.mxu0 0
      %347 = vmatprep.subr.bf16.mxu0 0
      %348 = vmatpush1.bf16.msra.mxu0 0
      %349 = vmatprep.subr.bf16.mxu0 0
      %350 = vmatpush1.bf16.msra.mxu0 0
      %351 = vmatprep.subr.bf16.mxu0 0
      %352 = vmatpush1.bf16.msra.mxu0 0
      %353 = vmatprep.subr.bf16.mxu0 0
      %354 = vmatpush1.bf16.msra.mxu0 %v326
      %355 = vmatprep.subr.bf16.mxu0 0
      %356 = vmatpush1.bf16.msra.mxu0 %v325
      %357 = vmatprep.subr.bf16.mxu0 0
      %358 = vmatpush1.bf16.msra.mxu0 %v324
      %359 = vmatprep.subr.bf16.mxu0 0
      %360 = vmatpush2.bf16.msra.mxu0 0
      %361 = vmatprep.subr.bf16.mxu0 0
      %362 = vmatpush2.bf16.msra.mxu0 0
      %363 = vmatprep.subr.bf16.mxu0 0
      %364 = vmatpush2.bf16.msra.mxu0 0
      %365 = vmatprep.subr.bf16.mxu0 0
      %366 = vmatpush2.bf16.msra.mxu0 0
      %367 = vmatprep.subr.bf16.mxu0 0
      %368 = vmatpush2.bf16.msra.mxu0 0
      %369 = vmatprep.subr.bf16.mxu0 0
      %370 = vmatpush2.bf16.msra.mxu0 0
      %371 = vmatprep.subr.bf16.mxu0 0
      %372 = vmatpush2.bf16.msra.mxu0 0
      %373 = vmatprep.subr.bf16.mxu0 0
      %374 = vmatpush2.bf16.msra.mxu0 0
      %375 = vmatprep.mubr.bf16.mxu0 0
      %376 = vmatmul.mubr.bf16.gmra.mxu0 %v332
      %v377 = vpop.f32.mrf.mxu0
      %v378 = vadd.f32 0.0, %v377
      %v379 = vpop.f32.mrf.mxu0
      %v380 = vpop.f32.mrf.mxu0
      %v381 = vadd.f32 0.0, %v380
      %v382 = vpop.f32.mrf.mxu0
      %383 = vmatprep.mubr.bf16.mxu0 0
      %384 = vmatmul.mubr.bf16.gmra.mxu0 %v335
      %v385 = vpop.f32.mrf.mxu0
      %v386 = vadd.f32 0.0, %v385
      %v387 = vpop.f32.mrf.mxu0
      %v388 = vpop.f32.mrf.mxu0
      %v389 = vadd.f32 0.0, %v388
      %v390 = vpop.f32.mrf.mxu0
      %391 = vmatprep.mubr.bf16.mxu0 0
      %392 = vmatmul.mubr.bf16.gmra.mxu0 %v338
      %v393 = vpop.f32.mrf.mxu0
      %v394 = vadd.f32 0.0, %v393
      %v395 = vpop.f32.mrf.mxu0
      %v396 = vpop.f32.mrf.mxu0
      %v397 = vadd.f32 0.0, %v396
      %v398 = vpop.f32.mrf.mxu0
      %399 = vmatprep.mubr.bf16.mxu0 0
      %400 = vmatmul.mubr.bf16.gmra.mxu0 %v341
      %v401 = vpop.f32.mrf.mxu0
      %v402 = vadd.f32 0.0, %v401
      %v403 = vpop.f32.mrf.mxu0
      %v404 = vpop.f32.mrf.mxu0
      %v405 = vadd.f32 0.0, %v404
      %v406 = vpop.f32.mrf.mxu0
      %407 = vdwg.mxu0
      %v408 = vadd.f32 %v278, %v378
      %v409 = vadd.f32 %v279, %v381
      %v410 = vadd.f32 %v280, %v386
      %v411 = vadd.f32 %v281, %v389
      %v412 = vadd.f32 %v282, %v394
      %v413 = vadd.f32 %v283, %v397
      %v414 = vadd.f32 %v284, %v402
      %v415 = vadd.f32 %v285, %v405
      %vm416 = vcmask 130048
      %417 = vst.msk [vmem:[#allocation2] sm:$0xff] %vm416, %v408
      %418 = vst.msk [vmem:[#allocation2 + $0x8] sm:$0xff] %vm416, %v409
      %419 = vst.msk [vmem:[#allocation2 + $0x10] sm:$0xff] %vm416, %v410
      %420 = vst.msk [vmem:[#allocation2 + $0x18] sm:$0xff] %vm416, %v411
      %421 = vst.msk [vmem:[#allocation2 + $0x20] sm:$0xff] %vm416, %v412
      %422 = vst.msk [vmem:[#allocation2 + $0x28] sm:$0xff] %vm416, %v413
      %423 = vst.msk [vmem:[#allocation2 + $0x30] sm:$0xff] %vm416, %v414
      %424 = vst.msk [vmem:[#allocation2 + $0x38] sm:$0xff] %vm416, %v415
      %v425 = vld [vmem:[%s235] sm:$0xf]
      %v426 = vld [vmem:[%s235 + $0x4] sm:$0x1]
      %v427 = vld [vmem:[%s235 + $0x8] sm:$0xf]
      %v428 = vld [vmem:[%s235 + $0xc] sm:$0x1]
      %v429 = vld [vmem:[%s235 + $0x10] sm:$0xf]
      %v430 = vld [vmem:[%s235 + $0x14] sm:$0x1]
      %v431 = vld [vmem:[%s235 + $0x18] sm:$0xf]
      %v432 = vld [vmem:[%s235 + $0x1c] sm:$0x1]
      %v433 = vld [vmem:[%s235 + $0x20] sm:$0xf]
      %v434 = vld [vmem:[%s235 + $0x24] sm:$0x1]
      %v435 = vld [vmem:[%s235 + $0x28] sm:$0xf]
      %v436 = vld [vmem:[%s235 + $0x2c] sm:$0x1]
      %v437 = vld [vmem:[%s235 + $0x30] sm:$0xf]
      %v438 = vld [vmem:[%s235 + $0x34] sm:$0x1]
      %v439 = vld [vmem:[%s235 + $0x38] sm:$0xf]
      %v440 = vld [vmem:[%s235 + $0x3c] sm:$0x1]
      %vm441 = vsmask.f32 3328
      %vm442 = vsmask.f32 7440
      %vm443 = vmor %vm441, %vm442
      %v445 = vshrl.u32 %v425, 16
      %v447 = vrot.slane %v445, 4
      %v448 = vshll.u32 %v425, 16
      %v450 = vrot.slane %v448, 5
      %v451 = vor.u32 %v447, %v450
      %v452 = vrot.slane %v451, 4
      %v454 = vshll.u32 %v426, 16
      %v456 = vrot.slane %v454, 5
      %v457 = vsel %vm443, %v452, %v456
      %v459 = vshrl.u32 %v427, 16
      %v461 = vrot.slane %v459, 4
      %v462 = vshll.u32 %v427, 16
      %v464 = vrot.slane %v462, 5
      %v465 = vor.u32 %v461, %v464
      %v466 = vrot.slane %v465, 4
      %v468 = vshll.u32 %v428, 16
      %v470 = vrot.slane %v468, 5
      %v471 = vsel %vm443, %v466, %v470
      %v473 = vshrl.u32 %v429, 16
      %v475 = vrot.slane %v473, 4
      %v476 = vshll.u32 %v429, 16
      %v478 = vrot.slane %v476, 5
      %v479 = vor.u32 %v475, %v478
      %v480 = vrot.slane %v479, 4
      %v482 = vshll.u32 %v430, 16
      %v484 = vrot.slane %v482, 5
      %v485 = vsel %vm443, %v480, %v484
      %v487 = vshrl.u32 %v431, 16
      %v489 = vrot.slane %v487, 4
      %v490 = vshll.u32 %v431, 16
      %v492 = vrot.slane %v490, 5
      %v493 = vor.u32 %v489, %v492
      %v494 = vrot.slane %v493, 4
      %v496 = vshll.u32 %v432, 16
      %v498 = vrot.slane %v496, 5
      %v499 = vsel %vm443, %v494, %v498
      %v501 = vshrl.u32 %v433, 16
      %v503 = vrot.slane %v501, 4
      %v504 = vshll.u32 %v433, 16
      %v506 = vrot.slane %v504, 5
      %v507 = vor.u32 %v503, %v506
      %v508 = vrot.slane %v507, 4
      %v510 = vshll.u32 %v434, 16
      %v512 = vrot.slane %v510, 5
      %v513 = vsel %vm443, %v508, %v512
      %v515 = vshrl.u32 %v435, 16
      %v517 = vrot.slane %v515, 4
      %v518 = vshll.u32 %v435, 16
      %v520 = vrot.slane %v518, 5
      %v521 = vor.u32 %v517, %v520
      %v522 = vrot.slane %v521, 4
      %v524 = vshll.u32 %v436, 16
      %v526 = vrot.slane %v524, 5
      %v527 = vsel %vm443, %v522, %v526
      %v529 = vshrl.u32 %v437, 16
      %v531 = vrot.slane %v529, 4
      %v532 = vshll.u32 %v437, 16
      %v534 = vrot.slane %v532, 5
      %v535 = vor.u32 %v531, %v534
      %v536 = vrot.slane %v535, 4
      %v538 = vshll.u32 %v438, 16
      %v540 = vrot.slane %v538, 5
      %v541 = vsel %vm443, %v536, %v540
      %v543 = vshrl.u32 %v439, 16
      %v545 = vrot.slane %v543, 4
      %v546 = vshll.u32 %v439, 16
      %v548 = vrot.slane %v546, 5
      %v549 = vor.u32 %v545, %v548
      %v550 = vrot.slane %v549, 4
      %v552 = vshll.u32 %v440, 16
      %v554 = vrot.slane %v552, 5
      %v555 = vsel %vm443, %v550, %v554
      %v556 = vld [vmem:[#allocation2] sm:$0xff]
      %v557 = vld [vmem:[#allocation2 + $0x8] sm:$0xff]
      %v558 = vld [vmem:[#allocation2 + $0x10] sm:$0xff]
      %v559 = vld [vmem:[#allocation2 + $0x18] sm:$0xff]
      %v560 = vld [vmem:[#allocation2 + $0x20] sm:$0xff]
      %v561 = vld [vmem:[#allocation2 + $0x28] sm:$0xff]
      %v562 = vld [vmem:[#allocation2 + $0x30] sm:$0xff]
      %v563 = vld [vmem:[#allocation2 + $0x38] sm:$0xff]
      %s564 = scalar_lea.vmem %s243, 24
      %v565 = vld [vmem:[%s564] sm:$0xf]
      %v566 = vld [vmem:[%s564 + $0x4] sm:$0xf]
      %v567 = vld [vmem:[%s564 + $0x8] sm:$0xf]
      %v568 = vld [vmem:[%s564 + $0xc] sm:$0xf]
      %v569 = vld [vmem:[%s564 + $0x10] sm:$0xf]
      %v570 = vld [vmem:[%s564 + $0x14] sm:$0xf]
      %v571 = vunpack.c.l.b16 %v457
      %v572 = vunpack.c.l.b16 %v471
      %v573 = vunpack.c.l.b16 %v485
      %v574 = vunpack.c.l.b16 %v499
      %v575 = vunpack.c.l.b16 %v513
      %v576 = vunpack.c.l.b16 %v527
      %v577 = vunpack.c.l.b16 %v541
      %v578 = vunpack.c.l.b16 %v555
      %v579 = vpack.c.b16 %v572, %v571
      %v580 = vpack.c.b16 %v574, %v573
      %v581 = vpack.c.b16 %v576, %v575
      %v582 = vpack.c.b16 %v578, %v577
      %v589 = vunpack.c.l.b16 %v565
      %v590 = vunpack.c.l.b16 %v566
      %v591 = vunpack.c.l.b16 %v567
      %v592 = vunpack.c.l.b16 %v568
      %v593 = vunpack.c.l.b16 %v569
      %v594 = vunpack.c.l.b16 %v570
      %v595 = vpack.c.b16 %v590, %v589
      %v596 = vpack.c.b16 %v592, %v591
      %v597 = vpack.c.b16 %v594, %v593
      %v602 = vsel %vm330, %v579, 0
      %v605 = vsel %vm330, %v580, 0
      %v608 = vsel %vm330, %v581, 0
      %v611 = vsel %vm330, %v582, 0
      %613 = vmatprep.subr.bf16.mxu0 0
      %614 = vmatpush1.bf16.msra.mxu0 0
      %615 = vmatprep.subr.bf16.mxu0 0
      %616 = vmatpush1.bf16.msra.mxu0 0
      %617 = vmatprep.subr.bf16.mxu0 0
      %618 = vmatpush1.bf16.msra.mxu0 0
      %619 = vmatprep.subr.bf16.mxu0 0
      %620 = vmatpush1.bf16.msra.mxu0 0
      %621 = vmatprep.subr.bf16.mxu0 0
      %622 = vmatpush1.bf16.msra.mxu0 0
      %623 = vmatprep.subr.bf16.mxu0 0
      %624 = vmatpush1.bf16.msra.mxu0 %v597
      %625 = vmatprep.subr.bf16.mxu0 0
      %626 = vmatpush1.bf16.msra.mxu0 %v596
      %627 = vmatprep.subr.bf16.mxu0 0
      %628 = vmatpush1.bf16.msra.mxu0 %v595
      %629 = vmatprep.subr.bf16.mxu0 0
      %630 = vmatpush2.bf16.msra.mxu0 0
      %631 = vmatprep.subr.bf16.mxu0 0
      %632 = vmatpush2.bf16.msra.mxu0 0
      %633 = vmatprep.subr.bf16.mxu0 0
      %634 = vmatpush2.bf16.msra.mxu0 0
      %635 = vmatprep.subr.bf16.mxu0 0
      %636 = vmatpush2.bf16.msra.mxu0 0
      %637 = vmatprep.subr.bf16.mxu0 0
      %638 = vmatpush2.bf16.msra.mxu0 0
      %639 = vmatprep.subr.bf16.mxu0 0
      %640 = vmatpush2.bf16.msra.mxu0 0
      %641 = vmatprep.subr.bf16.mxu0 0
      %642 = vmatpush2.bf16.msra.mxu0 0
      %643 = vmatprep.subr.bf16.mxu0 0
      %644 = vmatpush2.bf16.msra.mxu0 0
      %645 = vmatprep.mubr.bf16.mxu0 0
      %646 = vmatmul.mubr.bf16.gmra.mxu0 %v602
      %v647 = vpop.f32.mrf.mxu0
      %v648 = vadd.f32 0.0, %v647
      %v649 = vpop.f32.mrf.mxu0
      %v650 = vpop.f32.mrf.mxu0
      %v651 = vadd.f32 0.0, %v650
      %v652 = vpop.f32.mrf.mxu0
      %653 = vmatprep.mubr.bf16.mxu0 0
      %654 = vmatmul.mubr.bf16.gmra.mxu0 %v605
      %v655 = vpop.f32.mrf.mxu0
      %v656 = vadd.f32 0.0, %v655
      %v657 = vpop.f32.mrf.mxu0
      %v658 = vpop.f32.mrf.mxu0
      %v659 = vadd.f32 0.0, %v658
      %v660 = vpop.f32.mrf.mxu0
      %661 = vmatprep.mubr.bf16.mxu0 0
      %662 = vmatmul.mubr.bf16.gmra.mxu0 %v608
      %v663 = vpop.f32.mrf.mxu0
      %v664 = vadd.f32 0.0, %v663
      %v665 = vpop.f32.mrf.mxu0
      %v666 = vpop.f32.mrf.mxu0
      %v667 = vadd.f32 0.0, %v666
      %v668 = vpop.f32.mrf.mxu0
      %669 = vmatprep.mubr.bf16.mxu0 0
      %670 = vmatmul.mubr.bf16.gmra.mxu0 %v611
      %v671 = vpop.f32.mrf.mxu0
      %v672 = vadd.f32 0.0, %v671
      %v673 = vpop.f32.mrf.mxu0
      %v674 = vpop.f32.mrf.mxu0
      %v675 = vadd.f32 0.0, %v674
      %v676 = vpop.f32.mrf.mxu0
      %677 = vdwg.mxu0
      %v678 = vadd.f32 %v556, %v648
      %v679 = vadd.f32 %v557, %v651
      %v680 = vadd.f32 %v558, %v656
      %v681 = vadd.f32 %v559, %v659
      %v682 = vadd.f32 %v560, %v664
      %v683 = vadd.f32 %v561, %v667
      %v684 = vadd.f32 %v562, %v672
      %v685 = vadd.f32 %v563, %v675
      %686 = vst.msk [vmem:[#allocation2] sm:$0xff] %vm416, %v678
      %687 = vst.msk [vmem:[#allocation2 + $0x8] sm:$0xff] %vm416, %v679
      %688 = vst.msk [vmem:[#allocation2 + $0x10] sm:$0xff] %vm416, %v680
      %689 = vst.msk [vmem:[#allocation2 + $0x18] sm:$0xff] %vm416, %v681
      %690 = vst.msk [vmem:[#allocation2 + $0x20] sm:$0xff] %vm416, %v682
      %691 = vst.msk [vmem:[#allocation2 + $0x28] sm:$0xff] %vm416, %v683
      %692 = vst.msk [vmem:[#allocation2 + $0x30] sm:$0xff] %vm416, %v684
      %693 = vst.msk [vmem:[#allocation2 + $0x38] sm:$0xff] %vm416, %v685
      %v694 = vld [vmem:[%s235] sm:$0xe]
      %v695 = vld [vmem:[%s235 + $0x4] sm:$0x1]
      %v696 = vld [vmem:[%s235 + $0x8] sm:$0xe]
      %v697 = vld [vmem:[%s235 + $0xc] sm:$0x1]
      %v698 = vld [vmem:[%s235 + $0x10] sm:$0xe]
      %v699 = vld [vmem:[%s235 + $0x14] sm:$0x1]
      %v700 = vld [vmem:[%s235 + $0x18] sm:$0xe]
      %v701 = vld [vmem:[%s235 + $0x1c] sm:$0x1]
      %v702 = vld [vmem:[%s235 + $0x20] sm:$0xe]
      %v703 = vld [vmem:[%s235 + $0x24] sm:$0x1]
      %v704 = vld [vmem:[%s235 + $0x28] sm:$0xe]
      %v705 = vld [vmem:[%s235 + $0x2c] sm:$0x1]
      %v706 = vld [vmem:[%s235 + $0x30] sm:$0xe]
      %v707 = vld [vmem:[%s235 + $0x34] sm:$0x1]
      %v708 = vld [vmem:[%s235 + $0x38] sm:$0xe]
      %v709 = vld [vmem:[%s235 + $0x3c] sm:$0x1]
      %vm726 = vcmask 1042432
      %vm727 = vcmask 1046532
      %vm728 = vmor %vm726, %vm727
      %v729 = vrot.slane %v694, 5
      %v730 = vrot.slane %v729, 4
      %v731 = vrot.slane %v695, 5
      %v732 = vsel %vm728, %v730, %v731
      %v733 = vrot.slane %v696, 5
      %v734 = vrot.slane %v733, 4
      %v735 = vrot.slane %v697, 5
      %v736 = vsel %vm728, %v734, %v735
      %v737 = vrot.slane %v698, 5
      %v738 = vrot.slane %v737, 4
      %v739 = vrot.slane %v699, 5
      %v740 = vsel %vm728, %v738, %v739
      %v741 = vrot.slane %v700, 5
      %v742 = vrot.slane %v741, 4
      %v743 = vrot.slane %v701, 5
      %v744 = vsel %vm728, %v742, %v743
      %v745 = vrot.slane %v702, 5
      %v746 = vrot.slane %v745, 4
      %v747 = vrot.slane %v703, 5
      %v748 = vsel %vm728, %v746, %v747
      %v749 = vrot.slane %v704, 5
      %v750 = vrot.slane %v749, 4
      %v751 = vrot.slane %v705, 5
      %v752 = vsel %vm728, %v750, %v751
      %v753 = vrot.slane %v706, 5
      %v754 = vrot.slane %v753, 4
      %v755 = vrot.slane %v707, 5
      %v756 = vsel %vm728, %v754, %v755
      %v757 = vrot.slane %v708, 5
      %v758 = vrot.slane %v757, 4
      %v759 = vrot.slane %v709, 5
      %v760 = vsel %vm728, %v758, %v759
      %v761 = vld [vmem:[#allocation2] sm:$0xff]
      %v762 = vld [vmem:[#allocation2 + $0x8] sm:$0xff]
      %v763 = vld [vmem:[#allocation2 + $0x10] sm:$0xff]
      %v764 = vld [vmem:[#allocation2 + $0x18] sm:$0xff]
      %v765 = vld [vmem:[#allocation2 + $0x20] sm:$0xff]
      %v766 = vld [vmem:[#allocation2 + $0x28] sm:$0xff]
      %v767 = vld [vmem:[#allocation2 + $0x30] sm:$0xff]
      %v768 = vld [vmem:[#allocation2 + $0x38] sm:$0xff]
      %s769 = scalar_lea.vmem %s243, 48
      %v770 = vld [vmem:[%s769] sm:$0xf]
      %v771 = vld [vmem:[%s769 + $0x4] sm:$0xf]
      %v772 = vld [vmem:[%s769 + $0x8] sm:$0xf]
      %v773 = vld [vmem:[%s769 + $0xc] sm:$0xf]
      %v774 = vld [vmem:[%s769 + $0x10] sm:$0xf]
      %v775 = vld [vmem:[%s769 + $0x14] sm:$0xf]
      %v776 = vunpack.c.l.b16 %v732
      %v777 = vunpack.c.l.b16 %v736
      %v778 = vunpack.c.l.b16 %v740
      %v779 = vunpack.c.l.b16 %v744
      %v780 = vunpack.c.l.b16 %v748
      %v781 = vunpack.c.l.b16 %v752
      %v782 = vunpack.c.l.b16 %v756
      %v783 = vunpack.c.l.b16 %v760
      %v784 = vpack.c.b16 %v777, %v776
      %v785 = vpack.c.b16 %v779, %v778
      %v786 = vpack.c.b16 %v781, %v780
      %v787 = vpack.c.b16 %v783, %v782
      %v794 = vunpack.c.l.b16 %v770
      %v795 = vunpack.c.l.b16 %v771
      %v796 = vunpack.c.l.b16 %v772
      %v797 = vunpack.c.l.b16 %v773
      %v798 = vunpack.c.l.b16 %v774
      %v799 = vunpack.c.l.b16 %v775
      %v800 = vpack.c.b16 %v795, %v794
      %v801 = vpack.c.b16 %v797, %v796
      %v802 = vpack.c.b16 %v799, %v798
      %v807 = vsel %vm330, %v784, 0
      %v810 = vsel %vm330, %v785, 0
      %v813 = vsel %vm330, %v786, 0
      %v816 = vsel %vm330, %v787, 0
      %818 = vmatprep.subr.bf16.mxu0 0
      %819 = vmatpush1.bf16.msra.mxu0 0
      %820 = vmatprep.subr.bf16.mxu0 0
      %821 = vmatpush1.bf16.msra.mxu0 0
      %822 = vmatprep.subr.bf16.mxu0 0
      %823 = vmatpush1.bf16.msra.mxu0 0
      %824 = vmatprep.subr.bf16.mxu0 0
      %825 = vmatpush1.bf16.msra.mxu0 0
      %826 = vmatprep.subr.bf16.mxu0 0
      %827 = vmatpush1.bf16.msra.mxu0 0
      %828 = vmatprep.subr.bf16.mxu0 0
      %829 = vmatpush1.bf16.msra.mxu0 %v802
      %830 = vmatprep.subr.bf16.mxu0 0
      %831 = vmatpush1.bf16.msra.mxu0 %v801
      %832 = vmatprep.subr.bf16.mxu0 0
      %833 = vmatpush1.bf16.msra.mxu0 %v800
      %834 = vmatprep.subr.bf16.mxu0 0
      %835 = vmatpush2.bf16.msra.mxu0 0
      %836 = vmatprep.subr.bf16.mxu0 0
      %837 = vmatpush2.bf16.msra.mxu0 0
      %838 = vmatprep.subr.bf16.mxu0 0
      %839 = vmatpush2.bf16.msra.mxu0 0
      %840 = vmatprep.subr.bf16.mxu0 0
      %841 = vmatpush2.bf16.msra.mxu0 0
      %842 = vmatprep.subr.bf16.mxu0 0
      %843 = vmatpush2.bf16.msra.mxu0 0
      %844 = vmatprep.subr.bf16.mxu0 0
      %845 = vmatpush2.bf16.msra.mxu0 0
      %846 = vmatprep.subr.bf16.mxu0 0
      %847 = vmatpush2.bf16.msra.mxu0 0
      %848 = vmatprep.subr.bf16.mxu0 0
      %849 = vmatpush2.bf16.msra.mxu0 0
      %850 = vmatprep.mubr.bf16.mxu0 0
      %851 = vmatmul.mubr.bf16.gmra.mxu0 %v807
      %v852 = vpop.f32.mrf.mxu0
      %v853 = vadd.f32 0.0, %v852
      %v854 = vpop.f32.mrf.mxu0
      %v855 = vpop.f32.mrf.mxu0
      %v856 = vadd.f32 0.0, %v855
      %v857 = vpop.f32.mrf.mxu0
      %858 = vmatprep.mubr.bf16.mxu0 0
      %859 = vmatmul.mubr.bf16.gmra.mxu0 %v810
      %v860 = vpop.f32.mrf.mxu0
      %v861 = vadd.f32 0.0, %v860
      %v862 = vpop.f32.mrf.mxu0
      %v863 = vpop.f32.mrf.mxu0
      %v864 = vadd.f32 0.0, %v863
      %v865 = vpop.f32.mrf.mxu0
      %866 = vmatprep.mubr.bf16.mxu0 0
      %867 = vmatmul.mubr.bf16.gmra.mxu0 %v813
      %v868 = vpop.f32.mrf.mxu0
      %v869 = vadd.f32 0.0, %v868
      %v870 = vpop.f32.mrf.mxu0
      %v871 = vpop.f32.mrf.mxu0
      %v872 = vadd.f32 0.0, %v871
      %v873 = vpop.f32.mrf.mxu0
      %874 = vmatprep.mubr.bf16.mxu0 0
      %875 = vmatmul.mubr.bf16.gmra.mxu0 %v816
      %v876 = vpop.f32.mrf.mxu0
      %v877 = vadd.f32 0.0, %v876
      %v878 = vpop.f32.mrf.mxu0
      %v879 = vpop.f32.mrf.mxu0
      %v880 = vadd.f32 0.0, %v879
      %v881 = vpop.f32.mrf.mxu0
      %882 = vdwg.mxu0
      %v883 = vadd.f32 %v761, %v853
      %v884 = vadd.f32 %v762, %v856
      %v885 = vadd.f32 %v763, %v861
      %v886 = vadd.f32 %v764, %v864
      %v887 = vadd.f32 %v765, %v869
      %v888 = vadd.f32 %v766, %v872
      %v889 = vadd.f32 %v767, %v877
      %v890 = vadd.f32 %v768, %v880
      %891 = vst.msk [vmem:[#allocation2] sm:$0xff] %vm416, %v883
      %892 = vst.msk [vmem:[#allocation2 + $0x8] sm:$0xff] %vm416, %v884
      %893 = vst.msk [vmem:[#allocation2 + $0x10] sm:$0xff] %vm416, %v885
      %894 = vst.msk [vmem:[#allocation2 + $0x18] sm:$0xff] %vm416, %v886
      %895 = vst.msk [vmem:[#allocation2 + $0x20] sm:$0xff] %vm416, %v887
      %896 = vst.msk [vmem:[#allocation2 + $0x28] sm:$0xff] %vm416, %v888
      %897 = vst.msk [vmem:[#allocation2 + $0x30] sm:$0xff] %vm416, %v889
      %898 = vst.msk [vmem:[#allocation2 + $0x38] sm:$0xff] %vm416, %v890
      %s899 = scalar_lea.vmem %s235, 8
      %v900 = vld [vmem:[%s899] sm:$0xf]
      %v901 = vld [vmem:[%s899 + $0x8] sm:$0xf]
      %v902 = vld [vmem:[%s899 + $0x10] sm:$0xf]
      %v903 = vld [vmem:[%s899 + $0x18] sm:$0xf]
      %v904 = vld [vmem:[%s899 + $0x20] sm:$0xf]
      %v905 = vld [vmem:[%s899 + $0x28] sm:$0xf]
      %v906 = vld [vmem:[%s899 + $0x30] sm:$0xf]
      %v907 = vld [vmem:[%s899 + $0x38] sm:$0xf]
      %v908 = vld [vmem:[#allocation2] sm:$0xff]
      %v909 = vld [vmem:[#allocation2 + $0x8] sm:$0xff]
      %v910 = vld [vmem:[#allocation2 + $0x10] sm:$0xff]
      %v911 = vld [vmem:[#allocation2 + $0x18] sm:$0xff]
      %v912 = vld [vmem:[#allocation2 + $0x20] sm:$0xff]
      %v913 = vld [vmem:[#allocation2 + $0x28] sm:$0xff]
      %v914 = vld [vmem:[#allocation2 + $0x30] sm:$0xff]
      %v915 = vld [vmem:[#allocation2 + $0x38] sm:$0xff]
      %s916 = scalar_lea.vmem %s243, 72
      %v917 = vld [vmem:[%s916] sm:$0xf]
      %v918 = vld [vmem:[%s916 + $0x4] sm:$0xf]
      %v919 = vld [vmem:[%s916 + $0x8] sm:$0xf]
      %v920 = vld [vmem:[%s916 + $0xc] sm:$0xf]
      %v921 = vld [vmem:[%s916 + $0x10] sm:$0xf]
      %v922 = vld [vmem:[%s916 + $0x14] sm:$0xf]
      %v931 = vunpack.c.l.b16 %v900
      %v932 = vunpack.c.l.b16 %v901
      %v933 = vunpack.c.l.b16 %v902
      %v934 = vunpack.c.l.b16 %v903
      %v935 = vunpack.c.l.b16 %v904
      %v936 = vunpack.c.l.b16 %v905
      %v937 = vunpack.c.l.b16 %v906
      %v938 = vunpack.c.l.b16 %v907
      %v939 = vpack.c.b16 %v932, %v931
      %v940 = vpack.c.b16 %v934, %v933
      %v941 = vpack.c.b16 %v936, %v935
      %v942 = vpack.c.b16 %v938, %v937
      %v949 = vunpack.c.l.b16 %v917
      %v950 = vunpack.c.l.b16 %v918
      %v951 = vunpack.c.l.b16 %v919
      %v952 = vunpack.c.l.b16 %v920
      %v953 = vunpack.c.l.b16 %v921
      %v954 = vunpack.c.l.b16 %v922
      %v955 = vpack.c.b16 %v950, %v949
      %v956 = vpack.c.b16 %v952, %v951
      %v957 = vpack.c.b16 %v954, %v953
      %v962 = vsel %vm330, %v939, 0
      %v965 = vsel %vm330, %v940, 0
      %v968 = vsel %vm330, %v941, 0
      %v971 = vsel %vm330, %v942, 0
      %973 = vmatprep.subr.bf16.mxu0 0
      %974 = vmatpush1.bf16.msra.mxu0 0
      %975 = vmatprep.subr.bf16.mxu0 0
      %976 = vmatpush1.bf16.msra.mxu0 0
      %977 = vmatprep.subr.bf16.mxu0 0
      %978 = vmatpush1.bf16.msra.mxu0 0
      %979 = vmatprep.subr.bf16.mxu0 0
      %980 = vmatpush1.bf16.msra.mxu0 0
      %981 = vmatprep.subr.bf16.mxu0 0
      %982 = vmatpush1.bf16.msra.mxu0 0
      %983 = vmatprep.subr.bf16.mxu0 0
      %984 = vmatpush1.bf16.msra.mxu0 %v957
      %985 = vmatprep.subr.bf16.mxu0 0
      %986 = vmatpush1.bf16.msra.mxu0 %v956
      %987 = vmatprep.subr.bf16.mxu0 0
      %988 = vmatpush1.bf16.msra.mxu0 %v955
      %989 = vmatprep.subr.bf16.mxu0 0
      %990 = vmatpush2.bf16.msra.mxu0 0
      %991 = vmatprep.subr.bf16.mxu0 0
      %992 = vmatpush2.bf16.msra.mxu0 0
      %993 = vmatprep.subr.bf16.mxu0 0
      %994 = vmatpush2.bf16.msra.mxu0 0
      %995 = vmatprep.subr.bf16.mxu0 0
      %996 = vmatpush2.bf16.msra.mxu0 0
      %997 = vmatprep.subr.bf16.mxu0 0
      %998 = vmatpush2.bf16.msra.mxu0 0
      %999 = vmatprep.subr.bf16.mxu0 0
      %1000 = vmatpush2.bf16.msra.mxu0 0
      %1001 = vmatprep.subr.bf16.mxu0 0
      %1002 = vmatpush2.bf16.msra.mxu0 0
      %1003 = vmatprep.subr.bf16.mxu0 0
      %1004 = vmatpush2.bf16.msra.mxu0 0
      %1005 = vmatprep.mubr.bf16.mxu0 0
      %1006 = vmatmul.mubr.bf16.gmra.mxu0 %v962
      %v1007 = vpop.f32.mrf.mxu0
      %v1008 = vadd.f32 0.0, %v1007
      %v1009 = vpop.f32.mrf.mxu0
      %v1010 = vpop.f32.mrf.mxu0
      %v1011 = vadd.f32 0.0, %v1010
      %v1012 = vpop.f32.mrf.mxu0
      %1013 = vmatprep.mubr.bf16.mxu0 0
      %1014 = vmatmul.mubr.bf16.gmra.mxu0 %v965
      %v1015 = vpop.f32.mrf.mxu0
      %v1016 = vadd.f32 0.0, %v1015
      %v1017 = vpop.f32.mrf.mxu0
      %v1018 = vpop.f32.mrf.mxu0
      %v1019 = vadd.f32 0.0, %v1018
      %v1020 = vpop.f32.mrf.mxu0
      %1021 = vmatprep.mubr.bf16.mxu0 0
      %1022 = vmatmul.mubr.bf16.gmra.mxu0 %v968
      %v1023 = vpop.f32.mrf.mxu0
      %v1024 = vadd.f32 0.0, %v1023
      %v1025 = vpop.f32.mrf.mxu0
      %v1026 = vpop.f32.mrf.mxu0
      %v1027 = vadd.f32 0.0, %v1026
      %v1028 = vpop.f32.mrf.mxu0
      %1029 = vmatprep.mubr.bf16.mxu0 0
      %1030 = vmatmul.mubr.bf16.gmra.mxu0 %v971
      %v1031 = vpop.f32.mrf.mxu0
      %v1032 = vadd.f32 0.0, %v1031
      %v1033 = vpop.f32.mrf.mxu0
      %v1034 = vpop.f32.mrf.mxu0
      %v1035 = vadd.f32 0.0, %v1034
      %v1036 = vpop.f32.mrf.mxu0
      %1037 = vdwg.mxu0
      %v1038 = vadd.f32 %v908, %v1008
      %v1039 = vadd.f32 %v909, %v1011
      %v1040 = vadd.f32 %v910, %v1016
      %v1041 = vadd.f32 %v911, %v1019
      %v1042 = vadd.f32 %v912, %v1024
      %v1043 = vadd.f32 %v913, %v1027
      %v1044 = vadd.f32 %v914, %v1032
      %v1045 = vadd.f32 %v915, %v1035
      %1046 = vst.msk [vmem:[#allocation2] sm:$0xff] %vm416, %v1038
      %1047 = vst.msk [vmem:[#allocation2 + $0x8] sm:$0xff] %vm416, %v1039
      %1048 = vst.msk [vmem:[#allocation2 + $0x10] sm:$0xff] %vm416, %v1040
      %1049 = vst.msk [vmem:[#allocation2 + $0x18] sm:$0xff] %vm416, %v1041
      %1050 = vst.msk [vmem:[#allocation2 + $0x20] sm:$0xff] %vm416, %v1042
      %1051 = vst.msk [vmem:[#allocation2 + $0x28] sm:$0xff] %vm416, %v1043
      %1052 = vst.msk [vmem:[#allocation2 + $0x30] sm:$0xff] %vm416, %v1044
      %1053 = vst.msk [vmem:[#allocation2 + $0x38] sm:$0xff] %vm416, %v1045
      %v1054 = vld [vmem:[%s899] sm:$0xf]
      %v1055 = vld [vmem:[%s899 + $0x4] sm:$0x1]
      %v1056 = vld [vmem:[%s899 + $0x8] sm:$0xf]
      %v1057 = vld [vmem:[%s899 + $0xc] sm:$0x1]
      %v1058 = vld [vmem:[%s899 + $0x10] sm:$0xf]
      %v1059 = vld [vmem:[%s899 + $0x14] sm:$0x1]
      %v1060 = vld [vmem:[%s899 + $0x18] sm:$0xf]
      %v1061 = vld [vmem:[%s899 + $0x1c] sm:$0x1]
      %v1062 = vld [vmem:[%s899 + $0x20] sm:$0xf]
      %v1063 = vld [vmem:[%s899 + $0x24] sm:$0x1]
      %v1064 = vld [vmem:[%s899 + $0x28] sm:$0xf]
      %v1065 = vld [vmem:[%s899 + $0x2c] sm:$0x1]
      %v1066 = vld [vmem:[%s899 + $0x30] sm:$0xf]
      %v1067 = vld [vmem:[%s899 + $0x34] sm:$0x1]
      %v1068 = vld [vmem:[%s899 + $0x38] sm:$0xf]
      %v1069 = vld [vmem:[%s899 + $0x3c] sm:$0x1]
      %v1071 = vshrl.u32 %v1054, 16
      %v1073 = vrot.slane %v1071, 4
      %v1074 = vshll.u32 %v1054, 16
      %v1076 = vrot.slane %v1074, 5
      %v1077 = vor.u32 %v1073, %v1076
      %v1078 = vrot.slane %v1077, 4
      %v1080 = vshll.u32 %v1055, 16
      %v1082 = vrot.slane %v1080, 5
      %v1083 = vsel %vm443, %v1078, %v1082
      %v1085 = vshrl.u32 %v1056, 16
      %v1087 = vrot.slane %v1085, 4
      %v1088 = vshll.u32 %v1056, 16
      %v1090 = vrot.slane %v1088, 5
      %v1091 = vor.u32 %v1087, %v1090
      %v1092 = vrot.slane %v1091, 4
      %v1094 = vshll.u32 %v1057, 16
      %v1096 = vrot.slane %v1094, 5
      %v1097 = vsel %vm443, %v1092, %v1096
      %v1099 = vshrl.u32 %v1058, 16
      %v1101 = vrot.slane %v1099, 4
      %v1102 = vshll.u32 %v1058, 16
      %v1104 = vrot.slane %v1102, 5
      %v1105 = vor.u32 %v1101, %v1104
      %v1106 = vrot.slane %v1105, 4
      %v1108 = vshll.u32 %v1059, 16
      %v1110 = vrot.slane %v1108, 5
      %v1111 = vsel %vm443, %v1106, %v1110
      %v1113 = vshrl.u32 %v1060, 16
      %v1115 = vrot.slane %v1113, 4
      %v1116 = vshll.u32 %v1060, 16
      %v1118 = vrot.slane %v1116, 5
      %v1119 = vor.u32 %v1115, %v1118
      %v1120 = vrot.slane %v1119, 4
      %v1122 = vshll.u32 %v1061, 16
      %v1124 = vrot.slane %v1122, 5
      %v1125 = vsel %vm443, %v1120, %v1124
      %v1127 = vshrl.u32 %v1062, 16
      %v1129 = vrot.slane %v1127, 4
      %v1130 = vshll.u32 %v1062, 16
      %v1132 = vrot.slane %v1130, 5
      %v1133 = vor.u32 %v1129, %v1132
      %v1134 = vrot.slane %v1133, 4
      %v1136 = vshll.u32 %v1063, 16
      %v1138 = vrot.slane %v1136, 5
      %v1139 = vsel %vm443, %v1134, %v1138
      %v1141 = vshrl.u32 %v1064, 16
      %v1143 = vrot.slane %v1141, 4
      %v1144 = vshll.u32 %v1064, 16
      %v1146 = vrot.slane %v1144, 5
      %v1147 = vor.u32 %v1143, %v1146
      %v1148 = vrot.slane %v1147, 4
      %v1150 = vshll.u32 %v1065, 16
      %v1152 = vrot.slane %v1150, 5
      %v1153 = vsel %vm443, %v1148, %v1152
      %v1155 = vshrl.u32 %v1066, 16
      %v1157 = vrot.slane %v1155, 4
      %v1158 = vshll.u32 %v1066, 16
      %v1160 = vrot.slane %v1158, 5
      %v1161 = vor.u32 %v1157, %v1160
      %v1162 = vrot.slane %v1161, 4
      %v1164 = vshll.u32 %v1067, 16
      %v1166 = vrot.slane %v1164, 5
      %v1167 = vsel %vm443, %v1162, %v1166
      %v1169 = vshrl.u32 %v1068, 16
      %v1171 = vrot.slane %v1169, 4
      %v1172 = vshll.u32 %v1068, 16
      %v1174 = vrot.slane %v1172, 5
      %v1175 = vor.u32 %v1171, %v1174
      %v1176 = vrot.slane %v1175, 4
      %v1178 = vshll.u32 %v1069, 16
      %v1180 = vrot.slane %v1178, 5
      %v1181 = vsel %vm443, %v1176, %v1180
      %v1182 = vld [vmem:[#allocation2] sm:$0xff]
      %v1183 = vld [vmem:[#allocation2 + $0x8] sm:$0xff]
      %v1184 = vld [vmem:[#allocation2 + $0x10] sm:$0xff]
      %v1185 = vld [vmem:[#allocation2 + $0x18] sm:$0xff]
      %v1186 = vld [vmem:[#allocation2 + $0x20] sm:$0xff]
      %v1187 = vld [vmem:[#allocation2 + $0x28] sm:$0xff]
      %v1188 = vld [vmem:[#allocation2 + $0x30] sm:$0xff]
      %v1189 = vld [vmem:[#allocation2 + $0x38] sm:$0xff]
      %s1190 = scalar_lea.vmem %s243, 96
      %v1191 = vld [vmem:[%s1190] sm:$0xf]
      %v1192 = vld [vmem:[%s1190 + $0x4] sm:$0xf]
      %v1193 = vld [vmem:[%s1190 + $0x8] sm:$0xf]
      %v1194 = vld [vmem:[%s1190 + $0xc] sm:$0xf]
      %v1195 = vld [vmem:[%s1190 + $0x10] sm:$0xf]
      %v1196 = vld [vmem:[%s1190 + $0x14] sm:$0xf]
      %v1197 = vunpack.c.l.b16 %v1083
      %v1198 = vunpack.c.l.b16 %v1097
      %v1199 = vunpack.c.l.b16 %v1111
      %v1200 = vunpack.c.l.b16 %v1125
      %v1201 = vunpack.c.l.b16 %v1139
      %v1202 = vunpack.c.l.b16 %v1153
      %v1203 = vunpack.c.l.b16 %v1167
      %v1204 = vunpack.c.l.b16 %v1181
      %v1205 = vpack.c.b16 %v1198, %v1197
      %v1206 = vpack.c.b16 %v1200, %v1199
      %v1207 = vpack.c.b16 %v1202, %v1201
      %v1208 = vpack.c.b16 %v1204, %v1203
      %v1215 = vunpack.c.l.b16 %v1191
      %v1216 = vunpack.c.l.b16 %v1192
      %v1217 = vunpack.c.l.b16 %v1193
      %v1218 = vunpack.c.l.b16 %v1194
      %v1219 = vunpack.c.l.b16 %v1195
      %v1220 = vunpack.c.l.b16 %v1196
      %v1221 = vpack.c.b16 %v1216, %v1215
      %v1222 = vpack.c.b16 %v1218, %v1217
      %v1223 = vpack.c.b16 %v1220, %v1219
      %v1228 = vsel %vm330, %v1205, 0
      %v1231 = vsel %vm330, %v1206, 0
      %v1234 = vsel %vm330, %v1207, 0
      %v1237 = vsel %vm330, %v1208, 0
      %1239 = vmatprep.subr.bf16.mxu0 0
      %1240 = vmatpush1.bf16.msra.mxu0 0
      %1241 = vmatprep.subr.bf16.mxu0 0
      %1242 = vmatpush1.bf16.msra.mxu0 0
      %1243 = vmatprep.subr.bf16.mxu0 0
      %1244 = vmatpush1.bf16.msra.mxu0 0
      %1245 = vmatprep.subr.bf16.mxu0 0
      %1246 = vmatpush1.bf16.msra.mxu0 0
      %1247 = vmatprep.subr.bf16.mxu0 0
      %1248 = vmatpush1.bf16.msra.mxu0 0
      %1249 = vmatprep.subr.bf16.mxu0 0
      %1250 = vmatpush1.bf16.msra.mxu0 %v1223
      %1251 = vmatprep.subr.bf16.mxu0 0
      %1252 = vmatpush1.bf16.msra.mxu0 %v1222
      %1253 = vmatprep.subr.bf16.mxu0 0
      %1254 = vmatpush1.bf16.msra.mxu0 %v1221
      %1255 = vmatprep.subr.bf16.mxu0 0
      %1256 = vmatpush2.bf16.msra.mxu0 0
      %1257 = vmatprep.subr.bf16.mxu0 0
      %1258 = vmatpush2.bf16.msra.mxu0 0
      %1259 = vmatprep.subr.bf16.mxu0 0
      %1260 = vmatpush2.bf16.msra.mxu0 0
      %1261 = vmatprep.subr.bf16.mxu0 0
      %1262 = vmatpush2.bf16.msra.mxu0 0
      %1263 = vmatprep.subr.bf16.mxu0 0
      %1264 = vmatpush2.bf16.msra.mxu0 0
      %1265 = vmatprep.subr.bf16.mxu0 0
      %1266 = vmatpush2.bf16.msra.mxu0 0
      %1267 = vmatprep.subr.bf16.mxu0 0
      %1268 = vmatpush2.bf16.msra.mxu0 0
      %1269 = vmatprep.subr.bf16.mxu0 0
      %1270 = vmatpush2.bf16.msra.mxu0 0
      %1271 = vmatprep.mubr.bf16.mxu0 0
      %1272 = vmatmul.mubr.bf16.gmra.mxu0 %v1228
      %v1273 = vpop.f32.mrf.mxu0
      %v1274 = vadd.f32 0.0, %v1273
      %v1275 = vpop.f32.mrf.mxu0
      %v1276 = vpop.f32.mrf.mxu0
      %v1277 = vadd.f32 0.0, %v1276
      %v1278 = vpop.f32.mrf.mxu0
      %1279 = vmatprep.mubr.bf16.mxu0 0
      %1280 = vmatmul.mubr.bf16.gmra.mxu0 %v1231
      %v1281 = vpop.f32.mrf.mxu0
      %v1282 = vadd.f32 0.0, %v1281
      %v1283 = vpop.f32.mrf.mxu0
      %v1284 = vpop.f32.mrf.mxu0
      %v1285 = vadd.f32 0.0, %v1284
      %v1286 = vpop.f32.mrf.mxu0
      %1287 = vmatprep.mubr.bf16.mxu0 0
      %1288 = vmatmul.mubr.bf16.gmra.mxu0 %v1234
      %v1289 = vpop.f32.mrf.mxu0
      %v1290 = vadd.f32 0.0, %v1289
      %v1291 = vpop.f32.mrf.mxu0
      %v1292 = vpop.f32.mrf.mxu0
      %v1293 = vadd.f32 0.0, %v1292
      %v1294 = vpop.f32.mrf.mxu0
      %1295 = vmatprep.mubr.bf16.mxu0 0
      %1296 = vmatmul.mubr.bf16.gmra.mxu0 %v1237
      %v1297 = vpop.f32.mrf.mxu0
      %v1298 = vadd.f32 0.0, %v1297
      %v1299 = vpop.f32.mrf.mxu0
      %v1300 = vpop.f32.mrf.mxu0
      %v1301 = vadd.f32 0.0, %v1300
      %v1302 = vpop.f32.mrf.mxu0
      %1303 = vdwg.mxu0
      %v1304 = vadd.f32 %v1182, %v1274
      %v1305 = vadd.f32 %v1183, %v1277
      %v1306 = vadd.f32 %v1184, %v1282
      %v1307 = vadd.f32 %v1185, %v1285
      %v1308 = vadd.f32 %v1186, %v1290
      %v1309 = vadd.f32 %v1187, %v1293
      %v1310 = vadd.f32 %v1188, %v1298
      %v1311 = vadd.f32 %v1189, %v1301
      %1312 = vst.msk [vmem:[#allocation2] sm:$0xff] %vm416, %v1304
      %1313 = vst.msk [vmem:[#allocation2 + $0x8] sm:$0xff] %vm416, %v1305
      %1314 = vst.msk [vmem:[#allocation2 + $0x10] sm:$0xff] %vm416, %v1306
      %1315 = vst.msk [vmem:[#allocation2 + $0x18] sm:$0xff] %vm416, %v1307
      %1316 = vst.msk [vmem:[#allocation2 + $0x20] sm:$0xff] %vm416, %v1308
      %1317 = vst.msk [vmem:[#allocation2 + $0x28] sm:$0xff] %vm416, %v1309
      %1318 = vst.msk [vmem:[#allocation2 + $0x30] sm:$0xff] %vm416, %v1310
      %1319 = vst.msk [vmem:[#allocation2 + $0x38] sm:$0xff] %vm416, %v1311
      %v1320 = vld [vmem:[%s899] sm:$0xe]
      %v1321 = vld [vmem:[%s899 + $0x4] sm:$0x1]
      %v1322 = vld [vmem:[%s899 + $0x8] sm:$0xe]
      %v1323 = vld [vmem:[%s899 + $0xc] sm:$0x1]
      %v1324 = vld [vmem:[%s899 + $0x10] sm:$0xe]
      %v1325 = vld [vmem:[%s899 + $0x14] sm:$0x1]
      %v1326 = vld [vmem:[%s899 + $0x18] sm:$0xe]
      %v1327 = vld [vmem:[%s899 + $0x1c] sm:$0x1]
      %v1328 = vld [vmem:[%s899 + $0x20] sm:$0xe]
      %v1329 = vld [vmem:[%s899 + $0x24] sm:$0x1]
      %v1330 = vld [vmem:[%s899 + $0x28] sm:$0xe]
      %v1331 = vld [vmem:[%s899 + $0x2c] sm:$0x1]
      %v1332 = vld [vmem:[%s899 + $0x30] sm:$0xe]
      %v1333 = vld [vmem:[%s899 + $0x34] sm:$0x1]
      %v1334 = vld [vmem:[%s899 + $0x38] sm:$0xe]
      %v1335 = vld [vmem:[%s899 + $0x3c] sm:$0x1]
      %v1352 = vrot.slane %v1320, 5
      %v1353 = vrot.slane %v1352, 4
      %v1354 = vrot.slane %v1321, 5
      %v1355 = vsel %vm728, %v1353, %v1354
      %v1356 = vrot.slane %v1322, 5
      %v1357 = vrot.slane %v1356, 4
      %v1358 = vrot.slane %v1323, 5
      %v1359 = vsel %vm728, %v1357, %v1358
      %v1360 = vrot.slane %v1324, 5
      %v1361 = vrot.slane %v1360, 4
      %v1362 = vrot.slane %v1325, 5
      %v1363 = vsel %vm728, %v1361, %v1362
      %v1364 = vrot.slane %v1326, 5
      %v1365 = vrot.slane %v1364, 4
      %v1366 = vrot.slane %v1327, 5
      %v1367 = vsel %vm728, %v1365, %v1366
      %v1368 = vrot.slane %v1328, 5
      %v1369 = vrot.slane %v1368, 4
      %v1370 = vrot.slane %v1329, 5
      %v1371 = vsel %vm728, %v1369, %v1370
      %v1372 = vrot.slane %v1330, 5
      %v1373 = vrot.slane %v1372, 4
      %v1374 = vrot.slane %v1331, 5
      %v1375 = vsel %vm728, %v1373, %v1374
      %v1376 = vrot.slane %v1332, 5
      %v1377 = vrot.slane %v1376, 4
      %v1378 = vrot.slane %v1333, 5
      %v1379 = vsel %vm728, %v1377, %v1378
      %v1380 = vrot.slane %v1334, 5
      %v1381 = vrot.slane %v1380, 4
      %v1382 = vrot.slane %v1335, 5
      %v1383 = vsel %vm728, %v1381, %v1382
      %v1384 = vld [vmem:[#allocation2] sm:$0xff]
      %v1385 = vld [vmem:[#allocation2 + $0x8] sm:$0xff]
      %v1386 = vld [vmem:[#allocation2 + $0x10] sm:$0xff]
      %v1387 = vld [vmem:[#allocation2 + $0x18] sm:$0xff]
      %v1388 = vld [vmem:[#allocation2 + $0x20] sm:$0xff]
      %v1389 = vld [vmem:[#allocation2 + $0x28] sm:$0xff]
      %v1390 = vld [vmem:[#allocation2 + $0x30] sm:$0xff]
      %v1391 = vld [vmem:[#allocation2 + $0x38] sm:$0xff]
      %s1392 = scalar_lea.vmem %s243, 120
      %v1393 = vld [vmem:[%s1392] sm:$0xf]
      %v1394 = vld [vmem:[%s1392 + $0x4] sm:$0xf]
      %v1395 = vld [vmem:[%s1392 + $0x8] sm:$0xf]
      %v1396 = vld [vmem:[%s1392 + $0xc] sm:$0xf]
      %v1397 = vld [vmem:[%s1392 + $0x10] sm:$0xf]
      %v1398 = vld [vmem:[%s1392 + $0x14] sm:$0xf]
      %v1399 = vunpack.c.l.b16 %v1355
      %v1400 = vunpack.c.l.b16 %v1359
      %v1401 = vunpack.c.l.b16 %v1363
      %v1402 = vunpack.c.l.b16 %v1367
      %v1403 = vunpack.c.l.b16 %v1371
      %v1404 = vunpack.c.l.b16 %v1375
      %v1405 = vunpack.c.l.b16 %v1379
      %v1406 = vunpack.c.l.b16 %v1383
      %v1407 = vpack.c.b16 %v1400, %v1399
      %v1408 = vpack.c.b16 %v1402, %v1401
      %v1409 = vpack.c.b16 %v1404, %v1403
      %v1410 = vpack.c.b16 %v1406, %v1405
      %v1417 = vunpack.c.l.b16 %v1393
      %v1418 = vunpack.c.l.b16 %v1394
      %v1419 = vunpack.c.l.b16 %v1395
      %v1420 = vunpack.c.l.b16 %v1396
      %v1421 = vunpack.c.l.b16 %v1397
      %v1422 = vunpack.c.l.b16 %v1398
      %v1423 = vpack.c.b16 %v1418, %v1417
      %v1424 = vpack.c.b16 %v1420, %v1419
      %v1425 = vpack.c.b16 %v1422, %v1421
      %v1430 = vsel %vm330, %v1407, 0
      %v1433 = vsel %vm330, %v1408, 0
      %v1436 = vsel %vm330, %v1409, 0
      %v1439 = vsel %vm330, %v1410, 0
      %1441 = vmatprep.subr.bf16.mxu0 0
      %1442 = vmatpush1.bf16.msra.mxu0 0
      %1443 = vmatprep.subr.bf16.mxu0 0
      %1444 = vmatpush1.bf16.msra.mxu0 0
      %1445 = vmatprep.subr.bf16.mxu0 0
      %1446 = vmatpush1.bf16.msra.mxu0 0
      %1447 = vmatprep.subr.bf16.mxu0 0
      %1448 = vmatpush1.bf16.msra.mxu0 0
      %1449 = vmatprep.subr.bf16.mxu0 0
      %1450 = vmatpush1.bf16.msra.mxu0 0
      %1451 = vmatprep.subr.bf16.mxu0 0
      %1452 = vmatpush1.bf16.msra.mxu0 %v1425
      %1453 = vmatprep.subr.bf16.mxu0 0
      %1454 = vmatpush1.bf16.msra.mxu0 %v1424
      %1455 = vmatprep.subr.bf16.mxu0 0
      %1456 = vmatpush1.bf16.msra.mxu0 %v1423
      %1457 = vmatprep.subr.bf16.mxu0 0
      %1458 = vmatpush2.bf16.msra.mxu0 0
      %1459 = vmatprep.subr.bf16.mxu0 0
      %1460 = vmatpush2.bf16.msra.mxu0 0
      %1461 = vmatprep.subr.bf16.mxu0 0
      %1462 = vmatpush2.bf16.msra.mxu0 0
      %1463 = vmatprep.subr.bf16.mxu0 0
      %1464 = vmatpush2.bf16.msra.mxu0 0
      %1465 = vmatprep.subr.bf16.mxu0 0
      %1466 = vmatpush2.bf16.msra.mxu0 0
      %1467 = vmatprep.subr.bf16.mxu0 0
      %1468 = vmatpush2.bf16.msra.mxu0 0
      %1469 = vmatprep.subr.bf16.mxu0 0
      %1470 = vmatpush2.bf16.msra.mxu0 0
      %1471 = vmatprep.subr.bf16.mxu0 0
      %1472 = vmatpush2.bf16.msra.mxu0 0
      %1473 = vmatprep.mubr.bf16.mxu0 0
      %1474 = vmatmul.mubr.bf16.gmra.mxu0 %v1430
      %v1475 = vpop.f32.mrf.mxu0
      %v1476 = vadd.f32 0.0, %v1475
      %v1477 = vpop.f32.mrf.mxu0
      %v1478 = vpop.f32.mrf.mxu0
      %v1479 = vadd.f32 0.0, %v1478
      %v1480 = vpop.f32.mrf.mxu0
      %1481 = vmatprep.mubr.bf16.mxu0 0
      %1482 = vmatmul.mubr.bf16.gmra.mxu0 %v1433
      %v1483 = vpop.f32.mrf.mxu0
      %v1484 = vadd.f32 0.0, %v1483
      %v1485 = vpop.f32.mrf.mxu0
      %v1486 = vpop.f32.mrf.mxu0
      %v1487 = vadd.f32 0.0, %v1486
      %v1488 = vpop.f32.mrf.mxu0
      %1489 = vmatprep.mubr.bf16.mxu0 0
      %1490 = vmatmul.mubr.bf16.gmra.mxu0 %v1436
      %v1491 = vpop.f32.mrf.mxu0
      %v1492 = vadd.f32 0.0, %v1491
      %v1493 = vpop.f32.mrf.mxu0
      %v1494 = vpop.f32.mrf.mxu0
      %v1495 = vadd.f32 0.0, %v1494
      %v1496 = vpop.f32.mrf.mxu0
      %1497 = vmatprep.mubr.bf16.mxu0 0
      %1498 = vmatmul.mubr.bf16.gmra.mxu0 %v1439
      %v1499 = vpop.f32.mrf.mxu0
      %v1500 = vadd.f32 0.0, %v1499
      %v1501 = vpop.f32.mrf.mxu0
      %v1502 = vpop.f32.mrf.mxu0
      %v1503 = vadd.f32 0.0, %v1502
      %v1504 = vpop.f32.mrf.mxu0
      %1505 = vdwg.mxu0
      %v1506 = vadd.f32 %v1384, %v1476
      %v1507 = vadd.f32 %v1385, %v1479
      %v1508 = vadd.f32 %v1386, %v1484
      %v1509 = vadd.f32 %v1387, %v1487
      %v1510 = vadd.f32 %v1388, %v1492
      %v1511 = vadd.f32 %v1389, %v1495
      %v1512 = vadd.f32 %v1390, %v1500
      %v1513 = vadd.f32 %v1391, %v1503
      %1514 = vst.msk [vmem:[#allocation2] sm:$0xff] %vm416, %v1506
      %1515 = vst.msk [vmem:[#allocation2 + $0x8] sm:$0xff] %vm416, %v1507
      %1516 = vst.msk [vmem:[#allocation2 + $0x10] sm:$0xff] %vm416, %v1508
      %1517 = vst.msk [vmem:[#allocation2 + $0x18] sm:$0xff] %vm416, %v1509
      %1518 = vst.msk [vmem:[#allocation2 + $0x20] sm:$0xff] %vm416, %v1510
      %1519 = vst.msk [vmem:[#allocation2 + $0x28] sm:$0xff] %vm416, %v1511
      %1520 = vst.msk [vmem:[#allocation2 + $0x30] sm:$0xff] %vm416, %v1512
      %1521 = vst.msk [vmem:[#allocation2 + $0x38] sm:$0xff] %vm416, %v1513
      %s1522 = scalar_lea.vmem %s235, 16
      %v1523 = vld [vmem:[%s1522] sm:$0xf]
      %v1524 = vld [vmem:[%s1522 + $0x8] sm:$0xf]
      %v1525 = vld [vmem:[%s1522 + $0x10] sm:$0xf]
      %v1526 = vld [vmem:[%s1522 + $0x18] sm:$0xf]
      %v1527 = vld [vmem:[%s1522 + $0x20] sm:$0xf]
      %v1528 = vld [vmem:[%s1522 + $0x28] sm:$0xf]
      %v1529 = vld [vmem:[%s1522 + $0x30] sm:$0xf]
      %v1530 = vld [vmem:[%s1522 + $0x38] sm:$0xf]
      %v1531 = vld [vmem:[#allocation2] sm:$0xff]
      %v1532 = vld [vmem:[#allocation2 + $0x8] sm:$0xff]
      %v1533 = vld [vmem:[#allocation2 + $0x10] sm:$0xff]
      %v1534 = vld [vmem:[#allocation2 + $0x18] sm:$0xff]
      %v1535 = vld [vmem:[#allocation2 + $0x20] sm:$0xff]
      %v1536 = vld [vmem:[#allocation2 + $0x28] sm:$0xff]
      %v1537 = vld [vmem:[#allocation2 + $0x30] sm:$0xff]
      %v1538 = vld [vmem:[#allocation2 + $0x38] sm:$0xff]
      %s1539 = scalar_lea.vmem %s243, 144
      %v1540 = vld [vmem:[%s1539] sm:$0xf]
      %v1541 = vld [vmem:[%s1539 + $0x4] sm:$0xf]
      %v1542 = vld [vmem:[%s1539 + $0x8] sm:$0xf]
      %v1543 = vld [vmem:[%s1539 + $0xc] sm:$0xf]
      %v1544 = vld [vmem:[%s1539 + $0x10] sm:$0xf]
      %v1545 = vld [vmem:[%s1539 + $0x14] sm:$0xf]
      %v1554 = vunpack.c.l.b16 %v1523
      %v1555 = vunpack.c.l.b16 %v1524
      %v1556 = vunpack.c.l.b16 %v1525
      %v1557 = vunpack.c.l.b16 %v1526
      %v1558 = vunpack.c.l.b16 %v1527
      %v1559 = vunpack.c.l.b16 %v1528
      %v1560 = vunpack.c.l.b16 %v1529
      %v1561 = vunpack.c.l.b16 %v1530
      %v1562 = vpack.c.b16 %v1555, %v1554
      %v1563 = vpack.c.b16 %v1557, %v1556
      %v1564 = vpack.c.b16 %v1559, %v1558
      %v1565 = vpack.c.b16 %v1561, %v1560
      %v1572 = vunpack.c.l.b16 %v1540
      %v1573 = vunpack.c.l.b16 %v1541
      %v1574 = vunpack.c.l.b16 %v1542
      %v1575 = vunpack.c.l.b16 %v1543
      %v1576 = vunpack.c.l.b16 %v1544
      %v1577 = vunpack.c.l.b16 %v1545
      %v1578 = vpack.c.b16 %v1573, %v1572
      %v1579 = vpack.c.b16 %v1575, %v1574
      %v1580 = vpack.c.b16 %v1577, %v1576
      %v1585 = vsel %vm330, %v1562, 0
      %v1588 = vsel %vm330, %v1563, 0
      %v1591 = vsel %vm330, %v1564, 0
      %v1594 = vsel %vm330, %v1565, 0
      %1596 = vmatprep.subr.bf16.mxu0 0
      %1597 = vmatpush1.bf16.msra.mxu0 0
      %1598 = vmatprep.subr.bf16.mxu0 0
      %1599 = vmatpush1.bf16.msra.mxu0 0
      %1600 = vmatprep.subr.bf16.mxu0 0
      %1601 = vmatpush1.bf16.msra.mxu0 0
      %1602 = vmatprep.subr.bf16.mxu0 0
      %1603 = vmatpush1.bf16.msra.mxu0 0
      %1604 = vmatprep.subr.bf16.mxu0 0
      %1605 = vmatpush1.bf16.msra.mxu0 0
      %1606 = vmatprep.subr.bf16.mxu0 0
      %1607 = vmatpush1.bf16.msra.mxu0 %v1580
      %1608 = vmatprep.subr.bf16.mxu0 0
      %1609 = vmatpush1.bf16.msra.mxu0 %v1579
      %1610 = vmatprep.subr.bf16.mxu0 0
      %1611 = vmatpush1.bf16.msra.mxu0 %v1578
      %1612 = vmatprep.subr.bf16.mxu0 0
      %1613 = vmatpush2.bf16.msra.mxu0 0
      %1614 = vmatprep.subr.bf16.mxu0 0
      %1615 = vmatpush2.bf16.msra.mxu0 0
      %1616 = vmatprep.subr.bf16.mxu0 0
      %1617 = vmatpush2.bf16.msra.mxu0 0
      %1618 = vmatprep.subr.bf16.mxu0 0
      %1619 = vmatpush2.bf16.msra.mxu0 0
      %1620 = vmatprep.subr.bf16.mxu0 0
      %1621 = vmatpush2.bf16.msra.mxu0 0
      %1622 = vmatprep.subr.bf16.mxu0 0
      %1623 = vmatpush2.bf16.msra.mxu0 0
      %1624 = vmatprep.subr.bf16.mxu0 0
      %1625 = vmatpush2.bf16.msra.mxu0 0
      %1626 = vmatprep.subr.bf16.mxu0 0
      %1627 = vmatpush2.bf16.msra.mxu0 0
      %1628 = vmatprep.mubr.bf16.mxu0 0
      %1629 = vmatmul.mubr.bf16.gmra.mxu0 %v1585
      %v1630 = vpop.f32.mrf.mxu0
      %v1631 = vadd.f32 0.0, %v1630
      %v1632 = vpop.f32.mrf.mxu0
      %v1633 = vpop.f32.mrf.mxu0
      %v1634 = vadd.f32 0.0, %v1633
      %v1635 = vpop.f32.mrf.mxu0
      %1636 = vmatprep.mubr.bf16.mxu0 0
      %1637 = vmatmul.mubr.bf16.gmra.mxu0 %v1588
      %v1638 = vpop.f32.mrf.mxu0
      %v1639 = vadd.f32 0.0, %v1638
      %v1640 = vpop.f32.mrf.mxu0
      %v1641 = vpop.f32.mrf.mxu0
      %v1642 = vadd.f32 0.0, %v1641
      %v1643 = vpop.f32.mrf.mxu0
      %1644 = vmatprep.mubr.bf16.mxu0 0
      %1645 = vmatmul.mubr.bf16.gmra.mxu0 %v1591
      %v1646 = vpop.f32.mrf.mxu0
      %v1647 = vadd.f32 0.0, %v1646
      %v1648 = vpop.f32.mrf.mxu0
      %v1649 = vpop.f32.mrf.mxu0
      %v1650 = vadd.f32 0.0, %v1649
      %v1651 = vpop.f32.mrf.mxu0
      %1652 = vmatprep.mubr.bf16.mxu0 0
      %1653 = vmatmul.mubr.bf16.gmra.mxu0 %v1594
      %v1654 = vpop.f32.mrf.mxu0
      %v1655 = vadd.f32 0.0, %v1654
      %v1656 = vpop.f32.mrf.mxu0
      %v1657 = vpop.f32.mrf.mxu0
      %v1658 = vadd.f32 0.0, %v1657
      %v1659 = vpop.f32.mrf.mxu0
      %1660 = vdwg.mxu0
      %v1661 = vadd.f32 %v1531, %v1631
      %v1662 = vadd.f32 %v1532, %v1634
      %v1663 = vadd.f32 %v1533, %v1639
      %v1664 = vadd.f32 %v1534, %v1642
      %v1665 = vadd.f32 %v1535, %v1647
      %v1666 = vadd.f32 %v1536, %v1650
      %v1667 = vadd.f32 %v1537, %v1655
      %v1668 = vadd.f32 %v1538, %v1658
      %1669 = vst.msk [vmem:[#allocation2] sm:$0xff] %vm416, %v1661
      %1670 = vst.msk [vmem:[#allocation2 + $0x8] sm:$0xff] %vm416, %v1662
      %1671 = vst.msk [vmem:[#allocation2 + $0x10] sm:$0xff] %vm416, %v1663
      %1672 = vst.msk [vmem:[#allocation2 + $0x18] sm:$0xff] %vm416, %v1664
      %1673 = vst.msk [vmem:[#allocation2 + $0x20] sm:$0xff] %vm416, %v1665
      %1674 = vst.msk [vmem:[#allocation2 + $0x28] sm:$0xff] %vm416, %v1666
      %1675 = vst.msk [vmem:[#allocation2 + $0x30] sm:$0xff] %vm416, %v1667
      %1676 = vst.msk [vmem:[#allocation2 + $0x38] sm:$0xff] %vm416, %v1668
      %v1677 = vld [vmem:[%s1522] sm:$0xf]
      %v1678 = vld [vmem:[%s1522 + $0x4] sm:$0x1]
      %v1679 = vld [vmem:[%s1522 + $0x8] sm:$0xf]
      %v1680 = vld [vmem:[%s1522 + $0xc] sm:$0x1]
      %v1681 = vld [vmem:[%s1522 + $0x10] sm:$0xf]
      %v1682 = vld [vmem:[%s1522 + $0x14] sm:$0x1]
      %v1683 = vld [vmem:[%s1522 + $0x18] sm:$0xf]
      %v1684 = vld [vmem:[%s1522 + $0x1c] sm:$0x1]
      %v1685 = vld [vmem:[%s1522 + $0x20] sm:$0xf]
      %v1686 = vld [vmem:[%s1522 + $0x24] sm:$0x1]
      %v1687 = vld [vmem:[%s1522 + $0x28] sm:$0xf]
      %v1688 = vld [vmem:[%s1522 + $0x2c] sm:$0x1]
      %v1689 = vld [vmem:[%s1522 + $0x30] sm:$0xf]
      %v1690 = vld [vmem:[%s1522 + $0x34] sm:$0x1]
      %v1691 = vld [vmem:[%s1522 + $0x38] sm:$0xf]
      %v1692 = vld [vmem:[%s1522 + $0x3c] sm:$0x1]
      %v1694 = vshrl.u32 %v1677, 16
      %v1696 = vrot.slane %v1694, 4
      %v1697 = vshll.u32 %v1677, 16
      %v1699 = vrot.slane %v1697, 5
      %v1700 = vor.u32 %v1696, %v1699
      %v1701 = vrot.slane %v1700, 4
      %v1703 = vshll.u32 %v1678, 16
      %v1705 = vrot.slane %v1703, 5
      %v1706 = vsel %vm443, %v1701, %v1705
      %v1708 = vshrl.u32 %v1679, 16
      %v1710 = vrot.slane %v1708, 4
      %v1711 = vshll.u32 %v1679, 16
      %v1713 = vrot.slane %v1711, 5
      %v1714 = vor.u32 %v1710, %v1713
      %v1715 = vrot.slane %v1714, 4
      %v1717 = vshll.u32 %v1680, 16
      %v1719 = vrot.slane %v1717, 5
      %v1720 = vsel %vm443, %v1715, %v1719
      %v1722 = vshrl.u32 %v1681, 16
      %v1724 = vrot.slane %v1722, 4
      %v1725 = vshll.u32 %v1681, 16
      %v1727 = vrot.slane %v1725, 5
      %v1728 = vor.u32 %v1724, %v1727
      %v1729 = vrot.slane %v1728, 4
      %v1731 = vshll.u32 %v1682, 16
      %v1733 = vrot.slane %v1731, 5
      %v1734 = vsel %vm443, %v1729, %v1733
      %v1736 = vshrl.u32 %v1683, 16
      %v1738 = vrot.slane %v1736, 4
      %v1739 = vshll.u32 %v1683, 16
      %v1741 = vrot.slane %v1739, 5
      %v1742 = vor.u32 %v1738, %v1741
      %v1743 = vrot.slane %v1742, 4
      %v1745 = vshll.u32 %v1684, 16
      %v1747 = vrot.slane %v1745, 5
      %v1748 = vsel %vm443, %v1743, %v1747
      %v1750 = vshrl.u32 %v1685, 16
      %v1752 = vrot.slane %v1750, 4
      %v1753 = vshll.u32 %v1685, 16
      %v1755 = vrot.slane %v1753, 5
      %v1756 = vor.u32 %v1752, %v1755
      %v1757 = vrot.slane %v1756, 4
      %v1759 = vshll.u32 %v1686, 16
      %v1761 = vrot.slane %v1759, 5
      %v1762 = vsel %vm443, %v1757, %v1761
      %v1764 = vshrl.u32 %v1687, 16
      %v1766 = vrot.slane %v1764, 4
      %v1767 = vshll.u32 %v1687, 16
      %v1769 = vrot.slane %v1767, 5
      %v1770 = vor.u32 %v1766, %v1769
      %v1771 = vrot.slane %v1770, 4
      %v1773 = vshll.u32 %v1688, 16
      %v1775 = vrot.slane %v1773, 5
      %v1776 = vsel %vm443, %v1771, %v1775
      %v1778 = vshrl.u32 %v1689, 16
      %v1780 = vrot.slane %v1778, 4
      %v1781 = vshll.u32 %v1689, 16
      %v1783 = vrot.slane %v1781, 5
      %v1784 = vor.u32 %v1780, %v1783
      %v1785 = vrot.slane %v1784, 4
      %v1787 = vshll.u32 %v1690, 16
      %v1789 = vrot.slane %v1787, 5
      %v1790 = vsel %vm443, %v1785, %v1789
      %v1792 = vshrl.u32 %v1691, 16
      %v1794 = vrot.slane %v1792, 4
      %v1795 = vshll.u32 %v1691, 16
      %v1797 = vrot.slane %v1795, 5
      %v1798 = vor.u32 %v1794, %v1797
      %v1799 = vrot.slane %v1798, 4
      %v1801 = vshll.u32 %v1692, 16
      %v1803 = vrot.slane %v1801, 5
      %v1804 = vsel %vm443, %v1799, %v1803
      %v1805 = vld [vmem:[#allocation2] sm:$0xff]
      %v1806 = vld [vmem:[#allocation2 + $0x8] sm:$0xff]
      %v1807 = vld [vmem:[#allocation2 + $0x10] sm:$0xff]
      %v1808 = vld [vmem:[#allocation2 + $0x18] sm:$0xff]
      %v1809 = vld [vmem:[#allocation2 + $0x20] sm:$0xff]
      %v1810 = vld [vmem:[#allocation2 + $0x28] sm:$0xff]
      %v1811 = vld [vmem:[#allocation2 + $0x30] sm:$0xff]
      %v1812 = vld [vmem:[#allocation2 + $0x38] sm:$0xff]
      %s1813 = scalar_lea.vmem %s243, 168
      %v1814 = vld [vmem:[%s1813] sm:$0xf]
      %v1815 = vld [vmem:[%s1813 + $0x4] sm:$0xf]
      %v1816 = vld [vmem:[%s1813 + $0x8] sm:$0xf]
      %v1817 = vld [vmem:[%s1813 + $0xc] sm:$0xf]
      %v1818 = vld [vmem:[%s1813 + $0x10] sm:$0xf]
      %v1819 = vld [vmem:[%s1813 + $0x14] sm:$0xf]
      %v1820 = vunpack.c.l.b16 %v1706
      %v1821 = vunpack.c.l.b16 %v1720
      %v1822 = vunpack.c.l.b16 %v1734
      %v1823 = vunpack.c.l.b16 %v1748
      %v1824 = vunpack.c.l.b16 %v1762
      %v1825 = vunpack.c.l.b16 %v1776
      %v1826 = vunpack.c.l.b16 %v1790
      %v1827 = vunpack.c.l.b16 %v1804
      %v1828 = vpack.c.b16 %v1821, %v1820
      %v1829 = vpack.c.b16 %v1823, %v1822
      %v1830 = vpack.c.b16 %v1825, %v1824
      %v1831 = vpack.c.b16 %v1827, %v1826
      %v1838 = vunpack.c.l.b16 %v1814
      %v1839 = vunpack.c.l.b16 %v1815
      %v1840 = vunpack.c.l.b16 %v1816
      %v1841 = vunpack.c.l.b16 %v1817
      %v1842 = vunpack.c.l.b16 %v1818
      %v1843 = vunpack.c.l.b16 %v1819
      %v1844 = vpack.c.b16 %v1839, %v1838
      %v1845 = vpack.c.b16 %v1841, %v1840
      %v1846 = vpack.c.b16 %v1843, %v1842
      %v1851 = vsel %vm330, %v1828, 0
      %v1854 = vsel %vm330, %v1829, 0
      %v1857 = vsel %vm330, %v1830, 0
      %v1860 = vsel %vm330, %v1831, 0
      %1862 = vmatprep.subr.bf16.mxu0 0
      %1863 = vmatpush1.bf16.msra.mxu0 0
      %1864 = vmatprep.subr.bf16.mxu0 0
      %1865 = vmatpush1.bf16.msra.mxu0 0
      %1866 = vmatprep.subr.bf16.mxu0 0
      %1867 = vmatpush1.bf16.msra.mxu0 0
      %1868 = vmatprep.subr.bf16.mxu0 0
      %1869 = vmatpush1.bf16.msra.mxu0 0
      %1870 = vmatprep.subr.bf16.mxu0 0
      %1871 = vmatpush1.bf16.msra.mxu0 0
      %1872 = vmatprep.subr.bf16.mxu0 0
      %1873 = vmatpush1.bf16.msra.mxu0 %v1846
      %1874 = vmatprep.subr.bf16.mxu0 0
      %1875 = vmatpush1.bf16.msra.mxu0 %v1845
      %1876 = vmatprep.subr.bf16.mxu0 0
      %1877 = vmatpush1.bf16.msra.mxu0 %v1844
      %1878 = vmatprep.subr.bf16.mxu0 0
      %1879 = vmatpush2.bf16.msra.mxu0 0
      %1880 = vmatprep.subr.bf16.mxu0 0
      %1881 = vmatpush2.bf16.msra.mxu0 0
      %1882 = vmatprep.subr.bf16.mxu0 0
      %1883 = vmatpush2.bf16.msra.mxu0 0
      %1884 = vmatprep.subr.bf16.mxu0 0
      %1885 = vmatpush2.bf16.msra.mxu0 0
      %1886 = vmatprep.subr.bf16.mxu0 0
      %1887 = vmatpush2.bf16.msra.mxu0 0
      %1888 = vmatprep.subr.bf16.mxu0 0
      %1889 = vmatpush2.bf16.msra.mxu0 0
      %1890 = vmatprep.subr.bf16.mxu0 0
      %1891 = vmatpush2.bf16.msra.mxu0 0
      %1892 = vmatprep.subr.bf16.mxu0 0
      %1893 = vmatpush2.bf16.msra.mxu0 0
      %1894 = vmatprep.mubr.bf16.mxu0 0
      %1895 = vmatmul.mubr.bf16.gmra.mxu0 %v1851
      %v1896 = vpop.f32.mrf.mxu0
      %v1897 = vadd.f32 0.0, %v1896
      %v1898 = vpop.f32.mrf.mxu0
      %v1899 = vpop.f32.mrf.mxu0
      %v1900 = vadd.f32 0.0, %v1899
      %v1901 = vpop.f32.mrf.mxu0
      %1902 = vmatprep.mubr.bf16.mxu0 0
      %1903 = vmatmul.mubr.bf16.gmra.mxu0 %v1854
      %v1904 = vpop.f32.mrf.mxu0
      %v1905 = vadd.f32 0.0, %v1904
      %v1906 = vpop.f32.mrf.mxu0
      %v1907 = vpop.f32.mrf.mxu0
      %v1908 = vadd.f32 0.0, %v1907
      %v1909 = vpop.f32.mrf.mxu0
      %1910 = vmatprep.mubr.bf16.mxu0 0
      %1911 = vmatmul.mubr.bf16.gmra.mxu0 %v1857
      %v1912 = vpop.f32.mrf.mxu0
      %v1913 = vadd.f32 0.0, %v1912
      %v1914 = vpop.f32.mrf.mxu0
      %v1915 = vpop.f32.mrf.mxu0
      %v1916 = vadd.f32 0.0, %v1915
      %v1917 = vpop.f32.mrf.mxu0
      %1918 = vmatprep.mubr.bf16.mxu0 0
      %1919 = vmatmul.mubr.bf16.gmra.mxu0 %v1860
      %v1920 = vpop.f32.mrf.mxu0
      %v1921 = vadd.f32 0.0, %v1920
      %v1922 = vpop.f32.mrf.mxu0
      %v1923 = vpop.f32.mrf.mxu0
      %v1924 = vadd.f32 0.0, %v1923
      %v1925 = vpop.f32.mrf.mxu0
      %1926 = vdwg.mxu0
      %v1927 = vadd.f32 %v1805, %v1897
      %v1928 = vadd.f32 %v1806, %v1900
      %v1929 = vadd.f32 %v1807, %v1905
      %v1930 = vadd.f32 %v1808, %v1908
      %v1931 = vadd.f32 %v1809, %v1913
      %v1932 = vadd.f32 %v1810, %v1916
      %v1933 = vadd.f32 %v1811, %v1921
      %v1934 = vadd.f32 %v1812, %v1924
      %1935 = vst.msk [vmem:[#allocation2] sm:$0xff] %vm416, %v1927
      %1936 = vst.msk [vmem:[#allocation2 + $0x8] sm:$0xff] %vm416, %v1928
      %1937 = vst.msk [vmem:[#allocation2 + $0x10] sm:$0xff] %vm416, %v1929
      %1938 = vst.msk [vmem:[#allocation2 + $0x18] sm:$0xff] %vm416, %v1930
      %1939 = vst.msk [vmem:[#allocation2 + $0x20] sm:$0xff] %vm416, %v1931
      %1940 = vst.msk [vmem:[#allocation2 + $0x28] sm:$0xff] %vm416, %v1932
      %1941 = vst.msk [vmem:[#allocation2 + $0x30] sm:$0xff] %vm416, %v1933
      %1942 = vst.msk [vmem:[#allocation2 + $0x38] sm:$0xff] %vm416, %v1934
      %v1943 = vld [vmem:[%s1522] sm:$0xe]
      %v1944 = vld [vmem:[%s1522 + $0x4] sm:$0x1]
      %v1945 = vld [vmem:[%s1522 + $0x8] sm:$0xe]
      %v1946 = vld [vmem:[%s1522 + $0xc] sm:$0x1]
      %v1947 = vld [vmem:[%s1522 + $0x10] sm:$0xe]
      %v1948 = vld [vmem:[%s1522 + $0x14] sm:$0x1]
      %v1949 = vld [vmem:[%s1522 + $0x18] sm:$0xe]
      %v1950 = vld [vmem:[%s1522 + $0x1c] sm:$0x1]
      %v1951 = vld [vmem:[%s1522 + $0x20] sm:$0xe]
      %v1952 = vld [vmem:[%s1522 + $0x24] sm:$0x1]
      %v1953 = vld [vmem:[%s1522 + $0x28] sm:$0xe]
      %v1954 = vld [vmem:[%s1522 + $0x2c] sm:$0x1]
      %v1955 = vld [vmem:[%s1522 + $0x30] sm:$0xe]
      %v1956 = vld [vmem:[%s1522 + $0x34] sm:$0x1]
      %v1957 = vld [vmem:[%s1522 + $0x38] sm:$0xe]
      %v1958 = vld [vmem:[%s1522 + $0x3c] sm:$0x1]
      %v1975 = vrot.slane %v1943, 5
      %v1976 = vrot.slane %v1975, 4
      %v1977 = vrot.slane %v1944, 5
      %v1978 = vsel %vm728, %v1976, %v1977
      %v1979 = vrot.slane %v1945, 5
      %v1980 = vrot.slane %v1979, 4
      %v1981 = vrot.slane %v1946, 5
      %v1982 = vsel %vm728, %v1980, %v1981
      %v1983 = vrot.slane %v1947, 5
      %v1984 = vrot.slane %v1983, 4
      %v1985 = vrot.slane %v1948, 5
      %v1986 = vsel %vm728, %v1984, %v1985
      %v1987 = vrot.slane %v1949, 5
      %v1988 = vrot.slane %v1987, 4
      %v1989 = vrot.slane %v1950, 5
      %v1990 = vsel %vm728, %v1988, %v1989
      %v1991 = vrot.slane %v1951, 5
      %v1992 = vrot.slane %v1991, 4
      %v1993 = vrot.slane %v1952, 5
      %v1994 = vsel %vm728, %v1992, %v1993
      %v1995 = vrot.slane %v1953, 5
      %v1996 = vrot.slane %v1995, 4
      %v1997 = vrot.slane %v1954, 5
      %v1998 = vsel %vm728, %v1996, %v1997
      %v1999 = vrot.slane %v1955, 5
      %v2000 = vrot.slane %v1999, 4
      %v2001 = vrot.slane %v1956, 5
      %v2002 = vsel %vm728, %v2000, %v2001
      %v2003 = vrot.slane %v1957, 5
      %v2004 = vrot.slane %v2003, 4
      %v2005 = vrot.slane %v1958, 5
      %v2006 = vsel %vm728, %v2004, %v2005
      %v2007 = vld [vmem:[#allocation2] sm:$0xff]
      %v2008 = vld [vmem:[#allocation2 + $0x8] sm:$0xff]
      %v2009 = vld [vmem:[#allocation2 + $0x10] sm:$0xff]
      %v2010 = vld [vmem:[#allocation2 + $0x18] sm:$0xff]
      %v2011 = vld [vmem:[#allocation2 + $0x20] sm:$0xff]
      %v2012 = vld [vmem:[#allocation2 + $0x28] sm:$0xff]
      %v2013 = vld [vmem:[#allocation2 + $0x30] sm:$0xff]
      %v2014 = vld [vmem:[#allocation2 + $0x38] sm:$0xff]
      %s2015 = scalar_lea.vmem %s243, 192
      %v2016 = vld [vmem:[%s2015] sm:$0xf]
      %v2017 = vld [vmem:[%s2015 + $0x4] sm:$0xf]
      %v2018 = vld [vmem:[%s2015 + $0x8] sm:$0xf]
      %v2019 = vld [vmem:[%s2015 + $0xc] sm:$0xf]
      %v2020 = vld [vmem:[%s2015 + $0x10] sm:$0xf]
      %v2021 = vld [vmem:[%s2015 + $0x14] sm:$0xf]
      %v2022 = vunpack.c.l.b16 %v1978
      %v2023 = vunpack.c.l.b16 %v1982
      %v2024 = vunpack.c.l.b16 %v1986
      %v2025 = vunpack.c.l.b16 %v1990
      %v2026 = vunpack.c.l.b16 %v1994
      %v2027 = vunpack.c.l.b16 %v1998
      %v2028 = vunpack.c.l.b16 %v2002
      %v2029 = vunpack.c.l.b16 %v2006
      %v2030 = vpack.c.b16 %v2023, %v2022
      %v2031 = vpack.c.b16 %v2025, %v2024
      %v2032 = vpack.c.b16 %v2027, %v2026
      %v2033 = vpack.c.b16 %v2029, %v2028
      %v2040 = vunpack.c.l.b16 %v2016
      %v2041 = vunpack.c.l.b16 %v2017
      %v2042 = vunpack.c.l.b16 %v2018
      %v2043 = vunpack.c.l.b16 %v2019
      %v2044 = vunpack.c.l.b16 %v2020
      %v2045 = vunpack.c.l.b16 %v2021
      %v2046 = vpack.c.b16 %v2041, %v2040
      %v2047 = vpack.c.b16 %v2043, %v2042
      %v2048 = vpack.c.b16 %v2045, %v2044
      %v2053 = vsel %vm330, %v2030, 0
      %v2056 = vsel %vm330, %v2031, 0
      %v2059 = vsel %vm330, %v2032, 0
      %v2062 = vsel %vm330, %v2033, 0
      %2064 = vmatprep.subr.bf16.mxu0 0
      %2065 = vmatpush1.bf16.msra.mxu0 0
      %2066 = vmatprep.subr.bf16.mxu0 0
      %2067 = vmatpush1.bf16.msra.mxu0 0
      %2068 = vmatprep.subr.bf16.mxu0 0
      %2069 = vmatpush1.bf16.msra.mxu0 0
      %2070 = vmatprep.subr.bf16.mxu0 0
      %2071 = vmatpush1.bf16.msra.mxu0 0
      %2072 = vmatprep.subr.bf16.mxu0 0
      %2073 = vmatpush1.bf16.msra.mxu0 0
      %2074 = vmatprep.subr.bf16.mxu0 0
      %2075 = vmatpush1.bf16.msra.mxu0 %v2048
      %2076 = vmatprep.subr.bf16.mxu0 0
      %2077 = vmatpush1.bf16.msra.mxu0 %v2047
      %2078 = vmatprep.subr.bf16.mxu0 0
      %2079 = vmatpush1.bf16.msra.mxu0 %v2046
      %2080 = vmatprep.subr.bf16.mxu0 0
      %2081 = vmatpush2.bf16.msra.mxu0 0
      %2082 = vmatprep.subr.bf16.mxu0 0
      %2083 = vmatpush2.bf16.msra.mxu0 0
      %2084 = vmatprep.subr.bf16.mxu0 0
      %2085 = vmatpush2.bf16.msra.mxu0 0
      %2086 = vmatprep.subr.bf16.mxu0 0
      %2087 = vmatpush2.bf16.msra.mxu0 0
      %2088 = vmatprep.subr.bf16.mxu0 0
      %2089 = vmatpush2.bf16.msra.mxu0 0
      %2090 = vmatprep.subr.bf16.mxu0 0
      %2091 = vmatpush2.bf16.msra.mxu0 0
      %2092 = vmatprep.subr.bf16.mxu0 0
      %2093 = vmatpush2.bf16.msra.mxu0 0
      %2094 = vmatprep.subr.bf16.mxu0 0
      %2095 = vmatpush2.bf16.msra.mxu0 0
      %2096 = vmatprep.mubr.bf16.mxu0 0
      %2097 = vmatmul.mubr.bf16.gmra.mxu0 %v2053
      %v2098 = vpop.f32.mrf.mxu0
      %v2099 = vadd.f32 0.0, %v2098
      %v2100 = vpop.f32.mrf.mxu0
      %v2101 = vpop.f32.mrf.mxu0
      %v2102 = vadd.f32 0.0, %v2101
      %v2103 = vpop.f32.mrf.mxu0
      %2104 = vmatprep.mubr.bf16.mxu0 0
      %2105 = vmatmul.mubr.bf16.gmra.mxu0 %v2056
      %v2106 = vpop.f32.mrf.mxu0
      %v2107 = vadd.f32 0.0, %v2106
      %v2108 = vpop.f32.mrf.mxu0
      %v2109 = vpop.f32.mrf.mxu0
      %v2110 = vadd.f32 0.0, %v2109
      %v2111 = vpop.f32.mrf.mxu0
      %2112 = vmatprep.mubr.bf16.mxu0 0
      %2113 = vmatmul.mubr.bf16.gmra.mxu0 %v2059
      %v2114 = vpop.f32.mrf.mxu0
      %v2115 = vadd.f32 0.0, %v2114
      %v2116 = vpop.f32.mrf.mxu0
      %v2117 = vpop.f32.mrf.mxu0
      %v2118 = vadd.f32 0.0, %v2117
      %v2119 = vpop.f32.mrf.mxu0
      %2120 = vmatprep.mubr.bf16.mxu0 0
      %2121 = vmatmul.mubr.bf16.gmra.mxu0 %v2062
      %v2122 = vpop.f32.mrf.mxu0
      %v2123 = vadd.f32 0.0, %v2122
      %v2124 = vpop.f32.mrf.mxu0
      %v2125 = vpop.f32.mrf.mxu0
      %v2126 = vadd.f32 0.0, %v2125
      %v2127 = vpop.f32.mrf.mxu0
      %2128 = vdwg.mxu0
      %v2129 = vadd.f32 %v2007, %v2099
      %v2130 = vadd.f32 %v2008, %v2102
      %v2131 = vadd.f32 %v2009, %v2107
      %v2132 = vadd.f32 %v2010, %v2110
      %v2133 = vadd.f32 %v2011, %v2115
      %v2134 = vadd.f32 %v2012, %v2118
      %v2135 = vadd.f32 %v2013, %v2123
      %v2136 = vadd.f32 %v2014, %v2126
      %2137 = vst.msk [vmem:[#allocation2] sm:$0xff] %vm416, %v2129
      %2138 = vst.msk [vmem:[#allocation2 + $0x8] sm:$0xff] %vm416, %v2130
      %2139 = vst.msk [vmem:[#allocation2 + $0x10] sm:$0xff] %vm416, %v2131
      %2140 = vst.msk [vmem:[#allocation2 + $0x18] sm:$0xff] %vm416, %v2132
      %2141 = vst.msk [vmem:[#allocation2 + $0x20] sm:$0xff] %vm416, %v2133
      %2142 = vst.msk [vmem:[#allocation2 + $0x28] sm:$0xff] %vm416, %v2134
      %2143 = vst.msk [vmem:[#allocation2 + $0x30] sm:$0xff] %vm416, %v2135
      %2144 = vst.msk [vmem:[#allocation2 + $0x38] sm:$0xff] %vm416, %v2136
      // Predicated region
      $region37: #{transformer_block_1.27} parent=31 // pred_check
        %p2145 = pneg %p257
      $region38: #{transformer_block_1.27} parent=31 // pred_check_branch
        %2147 = sbr.rel (%p2145) target = $region40
      $region39: #{transformer_block_1.27} parent=31 // pred_region
        %v2148 = vld [vmem:[#allocation2] sm:$0xff]
        %v2149 = vld [vmem:[#allocation2 + $0x8] sm:$0xff]
        %v2150 = vld [vmem:[#allocation2 + $0x10] sm:$0xff]
        %v2151 = vld [vmem:[#allocation2 + $0x18] sm:$0xff]
        %v2152 = vld [vmem:[#allocation2 + $0x20] sm:$0xff]
        %v2153 = vld [vmem:[#allocation2 + $0x28] sm:$0xff]
        %v2154 = vld [vmem:[#allocation2 + $0x30] sm:$0xff]
        %v2155 = vld [vmem:[#allocation2 + $0x38] sm:$0xff]
        %v2156 = vld [vmem:[%s247] sm:$0x1]
        %v2158 = vlaneseq
        %v2159 = vshrl.u32 %v2158, 7
        %v2160 = vsub.s32 0, %v2159
        %v2161 = vrot.slane %v2156, %v2160
        %v2163 = vadd.f32 %v2148, %v2161
        %v2164 = vadd.f32 %v2149, %v2161
        %v2165 = vadd.f32 %v2150, %v2161
        %v2166 = vadd.f32 %v2151, %v2161
        %v2167 = vadd.f32 %v2152, %v2161
        %v2168 = vadd.f32 %v2153, %v2161
        %v2169 = vadd.f32 %v2154, %v2161
        %v2170 = vadd.f32 %v2155, %v2161
        %v2171 = vpack.c.bf16 %v2163, %v2163
        %v2172 = vpack.c.bf16 %v2164, %v2164
        %v2173 = vpack.c.bf16 %v2165, %v2165
        %v2174 = vpack.c.bf16 %v2166, %v2166
        %v2175 = vpack.c.bf16 %v2167, %v2167
        %v2176 = vpack.c.bf16 %v2168, %v2168
        %v2177 = vpack.c.bf16 %v2169, %v2169
        %v2178 = vpack.c.bf16 %v2170, %v2170
        %vm2179 = vcmask 125952
        %2180 = vst.msk [vmem:[%s255] sm:$0xf] %vm2179, %v2171
        %2181 = vst.msk [vmem:[%s255 + $0x4] sm:$0xf] %vm2179, %v2172
        %2182 = vst.msk [vmem:[%s255 + $0x8] sm:$0xf] %vm2179, %v2173
        %2183 = vst.msk [vmem:[%s255 + $0xc] sm:$0xf] %vm2179, %v2174
        %2184 = vst.msk [vmem:[%s255 + $0x10] sm:$0xf] %vm2179, %v2175
        %2185 = vst.msk [vmem:[%s255 + $0x14] sm:$0xf] %vm2179, %v2176
        %2186 = vst.msk [vmem:[%s255 + $0x18] sm:$0xf] %vm2179, %v2177
        %2187 = vst.msk [vmem:[%s255 + $0x1c] sm:$0xf] %vm2179, %v2178
      $region40: #{transformer_block_1.27} parent=31 // pred_fallthru
        _
      %p2188 = scmp.lt.s32.totalorder %s19, 1
      %s2189 = scalar_select %p2188, %s19, 1
      %p2190 = scmp.lt.s32.totalorder %s20, 0
      %s2191 = scalar_select %p2190, %s20, 0
      %s2192 = smul.addr %s2189, 8
      %s2193 = sadd.s32 %s2191, %s2192
      %s2194 = smul.addr %s2193, 4
      %s2195 = scalar_lea.vmem %s3, %s2194
      // Predicated region
      $region41: #{transformer_block_1.27} parent=31 // pred_check
        %p2196 = pneg %p135
      $region42: #{transformer_block_1.27} parent=31 // pred_check_branch
        %2198 = sbr.rel (%p2196) target = $region44
      $region43: #{transformer_block_1.27} parent=31 // pred_region
        _
      $region44: #{transformer_block_1.27} parent=31 // pred_fallthru
        _
    $region32: #{transformer_block_1.27} parent=5 // pred_fallthru
      _
    %p2199 = scmp.le.s32.totalorder 2, %s9
    // Predicated region
    $region45: #{transformer_block_1.27} parent=5 // pred_check
      %p2200 = pneg %p2199
    $region46: #{transformer_block_1.27} parent=5 // pred_check_branch
      %2202 = sbr.rel (%p2200) target = $region48
    $region47: #{transformer_block_1.27} parent=5 // pred_region
      %s2203 = ssub.s32 %s9, 2
      // Predicated region
      $region49: #{transformer_block_1.27} parent=47 // pred_check
        %p2204 = pneg %p141
      $region50: #{transformer_block_1.27} parent=47 // pred_check_branch
        %2206 = sbr.rel (%p2204) target = $region52
      $region51: #{transformer_block_1.27} parent=47 // pred_region
        %p2207 = scmp.lt.s32.totalorder %s22, 1
        %s2208 = scalar_select %p2207, %s22, 1
        %p2209 = scmp.lt.s32.totalorder %s23, 0
        %s2210 = scalar_select %p2209, %s23, 0
        %s2211 = smul.addr %s2208, 8
        %s2212 = sadd.s32 %s2210, %s2211
        %s2213 = smul.addr %s2212, 4
        %s2214 = scalar_lea.vmem %s3, %s2213
      $region52: #{transformer_block_1.27} parent=47 // pred_fallthru
        _
    $region48: #{transformer_block_1.27} parent=5 // pred_fallthru
      _
  $region6: #{transformer_block_1.27} parent=0 // loop_footer
    %s13 = sadd.s32 1, %s9
  $region7: #{transformer_block_1.27} parent=0 // loop_footer_branch
    %8 = sbr.rel target = $region3
  $region8: #{transformer_block_1.27} parent=0 // loop_exit
    _

// kernel: transformer_block_1.30
$region0: #{transformer_block_1.30}
  #allocation0 [shape = 'u32[]', space=smem, size = 0x4, offset = 0x4, fixed_abs, tag = 'smem constant byte address 0x4 - core index']
  #allocation1 [shape = 'u32[144,128]{1,0:T(1,128)}', space=vmem, size = 0x12000, scoped, tag = 'internal scratch']
  %s0 = inlined_call_operand.vmem [shape: bf16[128,16], index: 0, kind: input, shape index: {}]
  %s1 = inlined_call_operand.vmem [shape: bf16[16,16], index: 1, kind: input, shape index: {}]
  %s2 = inlined_call_operand.vmem [shape: f32[1,16], index: 2, kind: input, shape index: {}]
  %s3 = inlined_call_operand.vmem [shape: f32[128,16], index: 3, kind: output, shape index: {}]
  %s4 = sld [smem:[#allocation0]]
  $region22: #{transformer_block_1.30} parent=0
    _
  %s6 = ssub.s32 1, %s4
  %s7 = scalar_select 0, %s6, %s4
  // Predicated region
  $region2: #{transformer_block_1.30} parent=0 // pred_check
    _
  $region3: #{transformer_block_1.30} parent=0 // pred_check_branch
    %9 = sbr.rel (0) target = $region5
  $region4: #{transformer_block_1.30} parent=0 // pred_region
    _
  $region5: #{transformer_block_1.30} parent=0 // pred_fallthru
    _
  // Predicated region
  $region6: #{transformer_block_1.30} parent=0 // pred_check
    _
  $region7: #{transformer_block_1.30} parent=0 // pred_check_branch
    %11 = sbr.rel (0) target = $region9
  $region8: #{transformer_block_1.30} parent=0 // pred_region
    _
  $region9: #{transformer_block_1.30} parent=0 // pred_fallthru
    _
  // Predicated region
  $region10: #{transformer_block_1.30} parent=0 // pred_check
    _
  $region11: #{transformer_block_1.30} parent=0 // pred_check_branch
    %13 = sbr.rel (0) target = $region13
  $region12: #{transformer_block_1.30} parent=0 // pred_region
    _
  $region13: #{transformer_block_1.30} parent=0 // pred_fallthru
    _
  %v15 = vld [vmem:[%s0] sm:$0xf]
  %v16 = vld [vmem:[%s0 + $0x4] sm:$0xf]
  %v17 = vld [vmem:[%s0 + $0x8] sm:$0xf]
  %v18 = vld [vmem:[%s0 + $0xc] sm:$0xf]
  %v19 = vld [vmem:[%s0 + $0x10] sm:$0xf]
  %v20 = vld [vmem:[%s0 + $0x14] sm:$0xf]
  %v21 = vld [vmem:[%s0 + $0x18] sm:$0xf]
  %v22 = vld [vmem:[%s0 + $0x1c] sm:$0xf]
  %v23 = vld [vmem:[%s0 + $0x20] sm:$0xf]
  %v24 = vld [vmem:[%s0 + $0x24] sm:$0xf]
  %v25 = vld [vmem:[%s0 + $0x28] sm:$0xf]
  %v26 = vld [vmem:[%s0 + $0x2c] sm:$0xf]
  %v27 = vld [vmem:[%s0 + $0x30] sm:$0xf]
  %v28 = vld [vmem:[%s0 + $0x34] sm:$0xf]
  %v29 = vld [vmem:[%s0 + $0x38] sm:$0xf]
  %v30 = vld [vmem:[%s0 + $0x3c] sm:$0xf]
  %v31 = vld [vmem:[%s1] sm:$0xf]
  %v32 = vld [vmem:[%s1 + $0x4] sm:$0xf]
  %v33 = vld [vmem:[%s2] sm:$0x1]
  %v35 = vlaneseq
  %v36 = vshrl.u32 %v35, 7
  %v37 = vsub.s32 0, %v36
  %v38 = vrot.slane %v33, %v37
  %v56 = vunpack.c.l.b16 %v15
  %v57 = vunpack.c.l.b16 %v16
  %v58 = vunpack.c.l.b16 %v17
  %v59 = vunpack.c.l.b16 %v18
  %v60 = vunpack.c.l.b16 %v19
  %v61 = vunpack.c.l.b16 %v20
  %v62 = vunpack.c.l.b16 %v21
  %v63 = vunpack.c.l.b16 %v22
  %v64 = vunpack.c.l.b16 %v23
  %v65 = vunpack.c.l.b16 %v24
  %v66 = vunpack.c.l.b16 %v25
  %v67 = vunpack.c.l.b16 %v26
  %v68 = vunpack.c.l.b16 %v27
  %v69 = vunpack.c.l.b16 %v28
  %v70 = vunpack.c.l.b16 %v29
  %v71 = vunpack.c.l.b16 %v30
  %v72 = vpack.c.b16 %v57, %v56
  %v73 = vpack.c.b16 %v59, %v58
  %v74 = vpack.c.b16 %v61, %v60
  %v75 = vpack.c.b16 %v63, %v62
  %v76 = vpack.c.b16 %v65, %v64
  %v77 = vpack.c.b16 %v67, %v66
  %v78 = vpack.c.b16 %v69, %v68
  %v79 = vpack.c.b16 %v71, %v70
  %v82 = vunpack.c.l.b16 %v31
  %v83 = vunpack.c.l.b16 %v32
  %v84 = vpack.c.b16 %v83, %v82
  %vm86 = vcmask 130048
  %v88 = vsel %vm86, %v72, 0
  %v91 = vsel %vm86, %v73, 0
  %v94 = vsel %vm86, %v74, 0
  %v97 = vsel %vm86, %v75, 0
  %v100 = vsel %vm86, %v76, 0
  %v103 = vsel %vm86, %v77, 0
  %v106 = vsel %vm86, %v78, 0
  %v109 = vsel %vm86, %v79, 0
  %111 = vmatprep.subr.bf16.mxu0 0
  %112 = vmatpush1.bf16.msra.mxu0 0
  %113 = vmatprep.subr.bf16.mxu0 0
  %114 = vmatpush1.bf16.msra.mxu0 0
  %115 = vmatprep.subr.bf16.mxu0 0
  %116 = vmatpush1.bf16.msra.mxu0 0
  %117 = vmatprep.subr.bf16.mxu0 0
  %118 = vmatpush1.bf16.msra.mxu0 0
  %119 = vmatprep.subr.bf16.mxu0 0
  %120 = vmatpush1.bf16.msra.mxu0 0
  %121 = vmatprep.subr.bf16.mxu0 0
  %122 = vmatpush1.bf16.msra.mxu0 0
  %123 = vmatprep.subr.bf16.mxu0 0
  %124 = vmatpush1.bf16.msra.mxu0 0
  %125 = vmatprep.subr.bf16.mxu0 0
  %126 = vmatpush1.bf16.msra.mxu0 %v84
  %127 = vmatprep.subr.bf16.mxu0 0
  %128 = vmatpush2.bf16.msra.mxu0 0
  %129 = vmatprep.subr.bf16.mxu0 0
  %130 = vmatpush2.bf16.msra.mxu0 0
  %131 = vmatprep.subr.bf16.mxu0 0
  %132 = vmatpush2.bf16.msra.mxu0 0
  %133 = vmatprep.subr.bf16.mxu0 0
  %134 = vmatpush2.bf16.msra.mxu0 0
  %135 = vmatprep.subr.bf16.mxu0 0
  %136 = vmatpush2.bf16.msra.mxu0 0
  %137 = vmatprep.subr.bf16.mxu0 0
  %138 = vmatpush2.bf16.msra.mxu0 0
  %139 = vmatprep.subr.bf16.mxu0 0
  %140 = vmatpush2.bf16.msra.mxu0 0
  %141 = vmatprep.subr.bf16.mxu0 0
  %142 = vmatpush2.bf16.msra.mxu0 0
  %143 = vmatprep.mubr.bf16.mxu0 0
  %144 = vmatmul.mubr.bf16.gmra.mxu0 %v88
  %v145 = vpop.f32.mrf.mxu0
  %v146 = vadd.f32 %v38, %v145
  %v147 = vpop.f32.mrf.mxu0
  %v148 = vpop.f32.mrf.mxu0
  %v149 = vadd.f32 %v38, %v148
  %v150 = vpop.f32.mrf.mxu0
  %151 = vmatprep.mubr.bf16.mxu0 0
  %152 = vmatmul.mubr.bf16.gmra.mxu0 %v91
  %v153 = vpop.f32.mrf.mxu0
  %v154 = vadd.f32 %v38, %v153
  %v155 = vpop.f32.mrf.mxu0
  %v156 = vpop.f32.mrf.mxu0
  %v157 = vadd.f32 %v38, %v156
  %v158 = vpop.f32.mrf.mxu0
  %159 = vmatprep.mubr.bf16.mxu0 0
  %160 = vmatmul.mubr.bf16.gmra.mxu0 %v94
  %v161 = vpop.f32.mrf.mxu0
  %v162 = vadd.f32 %v38, %v161
  %v163 = vpop.f32.mrf.mxu0
  %v164 = vpop.f32.mrf.mxu0
  %v165 = vadd.f32 %v38, %v164
  %v166 = vpop.f32.mrf.mxu0
  %167 = vmatprep.mubr.bf16.mxu0 0
  %168 = vmatmul.mubr.bf16.gmra.mxu0 %v97
  %v169 = vpop.f32.mrf.mxu0
  %v170 = vadd.f32 %v38, %v169
  %v171 = vpop.f32.mrf.mxu0
  %v172 = vpop.f32.mrf.mxu0
  %v173 = vadd.f32 %v38, %v172
  %v174 = vpop.f32.mrf.mxu0
  %175 = vmatprep.mubr.bf16.mxu0 0
  %176 = vmatmul.mubr.bf16.gmra.mxu0 %v100
  %v177 = vpop.f32.mrf.mxu0
  %v178 = vadd.f32 %v38, %v177
  %v179 = vpop.f32.mrf.mxu0
  %v180 = vpop.f32.mrf.mxu0
  %v181 = vadd.f32 %v38, %v180
  %v182 = vpop.f32.mrf.mxu0
  %183 = vmatprep.mubr.bf16.mxu0 0
  %184 = vmatmul.mubr.bf16.gmra.mxu0 %v103
  %v185 = vpop.f32.mrf.mxu0
  %v186 = vadd.f32 %v38, %v185
  %v187 = vpop.f32.mrf.mxu0
  %v188 = vpop.f32.mrf.mxu0
  %v189 = vadd.f32 %v38, %v188
  %v190 = vpop.f32.mrf.mxu0
  %191 = vmatprep.mubr.bf16.mxu0 0
  %192 = vmatmul.mubr.bf16.gmra.mxu0 %v106
  %v193 = vpop.f32.mrf.mxu0
  %v194 = vadd.f32 %v38, %v193
  %v195 = vpop.f32.mrf.mxu0
  %v196 = vpop.f32.mrf.mxu0
  %v197 = vadd.f32 %v38, %v196
  %v198 = vpop.f32.mrf.mxu0
  %199 = vmatprep.mubr.bf16.mxu0 0
  %200 = vmatmul.mubr.bf16.gmra.mxu0 %v109
  %v201 = vpop.f32.mrf.mxu0
  %v202 = vadd.f32 %v38, %v201
  %v203 = vpop.f32.mrf.mxu0
  %v204 = vpop.f32.mrf.mxu0
  %v205 = vadd.f32 %v38, %v204
  %v206 = vpop.f32.mrf.mxu0
  %207 = vdwg.mxu0
  %208 = vst.msk [vmem:[%s3] sm:$0xff] %vm86, %v146
  %209 = vst.msk [vmem:[%s3 + $0x8] sm:$0xff] %vm86, %v149
  %210 = vst.msk [vmem:[%s3 + $0x10] sm:$0xff] %vm86, %v154
  %211 = vst.msk [vmem:[%s3 + $0x18] sm:$0xff] %vm86, %v157
  %212 = vst.msk [vmem:[%s3 + $0x20] sm:$0xff] %vm86, %v162
  %213 = vst.msk [vmem:[%s3 + $0x28] sm:$0xff] %vm86, %v165
  %214 = vst.msk [vmem:[%s3 + $0x30] sm:$0xff] %vm86, %v170
  %215 = vst.msk [vmem:[%s3 + $0x38] sm:$0xff] %vm86, %v173
  %216 = vst.msk [vmem:[%s3 + $0x40] sm:$0xff] %vm86, %v178
  %217 = vst.msk [vmem:[%s3 + $0x48] sm:$0xff] %vm86, %v181
  %218 = vst.msk [vmem:[%s3 + $0x50] sm:$0xff] %vm86, %v186
  %219 = vst.msk [vmem:[%s3 + $0x58] sm:$0xff] %vm86, %v189
  %220 = vst.msk [vmem:[%s3 + $0x60] sm:$0xff] %vm86, %v194
  %221 = vst.msk [vmem:[%s3 + $0x68] sm:$0xff] %vm86, %v197
  %222 = vst.msk [vmem:[%s3 + $0x70] sm:$0xff] %vm86, %v202
  %223 = vst.msk [vmem:[%s3 + $0x78] sm:$0xff] %vm86, %v205
  // Predicated region
  $region14: #{transformer_block_1.30} parent=0 // pred_check
    _
  $region15: #{transformer_block_1.30} parent=0 // pred_check_branch
    %225 = sbr.rel (0) target = $region17
  $region16: #{transformer_block_1.30} parent=0 // pred_region
    _
  $region17: #{transformer_block_1.30} parent=0 // pred_fallthru
    _
  // Predicated region
  $region18: #{transformer_block_1.30} parent=0 // pred_check
    _
  $region19: #{transformer_block_1.30} parent=0 // pred_check_branch
    %227 = sbr.rel (0) target = $region21
  $region20: #{transformer_block_1.30} parent=0 // pred_region
    _
  $region21: #{transformer_block_1.30} parent=0 // pred_fallthru
    _

// kernel: transformer_block_1.31
$region0: #{transformer_block_1.31}
  #allocation0 [shape = 'u32[]', space=smem, size = 0x4, offset = 0x4, fixed_abs, tag = 'smem constant byte address 0x4 - core index']
  #allocation1 [shape = 'u32[144,128]{1,0:T(1,128)}', space=vmem, size = 0x12000, scoped, tag = 'internal scratch']
  %s0 = inlined_call_operand.vmem [shape: f32[128,16], index: 0, kind: input, shape index: {}]
  %s1 = inlined_call_operand.vmem [shape: f32[1,16], index: 1, kind: input, shape index: {}]
  %s2 = inlined_call_operand.vmem [shape: f32[1,16], index: 2, kind: input, shape index: {}]
  %s3 = inlined_call_operand.vmem [shape: bf16[16,48], index: 3, kind: input, shape index: {}]
  %s4 = inlined_call_operand.vmem [shape: f32[1,48], index: 4, kind: input, shape index: {}]
  %s5 = inlined_call_operand.vmem [shape: bf16[128,48], index: 5, kind: output, shape index: {}]
  %s6 = sld [smem:[#allocation0]]
  $region30: #{transformer_block_1.31} parent=0
    _
  %s8 = ssub.s32 1, %s6
  %s9 = scalar_select 0, %s8, %s6
  // Predicated region
  $region2: #{transformer_block_1.31} parent=0 // pred_check
    _
  $region3: #{transformer_block_1.31} parent=0 // pred_check_branch
    %11 = sbr.rel (0) target = $region5
  $region4: #{transformer_block_1.31} parent=0 // pred_region
    _
  $region5: #{transformer_block_1.31} parent=0 // pred_fallthru
    _
  // Predicated region
  $region6: #{transformer_block_1.31} parent=0 // pred_check
    _
  $region7: #{transformer_block_1.31} parent=0 // pred_check_branch
    %13 = sbr.rel (0) target = $region9
  $region8: #{transformer_block_1.31} parent=0 // pred_region
    _
  $region9: #{transformer_block_1.31} parent=0 // pred_fallthru
    _
  // Predicated region
  $region10: #{transformer_block_1.31} parent=0 // pred_check
    _
  $region11: #{transformer_block_1.31} parent=0 // pred_check_branch
    %15 = sbr.rel (0) target = $region13
  $region12: #{transformer_block_1.31} parent=0 // pred_region
    _
  $region13: #{transformer_block_1.31} parent=0 // pred_fallthru
    _
  // Predicated region
  $region14: #{transformer_block_1.31} parent=0 // pred_check
    _
  $region15: #{transformer_block_1.31} parent=0 // pred_check_branch
    %17 = sbr.rel (0) target = $region17
  $region16: #{transformer_block_1.31} parent=0 // pred_region
    _
  $region17: #{transformer_block_1.31} parent=0 // pred_fallthru
    _
  // Predicated region
  $region18: #{transformer_block_1.31} parent=0 // pred_check
    _
  $region19: #{transformer_block_1.31} parent=0 // pred_check_branch
    %19 = sbr.rel (0) target = $region21
  $region20: #{transformer_block_1.31} parent=0 // pred_region
    _
  $region21: #{transformer_block_1.31} parent=0 // pred_fallthru
    _
  %v21 = vld [vmem:[%s0] sm:$0xff]
  %v22 = vld [vmem:[%s0 + $0x8] sm:$0xff]
  %v23 = vld [vmem:[%s0 + $0x10] sm:$0xff]
  %v24 = vld [vmem:[%s0 + $0x18] sm:$0xff]
  %v25 = vld [vmem:[%s0 + $0x20] sm:$0xff]
  %v26 = vld [vmem:[%s0 + $0x28] sm:$0xff]
  %v27 = vld [vmem:[%s0 + $0x30] sm:$0xff]
  %v28 = vld [vmem:[%s0 + $0x38] sm:$0xff]
  %v29 = vld [vmem:[%s0 + $0x40] sm:$0xff]
  %v30 = vld [vmem:[%s0 + $0x48] sm:$0xff]
  %v31 = vld [vmem:[%s0 + $0x50] sm:$0xff]
  %v32 = vld [vmem:[%s0 + $0x58] sm:$0xff]
  %v33 = vld [vmem:[%s0 + $0x60] sm:$0xff]
  %v34 = vld [vmem:[%s0 + $0x68] sm:$0xff]
  %v35 = vld [vmem:[%s0 + $0x70] sm:$0xff]
  %v36 = vld [vmem:[%s0 + $0x78] sm:$0xff]
  %vm37 = vcmask 130048
  %v38 = vsel %vm37, %v21, 0.0
  %39 = vadd.xlane.f32.xlu0 %v38
  %v40 = vpop.xlane.xlu0 %39
  %v41 = vsel %vm37, %v22, 0.0
  %42 = vadd.xlane.f32.xlu0 %v41
  %v43 = vpop.xlane.xlu0 %42
  %v44 = vsel %vm37, %v23, 0.0
  %45 = vadd.xlane.f32.xlu0 %v44
  %v46 = vpop.xlane.xlu0 %45
  %v47 = vsel %vm37, %v24, 0.0
  %48 = vadd.xlane.f32.xlu0 %v47
  %v49 = vpop.xlane.xlu0 %48
  %v50 = vsel %vm37, %v25, 0.0
  %51 = vadd.xlane.f32.xlu0 %v50
  %v52 = vpop.xlane.xlu0 %51
  %v53 = vsel %vm37, %v26, 0.0
  %54 = vadd.xlane.f32.xlu0 %v53
  %v55 = vpop.xlane.xlu0 %54
  %v56 = vsel %vm37, %v27, 0.0
  %57 = vadd.xlane.f32.xlu0 %v56
  %v58 = vpop.xlane.xlu0 %57
  %v59 = vsel %vm37, %v28, 0.0
  %60 = vadd.xlane.f32.xlu0 %v59
  %v61 = vpop.xlane.xlu0 %60
  %v62 = vsel %vm37, %v29, 0.0
  %63 = vadd.xlane.f32.xlu0 %v62
  %v64 = vpop.xlane.xlu0 %63
  %v65 = vsel %vm37, %v30, 0.0
  %66 = vadd.xlane.f32.xlu0 %v65
  %v67 = vpop.xlane.xlu0 %66
  %v68 = vsel %vm37, %v31, 0.0
  %69 = vadd.xlane.f32.xlu0 %v68
  %v70 = vpop.xlane.xlu0 %69
  %v71 = vsel %vm37, %v32, 0.0
  %72 = vadd.xlane.f32.xlu0 %v71
  %v73 = vpop.xlane.xlu0 %72
  %v74 = vsel %vm37, %v33, 0.0
  %75 = vadd.xlane.f32.xlu0 %v74
  %v76 = vpop.xlane.xlu0 %75
  %v77 = vsel %vm37, %v34, 0.0
  %78 = vadd.xlane.f32.xlu0 %v77
  %v79 = vpop.xlane.xlu0 %78
  %v80 = vsel %vm37, %v35, 0.0
  %81 = vadd.xlane.f32.xlu0 %v80
  %v82 = vpop.xlane.xlu0 %81
  %v83 = vsel %vm37, %v36, 0.0
  %84 = vadd.xlane.f32.xlu0 %v83
  %v85 = vpop.xlane.xlu0 %84
  %v86 = vrcp.pop 16.0
  %v87 = vmul.f32 %v40, %v86
  %v88 = vmul.f32 %v43, %v86
  %v89 = vmul.f32 %v46, %v86
  %v90 = vmul.f32 %v49, %v86
  %v91 = vmul.f32 %v52, %v86
  %v92 = vmul.f32 %v55, %v86
  %v93 = vmul.f32 %v58, %v86
  %v94 = vmul.f32 %v61, %v86
  %v95 = vmul.f32 %v64, %v86
  %v96 = vmul.f32 %v67, %v86
  %v97 = vmul.f32 %v70, %v86
  %v98 = vmul.f32 %v73, %v86
  %v99 = vmul.f32 %v76, %v86
  %v100 = vmul.f32 %v79, %v86
  %v101 = vmul.f32 %v82, %v86
  %v102 = vmul.f32 %v85, %v86
  %v103 = vsub.f32 %v21, %v87
  %v104 = vsub.f32 %v22, %v88
  %v105 = vsub.f32 %v23, %v89
  %v106 = vsub.f32 %v24, %v90
  %v107 = vsub.f32 %v25, %v91
  %v108 = vsub.f32 %v26, %v92
  %v109 = vsub.f32 %v27, %v93
  %v110 = vsub.f32 %v28, %v94
  %v111 = vsub.f32 %v29, %v95
  %v112 = vsub.f32 %v30, %v96
  %v113 = vsub.f32 %v31, %v97
  %v114 = vsub.f32 %v32, %v98
  %v115 = vsub.f32 %v33, %v99
  %v116 = vsub.f32 %v34, %v100
  %v117 = vsub.f32 %v35, %v101
  %v118 = vsub.f32 %v36, %v102
  %v119 = vmul.f32 %v103, %v103
  %v120 = vmul.f32 %v104, %v104
  %v121 = vmul.f32 %v105, %v105
  %v122 = vmul.f32 %v106, %v106
  %v123 = vmul.f32 %v107, %v107
  %v124 = vmul.f32 %v108, %v108
  %v125 = vmul.f32 %v109, %v109
  %v126 = vmul.f32 %v110, %v110
  %v127 = vmul.f32 %v111, %v111
  %v128 = vmul.f32 %v112, %v112
  %v129 = vmul.f32 %v113, %v113
  %v130 = vmul.f32 %v114, %v114
  %v131 = vmul.f32 %v115, %v115
  %v132 = vmul.f32 %v116, %v116
  %v133 = vmul.f32 %v117, %v117
  %v134 = vmul.f32 %v118, %v118
  %v135 = vsel %vm37, %v119, 0.0
  %136 = vadd.xlane.f32.xlu0 %v135
  %v137 = vpop.xlane.xlu0 %136
  %v138 = vsel %vm37, %v120, 0.0
  %139 = vadd.xlane.f32.xlu0 %v138
  %v140 = vpop.xlane.xlu0 %139
  %v141 = vsel %vm37, %v121, 0.0
  %142 = vadd.xlane.f32.xlu0 %v141
  %v143 = vpop.xlane.xlu0 %142
  %v144 = vsel %vm37, %v122, 0.0
  %145 = vadd.xlane.f32.xlu0 %v144
  %v146 = vpop.xlane.xlu0 %145
  %v147 = vsel %vm37, %v123, 0.0
  %148 = vadd.xlane.f32.xlu0 %v147
  %v149 = vpop.xlane.xlu0 %148
  %v150 = vsel %vm37, %v124, 0.0
  %151 = vadd.xlane.f32.xlu0 %v150
  %v152 = vpop.xlane.xlu0 %151
  %v153 = vsel %vm37, %v125, 0.0
  %154 = vadd.xlane.f32.xlu0 %v153
  %v155 = vpop.xlane.xlu0 %154
  %v156 = vsel %vm37, %v126, 0.0
  %157 = vadd.xlane.f32.xlu0 %v156
  %v158 = vpop.xlane.xlu0 %157
  %v159 = vsel %vm37, %v127, 0.0
  %160 = vadd.xlane.f32.xlu0 %v159
  %v161 = vpop.xlane.xlu0 %160
  %v162 = vsel %vm37, %v128, 0.0
  %163 = vadd.xlane.f32.xlu0 %v162
  %v164 = vpop.xlane.xlu0 %163
  %v165 = vsel %vm37, %v129, 0.0
  %166 = vadd.xlane.f32.xlu0 %v165
  %v167 = vpop.xlane.xlu0 %166
  %v168 = vsel %vm37, %v130, 0.0
  %169 = vadd.xlane.f32.xlu0 %v168
  %v170 = vpop.xlane.xlu0 %169
  %v171 = vsel %vm37, %v131, 0.0
  %172 = vadd.xlane.f32.xlu0 %v171
  %v173 = vpop.xlane.xlu0 %172
  %v174 = vsel %vm37, %v132, 0.0
  %175 = vadd.xlane.f32.xlu0 %v174
  %v176 = vpop.xlane.xlu0 %175
  %v177 = vsel %vm37, %v133, 0.0
  %178 = vadd.xlane.f32.xlu0 %v177
  %v179 = vpop.xlane.xlu0 %178
  %v180 = vsel %vm37, %v134, 0.0
  %181 = vadd.xlane.f32.xlu0 %v180
  %v182 = vpop.xlane.xlu0 %181
  %v183 = vmul.f32 %v137, %v86
  %v184 = vmul.f32 %v140, %v86
  %v185 = vmul.f32 %v143, %v86
  %v186 = vmul.f32 %v146, %v86
  %v187 = vmul.f32 %v149, %v86
  %v188 = vmul.f32 %v152, %v86
  %v189 = vmul.f32 %v155, %v86
  %v190 = vmul.f32 %v158, %v86
  %v191 = vmul.f32 %v161, %v86
  %v192 = vmul.f32 %v164, %v86
  %v193 = vmul.f32 %v167, %v86
  %v194 = vmul.f32 %v170, %v86
  %v195 = vmul.f32 %v173, %v86
  %v196 = vmul.f32 %v176, %v86
  %v197 = vmul.f32 %v179, %v86
  %v198 = vmul.f32 %v182, %v86
  %v199 = vadd.f32 %v183, 1e-05
  %v200 = vadd.f32 %v184, 1e-05
  %v201 = vadd.f32 %v185, 1e-05
  %v202 = vadd.f32 %v186, 1e-05
  %v203 = vadd.f32 %v187, 1e-05
  %v204 = vadd.f32 %v188, 1e-05
  %v205 = vadd.f32 %v189, 1e-05
  %v206 = vadd.f32 %v190, 1e-05
  %v207 = vadd.f32 %v191, 1e-05
  %v208 = vadd.f32 %v192, 1e-05
  %v209 = vadd.f32 %v193, 1e-05
  %v210 = vadd.f32 %v194, 1e-05
  %v211 = vadd.f32 %v195, 1e-05
  %v212 = vadd.f32 %v196, 1e-05
  %v213 = vadd.f32 %v197, 1e-05
  %v214 = vadd.f32 %v198, 1e-05
  %v215 = vrsqrt.pop %v199
  %v216 = vrsqrt.pop %v200
  %v217 = vrsqrt.pop %v201
  %v218 = vrsqrt.pop %v202
  %v219 = vrsqrt.pop %v203
  %v220 = vrsqrt.pop %v204
  %v221 = vrsqrt.pop %v205
  %v222 = vrsqrt.pop %v206
  %v223 = vrsqrt.pop %v207
  %v224 = vrsqrt.pop %v208
  %v225 = vrsqrt.pop %v209
  %v226 = vrsqrt.pop %v210
  %v227 = vrsqrt.pop %v211
  %v228 = vrsqrt.pop %v212
  %v229 = vrsqrt.pop %v213
  %v230 = vrsqrt.pop %v214
  %v231 = vmul.f32 %v103, %v215
  %v232 = vmul.f32 %v104, %v216
  %v233 = vmul.f32 %v105, %v217
  %v234 = vmul.f32 %v106, %v218
  %v235 = vmul.f32 %v107, %v219
  %v236 = vmul.f32 %v108, %v220
  %v237 = vmul.f32 %v109, %v221
  %v238 = vmul.f32 %v110, %v222
  %v239 = vmul.f32 %v111, %v223
  %v240 = vmul.f32 %v112, %v224
  %v241 = vmul.f32 %v113, %v225
  %v242 = vmul.f32 %v114, %v226
  %v243 = vmul.f32 %v115, %v227
  %v244 = vmul.f32 %v116, %v228
  %v245 = vmul.f32 %v117, %v229
  %v246 = vmul.f32 %v118, %v230
  %v247 = vld [vmem:[%s1] sm:$0x1]
  %v249 = vlaneseq
  %v250 = vshrl.u32 %v249, 7
  %v251 = vsub.s32 0, %v250
  %v252 = vrot.slane %v247, %v251
  %v254 = vmul.f32 %v231, %v252
  %v255 = vmul.f32 %v232, %v252
  %v256 = vmul.f32 %v233, %v252
  %v257 = vmul.f32 %v234, %v252
  %v258 = vmul.f32 %v235, %v252
  %v259 = vmul.f32 %v236, %v252
  %v260 = vmul.f32 %v237, %v252
  %v261 = vmul.f32 %v238, %v252
  %v262 = vmul.f32 %v239, %v252
  %v263 = vmul.f32 %v240, %v252
  %v264 = vmul.f32 %v241, %v252
  %v265 = vmul.f32 %v242, %v252
  %v266 = vmul.f32 %v243, %v252
  %v267 = vmul.f32 %v244, %v252
  %v268 = vmul.f32 %v245, %v252
  %v269 = vmul.f32 %v246, %v252
  %v270 = vld [vmem:[%s2] sm:$0x1]
  %v272 = vlaneseq
  %v273 = vshrl.u32 %v272, 7
  %v274 = vsub.s32 0, %v273
  %v275 = vrot.slane %v270, %v274
  %v277 = vadd.f32 %v254, %v275
  %v278 = vadd.f32 %v255, %v275
  %v279 = vadd.f32 %v256, %v275
  %v280 = vadd.f32 %v257, %v275
  %v281 = vadd.f32 %v258, %v275
  %v282 = vadd.f32 %v259, %v275
  %v283 = vadd.f32 %v260, %v275
  %v284 = vadd.f32 %v261, %v275
  %v285 = vadd.f32 %v262, %v275
  %v286 = vadd.f32 %v263, %v275
  %v287 = vadd.f32 %v264, %v275
  %v288 = vadd.f32 %v265, %v275
  %v289 = vadd.f32 %v266, %v275
  %v290 = vadd.f32 %v267, %v275
  %v291 = vadd.f32 %v268, %v275
  %v292 = vadd.f32 %v269, %v275
  %v293 = vpack.c.bf16 %v278, %v277
  %v294 = vpack.c.bf16 %v280, %v279
  %v295 = vpack.c.bf16 %v282, %v281
  %v296 = vpack.c.bf16 %v284, %v283
  %v297 = vpack.c.bf16 %v286, %v285
  %v298 = vpack.c.bf16 %v288, %v287
  %v299 = vpack.c.bf16 %v290, %v289
  %v300 = vpack.c.bf16 %v292, %v291
  %v301 = vld [vmem:[%s3] sm:$0xf]
  %v302 = vld [vmem:[%s3 + $0x4] sm:$0xf]
  %v303 = vld [vmem:[%s4] sm:$0x1]
  %v305 = vlaneseq
  %v306 = vshrl.u32 %v305, 7
  %v307 = vsub.s32 0, %v306
  %v308 = vrot.slane %v303, %v307
  %v312 = vunpack.c.l.b16 %v301
  %v313 = vunpack.c.l.b16 %v302
  %v314 = vpack.c.b16 %v313, %v312
  %v317 = vsel %vm37, %v293, 0
  %v320 = vsel %vm37, %v294, 0
  %v323 = vsel %vm37, %v295, 0
  %v326 = vsel %vm37, %v296, 0
  %v329 = vsel %vm37, %v297, 0
  %v332 = vsel %vm37, %v298, 0
  %v335 = vsel %vm37, %v299, 0
  %v338 = vsel %vm37, %v300, 0
  %340 = vmatprep.subr.bf16.mxu0 0
  %341 = vmatpush1.bf16.msra.mxu0 0
  %342 = vmatprep.subr.bf16.mxu0 0
  %343 = vmatpush1.bf16.msra.mxu0 0
  %344 = vmatprep.subr.bf16.mxu0 0
  %345 = vmatpush1.bf16.msra.mxu0 0
  %346 = vmatprep.subr.bf16.mxu0 0
  %347 = vmatpush1.bf16.msra.mxu0 0
  %348 = vmatprep.subr.bf16.mxu0 0
  %349 = vmatpush1.bf16.msra.mxu0 0
  %350 = vmatprep.subr.bf16.mxu0 0
  %351 = vmatpush1.bf16.msra.mxu0 0
  %352 = vmatprep.subr.bf16.mxu0 0
  %353 = vmatpush1.bf16.msra.mxu0 0
  %354 = vmatprep.subr.bf16.mxu0 0
  %355 = vmatpush1.bf16.msra.mxu0 %v314
  %356 = vmatprep.subr.bf16.mxu0 0
  %357 = vmatpush2.bf16.msra.mxu0 0
  %358 = vmatprep.subr.bf16.mxu0 0
  %359 = vmatpush2.bf16.msra.mxu0 0
  %360 = vmatprep.subr.bf16.mxu0 0
  %361 = vmatpush2.bf16.msra.mxu0 0
  %362 = vmatprep.subr.bf16.mxu0 0
  %363 = vmatpush2.bf16.msra.mxu0 0
  %364 = vmatprep.subr.bf16.mxu0 0
  %365 = vmatpush2.bf16.msra.mxu0 0
  %366 = vmatprep.subr.bf16.mxu0 0
  %367 = vmatpush2.bf16.msra.mxu0 0
  %368 = vmatprep.subr.bf16.mxu0 0
  %369 = vmatpush2.bf16.msra.mxu0 0
  %370 = vmatprep.subr.bf16.mxu0 0
  %371 = vmatpush2.bf16.msra.mxu0 0
  %372 = vmatprep.mubr.bf16.mxu0 0
  %373 = vmatmul.mubr.bf16.gmra.mxu0 %v317
  %v374 = vpop.f32.mrf.mxu0
  %v375 = vadd.f32 %v308, %v374
  %v376 = vpop.f32.mrf.mxu0
  %v377 = vpop.f32.mrf.mxu0
  %v378 = vadd.f32 %v308, %v377
  %v379 = vpop.f32.mrf.mxu0
  %380 = vmatprep.mubr.bf16.mxu0 0
  %381 = vmatmul.mubr.bf16.gmra.mxu0 %v320
  %v382 = vpop.f32.mrf.mxu0
  %v383 = vadd.f32 %v308, %v382
  %v384 = vpop.f32.mrf.mxu0
  %v385 = vpop.f32.mrf.mxu0
  %v386 = vadd.f32 %v308, %v385
  %v387 = vpop.f32.mrf.mxu0
  %388 = vmatprep.mubr.bf16.mxu0 0
  %389 = vmatmul.mubr.bf16.gmra.mxu0 %v323
  %v390 = vpop.f32.mrf.mxu0
  %v391 = vadd.f32 %v308, %v390
  %v392 = vpop.f32.mrf.mxu0
  %v393 = vpop.f32.mrf.mxu0
  %v394 = vadd.f32 %v308, %v393
  %v395 = vpop.f32.mrf.mxu0
  %396 = vmatprep.mubr.bf16.mxu0 0
  %397 = vmatmul.mubr.bf16.gmra.mxu0 %v326
  %v398 = vpop.f32.mrf.mxu0
  %v399 = vadd.f32 %v308, %v398
  %v400 = vpop.f32.mrf.mxu0
  %v401 = vpop.f32.mrf.mxu0
  %v402 = vadd.f32 %v308, %v401
  %v403 = vpop.f32.mrf.mxu0
  %404 = vmatprep.mubr.bf16.mxu0 0
  %405 = vmatmul.mubr.bf16.gmra.mxu0 %v329
  %v406 = vpop.f32.mrf.mxu0
  %v407 = vadd.f32 %v308, %v406
  %v408 = vpop.f32.mrf.mxu0
  %v409 = vpop.f32.mrf.mxu0
  %v410 = vadd.f32 %v308, %v409
  %v411 = vpop.f32.mrf.mxu0
  %412 = vmatprep.mubr.bf16.mxu0 0
  %413 = vmatmul.mubr.bf16.gmra.mxu0 %v332
  %v414 = vpop.f32.mrf.mxu0
  %v415 = vadd.f32 %v308, %v414
  %v416 = vpop.f32.mrf.mxu0
  %v417 = vpop.f32.mrf.mxu0
  %v418 = vadd.f32 %v308, %v417
  %v419 = vpop.f32.mrf.mxu0
  %420 = vmatprep.mubr.bf16.mxu0 0
  %421 = vmatmul.mubr.bf16.gmra.mxu0 %v335
  %v422 = vpop.f32.mrf.mxu0
  %v423 = vadd.f32 %v308, %v422
  %v424 = vpop.f32.mrf.mxu0
  %v425 = vpop.f32.mrf.mxu0
  %v426 = vadd.f32 %v308, %v425
  %v427 = vpop.f32.mrf.mxu0
  %428 = vmatprep.mubr.bf16.mxu0 0
  %429 = vmatmul.mubr.bf16.gmra.mxu0 %v338
  %v430 = vpop.f32.mrf.mxu0
  %v431 = vadd.f32 %v308, %v430
  %v432 = vpop.f32.mrf.mxu0
  %v433 = vpop.f32.mrf.mxu0
  %v434 = vadd.f32 %v308, %v433
  %v435 = vpop.f32.mrf.mxu0
  %436 = vdwg.mxu0
  %v437 = vpack.c.bf16 %v378, %v375
  %v438 = vpack.c.bf16 %v386, %v383
  %v439 = vpack.c.bf16 %v394, %v391
  %v440 = vpack.c.bf16 %v402, %v399
  %v441 = vpack.c.bf16 %v410, %v407
  %v442 = vpack.c.bf16 %v418, %v415
  %v443 = vpack.c.bf16 %v426, %v423
  %v444 = vpack.c.bf16 %v434, %v431
  %v453 = vunpack.c.l.b16 %v437
  %v454 = vunpack.c.h.b16 %v437
  %v455 = vunpack.c.l.b16 %v438
  %v456 = vunpack.c.h.b16 %v438
  %v457 = vunpack.c.l.b16 %v439
  %v458 = vunpack.c.h.b16 %v439
  %v459 = vunpack.c.l.b16 %v440
  %v460 = vunpack.c.h.b16 %v440
  %v461 = vunpack.c.l.b16 %v441
  %v462 = vunpack.c.h.b16 %v441
  %v463 = vunpack.c.l.b16 %v442
  %v464 = vunpack.c.h.b16 %v442
  %v465 = vunpack.c.l.b16 %v443
  %v466 = vunpack.c.h.b16 %v443
  %v467 = vunpack.c.l.b16 %v444
  %v468 = vunpack.c.h.b16 %v444
  %v469 = vpack.c.b16 %v453, %v453
  %v470 = vpack.c.b16 %v454, %v454
  %v471 = vpack.c.b16 %v455, %v455
  %v472 = vpack.c.b16 %v456, %v456
  %v473 = vpack.c.b16 %v457, %v457
  %v474 = vpack.c.b16 %v458, %v458
  %v475 = vpack.c.b16 %v459, %v459
  %v476 = vpack.c.b16 %v460, %v460
  %v477 = vpack.c.b16 %v461, %v461
  %v478 = vpack.c.b16 %v462, %v462
  %v479 = vpack.c.b16 %v463, %v463
  %v480 = vpack.c.b16 %v464, %v464
  %v481 = vpack.c.b16 %v465, %v465
  %v482 = vpack.c.b16 %v466, %v466
  %v483 = vpack.c.b16 %v467, %v467
  %v484 = vpack.c.b16 %v468, %v468
  %vm501 = vcmask 388096
  %502 = vst.msk [vmem:[%s5] sm:$0xf] %vm501, %v469
  %503 = vst.msk [vmem:[%s5 + $0x4] sm:$0xf] %vm501, %v470
  %504 = vst.msk [vmem:[%s5 + $0x8] sm:$0xf] %vm501, %v471
  %505 = vst.msk [vmem:[%s5 + $0xc] sm:$0xf] %vm501, %v472
  %506 = vst.msk [vmem:[%s5 + $0x10] sm:$0xf] %vm501, %v473
  %507 = vst.msk [vmem:[%s5 + $0x14] sm:$0xf] %vm501, %v474
  %508 = vst.msk [vmem:[%s5 + $0x18] sm:$0xf] %vm501, %v475
  %509 = vst.msk [vmem:[%s5 + $0x1c] sm:$0xf] %vm501, %v476
  %510 = vst.msk [vmem:[%s5 + $0x20] sm:$0xf] %vm501, %v477
  %511 = vst.msk [vmem:[%s5 + $0x24] sm:$0xf] %vm501, %v478
  %512 = vst.msk [vmem:[%s5 + $0x28] sm:$0xf] %vm501, %v479
  %513 = vst.msk [vmem:[%s5 + $0x2c] sm:$0xf] %vm501, %v480
  %514 = vst.msk [vmem:[%s5 + $0x30] sm:$0xf] %vm501, %v481
  %515 = vst.msk [vmem:[%s5 + $0x34] sm:$0xf] %vm501, %v482
  %516 = vst.msk [vmem:[%s5 + $0x38] sm:$0xf] %vm501, %v483
  %517 = vst.msk [vmem:[%s5 + $0x3c] sm:$0xf] %vm501, %v484
  // Predicated region
  $region22: #{transformer_block_1.31} parent=0 // pred_check
    _
  $region23: #{transformer_block_1.31} parent=0 // pred_check_branch
    %519 = sbr.rel (0) target = $region25
  $region24: #{transformer_block_1.31} parent=0 // pred_region
    _
  $region25: #{transformer_block_1.31} parent=0 // pred_fallthru
    _
  // Predicated region
  $region26: #{transformer_block_1.31} parent=0 // pred_check
    _
  $region27: #{transformer_block_1.31} parent=0 // pred_check_branch
    %521 = sbr.rel (0) target = $region29
  $region28: #{transformer_block_1.31} parent=0 // pred_region
    _
  $region29: #{transformer_block_1.31} parent=0 // pred_fallthru
    _

// kernel: transformer_block_1.34
$region0: #{transformer_block_1.34}
  #allocation0 [shape = 'u32[]', space=smem, size = 0x4, offset = 0x4, fixed_abs, tag = 'smem constant byte address 0x4 - core index']
  #allocation1 [shape = 'u32[144,128]{1,0:T(1,128)}', space=vmem, size = 0x12000, scoped, tag = 'internal scratch']
  %s0 = inlined_call_operand.vmem [shape: bf16[2,4,4,4], index: 0, kind: input, shape index: {}]
  %s1 = inlined_call_operand.vmem [shape: bf16[2,64,16], index: 1, kind: input, shape index: {}]
  %s2 = inlined_call_operand.vmem [shape: bf16[2,64,16], index: 2, kind: output, shape index: {}]
  %s3 = sld [smem:[#allocation0]]
  $region41: #{transformer_block_1.34} parent=0
    _
  %s5 = ssub.s32 1, %s3
  %s6 = scalar_select 0, %s5, %s3
  loop: start=0, step=1, limit=4
  $region2: #{transformer_block_1.34} parent=0 // loop_pre_header
    _
  $region3: #{transformer_block_1.34} parent=0 // loop_header
    %s8 = sphi 0, %s12
    %p9 = scmp.ge.s32.totalorder %s8, 4
    %s15 = sphi 0, %s27
    %s16 = sphi 0, %s23
    %s17 = sphi 0, %s15
    %s18 = sphi 0, %s16
    %s19 = sphi 0, %s17
    %s20 = sphi 0, %s18
    %s30 = sphi 0, %s32
    %s33 = sphi 0, %s30
    %s34 = sphi 0, %s33
    %s50 = sphi 0, %s34
    %s58 = sphi 0, %s60
    %s61 = sphi 0, %s58
    %s62 = sphi 0, %s61
    %s78 = sphi 0, %s62
    %s86 = sphi 0, %s88
    %s89 = sphi 0, %s86
    %s90 = sphi 0, %s89
    %s106 = sphi 0, %s90
  $region4: #{transformer_block_1.34} parent=0 // loop_header_branch
    %11 = sbr.rel (%p9) target = $region8
  $region5: #{transformer_block_1.34} parent=0 // loop_body
    %s13 = ssub.s32 %s8, 1
    %s14 = ssub.s32 %s8, 2
    %s21 = sadd.s32 1, %s16
    %p22 = scmp.ge.s32.totalorder %s21, 1
    %s23 = scalar_select %p22, 0, %s21
    %s24 = sadd.s32 1, %s15
    %s25 = scalar_select %p22, %s24, %s15
    %p26 = scmp.ge.s32.totalorder %s25, 2
    %s27 = scalar_select %p26, 0, %s25
    %s28 = ssub.s32 %s15, %s27
    %p29 = scmp.eq.s32.totalorder %s28, 0
    %s31 = sadd.s32 %s30, 1
    %s32 = scalar_select %p29, %s30, %s31
    %p35 = pneg %p29
    %p36 = scmp.eq.s32.totalorder %s8, 1
    %p37 = por %p35, %p36
    %p38 = scmp.ne.s32.totalorder %s30, %s33
    %p39 = scmp.eq.s32.totalorder %s8, 0
    %p40 = por %p38, %p39
    %p41 = scmp.ne.s32.totalorder %s30, %s33
    %p42 = scmp.eq.s32.totalorder %s13, 1
    %p43 = por %p41, %p42
    %p44 = scmp.ne.s32.totalorder %s33, %s34
    %p45 = scmp.eq.s32.totalorder %s13, 0
    %p46 = por %p44, %p45
    %p47 = scmp.ne.s32.totalorder %s33, %s34
    %p48 = scmp.eq.s32.totalorder %s14, 1
    %p49 = por %p47, %p48
    %p51 = scmp.ne.s32.totalorder %s34, %s50
    %p52 = scmp.eq.s32.totalorder %s14, 0
    %p53 = por %p51, %p52
    %s54 = ssub.s32 %s15, %s27
    %s55 = ssub.s32 %s16, %s23
    %s56 = sor.u32 %s54, %s55
    %p57 = scmp.eq.s32.totalorder %s56, 0
    %s59 = sadd.s32 %s58, 1
    %s60 = scalar_select %p57, %s58, %s59
    %p63 = pneg %p57
    %p64 = scmp.eq.s32.totalorder %s8, 1
    %p65 = por %p63, %p64
    %p66 = scmp.ne.s32.totalorder %s58, %s61
    %p67 = scmp.eq.s32.totalorder %s8, 0
    %p68 = por %p66, %p67
    %p69 = scmp.ne.s32.totalorder %s58, %s61
    %p70 = scmp.eq.s32.totalorder %s13, 1
    %p71 = por %p69, %p70
    %p72 = scmp.ne.s32.totalorder %s61, %s62
    %p73 = scmp.eq.s32.totalorder %s13, 0
    %p74 = por %p72, %p73
    %p75 = scmp.ne.s32.totalorder %s61, %s62
    %p76 = scmp.eq.s32.totalorder %s14, 1
    %p77 = por %p75, %p76
    %p79 = scmp.ne.s32.totalorder %s62, %s78
    %p80 = scmp.eq.s32.totalorder %s14, 0
    %p81 = por %p79, %p80
    %s82 = ssub.s32 %s15, %s27
    %s83 = ssub.s32 %s16, %s23
    %s84 = sor.u32 %s82, %s83
    %p85 = scmp.eq.s32.totalorder %s84, 0
    %s87 = sadd.s32 %s86, 1
    %s88 = scalar_select %p85, %s86, %s87
    %p91 = pneg %p85
    %p92 = scmp.eq.s32.totalorder %s8, 1
    %p93 = por %p91, %p92
    %p94 = scmp.ne.s32.totalorder %s86, %s89
    %p95 = scmp.eq.s32.totalorder %s8, 0
    %p96 = por %p94, %p95
    %p97 = scmp.ne.s32.totalorder %s86, %s89
    %p98 = scmp.eq.s32.totalorder %s13, 1
    %p99 = por %p97, %p98
    %p100 = scmp.ne.s32.totalorder %s89, %s90
    %p101 = scmp.eq.s32.totalorder %s13, 0
    %p102 = por %p100, %p101
    %p103 = scmp.ne.s32.totalorder %s89, %s90
    %p104 = scmp.eq.s32.totalorder %s14, 1
    %p105 = por %p103, %p104
    %p107 = scmp.ne.s32.totalorder %s90, %s106
    %p108 = scmp.eq.s32.totalorder %s14, 0
    %p109 = por %p107, %p108
    %p110 = scmp.le.s32.totalorder 1, %s8
    %p111 = scmp.lt.s32.totalorder %s8, 3
    %p112 = pnand %p110, %p111
    %p113 = pneg %p112
    // Predicated region
    $region9: #{transformer_block_1.34} parent=5 // pred_check
      _
    $region10: #{transformer_block_1.34} parent=5 // pred_check_branch
      %115 = sbr.rel (%p112) target = $region12
    $region11: #{transformer_block_1.34} parent=5 // pred_region
      %s116 = ssub.s32 %s8, 1
    $region12: #{transformer_block_1.34} parent=5 // pred_fallthru
      _
    %p117 = scmp.lt.s32.totalorder %s8, 2
    // Predicated region
    $region13: #{transformer_block_1.34} parent=5 // pred_check
      %p118 = pneg %p117
    $region14: #{transformer_block_1.34} parent=5 // pred_check_branch
      %120 = sbr.rel (%p118) target = $region16
    $region15: #{transformer_block_1.34} parent=5 // pred_region
      // Predicated region
      $region17: #{transformer_block_1.34} parent=15 // pred_check
        %p121 = pneg %p40
      $region18: #{transformer_block_1.34} parent=15 // pred_check_branch
        %123 = sbr.rel (%p121) target = $region20
      $region19: #{transformer_block_1.34} parent=15 // pred_region
        %p124 = scmp.lt.s32.totalorder %s15, 1
        %s125 = scalar_select %p124, %s15, 1
        %s126 = smul.addr %s125, 4
        %s127 = smul.addr %s126, 2
        %s128 = scalar_lea.vmem %s0, %s127
      $region20: #{transformer_block_1.34} parent=15 // pred_fallthru
        _
      // Predicated region
      $region21: #{transformer_block_1.34} parent=15 // pred_check
        %p129 = pneg %p68
      $region22: #{transformer_block_1.34} parent=15 // pred_check_branch
        %131 = sbr.rel (%p129) target = $region24
      $region23: #{transformer_block_1.34} parent=15 // pred_region
        %s132 = smul.u32 8, %s16
        %p133 = scmp.lt.s32.totalorder %s15, 1
        %s134 = scalar_select %p133, %s15, 1
        %p135 = scmp.lt.s32.totalorder %s132, 7
        %s136 = scalar_select %p135, %s132, 7
        %s137 = smul.addr %s134, 8
        %s138 = sadd.s32 %s136, %s137
        %s139 = smul.addr %s138, 4
        %s140 = scalar_lea.vmem %s1, %s139
        %s141 = smul.u32 8, %s16
      $region24: #{transformer_block_1.34} parent=15 // pred_fallthru
        _
    $region16: #{transformer_block_1.34} parent=5 // pred_fallthru
      _
    %p142 = scmp.le.s32.totalorder 1, %s8
    %p143 = scmp.lt.s32.totalorder %s8, 3
    %p144 = pnand %p142, %p143
    %p145 = pneg %p144
    // Predicated region
    $region25: #{transformer_block_1.34} parent=5 // pred_check
      _
    $region26: #{transformer_block_1.34} parent=5 // pred_check_branch
      %147 = sbr.rel (%p144) target = $region28
    $region27: #{transformer_block_1.34} parent=5 // pred_region
      %s148 = ssub.s32 %s8, 1
      %p149 = scmp.lt.s32.totalorder %s17, 1
      %s150 = scalar_select %p149, %s17, 1
      %s151 = smul.addr %s150, 4
      %s152 = smul.addr %s151, 2
      %s153 = scalar_lea.vmem %s0, %s152
      %p154 = pneg %p46
      %p155 = pneg %p43
      %s156 = smul.u32 8, %s18
      %p157 = scmp.lt.s32.totalorder %s17, 1
      %s158 = scalar_select %p157, %s17, 1
      %p159 = scmp.lt.s32.totalorder %s156, 7
      %s160 = scalar_select %p159, %s156, 7
      %s161 = smul.addr %s158, 8
      %s162 = sadd.s32 %s160, %s161
      %s163 = smul.addr %s162, 4
      %s164 = scalar_lea.vmem %s1, %s163
      %p165 = pneg %p74
      %p166 = pneg %p71
      %p167 = pneg %p102
      %p168 = pneg %p99
      %s169 = smul.u32 8, %s18
      %p170 = scmp.lt.s32.totalorder %s17, 1
      %s171 = scalar_select %p170, %s17, 1
      %p172 = scmp.lt.s32.totalorder %s169, 7
      %s173 = scalar_select %p172, %s169, 7
      %s174 = smul.addr %s171, 8
      %s175 = sadd.s32 %s173, %s174
      %s176 = smul.addr %s175, 4
      %s177 = scalar_lea.vmem %s2, %s176
      %p178 = scmp.lt.s32.totalorder %s17, 1
      %s179 = scalar_select %p178, %s17, 1
      %s180 = smul.addr %s179, 4
      %s181 = smul.addr %s180, 2
      %s182 = scalar_lea.vmem %s0, %s181
      %s183 = smul.u32 8, %s18
      %p184 = scmp.lt.s32.totalorder %s17, 1
      %s185 = scalar_select %p184, %s17, 1
      %p186 = scmp.lt.s32.totalorder %s183, 7
      %s187 = scalar_select %p186, %s183, 7
      %s188 = smul.addr %s185, 8
      %s189 = sadd.s32 %s187, %s188
      %s190 = smul.addr %s189, 4
      %s191 = scalar_lea.vmem %s1, %s190
      %s192 = smul.u32 8, %s18
      %s193 = smul.u32 8, %s18
      %p194 = scmp.lt.s32.totalorder %s17, 1
      %s195 = scalar_select %p194, %s17, 1
      %p196 = scmp.lt.s32.totalorder %s193, 7
      %s197 = scalar_select %p196, %s193, 7
      %s198 = smul.addr %s195, 8
      %s199 = sadd.s32 %s197, %s198
      %s200 = smul.addr %s199, 4
      %s201 = scalar_lea.vmem %s2, %s200
      %s202 = smul.u32 8, %s18
      %v204 = vld [vmem:[%s191] sm:$0xf]
      %v205 = vld [vmem:[%s191 + $0x4] sm:$0xf]
      %v206 = vld [vmem:[%s191 + $0x8] sm:$0xf]
      %v207 = vld [vmem:[%s191 + $0xc] sm:$0xf]
      %v208 = vld [vmem:[%s191 + $0x10] sm:$0xf]
      %v209 = vld [vmem:[%s191 + $0x14] sm:$0xf]
      %v210 = vld [vmem:[%s191 + $0x18] sm:$0xf]
      %v211 = vld [vmem:[%s191 + $0x1c] sm:$0xf]
      %v212 = vld [vmem:[%s182] sm:$0x3]
      %v221 = vunpack.c.l.b16 %v204
      %v222 = vunpack.c.l.b16 %v205
      %v223 = vunpack.c.l.b16 %v206
      %v224 = vunpack.c.l.b16 %v207
      %v225 = vunpack.c.l.b16 %v208
      %v226 = vunpack.c.l.b16 %v209
      %v227 = vunpack.c.l.b16 %v210
      %v228 = vunpack.c.l.b16 %v211
      %v229 = vpack.c.b16 %v222, %v221
      %v230 = vpack.c.b16 %v224, %v223
      %v231 = vpack.c.b16 %v226, %v225
      %v232 = vpack.c.b16 %v228, %v227
      %vm233 = vcmask 31744
      %v235 = vsel %vm233, %v229, 0
      %v238 = vsel %vm233, %v230, 0
      %v241 = vsel %vm233, %v231, 0
      %v244 = vsel %vm233, %v232, 0
      %vm246 = vcmask 1041408
      %v248 = vsel %vm246, %v212, 0
      %250 = vmatprep.subr.bf16.mxu0 0
      %251 = vmatpush1.bf16.msra.mxu0 0
      %252 = vmatprep.subr.bf16.mxu0 0
      %253 = vmatpush1.bf16.msra.mxu0 0
      %254 = vmatprep.subr.bf16.mxu0 0
      %255 = vmatpush1.bf16.msra.mxu0 0
      %256 = vmatprep.subr.bf16.mxu0 0
      %257 = vmatpush1.bf16.msra.mxu0 0
      %258 = vmatprep.subr.bf16.mxu0 0
      %259 = vmatpush1.bf16.msra.mxu0 0
      %260 = vmatprep.subr.bf16.mxu0 0
      %261 = vmatpush1.bf16.msra.mxu0 0
      %262 = vmatprep.subr.bf16.mxu0 0
      %263 = vmatpush1.bf16.msra.mxu0 0
      %264 = vmatprep.subr.bf16.mxu0 0
      %265 = vmatpush1.bf16.msra.mxu0 %v248
      %266 = vmatprep.subr.bf16.mxu0 0
      %267 = vmatpush2.bf16.msra.mxu0 0
      %268 = vmatprep.subr.bf16.mxu0 0
      %269 = vmatpush2.bf16.msra.mxu0 0
      %270 = vmatprep.subr.bf16.mxu0 0
      %271 = vmatpush2.bf16.msra.mxu0 0
      %272 = vmatprep.subr.bf16.mxu0 0
      %273 = vmatpush2.bf16.msra.mxu0 0
      %274 = vmatprep.subr.bf16.mxu0 0
      %275 = vmatpush2.bf16.msra.mxu0 0
      %276 = vmatprep.subr.bf16.mxu0 0
      %277 = vmatpush2.bf16.msra.mxu0 0
      %278 = vmatprep.subr.bf16.mxu0 0
      %279 = vmatpush2.bf16.msra.mxu0 0
      %280 = vmatprep.subr.bf16.mxu0 0
      %281 = vmatpush2.bf16.msra.mxu0 0
      %282 = vmatprep.mubr.bf16.mxu0 0
      %283 = vmatmul.mubr.bf16.gmra.mxu0 %v235
      %v284 = vpop.f32.mrf.mxu0
      %v285 = vadd.f32 0.0, %v284
      %v286 = vpop.f32.mrf.mxu0
      %v287 = vpop.f32.mrf.mxu0
      %v288 = vadd.f32 0.0, %v287
      %v289 = vpop.f32.mrf.mxu0
      %290 = vmatprep.mubr.bf16.mxu0 0
      %291 = vmatmul.mubr.bf16.gmra.mxu0 %v238
      %v292 = vpop.f32.mrf.mxu0
      %v293 = vadd.f32 0.0, %v292
      %v294 = vpop.f32.mrf.mxu0
      %v295 = vpop.f32.mrf.mxu0
      %v296 = vadd.f32 0.0, %v295
      %v297 = vpop.f32.mrf.mxu0
      %298 = vmatprep.mubr.bf16.mxu0 0
      %299 = vmatmul.mubr.bf16.gmra.mxu0 %v241
      %v300 = vpop.f32.mrf.mxu0
      %v301 = vadd.f32 0.0, %v300
      %v302 = vpop.f32.mrf.mxu0
      %v303 = vpop.f32.mrf.mxu0
      %v304 = vadd.f32 0.0, %v303
      %v305 = vpop.f32.mrf.mxu0
      %306 = vmatprep.mubr.bf16.mxu0 0
      %307 = vmatmul.mubr.bf16.gmra.mxu0 %v244
      %v308 = vpop.f32.mrf.mxu0
      %v309 = vadd.f32 0.0, %v308
      %v310 = vpop.f32.mrf.mxu0
      %v311 = vpop.f32.mrf.mxu0
      %v312 = vadd.f32 0.0, %v311
      %v313 = vpop.f32.mrf.mxu0
      %314 = vdwg.mxu0
      %s315 = scalar_lea.vmem %s182, 2
      %v316 = vld [vmem:[%s315] sm:$0x3]
      %317 = vrot.lane.b32.xlu0 %v229, 124
      %v318 = vpop.permute.xlu0 %317
      %319 = vrot.lane.b32.xlu0 %v230, 124
      %v320 = vpop.permute.xlu0 %319
      %321 = vrot.lane.b32.xlu0 %v231, 124
      %v322 = vpop.permute.xlu0 %321
      %323 = vrot.lane.b32.xlu0 %v232, 124
      %v324 = vpop.permute.xlu0 %323
      %v326 = vsel %vm233, %v318, 0
      %v329 = vsel %vm233, %v320, 0
      %v332 = vsel %vm233, %v322, 0
      %v335 = vsel %vm233, %v324, 0
      %v338 = vsel %vm246, %v316, 0
      %340 = vmatprep.subr.bf16.mxu0 0
      %341 = vmatpush1.bf16.msra.mxu0 0
      %342 = vmatprep.subr.bf16.mxu0 0
      %343 = vmatpush1.bf16.msra.mxu0 0
      %344 = vmatprep.subr.bf16.mxu0 0
      %345 = vmatpush1.bf16.msra.mxu0 0
      %346 = vmatprep.subr.bf16.mxu0 0
      %347 = vmatpush1.bf16.msra.mxu0 0
      %348 = vmatprep.subr.bf16.mxu0 0
      %349 = vmatpush1.bf16.msra.mxu0 0
      %350 = vmatprep.subr.bf16.mxu0 0
      %351 = vmatpush1.bf16.msra.mxu0 0
      %352 = vmatprep.subr.bf16.mxu0 0
      %353 = vmatpush1.bf16.msra.mxu0 0
      %354 = vmatprep.subr.bf16.mxu0 0
      %355 = vmatpush1.bf16.msra.mxu0 %v338
      %356 = vmatprep.subr.bf16.mxu0 0
      %357 = vmatpush2.bf16.msra.mxu0 0
      %358 = vmatprep.subr.bf16.mxu0 0
      %359 = vmatpush2.bf16.msra.mxu0 0
      %360 = vmatprep.subr.bf16.mxu0 0
      %361 = vmatpush2.bf16.msra.mxu0 0
      %362 = vmatprep.subr.bf16.mxu0 0
      %363 = vmatpush2.bf16.msra.mxu0 0
      %364 = vmatprep.subr.bf16.mxu0 0
      %365 = vmatpush2.bf16.msra.mxu0 0
      %366 = vmatprep.subr.bf16.mxu0 0
      %367 = vmatpush2.bf16.msra.mxu0 0
      %368 = vmatprep.subr.bf16.mxu0 0
      %369 = vmatpush2.bf16.msra.mxu0 0
      %370 = vmatprep.subr.bf16.mxu0 0
      %371 = vmatpush2.bf16.msra.mxu0 0
      %372 = vmatprep.mubr.bf16.mxu0 0
      %373 = vmatmul.mubr.bf16.gmra.mxu0 %v326
      %v374 = vpop.f32.mrf.mxu0
      %v375 = vadd.f32 0.0, %v374
      %v376 = vpop.f32.mrf.mxu0
      %v377 = vpop.f32.mrf.mxu0
      %v378 = vadd.f32 0.0, %v377
      %v379 = vpop.f32.mrf.mxu0
      %380 = vmatprep.mubr.bf16.mxu0 0
      %381 = vmatmul.mubr.bf16.gmra.mxu0 %v329
      %v382 = vpop.f32.mrf.mxu0
      %v383 = vadd.f32 0.0, %v382
      %v384 = vpop.f32.mrf.mxu0
      %v385 = vpop.f32.mrf.mxu0
      %v386 = vadd.f32 0.0, %v385
      %v387 = vpop.f32.mrf.mxu0
      %388 = vmatprep.mubr.bf16.mxu0 0
      %389 = vmatmul.mubr.bf16.gmra.mxu0 %v332
      %v390 = vpop.f32.mrf.mxu0
      %v391 = vadd.f32 0.0, %v390
      %v392 = vpop.f32.mrf.mxu0
      %v393 = vpop.f32.mrf.mxu0
      %v394 = vadd.f32 0.0, %v393
      %v395 = vpop.f32.mrf.mxu0
      %396 = vmatprep.mubr.bf16.mxu0 0
      %397 = vmatmul.mubr.bf16.gmra.mxu0 %v335
      %v398 = vpop.f32.mrf.mxu0
      %v399 = vadd.f32 0.0, %v398
      %v400 = vpop.f32.mrf.mxu0
      %v401 = vpop.f32.mrf.mxu0
      %v402 = vadd.f32 0.0, %v401
      %v403 = vpop.f32.mrf.mxu0
      %404 = vdwg.mxu0
      %s405 = scalar_lea.vmem %s182, 4
      %v406 = vld [vmem:[%s405] sm:$0x3]
      %407 = vrot.lane.b32.xlu0 %v229, 120
      %v408 = vpop.permute.xlu0 %407
      %409 = vrot.lane.b32.xlu0 %v230, 120
      %v410 = vpop.permute.xlu0 %409
      %411 = vrot.lane.b32.xlu0 %v231, 120
      %v412 = vpop.permute.xlu0 %411
      %413 = vrot.lane.b32.xlu0 %v232, 120
      %v414 = vpop.permute.xlu0 %413
      %v416 = vsel %vm233, %v408, 0
      %v419 = vsel %vm233, %v410, 0
      %v422 = vsel %vm233, %v412, 0
      %v425 = vsel %vm233, %v414, 0
      %v428 = vsel %vm246, %v406, 0
      %430 = vmatprep.subr.bf16.mxu0 0
      %431 = vmatpush1.bf16.msra.mxu0 0
      %432 = vmatprep.subr.bf16.mxu0 0
      %433 = vmatpush1.bf16.msra.mxu0 0
      %434 = vmatprep.subr.bf16.mxu0 0
      %435 = vmatpush1.bf16.msra.mxu0 0
      %436 = vmatprep.subr.bf16.mxu0 0
      %437 = vmatpush1.bf16.msra.mxu0 0
      %438 = vmatprep.subr.bf16.mxu0 0
      %439 = vmatpush1.bf16.msra.mxu0 0
      %440 = vmatprep.subr.bf16.mxu0 0
      %441 = vmatpush1.bf16.msra.mxu0 0
      %442 = vmatprep.subr.bf16.mxu0 0
      %443 = vmatpush1.bf16.msra.mxu0 0
      %444 = vmatprep.subr.bf16.mxu0 0
      %445 = vmatpush1.bf16.msra.mxu0 %v428
      %446 = vmatprep.subr.bf16.mxu0 0
      %447 = vmatpush2.bf16.msra.mxu0 0
      %448 = vmatprep.subr.bf16.mxu0 0
      %449 = vmatpush2.bf16.msra.mxu0 0
      %450 = vmatprep.subr.bf16.mxu0 0
      %451 = vmatpush2.bf16.msra.mxu0 0
      %452 = vmatprep.subr.bf16.mxu0 0
      %453 = vmatpush2.bf16.msra.mxu0 0
      %454 = vmatprep.subr.bf16.mxu0 0
      %455 = vmatpush2.bf16.msra.mxu0 0
      %456 = vmatprep.subr.bf16.mxu0 0
      %457 = vmatpush2.bf16.msra.mxu0 0
      %458 = vmatprep.subr.bf16.mxu0 0
      %459 = vmatpush2.bf16.msra.mxu0 0
      %460 = vmatprep.subr.bf16.mxu0 0
      %461 = vmatpush2.bf16.msra.mxu0 0
      %462 = vmatprep.mubr.bf16.mxu0 0
      %463 = vmatmul.mubr.bf16.gmra.mxu0 %v416
      %v464 = vpop.f32.mrf.mxu0
      %v465 = vadd.f32 0.0, %v464
      %v466 = vpop.f32.mrf.mxu0
      %v467 = vpop.f32.mrf.mxu0
      %v468 = vadd.f32 0.0, %v467
      %v469 = vpop.f32.mrf.mxu0
      %470 = vmatprep.mubr.bf16.mxu0 0
      %471 = vmatmul.mubr.bf16.gmra.mxu0 %v419
      %v472 = vpop.f32.mrf.mxu0
      %v473 = vadd.f32 0.0, %v472
      %v474 = vpop.f32.mrf.mxu0
      %v475 = vpop.f32.mrf.mxu0
      %v476 = vadd.f32 0.0, %v475
      %v477 = vpop.f32.mrf.mxu0
      %478 = vmatprep.mubr.bf16.mxu0 0
      %479 = vmatmul.mubr.bf16.gmra.mxu0 %v422
      %v480 = vpop.f32.mrf.mxu0
      %v481 = vadd.f32 0.0, %v480
      %v482 = vpop.f32.mrf.mxu0
      %v483 = vpop.f32.mrf.mxu0
      %v484 = vadd.f32 0.0, %v483
      %v485 = vpop.f32.mrf.mxu0
      %486 = vmatprep.mubr.bf16.mxu0 0
      %487 = vmatmul.mubr.bf16.gmra.mxu0 %v425
      %v488 = vpop.f32.mrf.mxu0
      %v489 = vadd.f32 0.0, %v488
      %v490 = vpop.f32.mrf.mxu0
      %v491 = vpop.f32.mrf.mxu0
      %v492 = vadd.f32 0.0, %v491
      %v493 = vpop.f32.mrf.mxu0
      %494 = vdwg.mxu0
      %s495 = scalar_lea.vmem %s182, 6
      %v496 = vld [vmem:[%s495] sm:$0x3]
      %497 = vrot.lane.b32.xlu0 %v229, 116
      %v498 = vpop.permute.xlu0 %497
      %499 = vrot.lane.b32.xlu0 %v230, 116
      %v500 = vpop.permute.xlu0 %499
      %501 = vrot.lane.b32.xlu0 %v231, 116
      %v502 = vpop.permute.xlu0 %501
      %503 = vrot.lane.b32.xlu0 %v232, 116
      %v504 = vpop.permute.xlu0 %503
      %v506 = vsel %vm233, %v498, 0
      %v509 = vsel %vm233, %v500, 0
      %v512 = vsel %vm233, %v502, 0
      %v515 = vsel %vm233, %v504, 0
      %v518 = vsel %vm246, %v496, 0
      %520 = vmatprep.subr.bf16.mxu0 0
      %521 = vmatpush1.bf16.msra.mxu0 0
      %522 = vmatprep.subr.bf16.mxu0 0
      %523 = vmatpush1.bf16.msra.mxu0 0
      %524 = vmatprep.subr.bf16.mxu0 0
      %525 = vmatpush1.bf16.msra.mxu0 0
      %526 = vmatprep.subr.bf16.mxu0 0
      %527 = vmatpush1.bf16.msra.mxu0 0
      %528 = vmatprep.subr.bf16.mxu0 0
      %529 = vmatpush1.bf16.msra.mxu0 0
      %530 = vmatprep.subr.bf16.mxu0 0
      %531 = vmatpush1.bf16.msra.mxu0 0
      %532 = vmatprep.subr.bf16.mxu0 0
      %533 = vmatpush1.bf16.msra.mxu0 0
      %534 = vmatprep.subr.bf16.mxu0 0
      %535 = vmatpush1.bf16.msra.mxu0 %v518
      %536 = vmatprep.subr.bf16.mxu0 0
      %537 = vmatpush2.bf16.msra.mxu0 0
      %538 = vmatprep.subr.bf16.mxu0 0
      %539 = vmatpush2.bf16.msra.mxu0 0
      %540 = vmatprep.subr.bf16.mxu0 0
      %541 = vmatpush2.bf16.msra.mxu0 0
      %542 = vmatprep.subr.bf16.mxu0 0
      %543 = vmatpush2.bf16.msra.mxu0 0
      %544 = vmatprep.subr.bf16.mxu0 0
      %545 = vmatpush2.bf16.msra.mxu0 0
      %546 = vmatprep.subr.bf16.mxu0 0
      %547 = vmatpush2.bf16.msra.mxu0 0
      %548 = vmatprep.subr.bf16.mxu0 0
      %549 = vmatpush2.bf16.msra.mxu0 0
      %550 = vmatprep.subr.bf16.mxu0 0
      %551 = vmatpush2.bf16.msra.mxu0 0
      %552 = vmatprep.mubr.bf16.mxu0 0
      %553 = vmatmul.mubr.bf16.gmra.mxu0 %v506
      %v554 = vpop.f32.mrf.mxu0
      %v555 = vadd.f32 0.0, %v554
      %v556 = vpop.f32.mrf.mxu0
      %v557 = vpop.f32.mrf.mxu0
      %v558 = vadd.f32 0.0, %v557
      %v559 = vpop.f32.mrf.mxu0
      %560 = vmatprep.mubr.bf16.mxu0 0
      %561 = vmatmul.mubr.bf16.gmra.mxu0 %v509
      %v562 = vpop.f32.mrf.mxu0
      %v563 = vadd.f32 0.0, %v562
      %v564 = vpop.f32.mrf.mxu0
      %v565 = vpop.f32.mrf.mxu0
      %v566 = vadd.f32 0.0, %v565
      %v567 = vpop.f32.mrf.mxu0
      %568 = vmatprep.mubr.bf16.mxu0 0
      %569 = vmatmul.mubr.bf16.gmra.mxu0 %v512
      %v570 = vpop.f32.mrf.mxu0
      %v571 = vadd.f32 0.0, %v570
      %v572 = vpop.f32.mrf.mxu0
      %v573 = vpop.f32.mrf.mxu0
      %v574 = vadd.f32 0.0, %v573
      %v575 = vpop.f32.mrf.mxu0
      %576 = vmatprep.mubr.bf16.mxu0 0
      %577 = vmatmul.mubr.bf16.gmra.mxu0 %v515
      %v578 = vpop.f32.mrf.mxu0
      %v579 = vadd.f32 0.0, %v578
      %v580 = vpop.f32.mrf.mxu0
      %v581 = vpop.f32.mrf.mxu0
      %v582 = vadd.f32 0.0, %v581
      %v583 = vpop.f32.mrf.mxu0
      %584 = vdwg.mxu0
      %593 = vrot.lane.b32.xlu0 %v375, 4
      %v594 = vpop.permute.xlu0 %593
      %595 = vrot.lane.b32.xlu0 %v378, 4
      %v596 = vpop.permute.xlu0 %595
      %597 = vrot.lane.b32.xlu0 %v383, 4
      %v598 = vpop.permute.xlu0 %597
      %599 = vrot.lane.b32.xlu0 %v386, 4
      %v600 = vpop.permute.xlu0 %599
      %601 = vrot.lane.b32.xlu0 %v391, 4
      %v602 = vpop.permute.xlu0 %601
      %603 = vrot.lane.b32.xlu0 %v394, 4
      %v604 = vpop.permute.xlu0 %603
      %605 = vrot.lane.b32.xlu0 %v399, 4
      %v606 = vpop.permute.xlu0 %605
      %607 = vrot.lane.b32.xlu0 %v402, 4
      %v608 = vpop.permute.xlu0 %607
      %625 = vrot.lane.b32.xlu0 %v465, 8
      %v626 = vpop.permute.xlu0 %625
      %627 = vrot.lane.b32.xlu0 %v468, 8
      %v628 = vpop.permute.xlu0 %627
      %629 = vrot.lane.b32.xlu0 %v473, 8
      %v630 = vpop.permute.xlu0 %629
      %631 = vrot.lane.b32.xlu0 %v476, 8
      %v632 = vpop.permute.xlu0 %631
      %633 = vrot.lane.b32.xlu0 %v481, 8
      %v634 = vpop.permute.xlu0 %633
      %635 = vrot.lane.b32.xlu0 %v484, 8
      %v636 = vpop.permute.xlu0 %635
      %637 = vrot.lane.b32.xlu0 %v489, 8
      %v638 = vpop.permute.xlu0 %637
      %639 = vrot.lane.b32.xlu0 %v492, 8
      %v640 = vpop.permute.xlu0 %639
      %657 = vrot.lane.b32.xlu0 %v555, 12
      %v658 = vpop.permute.xlu0 %657
      %659 = vrot.lane.b32.xlu0 %v558, 12
      %v660 = vpop.permute.xlu0 %659
      %661 = vrot.lane.b32.xlu0 %v563, 12
      %v662 = vpop.permute.xlu0 %661
      %663 = vrot.lane.b32.xlu0 %v566, 12
      %v664 = vpop.permute.xlu0 %663
      %665 = vrot.lane.b32.xlu0 %v571, 12
      %v666 = vpop.permute.xlu0 %665
      %667 = vrot.lane.b32.xlu0 %v574, 12
      %v668 = vpop.permute.xlu0 %667
      %669 = vrot.lane.b32.xlu0 %v579, 12
      %v670 = vpop.permute.xlu0 %669
      %671 = vrot.lane.b32.xlu0 %v582, 12
      %v672 = vpop.permute.xlu0 %671
      %v681 = vsel %vm233, %v285, %v594
      %v682 = vsel %vm233, %v288, %v596
      %v683 = vsel %vm233, %v293, %v598
      %v684 = vsel %vm233, %v296, %v600
      %v685 = vsel %vm233, %v301, %v602
      %v686 = vsel %vm233, %v304, %v604
      %v687 = vsel %vm233, %v309, %v606
      %v688 = vsel %vm233, %v312, %v608
      %vm689 = vcmask 64512
      %v690 = vsel %vm689, %v681, %v626
      %v691 = vsel %vm689, %v682, %v628
      %v692 = vsel %vm689, %v683, %v630
      %v693 = vsel %vm689, %v684, %v632
      %v694 = vsel %vm689, %v685, %v634
      %v695 = vsel %vm689, %v686, %v636
      %v696 = vsel %vm689, %v687, %v638
      %v697 = vsel %vm689, %v688, %v640
      %vm698 = vcmask 97280
      %v699 = vsel %vm698, %v690, %v658
      %v700 = vsel %vm698, %v691, %v660
      %v701 = vsel %vm698, %v692, %v662
      %v702 = vsel %vm698, %v693, %v664
      %v703 = vsel %vm698, %v694, %v666
      %v704 = vsel %vm698, %v695, %v668
      %v705 = vsel %vm698, %v696, %v670
      %v706 = vsel %vm698, %v697, %v672
      %v707 = vpack.c.bf16 %v700, %v699
      %v708 = vpack.c.bf16 %v702, %v701
      %v709 = vpack.c.bf16 %v704, %v703
      %v710 = vpack.c.bf16 %v706, %v705
      %v715 = vunpack.c.l.b16 %v707
      %v716 = vunpack.c.h.b16 %v707
      %v717 = vunpack.c.l.b16 %v708
      %v718 = vunpack.c.h.b16 %v708
      %v719 = vunpack.c.l.b16 %v709
      %v720 = vunpack.c.h.b16 %v709
      %v721 = vunpack.c.l.b16 %v710
      %v722 = vunpack.c.h.b16 %v710
      %v723 = vpack.c.b16 %v715, %v715
      %v724 = vpack.c.b16 %v716, %v716
      %v725 = vpack.c.b16 %v717, %v717
      %v726 = vpack.c.b16 %v718, %v718
      %v727 = vpack.c.b16 %v719, %v719
      %v728 = vpack.c.b16 %v720, %v720
      %v729 = vpack.c.b16 %v721, %v721
      %v730 = vpack.c.b16 %v722, %v722
      %vm739 = vcmask 125952
      %740 = vst.msk [vmem:[%s201] sm:$0xf] %vm739, %v723
      %741 = vst.msk [vmem:[%s201 + $0x4] sm:$0xf] %vm739, %v724
      %742 = vst.msk [vmem:[%s201 + $0x8] sm:$0xf] %vm739, %v725
      %743 = vst.msk [vmem:[%s201 + $0xc] sm:$0xf] %vm739, %v726
      %744 = vst.msk [vmem:[%s201 + $0x10] sm:$0xf] %vm739, %v727
      %745 = vst.msk [vmem:[%s201 + $0x14] sm:$0xf] %vm739, %v728
      %746 = vst.msk [vmem:[%s201 + $0x18] sm:$0xf] %vm739, %v729
      %747 = vst.msk [vmem:[%s201 + $0x1c] sm:$0xf] %vm739, %v730
      %s748 = smul.u32 8, %s18
      %p749 = scmp.lt.s32.totalorder %s17, 1
      %s750 = scalar_select %p749, %s17, 1
      %p751 = scmp.lt.s32.totalorder %s748, 7
      %s752 = scalar_select %p751, %s748, 7
      %s753 = smul.addr %s750, 8
      %s754 = sadd.s32 %s752, %s753
      %s755 = smul.addr %s754, 4
      %s756 = scalar_lea.vmem %s2, %s755
      // Predicated region
      $region29: #{transformer_block_1.34} parent=27 // pred_check
        %p757 = pneg %p99
      $region30: #{transformer_block_1.34} parent=27 // pred_check_branch
        %759 = sbr.rel (%p757) target = $region32
      $region31: #{transformer_block_1.34} parent=27 // pred_region
        %s760 = smul.u32 8, %s18
      $region32: #{transformer_block_1.34} parent=27 // pred_fallthru
        _
    $region28: #{transformer_block_1.34} parent=5 // pred_fallthru
      _
    %p761 = scmp.le.s32.totalorder 2, %s8
    // Predicated region
    $region33: #{transformer_block_1.34} parent=5 // pred_check
      %p762 = pneg %p761
    $region34: #{transformer_block_1.34} parent=5 // pred_check_branch
      %764 = sbr.rel (%p762) target = $region36
    $region35: #{transformer_block_1.34} parent=5 // pred_region
      %s765 = ssub.s32 %s8, 2
      // Predicated region
      $region37: #{transformer_block_1.34} parent=35 // pred_check
        %p766 = pneg %p105
      $region38: #{transformer_block_1.34} parent=35 // pred_check_branch
        %768 = sbr.rel (%p766) target = $region40
      $region39: #{transformer_block_1.34} parent=35 // pred_region
        %s769 = smul.u32 8, %s20
        %p770 = scmp.lt.s32.totalorder %s19, 1
        %s771 = scalar_select %p770, %s19, 1
        %p772 = scmp.lt.s32.totalorder %s769, 7
        %s773 = scalar_select %p772, %s769, 7
        %s774 = smul.addr %s771, 8
        %s775 = sadd.s32 %s773, %s774
        %s776 = smul.addr %s775, 4
        %s777 = scalar_lea.vmem %s2, %s776
      $region40: #{transformer_block_1.34} parent=35 // pred_fallthru
        _
    $region36: #{transformer_block_1.34} parent=5 // pred_fallthru
      _
  $region6: #{transformer_block_1.34} parent=0 // loop_footer
    %s12 = sadd.s32 1, %s8
  $region7: #{transformer_block_1.34} parent=0 // loop_footer_branch
    %7 = sbr.rel target = $region3
  $region8: #{transformer_block_1.34} parent=0 // loop_exit
    _

// kernel: transformer_block_1.32
$region0: #{transformer_block_1.32}
  #allocation0 [shape = 'u32[]', space=smem, size = 0x4, offset = 0x4, fixed_abs, tag = 'smem constant byte address 0x4 - core index']
  #allocation1 [shape = 'u32[144,128]{1,0:T(1,128)}', space=vmem, size = 0x12000, scoped, tag = 'internal scratch']
  %s0 = inlined_call_operand.vmem [shape: bf16[2,10,10,48], index: 0, kind: input, shape index: {}]
  %s1 = inlined_call_operand.vmem [shape: f32[3,3,48], index: 1, kind: input, shape index: {}]
  %s2 = inlined_call_operand.vmem [shape: f32[1,1,48], index: 2, kind: input, shape index: {}]
  %s3 = inlined_call_operand.vmem [shape: bf16[2,8,8,48], index: 3, kind: output, shape index: {}]
  %s4 = sld [smem:[#allocation0]]
  $region45: #{transformer_block_1.32} parent=0
    _
  %s6 = ssub.s32 1, %s4
  %s7 = scalar_select 0, %s6, %s4
  loop: start=0, step=1, limit=4
  $region2: #{transformer_block_1.32} parent=0 // loop_pre_header
    _
  $region3: #{transformer_block_1.32} parent=0 // loop_header
    %s9 = sphi 0, %s13
    %p10 = scmp.ge.s32.totalorder %s9, 4
    %s16 = sphi 0, %s28
    %s17 = sphi 0, %s24
    %s18 = sphi 0, %s16
    %s19 = sphi 0, %s17
    %s20 = sphi 0, %s18
    %s21 = sphi 0, %s19
    %s33 = sphi 0, %s35
    %s36 = sphi 0, %s33
    %s37 = sphi 0, %s36
    %s53 = sphi 0, %s37
    %s59 = sphi 0, %s61
    %s62 = sphi 0, %s59
    %s63 = sphi 0, %s62
    %s79 = sphi 0, %s63
    %s85 = sphi 0, %s87
    %s88 = sphi 0, %s85
    %s89 = sphi 0, %s88
    %s105 = sphi 0, %s89
    %s113 = sphi 0, %s115
    %s116 = sphi 0, %s113
    %s117 = sphi 0, %s116
    %s133 = sphi 0, %s117
  $region4: #{transformer_block_1.32} parent=0 // loop_header_branch
    %12 = sbr.rel (%p10) target = $region8
  $region5: #{transformer_block_1.32} parent=0 // loop_body
    %s14 = ssub.s32 %s9, 1
    %s15 = ssub.s32 %s9, 2
    %s22 = sadd.s32 1, %s17
    %p23 = scmp.ge.s32.totalorder %s22, 1
    %s24 = scalar_select %p23, 0, %s22
    %s25 = sadd.s32 1, %s16
    %s26 = scalar_select %p23, %s25, %s16
    %p27 = scmp.ge.s32.totalorder %s26, 2
    %s28 = scalar_select %p27, 0, %s26
    %s29 = ssub.s32 %s16, %s28
    %s30 = ssub.s32 %s17, %s24
    %s31 = sor.u32 %s29, %s30
    %p32 = scmp.eq.s32.totalorder %s31, 0
    %s34 = sadd.s32 %s33, 1
    %s35 = scalar_select %p32, %s33, %s34
    %p38 = pneg %p32
    %p39 = scmp.eq.s32.totalorder %s9, 1
    %p40 = por %p38, %p39
    %p41 = scmp.ne.s32.totalorder %s33, %s36
    %p42 = scmp.eq.s32.totalorder %s9, 0
    %p43 = por %p41, %p42
    %p44 = scmp.ne.s32.totalorder %s33, %s36
    %p45 = scmp.eq.s32.totalorder %s14, 1
    %p46 = por %p44, %p45
    %p47 = scmp.ne.s32.totalorder %s36, %s37
    %p48 = scmp.eq.s32.totalorder %s14, 0
    %p49 = por %p47, %p48
    %p50 = scmp.ne.s32.totalorder %s36, %s37
    %p51 = scmp.eq.s32.totalorder %s15, 1
    %p52 = por %p50, %p51
    %p54 = scmp.ne.s32.totalorder %s37, %s53
    %p55 = scmp.eq.s32.totalorder %s15, 0
    %p56 = por %p54, %p55
    %s57 = ssub.s32 %s17, %s24
    %p58 = scmp.eq.s32.totalorder %s57, 0
    %s60 = sadd.s32 %s59, 1
    %s61 = scalar_select %p58, %s59, %s60
    %p64 = pneg %p58
    %p65 = scmp.eq.s32.totalorder %s9, 1
    %p66 = por %p64, %p65
    %p67 = scmp.ne.s32.totalorder %s59, %s62
    %p68 = scmp.eq.s32.totalorder %s9, 0
    %p69 = por %p67, %p68
    %p70 = scmp.ne.s32.totalorder %s59, %s62
    %p71 = scmp.eq.s32.totalorder %s14, 1
    %p72 = por %p70, %p71
    %p73 = scmp.ne.s32.totalorder %s62, %s63
    %p74 = scmp.eq.s32.totalorder %s14, 0
    %p75 = por %p73, %p74
    %p76 = scmp.ne.s32.totalorder %s62, %s63
    %p77 = scmp.eq.s32.totalorder %s15, 1
    %p78 = por %p76, %p77
    %p80 = scmp.ne.s32.totalorder %s63, %s79
    %p81 = scmp.eq.s32.totalorder %s15, 0
    %p82 = por %p80, %p81
    %s83 = ssub.s32 %s17, %s24
    %p84 = scmp.eq.s32.totalorder %s83, 0
    %s86 = sadd.s32 %s85, 1
    %s87 = scalar_select %p84, %s85, %s86
    %p90 = pneg %p84
    %p91 = scmp.eq.s32.totalorder %s9, 1
    %p92 = por %p90, %p91
    %p93 = scmp.ne.s32.totalorder %s85, %s88
    %p94 = scmp.eq.s32.totalorder %s9, 0
    %p95 = por %p93, %p94
    %p96 = scmp.ne.s32.totalorder %s85, %s88
    %p97 = scmp.eq.s32.totalorder %s14, 1
    %p98 = por %p96, %p97
    %p99 = scmp.ne.s32.totalorder %s88, %s89
    %p100 = scmp.eq.s32.totalorder %s14, 0
    %p101 = por %p99, %p100
    %p102 = scmp.ne.s32.totalorder %s88, %s89
    %p103 = scmp.eq.s32.totalorder %s15, 1
    %p104 = por %p102, %p103
    %p106 = scmp.ne.s32.totalorder %s89, %s105
    %p107 = scmp.eq.s32.totalorder %s15, 0
    %p108 = por %p106, %p107
    %s109 = ssub.s32 %s16, %s28
    %s110 = ssub.s32 %s17, %s24
    %s111 = sor.u32 %s109, %s110
    %p112 = scmp.eq.s32.totalorder %s111, 0
    %s114 = sadd.s32 %s113, 1
    %s115 = scalar_select %p112, %s113, %s114
    %p118 = pneg %p112
    %p119 = scmp.eq.s32.totalorder %s9, 1
    %p120 = por %p118, %p119
    %p121 = scmp.ne.s32.totalorder %s113, %s116
    %p122 = scmp.eq.s32.totalorder %s9, 0
    %p123 = por %p121, %p122
    %p124 = scmp.ne.s32.totalorder %s113, %s116
    %p125 = scmp.eq.s32.totalorder %s14, 1
    %p126 = por %p124, %p125
    %p127 = scmp.ne.s32.totalorder %s116, %s117
    %p128 = scmp.eq.s32.totalorder %s14, 0
    %p129 = por %p127, %p128
    %p130 = scmp.ne.s32.totalorder %s116, %s117
    %p131 = scmp.eq.s32.totalorder %s15, 1
    %p132 = por %p130, %p131
    %p134 = scmp.ne.s32.totalorder %s117, %s133
    %p135 = scmp.eq.s32.totalorder %s15, 0
    %p136 = por %p134, %p135
    %p137 = scmp.le.s32.totalorder 1, %s9
    %p138 = scmp.lt.s32.totalorder %s9, 3
    %p139 = pnand %p137, %p138
    %p140 = pneg %p139
    // Predicated region
    $region9: #{transformer_block_1.32} parent=5 // pred_check
      _
    $region10: #{transformer_block_1.32} parent=5 // pred_check_branch
      %142 = sbr.rel (%p139) target = $region12
    $region11: #{transformer_block_1.32} parent=5 // pred_region
      %s143 = ssub.s32 %s9, 1
      // Predicated region
      $region13: #{transformer_block_1.32} parent=11 // pred_check
        %p144 = pneg %p75
      $region14: #{transformer_block_1.32} parent=11 // pred_check_branch
        %146 = sbr.rel (%p144) target = $region16
      $region15: #{transformer_block_1.32} parent=11 // pred_region
        %p147 = scmp.lt.s32.totalorder %s19, 0
        %s148 = scalar_select %p147, %s19, 0
        %s149 = smul.addr %s148, 4
        %s150 = scalar_lea.vmem %s1, %s149
      $region16: #{transformer_block_1.32} parent=11 // pred_fallthru
        _
      // Predicated region
      $region17: #{transformer_block_1.32} parent=11 // pred_check
        %p151 = pneg %p101
      $region18: #{transformer_block_1.32} parent=11 // pred_check_branch
        %153 = sbr.rel (%p151) target = $region20
      $region19: #{transformer_block_1.32} parent=11 // pred_region
        %p154 = scmp.lt.s32.totalorder %s19, 0
        %s155 = scalar_select %p154, %s19, 0
        %s156 = scalar_lea.vmem %s2, %s155
      $region20: #{transformer_block_1.32} parent=11 // pred_fallthru
        _
    $region12: #{transformer_block_1.32} parent=5 // pred_fallthru
      _
    %p157 = scmp.lt.s32.totalorder %s9, 2
    // Predicated region
    $region21: #{transformer_block_1.32} parent=5 // pred_check
      %p158 = pneg %p157
    $region22: #{transformer_block_1.32} parent=5 // pred_check_branch
      %160 = sbr.rel (%p158) target = $region24
    $region23: #{transformer_block_1.32} parent=5 // pred_region
      // Predicated region
      $region25: #{transformer_block_1.32} parent=23 // pred_check
        %p161 = pneg %p43
      $region26: #{transformer_block_1.32} parent=23 // pred_check_branch
        %163 = sbr.rel (%p161) target = $region28
      $region27: #{transformer_block_1.32} parent=23 // pred_region
        %p164 = scmp.lt.s32.totalorder %s16, 1
        %s165 = scalar_select %p164, %s16, 1
        %p166 = scmp.lt.s32.totalorder %s17, 0
        %s167 = scalar_select %p166, %s17, 0
        %s168 = smul.addr %s165, 20
        %s169 = sadd.s32 %s167, %s168
        %s170 = smul.addr %s169, 4
        %s171 = scalar_lea.vmem %s0, %s170
      $region28: #{transformer_block_1.32} parent=23 // pred_fallthru
        _
    $region24: #{transformer_block_1.32} parent=5 // pred_fallthru
      _
    %p172 = scmp.le.s32.totalorder 1, %s9
    %p173 = scmp.lt.s32.totalorder %s9, 3
    %p174 = pnand %p172, %p173
    %p175 = pneg %p174
    // Predicated region
    $region29: #{transformer_block_1.32} parent=5 // pred_check
      _
    $region30: #{transformer_block_1.32} parent=5 // pred_check_branch
      %177 = sbr.rel (%p174) target = $region32
    $region31: #{transformer_block_1.32} parent=5 // pred_region
      %s178 = ssub.s32 %s9, 1
      %p179 = scmp.lt.s32.totalorder %s18, 1
      %s180 = scalar_select %p179, %s18, 1
      %p181 = scmp.lt.s32.totalorder %s19, 0
      %s182 = scalar_select %p181, %s19, 0
      %s183 = smul.addr %s180, 20
      %s184 = sadd.s32 %s182, %s183
      %s185 = smul.addr %s184, 4
      %s186 = scalar_lea.vmem %s0, %s185
      %p187 = pneg %p49
      %p188 = pneg %p46
      %p189 = scmp.lt.s32.totalorder %s19, 0
      %s190 = scalar_select %p189, %s19, 0
      %s191 = smul.addr %s190, 4
      %s192 = scalar_lea.vmem %s1, %s191
      %p193 = pneg %p75
      %p194 = pneg %p72
      %p195 = scmp.lt.s32.totalorder %s19, 0
      %s196 = scalar_select %p195, %s19, 0
      %s197 = scalar_lea.vmem %s2, %s196
      %p198 = pneg %p101
      %p199 = pneg %p98
      %p200 = pneg %p129
      %p201 = pneg %p126
      %p202 = scmp.lt.s32.totalorder %s18, 1
      %s203 = scalar_select %p202, %s18, 1
      %p204 = scmp.lt.s32.totalorder %s19, 0
      %s205 = scalar_select %p204, %s19, 0
      %s206 = smul.addr %s203, 8
      %s207 = sadd.s32 %s205, %s206
      %s208 = smul.addr %s207, 4
      %s209 = scalar_lea.vmem %s3, %s208
      %p210 = scmp.lt.s32.totalorder %s18, 1
      %s211 = scalar_select %p210, %s18, 1
      %p212 = scmp.lt.s32.totalorder %s19, 0
      %s213 = scalar_select %p212, %s19, 0
      %s214 = smul.addr %s211, 20
      %s215 = sadd.s32 %s213, %s214
      %s216 = smul.addr %s215, 4
      %s217 = scalar_lea.vmem %s0, %s216
      %p218 = scmp.lt.s32.totalorder %s19, 0
      %s219 = scalar_select %p218, %s19, 0
      %s220 = smul.addr %s219, 4
      %s221 = scalar_lea.vmem %s1, %s220
      %p222 = scmp.lt.s32.totalorder %s19, 0
      %s223 = scalar_select %p222, %s19, 0
      %s224 = scalar_lea.vmem %s2, %s223
      %p225 = scmp.lt.s32.totalorder %s18, 1
      %s226 = scalar_select %p225, %s18, 1
      %p227 = scmp.lt.s32.totalorder %s19, 0
      %s228 = scalar_select %p227, %s19, 0
      %s229 = smul.addr %s226, 8
      %s230 = sadd.s32 %s228, %s229
      %s231 = smul.addr %s230, 4
      %s232 = scalar_lea.vmem %s3, %s231
      %v233 = vld [vmem:[%s221] sm:$0x7]
      %v234 = vld [vmem:[%s221 + $0x4] sm:$0x7]
      %v235 = vld [vmem:[%s221 + $0x8] sm:$0x7]
      %v236 = vld [vmem:[%s217] sm:$0xf]
      %v237 = vld [vmem:[%s217 + $0x8] sm:$0xf]
      %v238 = vld [vmem:[%s217 + $0x10] sm:$0xf]
      %v239 = vld [vmem:[%s217 + $0x18] sm:$0xf]
      %v240 = vld [vmem:[%s217 + $0x20] sm:$0xf]
      %v241 = vld [vmem:[%s217 + $0x28] sm:$0xf]
      %v242 = vld [vmem:[%s217 + $0x30] sm:$0xf]
      %v243 = vld [vmem:[%s217 + $0x38] sm:$0xf]
      %v244 = vunpack.c.l.bf16 %v236
      %v245 = vunpack.c.l.bf16 %v237
      %v246 = vunpack.c.l.bf16 %v238
      %v247 = vunpack.c.l.bf16 %v239
      %v248 = vunpack.c.l.bf16 %v240
      %v249 = vunpack.c.l.bf16 %v241
      %v250 = vunpack.c.l.bf16 %v242
      %v251 = vunpack.c.l.bf16 %v243
      %v252 = vlaneseq
      %v253 = vshrl.u32 %v252, 7
      %v254 = vsub.s32 0, %v253
      %v255 = vrot.slane %v233, %v254
      %v256 = vmul.f32 %v244, %v255
      %v257 = vmul.f32 %v245, %v255
      %v258 = vmul.f32 %v246, %v255
      %v259 = vmul.f32 %v247, %v255
      %v260 = vmul.f32 %v248, %v255
      %v261 = vmul.f32 %v249, %v255
      %v262 = vmul.f32 %v250, %v255
      %v263 = vmul.f32 %v251, %v255
      %v264 = vld [vmem:[%s217 + $0x4] sm:$0x1]
      %v265 = vld [vmem:[%s217 + $0xc] sm:$0x1]
      %v266 = vld [vmem:[%s217 + $0x14] sm:$0x1]
      %v267 = vld [vmem:[%s217 + $0x1c] sm:$0x1]
      %v268 = vld [vmem:[%s217 + $0x24] sm:$0x1]
      %v269 = vld [vmem:[%s217 + $0x2c] sm:$0x1]
      %v270 = vld [vmem:[%s217 + $0x34] sm:$0x1]
      %v271 = vld [vmem:[%s217 + $0x3c] sm:$0x1]
      %v272 = vunpack.c.l.bf16 %v264
      %v273 = vunpack.c.l.bf16 %v265
      %v274 = vunpack.c.l.bf16 %v266
      %v275 = vunpack.c.l.bf16 %v267
      %v276 = vunpack.c.l.bf16 %v268
      %v277 = vunpack.c.l.bf16 %v269
      %v278 = vunpack.c.l.bf16 %v270
      %v279 = vunpack.c.l.bf16 %v271
      %v280 = vlaneseq
      %v281 = vshrl.u32 %v280, 7
      %v282 = vsub.s32 1, %v281
      %v283 = vrot.slane %v233, %v282
      %v284 = vmul.f32 %v244, %v283
      %v285 = vmul.f32 %v272, %v283
      %v286 = vmul.f32 %v245, %v283
      %v287 = vmul.f32 %v273, %v283
      %v288 = vmul.f32 %v246, %v283
      %v289 = vmul.f32 %v274, %v283
      %v290 = vmul.f32 %v247, %v283
      %v291 = vmul.f32 %v275, %v283
      %v292 = vmul.f32 %v248, %v283
      %v293 = vmul.f32 %v276, %v283
      %v294 = vmul.f32 %v249, %v283
      %v295 = vmul.f32 %v277, %v283
      %v296 = vmul.f32 %v250, %v283
      %v297 = vmul.f32 %v278, %v283
      %v298 = vmul.f32 %v251, %v283
      %v299 = vmul.f32 %v279, %v283
      %vm316 = vcmask 1046528
      %v317 = vrot.slane %v284, 1
      %v318 = vrot.slane %v285, 1
      %v319 = vsel %vm316, %v317, %v318
      %v320 = vrot.slane %v286, 1
      %v321 = vrot.slane %v287, 1
      %v322 = vsel %vm316, %v320, %v321
      %v323 = vrot.slane %v288, 1
      %v324 = vrot.slane %v289, 1
      %v325 = vsel %vm316, %v323, %v324
      %v326 = vrot.slane %v290, 1
      %v327 = vrot.slane %v291, 1
      %v328 = vsel %vm316, %v326, %v327
      %v329 = vrot.slane %v292, 1
      %v330 = vrot.slane %v293, 1
      %v331 = vsel %vm316, %v329, %v330
      %v332 = vrot.slane %v294, 1
      %v333 = vrot.slane %v295, 1
      %v334 = vsel %vm316, %v332, %v333
      %v335 = vrot.slane %v296, 1
      %v336 = vrot.slane %v297, 1
      %v337 = vsel %vm316, %v335, %v336
      %v338 = vrot.slane %v298, 1
      %v339 = vrot.slane %v299, 1
      %v340 = vsel %vm316, %v338, %v339
      %v349 = vadd.f32 %v256, %v319
      %v350 = vadd.f32 %v257, %v322
      %v351 = vadd.f32 %v258, %v325
      %v352 = vadd.f32 %v259, %v328
      %v353 = vadd.f32 %v260, %v331
      %v354 = vadd.f32 %v261, %v334
      %v355 = vadd.f32 %v262, %v337
      %v356 = vadd.f32 %v263, %v340
      %v357 = vld [vmem:[%s217] sm:$0xe]
      %v358 = vld [vmem:[%s217 + $0x8] sm:$0xe]
      %v359 = vld [vmem:[%s217 + $0x10] sm:$0xe]
      %v360 = vld [vmem:[%s217 + $0x18] sm:$0xe]
      %v361 = vld [vmem:[%s217 + $0x20] sm:$0xe]
      %v362 = vld [vmem:[%s217 + $0x28] sm:$0xe]
      %v363 = vld [vmem:[%s217 + $0x30] sm:$0xe]
      %v364 = vld [vmem:[%s217 + $0x38] sm:$0xe]
      %v365 = vunpack.c.l.bf16 %v357
      %v366 = vunpack.c.l.bf16 %v358
      %v367 = vunpack.c.l.bf16 %v359
      %v368 = vunpack.c.l.bf16 %v360
      %v369 = vunpack.c.l.bf16 %v361
      %v370 = vunpack.c.l.bf16 %v362
      %v371 = vunpack.c.l.bf16 %v363
      %v372 = vunpack.c.l.bf16 %v364
      %v373 = vlaneseq
      %v374 = vshrl.u32 %v373, 7
      %v375 = vsub.s32 2, %v374
      %v376 = vrot.slane %v233, %v375
      %v377 = vmul.f32 %v365, %v376
      %v378 = vmul.f32 %v272, %v376
      %v379 = vmul.f32 %v366, %v376
      %v380 = vmul.f32 %v273, %v376
      %v381 = vmul.f32 %v367, %v376
      %v382 = vmul.f32 %v274, %v376
      %v383 = vmul.f32 %v368, %v376
      %v384 = vmul.f32 %v275, %v376
      %v385 = vmul.f32 %v369, %v376
      %v386 = vmul.f32 %v276, %v376
      %v387 = vmul.f32 %v370, %v376
      %v388 = vmul.f32 %v277, %v376
      %v389 = vmul.f32 %v371, %v376
      %v390 = vmul.f32 %v278, %v376
      %v391 = vmul.f32 %v372, %v376
      %v392 = vmul.f32 %v279, %v376
      %vm409 = vcmask 1045504
      %v410 = vrot.slane %v377, 2
      %v411 = vrot.slane %v378, 2
      %v412 = vsel %vm409, %v410, %v411
      %v413 = vrot.slane %v379, 2
      %v414 = vrot.slane %v380, 2
      %v415 = vsel %vm409, %v413, %v414
      %v416 = vrot.slane %v381, 2
      %v417 = vrot.slane %v382, 2
      %v418 = vsel %vm409, %v416, %v417
      %v419 = vrot.slane %v383, 2
      %v420 = vrot.slane %v384, 2
      %v421 = vsel %vm409, %v419, %v420
      %v422 = vrot.slane %v385, 2
      %v423 = vrot.slane %v386, 2
      %v424 = vsel %vm409, %v422, %v423
      %v425 = vrot.slane %v387, 2
      %v426 = vrot.slane %v388, 2
      %v427 = vsel %vm409, %v425, %v426
      %v428 = vrot.slane %v389, 2
      %v429 = vrot.slane %v390, 2
      %v430 = vsel %vm409, %v428, %v429
      %v431 = vrot.slane %v391, 2
      %v432 = vrot.slane %v392, 2
      %v433 = vsel %vm409, %v431, %v432
      %v442 = vadd.f32 %v349, %v412
      %v443 = vadd.f32 %v350, %v415
      %v444 = vadd.f32 %v351, %v418
      %v445 = vadd.f32 %v352, %v421
      %v446 = vadd.f32 %v353, %v424
      %v447 = vadd.f32 %v354, %v427
      %v448 = vadd.f32 %v355, %v430
      %v449 = vadd.f32 %v356, %v433
      %s450 = scalar_lea.vmem %s217, 8
      %v451 = vld [vmem:[%s450] sm:$0xf]
      %v452 = vld [vmem:[%s450 + $0x8] sm:$0xf]
      %v453 = vld [vmem:[%s450 + $0x10] sm:$0xf]
      %v454 = vld [vmem:[%s450 + $0x18] sm:$0xf]
      %v455 = vld [vmem:[%s450 + $0x20] sm:$0xf]
      %v456 = vld [vmem:[%s450 + $0x28] sm:$0xf]
      %v457 = vld [vmem:[%s450 + $0x30] sm:$0xf]
      %v458 = vld [vmem:[%s450 + $0x38] sm:$0xf]
      %v459 = vunpack.c.l.bf16 %v451
      %v460 = vunpack.c.l.bf16 %v452
      %v461 = vunpack.c.l.bf16 %v453
      %v462 = vunpack.c.l.bf16 %v454
      %v463 = vunpack.c.l.bf16 %v455
      %v464 = vunpack.c.l.bf16 %v456
      %v465 = vunpack.c.l.bf16 %v457
      %v466 = vunpack.c.l.bf16 %v458
      %v467 = vlaneseq
      %v468 = vshrl.u32 %v467, 7
      %v469 = vsub.s32 0, %v468
      %v470 = vrot.slane %v234, %v469
      %v471 = vmul.f32 %v459, %v470
      %v472 = vmul.f32 %v460, %v470
      %v473 = vmul.f32 %v461, %v470
      %v474 = vmul.f32 %v462, %v470
      %v475 = vmul.f32 %v463, %v470
      %v476 = vmul.f32 %v464, %v470
      %v477 = vmul.f32 %v465, %v470
      %v478 = vmul.f32 %v466, %v470
      %v479 = vadd.f32 %v442, %v471
      %v480 = vadd.f32 %v443, %v472
      %v481 = vadd.f32 %v444, %v473
      %v482 = vadd.f32 %v445, %v474
      %v483 = vadd.f32 %v446, %v475
      %v484 = vadd.f32 %v447, %v476
      %v485 = vadd.f32 %v448, %v477
      %v486 = vadd.f32 %v449, %v478
      %v487 = vld [vmem:[%s450 + $0x4] sm:$0x1]
      %v488 = vld [vmem:[%s450 + $0xc] sm:$0x1]
      %v489 = vld [vmem:[%s450 + $0x14] sm:$0x1]
      %v490 = vld [vmem:[%s450 + $0x1c] sm:$0x1]
      %v491 = vld [vmem:[%s450 + $0x24] sm:$0x1]
      %v492 = vld [vmem:[%s450 + $0x2c] sm:$0x1]
      %v493 = vld [vmem:[%s450 + $0x34] sm:$0x1]
      %v494 = vld [vmem:[%s450 + $0x3c] sm:$0x1]
      %v495 = vunpack.c.l.bf16 %v487
      %v496 = vunpack.c.l.bf16 %v488
      %v497 = vunpack.c.l.bf16 %v489
      %v498 = vunpack.c.l.bf16 %v490
      %v499 = vunpack.c.l.bf16 %v491
      %v500 = vunpack.c.l.bf16 %v492
      %v501 = vunpack.c.l.bf16 %v493
      %v502 = vunpack.c.l.bf16 %v494
      %v503 = vlaneseq
      %v504 = vshrl.u32 %v503, 7
      %v505 = vsub.s32 1, %v504
      %v506 = vrot.slane %v234, %v505
      %v507 = vmul.f32 %v459, %v506
      %v508 = vmul.f32 %v495, %v506
      %v509 = vmul.f32 %v460, %v506
      %v510 = vmul.f32 %v496, %v506
      %v511 = vmul.f32 %v461, %v506
      %v512 = vmul.f32 %v497, %v506
      %v513 = vmul.f32 %v462, %v506
      %v514 = vmul.f32 %v498, %v506
      %v515 = vmul.f32 %v463, %v506
      %v516 = vmul.f32 %v499, %v506
      %v517 = vmul.f32 %v464, %v506
      %v518 = vmul.f32 %v500, %v506
      %v519 = vmul.f32 %v465, %v506
      %v520 = vmul.f32 %v501, %v506
      %v521 = vmul.f32 %v466, %v506
      %v522 = vmul.f32 %v502, %v506
      %v539 = vrot.slane %v507, 1
      %v540 = vrot.slane %v508, 1
      %v541 = vsel %vm316, %v539, %v540
      %v542 = vrot.slane %v509, 1
      %v543 = vrot.slane %v510, 1
      %v544 = vsel %vm316, %v542, %v543
      %v545 = vrot.slane %v511, 1
      %v546 = vrot.slane %v512, 1
      %v547 = vsel %vm316, %v545, %v546
      %v548 = vrot.slane %v513, 1
      %v549 = vrot.slane %v514, 1
      %v550 = vsel %vm316, %v548, %v549
      %v551 = vrot.slane %v515, 1
      %v552 = vrot.slane %v516, 1
      %v553 = vsel %vm316, %v551, %v552
      %v554 = vrot.slane %v517, 1
      %v555 = vrot.slane %v518, 1
      %v556 = vsel %vm316, %v554, %v555
      %v557 = vrot.slane %v519, 1
      %v558 = vrot.slane %v520, 1
      %v559 = vsel %vm316, %v557, %v558
      %v560 = vrot.slane %v521, 1
      %v561 = vrot.slane %v522, 1
      %v562 = vsel %vm316, %v560, %v561
      %v571 = vadd.f32 %v479, %v541
      %v572 = vadd.f32 %v480, %v544
      %v573 = vadd.f32 %v481, %v547
      %v574 = vadd.f32 %v482, %v550
      %v575 = vadd.f32 %v483, %v553
      %v576 = vadd.f32 %v484, %v556
      %v577 = vadd.f32 %v485, %v559
      %v578 = vadd.f32 %v486, %v562
      %v579 = vld [vmem:[%s450] sm:$0xe]
      %v580 = vld [vmem:[%s450 + $0x8] sm:$0xe]
      %v581 = vld [vmem:[%s450 + $0x10] sm:$0xe]
      %v582 = vld [vmem:[%s450 + $0x18] sm:$0xe]
      %v583 = vld [vmem:[%s450 + $0x20] sm:$0xe]
      %v584 = vld [vmem:[%s450 + $0x28] sm:$0xe]
      %v585 = vld [vmem:[%s450 + $0x30] sm:$0xe]
      %v586 = vld [vmem:[%s450 + $0x38] sm:$0xe]
      %v587 = vunpack.c.l.bf16 %v579
      %v588 = vunpack.c.l.bf16 %v580
      %v589 = vunpack.c.l.bf16 %v581
      %v590 = vunpack.c.l.bf16 %v582
      %v591 = vunpack.c.l.bf16 %v583
      %v592 = vunpack.c.l.bf16 %v584
      %v593 = vunpack.c.l.bf16 %v585
      %v594 = vunpack.c.l.bf16 %v586
      %v595 = vlaneseq
      %v596 = vshrl.u32 %v595, 7
      %v597 = vsub.s32 2, %v596
      %v598 = vrot.slane %v234, %v597
      %v599 = vmul.f32 %v587, %v598
      %v600 = vmul.f32 %v495, %v598
      %v601 = vmul.f32 %v588, %v598
      %v602 = vmul.f32 %v496, %v598
      %v603 = vmul.f32 %v589, %v598
      %v604 = vmul.f32 %v497, %v598
      %v605 = vmul.f32 %v590, %v598
      %v606 = vmul.f32 %v498, %v598
      %v607 = vmul.f32 %v591, %v598
      %v608 = vmul.f32 %v499, %v598
      %v609 = vmul.f32 %v592, %v598
      %v610 = vmul.f32 %v500, %v598
      %v611 = vmul.f32 %v593, %v598
      %v612 = vmul.f32 %v501, %v598
      %v613 = vmul.f32 %v594, %v598
      %v614 = vmul.f32 %v502, %v598
      %v631 = vrot.slane %v599, 2
      %v632 = vrot.slane %v600, 2
      %v633 = vsel %vm409, %v631, %v632
      %v634 = vrot.slane %v601, 2
      %v635 = vrot.slane %v602, 2
      %v636 = vsel %vm409, %v634, %v635
      %v637 = vrot.slane %v603, 2
      %v638 = vrot.slane %v604, 2
      %v639 = vsel %vm409, %v637, %v638
      %v640 = vrot.slane %v605, 2
      %v641 = vrot.slane %v606, 2
      %v642 = vsel %vm409, %v640, %v641
      %v643 = vrot.slane %v607, 2
      %v644 = vrot.slane %v608, 2
      %v645 = vsel %vm409, %v643, %v644
      %v646 = vrot.slane %v609, 2
      %v647 = vrot.slane %v610, 2
      %v648 = vsel %vm409, %v646, %v647
      %v649 = vrot.slane %v611, 2
      %v650 = vrot.slane %v612, 2
      %v651 = vsel %vm409, %v649, %v650
      %v652 = vrot.slane %v613, 2
      %v653 = vrot.slane %v614, 2
      %v654 = vsel %vm409, %v652, %v653
      %v663 = vadd.f32 %v571, %v633
      %v664 = vadd.f32 %v572, %v636
      %v665 = vadd.f32 %v573, %v639
      %v666 = vadd.f32 %v574, %v642
      %v667 = vadd.f32 %v575, %v645
      %v668 = vadd.f32 %v576, %v648
      %v669 = vadd.f32 %v577, %v651
      %v670 = vadd.f32 %v578, %v654
      %s671 = scalar_lea.vmem %s217, 16
      %v672 = vld [vmem:[%s671] sm:$0xf]
      %v673 = vld [vmem:[%s671 + $0x8] sm:$0xf]
      %v674 = vld [vmem:[%s671 + $0x10] sm:$0xf]
      %v675 = vld [vmem:[%s671 + $0x18] sm:$0xf]
      %v676 = vld [vmem:[%s671 + $0x20] sm:$0xf]
      %v677 = vld [vmem:[%s671 + $0x28] sm:$0xf]
      %v678 = vld [vmem:[%s671 + $0x30] sm:$0xf]
      %v679 = vld [vmem:[%s671 + $0x38] sm:$0xf]
      %v680 = vunpack.c.l.bf16 %v672
      %v681 = vunpack.c.l.bf16 %v673
      %v682 = vunpack.c.l.bf16 %v674
      %v683 = vunpack.c.l.bf16 %v675
      %v684 = vunpack.c.l.bf16 %v676
      %v685 = vunpack.c.l.bf16 %v677
      %v686 = vunpack.c.l.bf16 %v678
      %v687 = vunpack.c.l.bf16 %v679
      %v688 = vlaneseq
      %v689 = vshrl.u32 %v688, 7
      %v690 = vsub.s32 0, %v689
      %v691 = vrot.slane %v235, %v690
      %v692 = vmul.f32 %v680, %v691
      %v693 = vmul.f32 %v681, %v691
      %v694 = vmul.f32 %v682, %v691
      %v695 = vmul.f32 %v683, %v691
      %v696 = vmul.f32 %v684, %v691
      %v697 = vmul.f32 %v685, %v691
      %v698 = vmul.f32 %v686, %v691
      %v699 = vmul.f32 %v687, %v691
      %v700 = vadd.f32 %v663, %v692
      %v701 = vadd.f32 %v664, %v693
      %v702 = vadd.f32 %v665, %v694
      %v703 = vadd.f32 %v666, %v695
      %v704 = vadd.f32 %v667, %v696
      %v705 = vadd.f32 %v668, %v697
      %v706 = vadd.f32 %v669, %v698
      %v707 = vadd.f32 %v670, %v699
      %v708 = vld [vmem:[%s671 + $0x4] sm:$0x1]
      %v709 = vld [vmem:[%s671 + $0xc] sm:$0x1]
      %v710 = vld [vmem:[%s671 + $0x14] sm:$0x1]
      %v711 = vld [vmem:[%s671 + $0x1c] sm:$0x1]
      %v712 = vld [vmem:[%s671 + $0x24] sm:$0x1]
      %v713 = vld [vmem:[%s671 + $0x2c] sm:$0x1]
      %v714 = vld [vmem:[%s671 + $0x34] sm:$0x1]
      %v715 = vld [vmem:[%s671 + $0x3c] sm:$0x1]
      %v716 = vunpack.c.l.bf16 %v708
      %v717 = vunpack.c.l.bf16 %v709
      %v718 = vunpack.c.l.bf16 %v710
      %v719 = vunpack.c.l.bf16 %v711
      %v720 = vunpack.c.l.bf16 %v712
      %v721 = vunpack.c.l.bf16 %v713
      %v722 = vunpack.c.l.bf16 %v714
      %v723 = vunpack.c.l.bf16 %v715
      %v724 = vlaneseq
      %v725 = vshrl.u32 %v724, 7
      %v726 = vsub.s32 1, %v725
      %v727 = vrot.slane %v235, %v726
      %v728 = vmul.f32 %v680, %v727
      %v729 = vmul.f32 %v716, %v727
      %v730 = vmul.f32 %v681, %v727
      %v731 = vmul.f32 %v717, %v727
      %v732 = vmul.f32 %v682, %v727
      %v733 = vmul.f32 %v718, %v727
      %v734 = vmul.f32 %v683, %v727
      %v735 = vmul.f32 %v719, %v727
      %v736 = vmul.f32 %v684, %v727
      %v737 = vmul.f32 %v720, %v727
      %v738 = vmul.f32 %v685, %v727
      %v739 = vmul.f32 %v721, %v727
      %v740 = vmul.f32 %v686, %v727
      %v741 = vmul.f32 %v722, %v727
      %v742 = vmul.f32 %v687, %v727
      %v743 = vmul.f32 %v723, %v727
      %v760 = vrot.slane %v728, 1
      %v761 = vrot.slane %v729, 1
      %v762 = vsel %vm316, %v760, %v761
      %v763 = vrot.slane %v730, 1
      %v764 = vrot.slane %v731, 1
      %v765 = vsel %vm316, %v763, %v764
      %v766 = vrot.slane %v732, 1
      %v767 = vrot.slane %v733, 1
      %v768 = vsel %vm316, %v766, %v767
      %v769 = vrot.slane %v734, 1
      %v770 = vrot.slane %v735, 1
      %v771 = vsel %vm316, %v769, %v770
      %v772 = vrot.slane %v736, 1
      %v773 = vrot.slane %v737, 1
      %v774 = vsel %vm316, %v772, %v773
      %v775 = vrot.slane %v738, 1
      %v776 = vrot.slane %v739, 1
      %v777 = vsel %vm316, %v775, %v776
      %v778 = vrot.slane %v740, 1
      %v779 = vrot.slane %v741, 1
      %v780 = vsel %vm316, %v778, %v779
      %v781 = vrot.slane %v742, 1
      %v782 = vrot.slane %v743, 1
      %v783 = vsel %vm316, %v781, %v782
      %v792 = vadd.f32 %v700, %v762
      %v793 = vadd.f32 %v701, %v765
      %v794 = vadd.f32 %v702, %v768
      %v795 = vadd.f32 %v703, %v771
      %v796 = vadd.f32 %v704, %v774
      %v797 = vadd.f32 %v705, %v777
      %v798 = vadd.f32 %v706, %v780
      %v799 = vadd.f32 %v707, %v783
      %v800 = vld [vmem:[%s671] sm:$0xe]
      %v801 = vld [vmem:[%s671 + $0x8] sm:$0xe]
      %v802 = vld [vmem:[%s671 + $0x10] sm:$0xe]
      %v803 = vld [vmem:[%s671 + $0x18] sm:$0xe]
      %v804 = vld [vmem:[%s671 + $0x20] sm:$0xe]
      %v805 = vld [vmem:[%s671 + $0x28] sm:$0xe]
      %v806 = vld [vmem:[%s671 + $0x30] sm:$0xe]
      %v807 = vld [vmem:[%s671 + $0x38] sm:$0xe]
      %v808 = vunpack.c.l.bf16 %v800
      %v809 = vunpack.c.l.bf16 %v801
      %v810 = vunpack.c.l.bf16 %v802
      %v811 = vunpack.c.l.bf16 %v803
      %v812 = vunpack.c.l.bf16 %v804
      %v813 = vunpack.c.l.bf16 %v805
      %v814 = vunpack.c.l.bf16 %v806
      %v815 = vunpack.c.l.bf16 %v807
      %v816 = vlaneseq
      %v817 = vshrl.u32 %v816, 7
      %v818 = vsub.s32 2, %v817
      %v819 = vrot.slane %v235, %v818
      %v820 = vmul.f32 %v808, %v819
      %v821 = vmul.f32 %v716, %v819
      %v822 = vmul.f32 %v809, %v819
      %v823 = vmul.f32 %v717, %v819
      %v824 = vmul.f32 %v810, %v819
      %v825 = vmul.f32 %v718, %v819
      %v826 = vmul.f32 %v811, %v819
      %v827 = vmul.f32 %v719, %v819
      %v828 = vmul.f32 %v812, %v819
      %v829 = vmul.f32 %v720, %v819
      %v830 = vmul.f32 %v813, %v819
      %v831 = vmul.f32 %v721, %v819
      %v832 = vmul.f32 %v814, %v819
      %v833 = vmul.f32 %v722, %v819
      %v834 = vmul.f32 %v815, %v819
      %v835 = vmul.f32 %v723, %v819
      %v852 = vrot.slane %v820, 2
      %v853 = vrot.slane %v821, 2
      %v854 = vsel %vm409, %v852, %v853
      %v855 = vrot.slane %v822, 2
      %v856 = vrot.slane %v823, 2
      %v857 = vsel %vm409, %v855, %v856
      %v858 = vrot.slane %v824, 2
      %v859 = vrot.slane %v825, 2
      %v860 = vsel %vm409, %v858, %v859
      %v861 = vrot.slane %v826, 2
      %v862 = vrot.slane %v827, 2
      %v863 = vsel %vm409, %v861, %v862
      %v864 = vrot.slane %v828, 2
      %v865 = vrot.slane %v829, 2
      %v866 = vsel %vm409, %v864, %v865
      %v867 = vrot.slane %v830, 2
      %v868 = vrot.slane %v831, 2
      %v869 = vsel %vm409, %v867, %v868
      %v870 = vrot.slane %v832, 2
      %v871 = vrot.slane %v833, 2
      %v872 = vsel %vm409, %v870, %v871
      %v873 = vrot.slane %v834, 2
      %v874 = vrot.slane %v835, 2
      %v875 = vsel %vm409, %v873, %v874
      %v884 = vadd.f32 %v792, %v854
      %v885 = vadd.f32 %v793, %v857
      %v886 = vadd.f32 %v794, %v860
      %v887 = vadd.f32 %v795, %v863
      %v888 = vadd.f32 %v796, %v866
      %v889 = vadd.f32 %v797, %v869
      %v890 = vadd.f32 %v798, %v872
      %v891 = vadd.f32 %v799, %v875
      %v892 = vld [vmem:[%s224] sm:$0x1]
      %v894 = vlaneseq
      %v895 = vshrl.u32 %v894, 7
      %v896 = vsub.s32 0, %v895
      %v897 = vrot.slane %v892, %v896
      %v899 = vadd.f32 %v884, %v897
      %v900 = vadd.f32 %v885, %v897
      %v901 = vadd.f32 %v886, %v897
      %v902 = vadd.f32 %v887, %v897
      %v903 = vadd.f32 %v888, %v897
      %v904 = vadd.f32 %v889, %v897
      %v905 = vadd.f32 %v890, %v897
      %v906 = vadd.f32 %v891, %v897
      %v907 = vpack.c.bf16 %v899, %v899
      %v908 = vpack.c.bf16 %v900, %v900
      %v909 = vpack.c.bf16 %v901, %v901
      %v910 = vpack.c.bf16 %v902, %v902
      %v911 = vpack.c.bf16 %v903, %v903
      %v912 = vpack.c.bf16 %v904, %v904
      %v913 = vpack.c.bf16 %v905, %v905
      %v914 = vpack.c.bf16 %v906, %v906
      %vm915 = vcmask 388096
      %916 = vst.msk [vmem:[%s232] sm:$0xf] %vm915, %v907
      %917 = vst.msk [vmem:[%s232 + $0x4] sm:$0xf] %vm915, %v908
      %918 = vst.msk [vmem:[%s232 + $0x8] sm:$0xf] %vm915, %v909
      %919 = vst.msk [vmem:[%s232 + $0xc] sm:$0xf] %vm915, %v910
      %920 = vst.msk [vmem:[%s232 + $0x10] sm:$0xf] %vm915, %v911
      %921 = vst.msk [vmem:[%s232 + $0x14] sm:$0xf] %vm915, %v912
      %922 = vst.msk [vmem:[%s232 + $0x18] sm:$0xf] %vm915, %v913
      %923 = vst.msk [vmem:[%s232 + $0x1c] sm:$0xf] %vm915, %v914
      %p924 = scmp.lt.s32.totalorder %s18, 1
      %s925 = scalar_select %p924, %s18, 1
      %p926 = scmp.lt.s32.totalorder %s19, 0
      %s927 = scalar_select %p926, %s19, 0
      %s928 = smul.addr %s925, 8
      %s929 = sadd.s32 %s927, %s928
      %s930 = smul.addr %s929, 4
      %s931 = scalar_lea.vmem %s3, %s930
      // Predicated region
      $region33: #{transformer_block_1.32} parent=31 // pred_check
        %p932 = pneg %p126
      $region34: #{transformer_block_1.32} parent=31 // pred_check_branch
        %934 = sbr.rel (%p932) target = $region36
      $region35: #{transformer_block_1.32} parent=31 // pred_region
        _
      $region36: #{transformer_block_1.32} parent=31 // pred_fallthru
        _
    $region32: #{transformer_block_1.32} parent=5 // pred_fallthru
      _
    %p935 = scmp.le.s32.totalorder 2, %s9
    // Predicated region
    $region37: #{transformer_block_1.32} parent=5 // pred_check
      %p936 = pneg %p935
    $region38: #{transformer_block_1.32} parent=5 // pred_check_branch
      %938 = sbr.rel (%p936) target = $region40
    $region39: #{transformer_block_1.32} parent=5 // pred_region
      %s939 = ssub.s32 %s9, 2
      // Predicated region
      $region41: #{transformer_block_1.32} parent=39 // pred_check
        %p940 = pneg %p132
      $region42: #{transformer_block_1.32} parent=39 // pred_check_branch
        %942 = sbr.rel (%p940) target = $region44
      $region43: #{transformer_block_1.32} parent=39 // pred_region
        %p943 = scmp.lt.s32.totalorder %s20, 1
        %s944 = scalar_select %p943, %s20, 1
        %p945 = scmp.lt.s32.totalorder %s21, 0
        %s946 = scalar_select %p945, %s21, 0
        %s947 = smul.addr %s944, 8
        %s948 = sadd.s32 %s946, %s947
        %s949 = smul.addr %s948, 4
        %s950 = scalar_lea.vmem %s3, %s949
      $region44: #{transformer_block_1.32} parent=39 // pred_fallthru
        _
    $region40: #{transformer_block_1.32} parent=5 // pred_fallthru
      _
  $region6: #{transformer_block_1.32} parent=0 // loop_footer
    %s13 = sadd.s32 1, %s9
  $region7: #{transformer_block_1.32} parent=0 // loop_footer_branch
    %8 = sbr.rel target = $region3
  $region8: #{transformer_block_1.32} parent=0 // loop_exit
    _

// kernel: transformer_block_1.33
$region0: #{transformer_block_1.33}
  #allocation0 [shape = 'u32[]', space=smem, size = 0x4, offset = 0x4, fixed_abs, tag = 'smem constant byte address 0x4 - core index']
  #allocation1 [shape = 'u32[144,128]{1,0:T(1,128)}', space=vmem, size = 0x12000, scoped, tag = 'internal scratch']
  #allocation2 [shape = 'f32[4,4,4]{2,1,0:T(4,128)}', space=vmem, size = 0x2000, scoped, tag = 'scratch operand']
  #allocation3 [shape = 'f32[1,16]{1,0:T(1,128)}', space=vmem, size = 0x200, scoped, tag = 'scratch operand']
  #allocation4 [shape = 'f32[1,16]{1,0:T(1,128)}', space=vmem, size = 0x200, scoped, tag = 'scratch operand']
  %s0 = inlined_call_operand.vmem [shape: f32[4], index: 0, kind: input, shape index: {}]
  %s1 = inlined_call_operand.vmem [shape: bf16[2,64,16], index: 1, kind: input, shape index: {}]
  %s2 = inlined_call_operand.vmem [shape: bf16[2,64,16], index: 2, kind: input, shape index: {}]
  %s3 = inlined_call_operand.vmem [shape: bf16[2,4,4,4], index: 3, kind: output, shape index: {}]
  %s4 = sld [smem:[#allocation0]]
  $region57: #{transformer_block_1.33} parent=0
    _
  %s6 = ssub.s32 1, %s4
  %s7 = scalar_select 0, %s6, %s4
  $region1: #{transformer_block_1.33} parent=0
    #allocation5 [shape = 'u8[512]{0}', space=smem, size = 0x200, scoped, tag = 'input window, operand 0, single buffered']
    #allocation6 [shape = 's32[2]{0}', space=sflag, size = 0x8, scoped, tag = 'scoped memory for transformer_block_1.33']
    %8 = vsyncpa [#allocation6], 0
    loop: start=0, step=1, limit=4
    $region2: #{transformer_block_1.33} parent=1 // loop_pre_header
      _
    $region3: #{transformer_block_1.33} parent=1 // loop_header
      %s10 = sphi 0, %s14
      %p11 = scmp.ge.s32.totalorder %s10, 4
      %s17 = sphi 0, %s29
      %s18 = sphi 0, %s25
      %s19 = sphi 0, %s17
      %s20 = sphi 0, %s18
      %s21 = sphi 0, %s19
      %s22 = sphi 0, %s20
      %s30 = sphi 0, %s30
      %s32 = sphi 0, %s30
      %s33 = sphi 0, %s32
      %s47 = sphi 0, %s33
      %s55 = sphi 0, %s57
      %s58 = sphi 0, %s55
      %s59 = sphi 0, %s58
      %s75 = sphi 0, %s59
      %s83 = sphi 0, %s85
      %s86 = sphi 0, %s83
      %s87 = sphi 0, %s86
      %s103 = sphi 0, %s87
      %s109 = sphi 0, %s111
      %s112 = sphi 0, %s109
      %s113 = sphi 0, %s112
      %s129 = sphi 0, %s113
    $region4: #{transformer_block_1.33} parent=1 // loop_header_branch
      %13 = sbr.rel (%p11) target = $region8
    $region5: #{transformer_block_1.33} parent=1 // loop_body
      %s15 = ssub.s32 %s10, 1
      %s16 = ssub.s32 %s10, 2
      %s23 = sadd.s32 1, %s18
      %p24 = scmp.ge.s32.totalorder %s23, 1
      %s25 = scalar_select %p24, 0, %s23
      %s26 = sadd.s32 1, %s17
      %s27 = scalar_select %p24, %s26, %s17
      %p28 = scmp.ge.s32.totalorder %s27, 2
      %s29 = scalar_select %p28, 0, %s27
      %s31 = sadd.s32 %s30, 1
      %p34 = scmp.eq.s32.totalorder %s10, 1
      %p35 = scmp.ne.s32.totalorder %s30, %s32
      %p36 = scmp.eq.s32.totalorder %s10, 0
      %p37 = por %p35, %p36
      %p38 = scmp.ne.s32.totalorder %s30, %s32
      %p39 = scmp.eq.s32.totalorder %s15, 1
      %p40 = por %p38, %p39
      %p41 = scmp.ne.s32.totalorder %s32, %s33
      %p42 = scmp.eq.s32.totalorder %s15, 0
      %p43 = por %p41, %p42
      %p44 = scmp.ne.s32.totalorder %s32, %s33
      %p45 = scmp.eq.s32.totalorder %s16, 1
      %p46 = por %p44, %p45
      %p48 = scmp.ne.s32.totalorder %s33, %s47
      %p49 = scmp.eq.s32.totalorder %s16, 0
      %p50 = por %p48, %p49
      %s51 = ssub.s32 %s17, %s29
      %s52 = ssub.s32 %s18, %s25
      %s53 = sor.u32 %s51, %s52
      %p54 = scmp.eq.s32.totalorder %s53, 0
      %s56 = sadd.s32 %s55, 1
      %s57 = scalar_select %p54, %s55, %s56
      %p60 = pneg %p54
      %p61 = scmp.eq.s32.totalorder %s10, 1
      %p62 = por %p60, %p61
      %p63 = scmp.ne.s32.totalorder %s55, %s58
      %p64 = scmp.eq.s32.totalorder %s10, 0
      %p65 = por %p63, %p64
      %p66 = scmp.ne.s32.totalorder %s55, %s58
      %p67 = scmp.eq.s32.totalorder %s15, 1
      %p68 = por %p66, %p67
      %p69 = scmp.ne.s32.totalorder %s58, %s59
      %p70 = scmp.eq.s32.totalorder %s15, 0
      %p71 = por %p69, %p70
      %p72 = scmp.ne.s32.totalorder %s58, %s59
      %p73 = scmp.eq.s32.totalorder %s16, 1
      %p74 = por %p72, %p73
      %p76 = scmp.ne.s32.totalorder %s59, %s75
      %p77 = scmp.eq.s32.totalorder %s16, 0
      %p78 = por %p76, %p77
      %s79 = ssub.s32 %s17, %s29
      %s80 = ssub.s32 %s18, %s25
      %s81 = sor.u32 %s79, %s80
      %p82 = scmp.eq.s32.totalorder %s81, 0
      %s84 = sadd.s32 %s83, 1
      %s85 = scalar_select %p82, %s83, %s84
      %p88 = pneg %p82
      %p89 = scmp.eq.s32.totalorder %s10, 1
      %p90 = por %p88, %p89
      %p91 = scmp.ne.s32.totalorder %s83, %s86
      %p92 = scmp.eq.s32.totalorder %s10, 0
      %p93 = por %p91, %p92
      %p94 = scmp.ne.s32.totalorder %s83, %s86
      %p95 = scmp.eq.s32.totalorder %s15, 1
      %p96 = por %p94, %p95
      %p97 = scmp.ne.s32.totalorder %s86, %s87
      %p98 = scmp.eq.s32.totalorder %s15, 0
      %p99 = por %p97, %p98
      %p100 = scmp.ne.s32.totalorder %s86, %s87
      %p101 = scmp.eq.s32.totalorder %s16, 1
      %p102 = por %p100, %p101
      %p104 = scmp.ne.s32.totalorder %s87, %s103
      %p105 = scmp.eq.s32.totalorder %s16, 0
      %p106 = por %p104, %p105
      %s107 = ssub.s32 %s17, %s29
      %p108 = scmp.eq.s32.totalorder %s107, 0
      %s110 = sadd.s32 %s109, 1
      %s111 = scalar_select %p108, %s109, %s110
      %p114 = pneg %p108
      %p115 = scmp.eq.s32.totalorder %s10, 1
      %p116 = por %p114, %p115
      %p117 = scmp.ne.s32.totalorder %s109, %s112
      %p118 = scmp.eq.s32.totalorder %s10, 0
      %p119 = por %p117, %p118
      %p120 = scmp.ne.s32.totalorder %s109, %s112
      %p121 = scmp.eq.s32.totalorder %s15, 1
      %p122 = por %p120, %p121
      %p123 = scmp.ne.s32.totalorder %s112, %s113
      %p124 = scmp.eq.s32.totalorder %s15, 0
      %p125 = por %p123, %p124
      %p126 = scmp.ne.s32.totalorder %s112, %s113
      %p127 = scmp.eq.s32.totalorder %s16, 1
      %p128 = por %p126, %p127
      %p130 = scmp.ne.s32.totalorder %s113, %s129
      %p131 = scmp.eq.s32.totalorder %s16, 0
      %p132 = por %p130, %p131
      %p133 = scmp.le.s32.totalorder 1, %s10
      %p134 = scmp.lt.s32.totalorder %s10, 3
      %p135 = pnand %p133, %p134
      %p136 = pneg %p135
      // Predicated region
      $region9: #{transformer_block_1.33} parent=5 // pred_check
        _
      $region10: #{transformer_block_1.33} parent=5 // pred_check_branch
        %138 = sbr.rel (%p135) target = $region12
      $region11: #{transformer_block_1.33} parent=5 // pred_region
        %s139 = ssub.s32 %s10, 1
        // Predicated region
        $region13: #{transformer_block_1.33} parent=11 // pred_check
          %p140 = pneg %p43
        $region14: #{transformer_block_1.33} parent=11 // pred_check_branch
          %142 = sbr.rel (%p140) target = $region16
        $region15: #{transformer_block_1.33} parent=11 // pred_region
          %s144 = ssub.s32 16, 16
          %145 = vsyncadd [#allocation6], %s144
          %s147 = sshll.u32 %s0, 4
          %s148 = int_to_ptr.vmem [resolvable:$true] %s147
          %150 = dma.vmem_to_smem %s148, 16, [#allocation5], [#allocation6]
        $region16: #{transformer_block_1.33} parent=11 // pred_fallthru
          _
      $region12: #{transformer_block_1.33} parent=5 // pred_fallthru
        _
      %p151 = scmp.lt.s32.totalorder %s10, 2
      // Predicated region
      $region17: #{transformer_block_1.33} parent=5 // pred_check
        %p152 = pneg %p151
      $region18: #{transformer_block_1.33} parent=5 // pred_check_branch
        %154 = sbr.rel (%p152) target = $region20
      $region19: #{transformer_block_1.33} parent=5 // pred_region
        // Predicated region
        $region21: #{transformer_block_1.33} parent=19 // pred_check
          %p155 = pneg %p65
        $region22: #{transformer_block_1.33} parent=19 // pred_check_branch
          %157 = sbr.rel (%p155) target = $region24
        $region23: #{transformer_block_1.33} parent=19 // pred_region
          %s158 = smul.u32 8, %s18
          %p159 = scmp.lt.s32.totalorder %s17, 1
          %s160 = scalar_select %p159, %s17, 1
          %p161 = scmp.lt.s32.totalorder %s158, 7
          %s162 = scalar_select %p161, %s158, 7
          %s163 = smul.addr %s160, 8
          %s164 = sadd.s32 %s162, %s163
          %s165 = smul.addr %s164, 4
          %s166 = scalar_lea.vmem %s1, %s165
          %s167 = smul.u32 8, %s18
        $region24: #{transformer_block_1.33} parent=19 // pred_fallthru
          _
        // Predicated region
        $region25: #{transformer_block_1.33} parent=19 // pred_check
          %p168 = pneg %p93
        $region26: #{transformer_block_1.33} parent=19 // pred_check_branch
          %170 = sbr.rel (%p168) target = $region28
        $region27: #{transformer_block_1.33} parent=19 // pred_region
          %s171 = smul.u32 8, %s18
          %p172 = scmp.lt.s32.totalorder %s17, 1
          %s173 = scalar_select %p172, %s17, 1
          %p174 = scmp.lt.s32.totalorder %s171, 7
          %s175 = scalar_select %p174, %s171, 7
          %s176 = smul.addr %s173, 8
          %s177 = sadd.s32 %s175, %s176
          %s178 = smul.addr %s177, 4
          %s179 = scalar_lea.vmem %s2, %s178
          %s180 = smul.u32 8, %s18
        $region28: #{transformer_block_1.33} parent=19 // pred_fallthru
          _
      $region20: #{transformer_block_1.33} parent=5 // pred_fallthru
        _
      %p181 = scmp.le.s32.totalorder 1, %s10
      %p182 = scmp.lt.s32.totalorder %s10, 3
      %p183 = pnand %p181, %p182
      %p184 = pneg %p183
      // Predicated region
      $region29: #{transformer_block_1.33} parent=5 // pred_check
        _
      $region30: #{transformer_block_1.33} parent=5 // pred_check_branch
        %186 = sbr.rel (%p183) target = $region32
      $region31: #{transformer_block_1.33} parent=5 // pred_region
        %s187 = ssub.s32 %s10, 1
        // Predicated region
        $region33: #{transformer_block_1.33} parent=31 // pred_check
          %p188 = pneg %p43
        $region34: #{transformer_block_1.33} parent=31 // pred_check_branch
          %190 = sbr.rel (%p188) target = $region36
        $region35: #{transformer_block_1.33} parent=31 // pred_region
          %191 = dma.done [#allocation6], 16
        $region36: #{transformer_block_1.33} parent=31 // pred_fallthru
          _
        %192 = sfence
        %p193 = pneg %p43
        %p194 = pneg %p40
        %s195 = smul.u32 8, %s20
        %p196 = scmp.lt.s32.totalorder %s19, 1
        %s197 = scalar_select %p196, %s19, 1
        %p198 = scmp.lt.s32.totalorder %s195, 7
        %s199 = scalar_select %p198, %s195, 7
        %s200 = smul.addr %s197, 8
        %s201 = sadd.s32 %s199, %s200
        %s202 = smul.addr %s201, 4
        %s203 = scalar_lea.vmem %s1, %s202
        %p204 = pneg %p71
        %p205 = pneg %p68
        %s206 = smul.u32 8, %s20
        %p207 = scmp.lt.s32.totalorder %s19, 1
        %s208 = scalar_select %p207, %s19, 1
        %p209 = scmp.lt.s32.totalorder %s206, 7
        %s210 = scalar_select %p209, %s206, 7
        %s211 = smul.addr %s208, 8
        %s212 = sadd.s32 %s210, %s211
        %s213 = smul.addr %s212, 4
        %s214 = scalar_lea.vmem %s2, %s213
        %p215 = pneg %p99
        %p216 = pneg %p96
        %p217 = pneg %p125
        %p218 = pneg %p122
        %p219 = scmp.lt.s32.totalorder %s19, 1
        %s220 = scalar_select %p219, %s19, 1
        %s221 = smul.addr %s220, 4
        %s222 = smul.addr %s221, 2
        %s223 = scalar_lea.vmem %s3, %s222
        %s224 = smul.u32 8, %s20
        %p225 = scmp.lt.s32.totalorder %s19, 1
        %s226 = scalar_select %p225, %s19, 1
        %p227 = scmp.lt.s32.totalorder %s224, 7
        %s228 = scalar_select %p227, %s224, 7
        %s229 = smul.addr %s226, 8
        %s230 = sadd.s32 %s228, %s229
        %s231 = smul.addr %s230, 4
        %s232 = scalar_lea.vmem %s1, %s231
        %s233 = smul.u32 8, %s20
        %s234 = smul.u32 8, %s20
        %p235 = scmp.lt.s32.totalorder %s19, 1
        %s236 = scalar_select %p235, %s19, 1
        %p237 = scmp.lt.s32.totalorder %s234, 7
        %s238 = scalar_select %p237, %s234, 7
        %s239 = smul.addr %s236, 8
        %s240 = sadd.s32 %s238, %s239
        %s241 = smul.addr %s240, 4
        %s242 = scalar_lea.vmem %s2, %s241
        %s243 = smul.u32 8, %s20
        %p244 = scmp.lt.s32.totalorder %s19, 1
        %s245 = scalar_select %p244, %s19, 1
        %s246 = smul.addr %s245, 4
        %s247 = smul.addr %s246, 2
        %s248 = scalar_lea.vmem %s3, %s247
        %p250 = scmp.eq.s32.totalorder %s20, 0
        // Predicated region
        $region37: #{transformer_block_1.33} parent=31 // pred_check
          %p251 = pneg %p250
        $region38: #{transformer_block_1.33} parent=31 // pred_check_branch
          %253 = sbr.rel (%p251) target = $region40
        $region39: #{transformer_block_1.33} parent=31 // pred_region
          %vm254 = vcmask 27648
          %255 = vst.msk [vmem:[#allocation2] sm:$0xf] %vm254, 0.0
          %256 = vst.msk [vmem:[#allocation2 + $0x4] sm:$0xf] %vm254, 0.0
          %257 = vst.msk [vmem:[#allocation2 + $0x8] sm:$0xf] %vm254, 0.0
          %258 = vst.msk [vmem:[#allocation2 + $0xc] sm:$0xf] %vm254, 0.0
          %vm259 = vcmask 122880
          %260 = vst.msk [vmem:[#allocation3] sm:$0x1] %vm259, 0.0
          %261 = vst.msk [vmem:[#allocation4] sm:$0x1] %vm259, 0.0
        $region40: #{transformer_block_1.33} parent=31 // pred_fallthru
          _
        %v262 = vld [vmem:[%s232] sm:$0xf]
        %v263 = vld [vmem:[%s232 + $0x4] sm:$0xf]
        %v264 = vld [vmem:[%s232 + $0x8] sm:$0xf]
        %v265 = vld [vmem:[%s232 + $0xc] sm:$0xf]
        %v266 = vld [vmem:[%s232 + $0x10] sm:$0xf]
        %v267 = vld [vmem:[%s232 + $0x14] sm:$0xf]
        %v268 = vld [vmem:[%s232 + $0x18] sm:$0xf]
        %v269 = vld [vmem:[%s232 + $0x1c] sm:$0xf]
        %v270 = vld [vmem:[%s242] sm:$0xf]
        %v271 = vld [vmem:[%s242 + $0x4] sm:$0xf]
        %v272 = vld [vmem:[%s242 + $0x8] sm:$0xf]
        %v273 = vld [vmem:[%s242 + $0xc] sm:$0xf]
        %v274 = vld [vmem:[%s242 + $0x10] sm:$0xf]
        %v275 = vld [vmem:[%s242 + $0x14] sm:$0xf]
        %v276 = vld [vmem:[%s242 + $0x18] sm:$0xf]
        %v277 = vld [vmem:[%s242 + $0x1c] sm:$0xf]
        %v278 = vunpack.c.l.bf16 %v262
        %v279 = vunpack.c.l.bf16 %v263
        %v280 = vunpack.c.l.bf16 %v264
        %v281 = vunpack.c.l.bf16 %v265
        %v282 = vunpack.c.l.bf16 %v266
        %v283 = vunpack.c.l.bf16 %v267
        %v284 = vunpack.c.l.bf16 %v268
        %v285 = vunpack.c.l.bf16 %v269
        %v286 = vunpack.c.l.bf16 %v270
        %v287 = vunpack.c.l.bf16 %v271
        %v288 = vunpack.c.l.bf16 %v272
        %v289 = vunpack.c.l.bf16 %v273
        %v290 = vunpack.c.l.bf16 %v274
        %v291 = vunpack.c.l.bf16 %v275
        %v292 = vunpack.c.l.bf16 %v276
        %v293 = vunpack.c.l.bf16 %v277
        %v294 = vld [vmem:[#allocation3] sm:$0x1]
        %v295 = vmul.f32 %v278, %v278
        %v296 = vmul.f32 %v279, %v279
        %v297 = vmul.f32 %v280, %v280
        %v298 = vmul.f32 %v281, %v281
        %v299 = vmul.f32 %v282, %v282
        %v300 = vmul.f32 %v283, %v283
        %v301 = vmul.f32 %v284, %v284
        %v302 = vmul.f32 %v285, %v285
        %vm303 = vcmask 130048
        %v304 = vsel %vm303, %v295, 0.0
        %v305 = vsel %vm303, %v296, 0.0
        %v306 = vadd.f32 %v304, %v305
        %v307 = vsel %vm303, %v297, 0.0
        %v308 = vadd.f32 %v306, %v307
        %v309 = vsel %vm303, %v298, 0.0
        %v310 = vadd.f32 %v308, %v309
        %v311 = vsel %vm303, %v299, 0.0
        %v312 = vadd.f32 %v310, %v311
        %v313 = vsel %vm303, %v300, 0.0
        %v314 = vadd.f32 %v312, %v313
        %v315 = vsel %vm303, %v301, 0.0
        %v316 = vadd.f32 %v314, %v315
        %v317 = vsel %vm303, %v302, 0.0
        %v318 = vadd.f32 %v316, %v317
        %v319 = vrot.slane %v318, 4
        %v320 = vadd.f32 %v318, %v319
        %v321 = vrot.slane %v320, 2
        %v322 = vadd.f32 %v320, %v321
        %v323 = vrot.slane %v322, 1
        %v324 = vadd.f32 %v322, %v323
        %v325 = vadd.f32 %v294, %v324
        %vm326 = vcmask 122880
        %327 = vst.msk [vmem:[#allocation3] sm:$0x1] %vm326, %v325
        %v328 = vld [vmem:[#allocation4] sm:$0x1]
        %v329 = vmul.f32 %v286, %v286
        %v330 = vmul.f32 %v287, %v287
        %v331 = vmul.f32 %v288, %v288
        %v332 = vmul.f32 %v289, %v289
        %v333 = vmul.f32 %v290, %v290
        %v334 = vmul.f32 %v291, %v291
        %v335 = vmul.f32 %v292, %v292
        %v336 = vmul.f32 %v293, %v293
        %v337 = vsel %vm303, %v329, 0.0
        %v338 = vsel %vm303, %v330, 0.0
        %v339 = vadd.f32 %v337, %v338
        %v340 = vsel %vm303, %v331, 0.0
        %v341 = vadd.f32 %v339, %v340
        %v342 = vsel %vm303, %v332, 0.0
        %v343 = vadd.f32 %v341, %v342
        %v344 = vsel %vm303, %v333, 0.0
        %v345 = vadd.f32 %v343, %v344
        %v346 = vsel %vm303, %v334, 0.0
        %v347 = vadd.f32 %v345, %v346
        %v348 = vsel %vm303, %v335, 0.0
        %v349 = vadd.f32 %v347, %v348
        %v350 = vsel %vm303, %v336, 0.0
        %v351 = vadd.f32 %v349, %v350
        %v352 = vrot.slane %v351, 4
        %v353 = vadd.f32 %v351, %v352
        %v354 = vrot.slane %v353, 2
        %v355 = vadd.f32 %v353, %v354
        %v356 = vrot.slane %v355, 1
        %v357 = vadd.f32 %v355, %v356
        %v358 = vadd.f32 %v328, %v357
        %359 = vst.msk [vmem:[#allocation4] sm:$0x1] %vm326, %v358
        %v368 = vunpack.c.l.b16 %v262
        %v369 = vunpack.c.l.b16 %v263
        %v370 = vunpack.c.l.b16 %v264
        %v371 = vunpack.c.l.b16 %v265
        %v372 = vunpack.c.l.b16 %v266
        %v373 = vunpack.c.l.b16 %v267
        %v374 = vunpack.c.l.b16 %v268
        %v375 = vunpack.c.l.b16 %v269
        %v376 = vpack.c.b16 %v369, %v368
        %v377 = vpack.c.b16 %v371, %v370
        %v378 = vpack.c.b16 %v373, %v372
        %v379 = vpack.c.b16 %v375, %v374
        %384 = vxpose.xlu0.c.b16.start [1/8] %v376, 128
        %385 = vxpose.xlu0.c.b16.cont [2/8] %v377, 128
        %386 = vxpose.xlu0.c.b16.cont [3/8] %v378, 128
        %387 = vxpose.xlu0.c.b16.cont [4/8] %v379, 128
        %388 = vxpose.xlu0.c.b16.cont [5/8] 0, 128
        %389 = vxpose.xlu0.c.b16.cont [6/8] 0, 128
        %390 = vxpose.xlu0.c.b16.cont [7/8] 0, 128
        %391 = vxpose.xlu0.c.b16.end [8/8] 0, 128
        %v392 = vpop.trf.xlu0
        %v393 = vpop.trf.xlu0
        %v394 = vpop.trf.xlu0
        %v395 = vpop.trf.xlu0
        %v396 = vpop.trf.xlu0
        %v397 = vpop.trf.xlu0
        %v398 = vpop.trf.xlu0
        %v399 = vpop.trf.xlu0
        %v400 = vld [vmem:[#allocation2] sm:$0xf]
        %v409 = vunpack.c.l.b16 %v270
        %v410 = vunpack.c.l.b16 %v271
        %v411 = vunpack.c.l.b16 %v272
        %v412 = vunpack.c.l.b16 %v273
        %v413 = vunpack.c.l.b16 %v274
        %v414 = vunpack.c.l.b16 %v275
        %v415 = vunpack.c.l.b16 %v276
        %v416 = vunpack.c.l.b16 %v277
        %v417 = vpack.c.b16 %v410, %v409
        %v418 = vpack.c.b16 %v412, %v411
        %v419 = vpack.c.b16 %v414, %v413
        %v420 = vpack.c.b16 %v416, %v415
        %vm425 = vcmask 523264
        %v427 = vsel %vm425, %v392, 0
        %429 = vmatprep.subr.bf16.mxu0 0
        %430 = vmatpush1.bf16.msra.mxu0 0
        %431 = vmatprep.subr.bf16.mxu0 0
        %432 = vmatpush1.bf16.msra.mxu0 0
        %433 = vmatprep.subr.bf16.mxu0 0
        %434 = vmatpush1.bf16.msra.mxu0 0
        %435 = vmatprep.subr.bf16.mxu0 0
        %436 = vmatpush1.bf16.msra.mxu0 0
        %437 = vmatprep.subr.bf16.mxu0 0
        %438 = vmatpush1.bf16.msra.mxu0 %v420
        %439 = vmatprep.subr.bf16.mxu0 0
        %440 = vmatpush1.bf16.msra.mxu0 %v419
        %441 = vmatprep.subr.bf16.mxu0 0
        %442 = vmatpush1.bf16.msra.mxu0 %v418
        %443 = vmatprep.subr.bf16.mxu0 0
        %444 = vmatpush1.bf16.msra.mxu0 %v417
        %445 = vmatprep.subr.bf16.mxu0 0
        %446 = vmatpush2.bf16.msra.mxu0 0
        %447 = vmatprep.subr.bf16.mxu0 0
        %448 = vmatpush2.bf16.msra.mxu0 0
        %449 = vmatprep.subr.bf16.mxu0 0
        %450 = vmatpush2.bf16.msra.mxu0 0
        %451 = vmatprep.subr.bf16.mxu0 0
        %452 = vmatpush2.bf16.msra.mxu0 0
        %453 = vmatprep.subr.bf16.mxu0 0
        %454 = vmatpush2.bf16.msra.mxu0 0
        %455 = vmatprep.subr.bf16.mxu0 0
        %456 = vmatpush2.bf16.msra.mxu0 0
        %457 = vmatprep.subr.bf16.mxu0 0
        %458 = vmatpush2.bf16.msra.mxu0 0
        %459 = vmatprep.subr.bf16.mxu0 0
        %460 = vmatpush2.bf16.msra.mxu0 0
        %461 = vmatprep.mubr.bf16.mxu0 0
        %462 = vmatmul.mubr.bf16.gmra.mxu0 %v427
        %v463 = vpop.f32.mrf.mxu0
        %v464 = vadd.f32 0.0, %v463
        %v465 = vpop.f32.mrf.mxu0
        %v466 = vpop.f32.mrf.mxu0
        %v467 = vpop.f32.mrf.mxu0
        %468 = vdwg.mxu0
        %v469 = vadd.f32 %v400, %v464
        %vm470 = vcmask 27648
        %471 = vst.msk [vmem:[#allocation2] sm:$0xf] %vm470, %v469
        %s472 = scalar_lea.vmem [#allocation2], 4
        %v473 = vld [vmem:[%s472] sm:$0xf]
        %v475 = vrot.slane %v392, 2
        %476 = vrot.lane.b32.xlu0 %v417, 124
        %v477 = vpop.permute.xlu0 %476
        %478 = vrot.lane.b32.xlu0 %v418, 124
        %v479 = vpop.permute.xlu0 %478
        %480 = vrot.lane.b32.xlu0 %v419, 124
        %v481 = vpop.permute.xlu0 %480
        %482 = vrot.lane.b32.xlu0 %v420, 124
        %v483 = vpop.permute.xlu0 %482
        %v489 = vsel %vm425, %v475, 0
        %491 = vmatprep.subr.bf16.mxu0 0
        %492 = vmatpush1.bf16.msra.mxu0 0
        %493 = vmatprep.subr.bf16.mxu0 0
        %494 = vmatpush1.bf16.msra.mxu0 0
        %495 = vmatprep.subr.bf16.mxu0 0
        %496 = vmatpush1.bf16.msra.mxu0 0
        %497 = vmatprep.subr.bf16.mxu0 0
        %498 = vmatpush1.bf16.msra.mxu0 0
        %499 = vmatprep.subr.bf16.mxu0 0
        %500 = vmatpush1.bf16.msra.mxu0 %v483
        %501 = vmatprep.subr.bf16.mxu0 0
        %502 = vmatpush1.bf16.msra.mxu0 %v481
        %503 = vmatprep.subr.bf16.mxu0 0
        %504 = vmatpush1.bf16.msra.mxu0 %v479
        %505 = vmatprep.subr.bf16.mxu0 0
        %506 = vmatpush1.bf16.msra.mxu0 %v477
        %507 = vmatprep.subr.bf16.mxu0 0
        %508 = vmatpush2.bf16.msra.mxu0 0
        %509 = vmatprep.subr.bf16.mxu0 0
        %510 = vmatpush2.bf16.msra.mxu0 0
        %511 = vmatprep.subr.bf16.mxu0 0
        %512 = vmatpush2.bf16.msra.mxu0 0
        %513 = vmatprep.subr.bf16.mxu0 0
        %514 = vmatpush2.bf16.msra.mxu0 0
        %515 = vmatprep.subr.bf16.mxu0 0
        %516 = vmatpush2.bf16.msra.mxu0 0
        %517 = vmatprep.subr.bf16.mxu0 0
        %518 = vmatpush2.bf16.msra.mxu0 0
        %519 = vmatprep.subr.bf16.mxu0 0
        %520 = vmatpush2.bf16.msra.mxu0 0
        %521 = vmatprep.subr.bf16.mxu0 0
        %522 = vmatpush2.bf16.msra.mxu0 0
        %523 = vmatprep.mubr.bf16.mxu0 0
        %524 = vmatmul.mubr.bf16.gmra.mxu0 %v489
        %v525 = vpop.f32.mrf.mxu0
        %v526 = vadd.f32 0.0, %v525
        %v527 = vpop.f32.mrf.mxu0
        %v528 = vpop.f32.mrf.mxu0
        %v529 = vpop.f32.mrf.mxu0
        %530 = vdwg.mxu0
        %v531 = vadd.f32 %v473, %v526
        %532 = vst.msk [vmem:[%s472] sm:$0xf] %vm470, %v531
        %s533 = scalar_lea.vmem [#allocation2], 8
        %v534 = vld [vmem:[%s533] sm:$0xf]
        %v535 = vrot.slane %v392, 4
        %536 = vrot.lane.b32.xlu0 %v417, 120
        %v537 = vpop.permute.xlu0 %536
        %538 = vrot.lane.b32.xlu0 %v418, 120
        %v539 = vpop.permute.xlu0 %538
        %540 = vrot.lane.b32.xlu0 %v419, 120
        %v541 = vpop.permute.xlu0 %540
        %542 = vrot.lane.b32.xlu0 %v420, 120
        %v543 = vpop.permute.xlu0 %542
        %v549 = vsel %vm425, %v535, 0
        %551 = vmatprep.subr.bf16.mxu0 0
        %552 = vmatpush1.bf16.msra.mxu0 0
        %553 = vmatprep.subr.bf16.mxu0 0
        %554 = vmatpush1.bf16.msra.mxu0 0
        %555 = vmatprep.subr.bf16.mxu0 0
        %556 = vmatpush1.bf16.msra.mxu0 0
        %557 = vmatprep.subr.bf16.mxu0 0
        %558 = vmatpush1.bf16.msra.mxu0 0
        %559 = vmatprep.subr.bf16.mxu0 0
        %560 = vmatpush1.bf16.msra.mxu0 %v543
        %561 = vmatprep.subr.bf16.mxu0 0
        %562 = vmatpush1.bf16.msra.mxu0 %v541
        %563 = vmatprep.subr.bf16.mxu0 0
        %564 = vmatpush1.bf16.msra.mxu0 %v539
        %565 = vmatprep.subr.bf16.mxu0 0
        %566 = vmatpush1.bf16.msra.mxu0 %v537
        %567 = vmatprep.subr.bf16.mxu0 0
        %568 = vmatpush2.bf16.msra.mxu0 0
        %569 = vmatprep.subr.bf16.mxu0 0
        %570 = vmatpush2.bf16.msra.mxu0 0
        %571 = vmatprep.subr.bf16.mxu0 0
        %572 = vmatpush2.bf16.msra.mxu0 0
        %573 = vmatprep.subr.bf16.mxu0 0
        %574 = vmatpush2.bf16.msra.mxu0 0
        %575 = vmatprep.subr.bf16.mxu0 0
        %576 = vmatpush2.bf16.msra.mxu0 0
        %577 = vmatprep.subr.bf16.mxu0 0
        %578 = vmatpush2.bf16.msra.mxu0 0
        %579 = vmatprep.subr.bf16.mxu0 0
        %580 = vmatpush2.bf16.msra.mxu0 0
        %581 = vmatprep.subr.bf16.mxu0 0
        %582 = vmatpush2.bf16.msra.mxu0 0
        %583 = vmatprep.mubr.bf16.mxu0 0
        %584 = vmatmul.mubr.bf16.gmra.mxu0 %v549
        %v585 = vpop.f32.mrf.mxu0
        %v586 = vadd.f32 0.0, %v585
        %v587 = vpop.f32.mrf.mxu0
        %v588 = vpop.f32.mrf.mxu0
        %v589 = vpop.f32.mrf.mxu0
        %590 = vdwg.mxu0
        %v591 = vadd.f32 %v534, %v586
        %592 = vst.msk [vmem:[%s533] sm:$0xf] %vm470, %v591
        %s593 = scalar_lea.vmem [#allocation2], 12
        %v594 = vld [vmem:[%s593] sm:$0xf]
        %v595 = vrot.slane %v392, 6
        %596 = vrot.lane.b32.xlu0 %v417, 116
        %v597 = vpop.permute.xlu0 %596
        %598 = vrot.lane.b32.xlu0 %v418, 116
        %v599 = vpop.permute.xlu0 %598
        %600 = vrot.lane.b32.xlu0 %v419, 116
        %v601 = vpop.permute.xlu0 %600
        %602 = vrot.lane.b32.xlu0 %v420, 116
        %v603 = vpop.permute.xlu0 %602
        %v609 = vsel %vm425, %v595, 0
        %611 = vmatprep.subr.bf16.mxu0 0
        %612 = vmatpush1.bf16.msra.mxu0 0
        %613 = vmatprep.subr.bf16.mxu0 0
        %614 = vmatpush1.bf16.msra.mxu0 0
        %615 = vmatprep.subr.bf16.mxu0 0
        %616 = vmatpush1.bf16.msra.mxu0 0
        %617 = vmatprep.subr.bf16.mxu0 0
        %618 = vmatpush1.bf16.msra.mxu0 0
        %619 = vmatprep.subr.bf16.mxu0 0
        %620 = vmatpush1.bf16.msra.mxu0 %v603
        %621 = vmatprep.subr.bf16.mxu0 0
        %622 = vmatpush1.bf16.msra.mxu0 %v601
        %623 = vmatprep.subr.bf16.mxu0 0
        %624 = vmatpush1.bf16.msra.mxu0 %v599
        %625 = vmatprep.subr.bf16.mxu0 0
        %626 = vmatpush1.bf16.msra.mxu0 %v597
        %627 = vmatprep.subr.bf16.mxu0 0
        %628 = vmatpush2.bf16.msra.mxu0 0
        %629 = vmatprep.subr.bf16.mxu0 0
        %630 = vmatpush2.bf16.msra.mxu0 0
        %631 = vmatprep.subr.bf16.mxu0 0
        %632 = vmatpush2.bf16.msra.mxu0 0
        %633 = vmatprep.subr.bf16.mxu0 0
        %634 = vmatpush2.bf16.msra.mxu0 0
        %635 = vmatprep.subr.bf16.mxu0 0
        %636 = vmatpush2.bf16.msra.mxu0 0
        %637 = vmatprep.subr.bf16.mxu0 0
        %638 = vmatpush2.bf16.msra.mxu0 0
        %639 = vmatprep.subr.bf16.mxu0 0
        %640 = vmatpush2.bf16.msra.mxu0 0
        %641 = vmatprep.subr.bf16.mxu0 0
        %642 = vmatpush2.bf16.msra.mxu0 0
        %643 = vmatprep.mubr.bf16.mxu0 0
        %644 = vmatmul.mubr.bf16.gmra.mxu0 %v609
        %v645 = vpop.f32.mrf.mxu0
        %v646 = vadd.f32 0.0, %v645
        %v647 = vpop.f32.mrf.mxu0
        %v648 = vpop.f32.mrf.mxu0
        %v649 = vpop.f32.mrf.mxu0
        %650 = vdwg.mxu0
        %v651 = vadd.f32 %v594, %v646
        %652 = vst.msk [vmem:[%s593] sm:$0xf] %vm470, %v651
        // Predicated region
        $region41: #{transformer_block_1.33} parent=31 // pred_check
          %p653 = pneg %p250
        $region42: #{transformer_block_1.33} parent=31 // pred_check_branch
          %655 = sbr.rel (%p653) target = $region44
        $region43: #{transformer_block_1.33} parent=31 // pred_region
          %v656 = vld [vmem:[#allocation3] sm:$0x1]
          %v657 = vrsqrt.pop %v656
          %v658 = vmul.f32 %v656, %v657
          %vm659 = vcmp.eq.f32.partialorder %v656, inf
          %v660 = vsel %vm659, %v656, %v658
          %vm661 = vcmp.eq.f32.partialorder %v656, 0.0
          %v662 = vand.u32 %v656, 2147483648
          %v663 = vsel %vm661, %v662, %v660
          %v664 = vmax.f32 %v663, 1e-12
          %v665 = vld [vmem:[#allocation4] sm:$0x1]
          %v666 = vrsqrt.pop %v665
          %v667 = vmul.f32 %v665, %v666
          %vm668 = vcmp.eq.f32.partialorder %v665, inf
          %v669 = vsel %vm668, %v665, %v667
          %vm670 = vcmp.eq.f32.partialorder %v665, 0.0
          %v671 = vand.u32 %v665, 2147483648
          %v672 = vsel %vm670, %v671, %v669
          %v673 = vmax.f32 %v672, 1e-12
          %v674 = vld [vmem:[#allocation2] sm:$0xf]
          %675 = vxpose.xlu0.b32.start [1/16] %v664, 128
          %676 = vxpose.xlu0.b32.cont [2/16] 0.0, 128
          %677 = vxpose.xlu0.b32.cont [3/16] 0.0, 128
          %678 = vxpose.xlu0.b32.cont [4/16] 0.0, 128
          %679 = vxpose.xlu0.b32.cont [5/16] 0.0, 128
          %680 = vxpose.xlu0.b32.cont [6/16] 0.0, 128
          %681 = vxpose.xlu0.b32.cont [7/16] 0.0, 128
          %682 = vxpose.xlu0.b32.cont [8/16] 0.0, 128
          %683 = vxpose.xlu0.b32.cont [9/16] 0.0, 128
          %684 = vxpose.xlu0.b32.cont [10/16] 0.0, 128
          %685 = vxpose.xlu0.b32.cont [11/16] 0.0, 128
          %686 = vxpose.xlu0.b32.cont [12/16] 0.0, 128
          %687 = vxpose.xlu0.b32.cont [13/16] 0.0, 128
          %688 = vxpose.xlu0.b32.cont [14/16] 0.0, 128
          %689 = vxpose.xlu0.b32.cont [15/16] 0.0, 128
          %690 = vxpose.xlu0.b32.end [16/16] 0.0, 128
          %v691 = vpop.trf.xlu0
          %v692 = vpop.trf.xlu0
          %v693 = vpop.trf.xlu0
          %v694 = vpop.trf.xlu0
          %v695 = vpop.trf.xlu0
          %v696 = vpop.trf.xlu0
          %v697 = vpop.trf.xlu0
          %v698 = vpop.trf.xlu0
          %v699 = vpop.trf.xlu0
          %v700 = vpop.trf.xlu0
          %v701 = vpop.trf.xlu0
          %v702 = vpop.trf.xlu0
          %v703 = vpop.trf.xlu0
          %v704 = vpop.trf.xlu0
          %v705 = vpop.trf.xlu0
          %v706 = vpop.trf.xlu0
          %708 = vset.pattern.permute.xlu0 0
          %709 = vperm.xlu0 %708, %v691
          %v710 = vpop.permute.xlu0 %709
          %v713 = vlaneseq
          %v714 = vshrl.u32 %v713, 7
          %v715 = vsub.s32 0, %v714
          %v716 = vrot.slane %v673, %v715
          %v718 = vmul.f32 %v710, %v716
          %v719 = vrcp.pop %v718
          %v720 = vmul.f32 %v674, %v719
          %s721 = sld [smem:[#allocation5]]
          %v722 = vstv %s721
          %v723 = vmul.f32 %v720, %v722
          %v724 = vsel %vm470, %v723, -inf
          %725 = vmax.xlane.f32.xlu0 %v724
          %v726 = vpop.xlane.xlu0 %725
          %v727 = vsub.f32 %v723, %v726
          %v728 = vmul.f32 %v727, 1.442695
          %v729 = vpow.pop %v728
          %v730 = vsel %vm470, %v729, 0.0
          %731 = vadd.xlane.f32.xlu0 %v730
          %v732 = vpop.xlane.xlu0 %731
          %v733 = vrcp.pop %v732
          %v734 = vmul.f32 %v729, %v733
          %735 = vxpose.xlu0.b32.start [1/16] %v734, 128
          %736 = vxpose.xlu0.b32.cont [2/16] 0.0, 128
          %737 = vxpose.xlu0.b32.cont [3/16] 0.0, 128
          %738 = vxpose.xlu0.b32.cont [4/16] 0.0, 128
          %739 = vxpose.xlu0.b32.cont [5/16] 0.0, 128
          %740 = vxpose.xlu0.b32.cont [6/16] 0.0, 128
          %741 = vxpose.xlu0.b32.cont [7/16] 0.0, 128
          %742 = vxpose.xlu0.b32.cont [8/16] 0.0, 128
          %743 = vxpose.xlu0.b32.cont [9/16] 0.0, 128
          %744 = vxpose.xlu0.b32.cont [10/16] 0.0, 128
          %745 = vxpose.xlu0.b32.cont [11/16] 0.0, 128
          %746 = vxpose.xlu0.b32.cont [12/16] 0.0, 128
          %747 = vxpose.xlu0.b32.cont [13/16] 0.0, 128
          %748 = vxpose.xlu0.b32.cont [14/16] 0.0, 128
          %749 = vxpose.xlu0.b32.cont [15/16] 0.0, 128
          %750 = vxpose.xlu0.b32.end [16/16] 0.0, 128
          %v751 = vpop.trf.xlu0
          %v752 = vpop.trf.xlu0
          %v753 = vpop.trf.xlu0
          %v754 = vpop.trf.xlu0
          %v755 = vpop.trf.xlu0
          %v756 = vpop.trf.xlu0
          %v757 = vpop.trf.xlu0
          %v758 = vpop.trf.xlu0
          %v759 = vpop.trf.xlu0
          %v760 = vpop.trf.xlu0
          %v761 = vpop.trf.xlu0
          %v762 = vpop.trf.xlu0
          %v763 = vpop.trf.xlu0
          %v764 = vpop.trf.xlu0
          %v765 = vpop.trf.xlu0
          %v766 = vpop.trf.xlu0
          %v767 = vpack.c.bf16 %v751, %v751
          %vm768 = vcmask 25600
          %769 = vst.msk [vmem:[%s248] sm:$0x3] %vm768, %v767
          %v770 = vld [vmem:[#allocation3] sm:$0x1]
          %v771 = vrsqrt.pop %v770
          %v772 = vmul.f32 %v770, %v771
          %vm773 = vcmp.eq.f32.partialorder %v770, inf
          %v774 = vsel %vm773, %v770, %v772
          %vm775 = vcmp.eq.f32.partialorder %v770, 0.0
          %v776 = vand.u32 %v770, 2147483648
          %v777 = vsel %vm775, %v776, %v774
          %v778 = vmax.f32 %v777, 1e-12
          %v779 = vld [vmem:[#allocation4] sm:$0x1]
          %v780 = vrsqrt.pop %v779
          %v781 = vmul.f32 %v779, %v780
          %vm782 = vcmp.eq.f32.partialorder %v779, inf
          %v783 = vsel %vm782, %v779, %v781
          %vm784 = vcmp.eq.f32.partialorder %v779, 0.0
          %v785 = vand.u32 %v779, 2147483648
          %v786 = vsel %vm784, %v785, %v783
          %v787 = vmax.f32 %v786, 1e-12
          %v788 = vld [vmem:[%s472] sm:$0xf]
          %v790 = vlaneseq
          %v791 = vshrl.u32 %v790, 7
          %v792 = vsub.s32 0, %v791
          %v793 = vrot.slane %v778, %v792
          %794 = vrot.lane.b32.xlu0 %v793, 124
          %v795 = vpop.permute.xlu0 %794
          %797 = vxpose.xlu0.b32.start [1/16] %v795, 128
          %798 = vxpose.xlu0.b32.cont [2/16] 0.0, 128
          %799 = vxpose.xlu0.b32.cont [3/16] 0.0, 128
          %800 = vxpose.xlu0.b32.cont [4/16] 0.0, 128
          %801 = vxpose.xlu0.b32.cont [5/16] 0.0, 128
          %802 = vxpose.xlu0.b32.cont [6/16] 0.0, 128
          %803 = vxpose.xlu0.b32.cont [7/16] 0.0, 128
          %804 = vxpose.xlu0.b32.cont [8/16] 0.0, 128
          %805 = vxpose.xlu0.b32.cont [9/16] 0.0, 128
          %806 = vxpose.xlu0.b32.cont [10/16] 0.0, 128
          %807 = vxpose.xlu0.b32.cont [11/16] 0.0, 128
          %808 = vxpose.xlu0.b32.cont [12/16] 0.0, 128
          %809 = vxpose.xlu0.b32.cont [13/16] 0.0, 128
          %810 = vxpose.xlu0.b32.cont [14/16] 0.0, 128
          %811 = vxpose.xlu0.b32.cont [15/16] 0.0, 128
          %812 = vxpose.xlu0.b32.end [16/16] 0.0, 128
          %v813 = vpop.trf.xlu0
          %v814 = vpop.trf.xlu0
          %v815 = vpop.trf.xlu0
          %v816 = vpop.trf.xlu0
          %v817 = vpop.trf.xlu0
          %v818 = vpop.trf.xlu0
          %v819 = vpop.trf.xlu0
          %v820 = vpop.trf.xlu0
          %v821 = vpop.trf.xlu0
          %v822 = vpop.trf.xlu0
          %v823 = vpop.trf.xlu0
          %v824 = vpop.trf.xlu0
          %v825 = vpop.trf.xlu0
          %v826 = vpop.trf.xlu0
          %v827 = vpop.trf.xlu0
          %v828 = vpop.trf.xlu0
          %830 = vset.pattern.permute.xlu0 0
          %831 = vperm.xlu0 %830, %v813
          %v832 = vpop.permute.xlu0 %831
          %v835 = vlaneseq
          %v836 = vshrl.u32 %v835, 7
          %v837 = vsub.s32 0, %v836
          %v838 = vrot.slane %v787, %v837
          %v840 = vmul.f32 %v832, %v838
          %842 = vrot.lane.b32.xlu0 %v840, 124
          %v843 = vpop.permute.xlu0 %842
          %v845 = vrcp.pop %v843
          %v846 = vmul.f32 %v788, %v845
          %s847 = sld [smem:[#allocation5 + $0x1]]
          %v848 = vstv %s847
          %v849 = vmul.f32 %v846, %v848
          %v850 = vsel %vm470, %v849, -inf
          %851 = vmax.xlane.f32.xlu0 %v850
          %v852 = vpop.xlane.xlu0 %851
          %v853 = vsub.f32 %v849, %v852
          %v854 = vmul.f32 %v853, 1.442695
          %v855 = vpow.pop %v854
          %v856 = vsel %vm470, %v855, 0.0
          %857 = vadd.xlane.f32.xlu0 %v856
          %v858 = vpop.xlane.xlu0 %857
          %v859 = vrcp.pop %v858
          %v860 = vmul.f32 %v855, %v859
          %861 = vxpose.xlu0.b32.start [1/16] %v860, 128
          %862 = vxpose.xlu0.b32.cont [2/16] 0.0, 128
          %863 = vxpose.xlu0.b32.cont [3/16] 0.0, 128
          %864 = vxpose.xlu0.b32.cont [4/16] 0.0, 128
          %865 = vxpose.xlu0.b32.cont [5/16] 0.0, 128
          %866 = vxpose.xlu0.b32.cont [6/16] 0.0, 128
          %867 = vxpose.xlu0.b32.cont [7/16] 0.0, 128
          %868 = vxpose.xlu0.b32.cont [8/16] 0.0, 128
          %869 = vxpose.xlu0.b32.cont [9/16] 0.0, 128
          %870 = vxpose.xlu0.b32.cont [10/16] 0.0, 128
          %871 = vxpose.xlu0.b32.cont [11/16] 0.0, 128
          %872 = vxpose.xlu0.b32.cont [12/16] 0.0, 128
          %873 = vxpose.xlu0.b32.cont [13/16] 0.0, 128
          %874 = vxpose.xlu0.b32.cont [14/16] 0.0, 128
          %875 = vxpose.xlu0.b32.cont [15/16] 0.0, 128
          %876 = vxpose.xlu0.b32.end [16/16] 0.0, 128
          %v877 = vpop.trf.xlu0
          %v878 = vpop.trf.xlu0
          %v879 = vpop.trf.xlu0
          %v880 = vpop.trf.xlu0
          %v881 = vpop.trf.xlu0
          %v882 = vpop.trf.xlu0
          %v883 = vpop.trf.xlu0
          %v884 = vpop.trf.xlu0
          %v885 = vpop.trf.xlu0
          %v886 = vpop.trf.xlu0
          %v887 = vpop.trf.xlu0
          %v888 = vpop.trf.xlu0
          %v889 = vpop.trf.xlu0
          %v890 = vpop.trf.xlu0
          %v891 = vpop.trf.xlu0
          %v892 = vpop.trf.xlu0
          %v893 = vpack.c.bf16 %v877, %v877
          %s894 = scalar_lea.vmem %s248, 2
          %895 = vst.msk [vmem:[%s894] sm:$0x3] %vm768, %v893
          %v896 = vld [vmem:[#allocation3] sm:$0x1]
          %v897 = vrsqrt.pop %v896
          %v898 = vmul.f32 %v896, %v897
          %vm899 = vcmp.eq.f32.partialorder %v896, inf
          %v900 = vsel %vm899, %v896, %v898
          %vm901 = vcmp.eq.f32.partialorder %v896, 0.0
          %v902 = vand.u32 %v896, 2147483648
          %v903 = vsel %vm901, %v902, %v900
          %v904 = vmax.f32 %v903, 1e-12
          %v905 = vld [vmem:[#allocation4] sm:$0x1]
          %v906 = vrsqrt.pop %v905
          %v907 = vmul.f32 %v905, %v906
          %vm908 = vcmp.eq.f32.partialorder %v905, inf
          %v909 = vsel %vm908, %v905, %v907
          %vm910 = vcmp.eq.f32.partialorder %v905, 0.0
          %v911 = vand.u32 %v905, 2147483648
          %v912 = vsel %vm910, %v911, %v909
          %v913 = vmax.f32 %v912, 1e-12
          %v914 = vld [vmem:[%s533] sm:$0xf]
          %v916 = vlaneseq
          %v917 = vshrl.u32 %v916, 7
          %v918 = vsub.s32 0, %v917
          %v919 = vrot.slane %v904, %v918
          %920 = vrot.lane.b32.xlu0 %v919, 120
          %v921 = vpop.permute.xlu0 %920
          %923 = vxpose.xlu0.b32.start [1/16] %v921, 128
          %924 = vxpose.xlu0.b32.cont [2/16] 0.0, 128
          %925 = vxpose.xlu0.b32.cont [3/16] 0.0, 128
          %926 = vxpose.xlu0.b32.cont [4/16] 0.0, 128
          %927 = vxpose.xlu0.b32.cont [5/16] 0.0, 128
          %928 = vxpose.xlu0.b32.cont [6/16] 0.0, 128
          %929 = vxpose.xlu0.b32.cont [7/16] 0.0, 128
          %930 = vxpose.xlu0.b32.cont [8/16] 0.0, 128
          %931 = vxpose.xlu0.b32.cont [9/16] 0.0, 128
          %932 = vxpose.xlu0.b32.cont [10/16] 0.0, 128
          %933 = vxpose.xlu0.b32.cont [11/16] 0.0, 128
          %934 = vxpose.xlu0.b32.cont [12/16] 0.0, 128
          %935 = vxpose.xlu0.b32.cont [13/16] 0.0, 128
          %936 = vxpose.xlu0.b32.cont [14/16] 0.0, 128
          %937 = vxpose.xlu0.b32.cont [15/16] 0.0, 128
          %938 = vxpose.xlu0.b32.end [16/16] 0.0, 128
          %v939 = vpop.trf.xlu0
          %v940 = vpop.trf.xlu0
          %v941 = vpop.trf.xlu0
          %v942 = vpop.trf.xlu0
          %v943 = vpop.trf.xlu0
          %v944 = vpop.trf.xlu0
          %v945 = vpop.trf.xlu0
          %v946 = vpop.trf.xlu0
          %v947 = vpop.trf.xlu0
          %v948 = vpop.trf.xlu0
          %v949 = vpop.trf.xlu0
          %v950 = vpop.trf.xlu0
          %v951 = vpop.trf.xlu0
          %v952 = vpop.trf.xlu0
          %v953 = vpop.trf.xlu0
          %v954 = vpop.trf.xlu0
          %956 = vset.pattern.permute.xlu0 0
          %957 = vperm.xlu0 %956, %v939
          %v958 = vpop.permute.xlu0 %957
          %v961 = vlaneseq
          %v962 = vshrl.u32 %v961, 7
          %v963 = vsub.s32 0, %v962
          %v964 = vrot.slane %v913, %v963
          %v966 = vmul.f32 %v958, %v964
          %968 = vrot.lane.b32.xlu0 %v966, 120
          %v969 = vpop.permute.xlu0 %968
          %v971 = vrcp.pop %v969
          %v972 = vmul.f32 %v914, %v971
          %s973 = sld [smem:[#allocation5 + $0x2]]
          %v974 = vstv %s973
          %v975 = vmul.f32 %v972, %v974
          %v976 = vsel %vm470, %v975, -inf
          %977 = vmax.xlane.f32.xlu0 %v976
          %v978 = vpop.xlane.xlu0 %977
          %v979 = vsub.f32 %v975, %v978
          %v980 = vmul.f32 %v979, 1.442695
          %v981 = vpow.pop %v980
          %v982 = vsel %vm470, %v981, 0.0
          %983 = vadd.xlane.f32.xlu0 %v982
          %v984 = vpop.xlane.xlu0 %983
          %v985 = vrcp.pop %v984
          %v986 = vmul.f32 %v981, %v985
          %987 = vxpose.xlu0.b32.start [1/16] %v986, 128
          %988 = vxpose.xlu0.b32.cont [2/16] 0.0, 128
          %989 = vxpose.xlu0.b32.cont [3/16] 0.0, 128
          %990 = vxpose.xlu0.b32.cont [4/16] 0.0, 128
          %991 = vxpose.xlu0.b32.cont [5/16] 0.0, 128
          %992 = vxpose.xlu0.b32.cont [6/16] 0.0, 128
          %993 = vxpose.xlu0.b32.cont [7/16] 0.0, 128
          %994 = vxpose.xlu0.b32.cont [8/16] 0.0, 128
          %995 = vxpose.xlu0.b32.cont [9/16] 0.0, 128
          %996 = vxpose.xlu0.b32.cont [10/16] 0.0, 128
          %997 = vxpose.xlu0.b32.cont [11/16] 0.0, 128
          %998 = vxpose.xlu0.b32.cont [12/16] 0.0, 128
          %999 = vxpose.xlu0.b32.cont [13/16] 0.0, 128
          %1000 = vxpose.xlu0.b32.cont [14/16] 0.0, 128
          %1001 = vxpose.xlu0.b32.cont [15/16] 0.0, 128
          %1002 = vxpose.xlu0.b32.end [16/16] 0.0, 128
          %v1003 = vpop.trf.xlu0
          %v1004 = vpop.trf.xlu0
          %v1005 = vpop.trf.xlu0
          %v1006 = vpop.trf.xlu0
          %v1007 = vpop.trf.xlu0
          %v1008 = vpop.trf.xlu0
          %v1009 = vpop.trf.xlu0
          %v1010 = vpop.trf.xlu0
          %v1011 = vpop.trf.xlu0
          %v1012 = vpop.trf.xlu0
          %v1013 = vpop.trf.xlu0
          %v1014 = vpop.trf.xlu0
          %v1015 = vpop.trf.xlu0
          %v1016 = vpop.trf.xlu0
          %v1017 = vpop.trf.xlu0
          %v1018 = vpop.trf.xlu0
          %v1019 = vpack.c.bf16 %v1003, %v1003
          %s1020 = scalar_lea.vmem %s248, 4
          %1021 = vst.msk [vmem:[%s1020] sm:$0x3] %vm768, %v1019
          %v1022 = vld [vmem:[#allocation3] sm:$0x1]
          %v1023 = vrsqrt.pop %v1022
          %v1024 = vmul.f32 %v1022, %v1023
          %vm1025 = vcmp.eq.f32.partialorder %v1022, inf
          %v1026 = vsel %vm1025, %v1022, %v1024
          %vm1027 = vcmp.eq.f32.partialorder %v1022, 0.0
          %v1028 = vand.u32 %v1022, 2147483648
          %v1029 = vsel %vm1027, %v1028, %v1026
          %v1030 = vmax.f32 %v1029, 1e-12
          %v1031 = vld [vmem:[#allocation4] sm:$0x1]
          %v1032 = vrsqrt.pop %v1031
          %v1033 = vmul.f32 %v1031, %v1032
          %vm1034 = vcmp.eq.f32.partialorder %v1031, inf
          %v1035 = vsel %vm1034, %v1031, %v1033
          %vm1036 = vcmp.eq.f32.partialorder %v1031, 0.0
          %v1037 = vand.u32 %v1031, 2147483648
          %v1038 = vsel %vm1036, %v1037, %v1035
          %v1039 = vmax.f32 %v1038, 1e-12
          %v1040 = vld [vmem:[%s593] sm:$0xf]
          %v1042 = vlaneseq
          %v1043 = vshrl.u32 %v1042, 7
          %v1044 = vsub.s32 0, %v1043
          %v1045 = vrot.slane %v1030, %v1044
          %1046 = vrot.lane.b32.xlu0 %v1045, 116
          %v1047 = vpop.permute.xlu0 %1046
          %1049 = vxpose.xlu0.b32.start [1/16] %v1047, 128
          %1050 = vxpose.xlu0.b32.cont [2/16] 0.0, 128
          %1051 = vxpose.xlu0.b32.cont [3/16] 0.0, 128
          %1052 = vxpose.xlu0.b32.cont [4/16] 0.0, 128
          %1053 = vxpose.xlu0.b32.cont [5/16] 0.0, 128
          %1054 = vxpose.xlu0.b32.cont [6/16] 0.0, 128
          %1055 = vxpose.xlu0.b32.cont [7/16] 0.0, 128
          %1056 = vxpose.xlu0.b32.cont [8/16] 0.0, 128
          %1057 = vxpose.xlu0.b32.cont [9/16] 0.0, 128
          %1058 = vxpose.xlu0.b32.cont [10/16] 0.0, 128
          %1059 = vxpose.xlu0.b32.cont [11/16] 0.0, 128
          %1060 = vxpose.xlu0.b32.cont [12/16] 0.0, 128
          %1061 = vxpose.xlu0.b32.cont [13/16] 0.0, 128
          %1062 = vxpose.xlu0.b32.cont [14/16] 0.0, 128
          %1063 = vxpose.xlu0.b32.cont [15/16] 0.0, 128
          %1064 = vxpose.xlu0.b32.end [16/16] 0.0, 128
          %v1065 = vpop.trf.xlu0
          %v1066 = vpop.trf.xlu0
          %v1067 = vpop.trf.xlu0
          %v1068 = vpop.trf.xlu0
          %v1069 = vpop.trf.xlu0
          %v1070 = vpop.trf.xlu0
          %v1071 = vpop.trf.xlu0
          %v1072 = vpop.trf.xlu0
          %v1073 = vpop.trf.xlu0
          %v1074 = vpop.trf.xlu0
          %v1075 = vpop.trf.xlu0
          %v1076 = vpop.trf.xlu0
          %v1077 = vpop.trf.xlu0
          %v1078 = vpop.trf.xlu0
          %v1079 = vpop.trf.xlu0
          %v1080 = vpop.trf.xlu0
          %1082 = vset.pattern.permute.xlu0 0
          %1083 = vperm.xlu0 %1082, %v1065
          %v1084 = vpop.permute.xlu0 %1083
          %v1087 = vlaneseq
          %v1088 = vshrl.u32 %v1087, 7
          %v1089 = vsub.s32 0, %v1088
          %v1090 = vrot.slane %v1039, %v1089
          %v1092 = vmul.f32 %v1084, %v1090
          %1094 = vrot.lane.b32.xlu0 %v1092, 116
          %v1095 = vpop.permute.xlu0 %1094
          %v1097 = vrcp.pop %v1095
          %v1098 = vmul.f32 %v1040, %v1097
          %s1099 = sld [smem:[#allocation5 + $0x3]]
          %v1100 = vstv %s1099
          %v1101 = vmul.f32 %v1098, %v1100
          %v1102 = vsel %vm470, %v1101, -inf
          %1103 = vmax.xlane.f32.xlu0 %v1102
          %v1104 = vpop.xlane.xlu0 %1103
          %v1105 = vsub.f32 %v1101, %v1104
          %v1106 = vmul.f32 %v1105, 1.442695
          %v1107 = vpow.pop %v1106
          %v1108 = vsel %vm470, %v1107, 0.0
          %1109 = vadd.xlane.f32.xlu0 %v1108
          %v1110 = vpop.xlane.xlu0 %1109
          %v1111 = vrcp.pop %v1110
          %v1112 = vmul.f32 %v1107, %v1111
          %1113 = vxpose.xlu0.b32.start [1/16] %v1112, 128
          %1114 = vxpose.xlu0.b32.cont [2/16] 0.0, 128
          %1115 = vxpose.xlu0.b32.cont [3/16] 0.0, 128
          %1116 = vxpose.xlu0.b32.cont [4/16] 0.0, 128
          %1117 = vxpose.xlu0.b32.cont [5/16] 0.0, 128
          %1118 = vxpose.xlu0.b32.cont [6/16] 0.0, 128
          %1119 = vxpose.xlu0.b32.cont [7/16] 0.0, 128
          %1120 = vxpose.xlu0.b32.cont [8/16] 0.0, 128
          %1121 = vxpose.xlu0.b32.cont [9/16] 0.0, 128
          %1122 = vxpose.xlu0.b32.cont [10/16] 0.0, 128
          %1123 = vxpose.xlu0.b32.cont [11/16] 0.0, 128
          %1124 = vxpose.xlu0.b32.cont [12/16] 0.0, 128
          %1125 = vxpose.xlu0.b32.cont [13/16] 0.0, 128
          %1126 = vxpose.xlu0.b32.cont [14/16] 0.0, 128
          %1127 = vxpose.xlu0.b32.cont [15/16] 0.0, 128
          %1128 = vxpose.xlu0.b32.end [16/16] 0.0, 128
          %v1129 = vpop.trf.xlu0
          %v1130 = vpop.trf.xlu0
          %v1131 = vpop.trf.xlu0
          %v1132 = vpop.trf.xlu0
          %v1133 = vpop.trf.xlu0
          %v1134 = vpop.trf.xlu0
          %v1135 = vpop.trf.xlu0
          %v1136 = vpop.trf.xlu0
          %v1137 = vpop.trf.xlu0
          %v1138 = vpop.trf.xlu0
          %v1139 = vpop.trf.xlu0
          %v1140 = vpop.trf.xlu0
          %v1141 = vpop.trf.xlu0
          %v1142 = vpop.trf.xlu0
          %v1143 = vpop.trf.xlu0
          %v1144 = vpop.trf.xlu0
          %v1145 = vpack.c.bf16 %v1129, %v1129
          %s1146 = scalar_lea.vmem %s248, 6
          %1147 = vst.msk [vmem:[%s1146] sm:$0x3] %vm768, %v1145
        $region44: #{transformer_block_1.33} parent=31 // pred_fallthru
          _
        %p1148 = scmp.lt.s32.totalorder %s19, 1
        %s1149 = scalar_select %p1148, %s19, 1
        %s1150 = smul.addr %s1149, 4
        %s1151 = smul.addr %s1150, 2
        %s1152 = scalar_lea.vmem %s3, %s1151
        // Predicated region
        $region45: #{transformer_block_1.33} parent=31 // pred_check
          %p1153 = pneg %p122
        $region46: #{transformer_block_1.33} parent=31 // pred_check_branch
          %1155 = sbr.rel (%p1153) target = $region48
        $region47: #{transformer_block_1.33} parent=31 // pred_region
          _
        $region48: #{transformer_block_1.33} parent=31 // pred_fallthru
          _
      $region32: #{transformer_block_1.33} parent=5 // pred_fallthru
        _
      %p1156 = scmp.le.s32.totalorder 2, %s10
      // Predicated region
      $region49: #{transformer_block_1.33} parent=5 // pred_check
        %p1157 = pneg %p1156
      $region50: #{transformer_block_1.33} parent=5 // pred_check_branch
        %1159 = sbr.rel (%p1157) target = $region52
      $region51: #{transformer_block_1.33} parent=5 // pred_region
        %s1160 = ssub.s32 %s10, 2
        // Predicated region
        $region53: #{transformer_block_1.33} parent=51 // pred_check
          %p1161 = pneg %p128
        $region54: #{transformer_block_1.33} parent=51 // pred_check_branch
          %1163 = sbr.rel (%p1161) target = $region56
        $region55: #{transformer_block_1.33} parent=51 // pred_region
          %p1164 = scmp.lt.s32.totalorder %s21, 1
          %s1165 = scalar_select %p1164, %s21, 1
          %s1166 = smul.addr %s1165, 4
          %s1167 = smul.addr %s1166, 2
          %s1168 = scalar_lea.vmem %s3, %s1167
        $region56: #{transformer_block_1.33} parent=51 // pred_fallthru
          _
      $region52: #{transformer_block_1.33} parent=5 // pred_fallthru
        _
    $region6: #{transformer_block_1.33} parent=1 // loop_footer
      %s14 = sadd.s32 1, %s10
    $region7: #{transformer_block_1.33} parent=1 // loop_footer_branch
      %9 = sbr.rel target = $region3
    $region8: #{transformer_block_1.33} parent=1 // loop_exit
      _
    %1169 = vsyncpa [#allocation6], 1
    %s1170 = scalar_lea.sflag [#allocation6], 1
    %1171 = vsyncpa %s1170, 1

// kernel: transformer_block_1.36
$region0: #{transformer_block_1.36}
  #allocation0 [shape = 'u32[]', space=smem, size = 0x4, offset = 0x4, fixed_abs, tag = 'smem constant byte address 0x4 - core index']
  #allocation1 [shape = 'u32[144,128]{1,0:T(1,128)}', space=vmem, size = 0x12000, scoped, tag = 'internal scratch']
  %s0 = inlined_call_operand.vmem [shape: f32[128,16], index: 0, kind: input, shape index: {}]
  %s1 = inlined_call_operand.vmem [shape: f32[1,16], index: 1, kind: input, shape index: {}]
  %s2 = inlined_call_operand.vmem [shape: f32[1,16], index: 2, kind: input, shape index: {}]
  %s3 = inlined_call_operand.vmem [shape: bf16[16,84], index: 3, kind: input, shape index: {}]
  %s4 = inlined_call_operand.vmem [shape: f32[1,84], index: 4, kind: input, shape index: {}]
  %s5 = inlined_call_operand.vmem [shape: bf16[128,84], index: 5, kind: output, shape index: {}]
  %s6 = sld [smem:[#allocation0]]
  $region30: #{transformer_block_1.36} parent=0
    _
  %s8 = ssub.s32 1, %s6
  %s9 = scalar_select 0, %s8, %s6
  // Predicated region
  $region2: #{transformer_block_1.36} parent=0 // pred_check
    _
  $region3: #{transformer_block_1.36} parent=0 // pred_check_branch
    %11 = sbr.rel (0) target = $region5
  $region4: #{transformer_block_1.36} parent=0 // pred_region
    _
  $region5: #{transformer_block_1.36} parent=0 // pred_fallthru
    _
  // Predicated region
  $region6: #{transformer_block_1.36} parent=0 // pred_check
    _
  $region7: #{transformer_block_1.36} parent=0 // pred_check_branch
    %13 = sbr.rel (0) target = $region9
  $region8: #{transformer_block_1.36} parent=0 // pred_region
    _
  $region9: #{transformer_block_1.36} parent=0 // pred_fallthru
    _
  // Predicated region
  $region10: #{transformer_block_1.36} parent=0 // pred_check
    _
  $region11: #{transformer_block_1.36} parent=0 // pred_check_branch
    %15 = sbr.rel (0) target = $region13
  $region12: #{transformer_block_1.36} parent=0 // pred_region
    _
  $region13: #{transformer_block_1.36} parent=0 // pred_fallthru
    _
  // Predicated region
  $region14: #{transformer_block_1.36} parent=0 // pred_check
    _
  $region15: #{transformer_block_1.36} parent=0 // pred_check_branch
    %17 = sbr.rel (0) target = $region17
  $region16: #{transformer_block_1.36} parent=0 // pred_region
    _
  $region17: #{transformer_block_1.36} parent=0 // pred_fallthru
    _
  // Predicated region
  $region18: #{transformer_block_1.36} parent=0 // pred_check
    _
  $region19: #{transformer_block_1.36} parent=0 // pred_check_branch
    %19 = sbr.rel (0) target = $region21
  $region20: #{transformer_block_1.36} parent=0 // pred_region
    _
  $region21: #{transformer_block_1.36} parent=0 // pred_fallthru
    _
  %v21 = vld [vmem:[%s0] sm:$0xff]
  %v22 = vld [vmem:[%s0 + $0x8] sm:$0xff]
  %v23 = vld [vmem:[%s0 + $0x10] sm:$0xff]
  %v24 = vld [vmem:[%s0 + $0x18] sm:$0xff]
  %v25 = vld [vmem:[%s0 + $0x20] sm:$0xff]
  %v26 = vld [vmem:[%s0 + $0x28] sm:$0xff]
  %v27 = vld [vmem:[%s0 + $0x30] sm:$0xff]
  %v28 = vld [vmem:[%s0 + $0x38] sm:$0xff]
  %v29 = vld [vmem:[%s0 + $0x40] sm:$0xff]
  %v30 = vld [vmem:[%s0 + $0x48] sm:$0xff]
  %v31 = vld [vmem:[%s0 + $0x50] sm:$0xff]
  %v32 = vld [vmem:[%s0 + $0x58] sm:$0xff]
  %v33 = vld [vmem:[%s0 + $0x60] sm:$0xff]
  %v34 = vld [vmem:[%s0 + $0x68] sm:$0xff]
  %v35 = vld [vmem:[%s0 + $0x70] sm:$0xff]
  %v36 = vld [vmem:[%s0 + $0x78] sm:$0xff]
  %vm37 = vcmask 130048
  %v38 = vsel %vm37, %v21, 0.0
  %39 = vadd.xlane.f32.xlu0 %v38
  %v40 = vpop.xlane.xlu0 %39
  %v41 = vsel %vm37, %v22, 0.0
  %42 = vadd.xlane.f32.xlu0 %v41
  %v43 = vpop.xlane.xlu0 %42
  %v44 = vsel %vm37, %v23, 0.0
  %45 = vadd.xlane.f32.xlu0 %v44
  %v46 = vpop.xlane.xlu0 %45
  %v47 = vsel %vm37, %v24, 0.0
  %48 = vadd.xlane.f32.xlu0 %v47
  %v49 = vpop.xlane.xlu0 %48
  %v50 = vsel %vm37, %v25, 0.0
  %51 = vadd.xlane.f32.xlu0 %v50
  %v52 = vpop.xlane.xlu0 %51
  %v53 = vsel %vm37, %v26, 0.0
  %54 = vadd.xlane.f32.xlu0 %v53
  %v55 = vpop.xlane.xlu0 %54
  %v56 = vsel %vm37, %v27, 0.0
  %57 = vadd.xlane.f32.xlu0 %v56
  %v58 = vpop.xlane.xlu0 %57
  %v59 = vsel %vm37, %v28, 0.0
  %60 = vadd.xlane.f32.xlu0 %v59
  %v61 = vpop.xlane.xlu0 %60
  %v62 = vsel %vm37, %v29, 0.0
  %63 = vadd.xlane.f32.xlu0 %v62
  %v64 = vpop.xlane.xlu0 %63
  %v65 = vsel %vm37, %v30, 0.0
  %66 = vadd.xlane.f32.xlu0 %v65
  %v67 = vpop.xlane.xlu0 %66
  %v68 = vsel %vm37, %v31, 0.0
  %69 = vadd.xlane.f32.xlu0 %v68
  %v70 = vpop.xlane.xlu0 %69
  %v71 = vsel %vm37, %v32, 0.0
  %72 = vadd.xlane.f32.xlu0 %v71
  %v73 = vpop.xlane.xlu0 %72
  %v74 = vsel %vm37, %v33, 0.0
  %75 = vadd.xlane.f32.xlu0 %v74
  %v76 = vpop.xlane.xlu0 %75
  %v77 = vsel %vm37, %v34, 0.0
  %78 = vadd.xlane.f32.xlu0 %v77
  %v79 = vpop.xlane.xlu0 %78
  %v80 = vsel %vm37, %v35, 0.0
  %81 = vadd.xlane.f32.xlu0 %v80
  %v82 = vpop.xlane.xlu0 %81
  %v83 = vsel %vm37, %v36, 0.0
  %84 = vadd.xlane.f32.xlu0 %v83
  %v85 = vpop.xlane.xlu0 %84
  %v86 = vrcp.pop 16.0
  %v87 = vmul.f32 %v40, %v86
  %v88 = vmul.f32 %v43, %v86
  %v89 = vmul.f32 %v46, %v86
  %v90 = vmul.f32 %v49, %v86
  %v91 = vmul.f32 %v52, %v86
  %v92 = vmul.f32 %v55, %v86
  %v93 = vmul.f32 %v58, %v86
  %v94 = vmul.f32 %v61, %v86
  %v95 = vmul.f32 %v64, %v86
  %v96 = vmul.f32 %v67, %v86
  %v97 = vmul.f32 %v70, %v86
  %v98 = vmul.f32 %v73, %v86
  %v99 = vmul.f32 %v76, %v86
  %v100 = vmul.f32 %v79, %v86
  %v101 = vmul.f32 %v82, %v86
  %v102 = vmul.f32 %v85, %v86
  %v103 = vsub.f32 %v21, %v87
  %v104 = vsub.f32 %v22, %v88
  %v105 = vsub.f32 %v23, %v89
  %v106 = vsub.f32 %v24, %v90
  %v107 = vsub.f32 %v25, %v91
  %v108 = vsub.f32 %v26, %v92
  %v109 = vsub.f32 %v27, %v93
  %v110 = vsub.f32 %v28, %v94
  %v111 = vsub.f32 %v29, %v95
  %v112 = vsub.f32 %v30, %v96
  %v113 = vsub.f32 %v31, %v97
  %v114 = vsub.f32 %v32, %v98
  %v115 = vsub.f32 %v33, %v99
  %v116 = vsub.f32 %v34, %v100
  %v117 = vsub.f32 %v35, %v101
  %v118 = vsub.f32 %v36, %v102
  %v119 = vmul.f32 %v103, %v103
  %v120 = vmul.f32 %v104, %v104
  %v121 = vmul.f32 %v105, %v105
  %v122 = vmul.f32 %v106, %v106
  %v123 = vmul.f32 %v107, %v107
  %v124 = vmul.f32 %v108, %v108
  %v125 = vmul.f32 %v109, %v109
  %v126 = vmul.f32 %v110, %v110
  %v127 = vmul.f32 %v111, %v111
  %v128 = vmul.f32 %v112, %v112
  %v129 = vmul.f32 %v113, %v113
  %v130 = vmul.f32 %v114, %v114
  %v131 = vmul.f32 %v115, %v115
  %v132 = vmul.f32 %v116, %v116
  %v133 = vmul.f32 %v117, %v117
  %v134 = vmul.f32 %v118, %v118
  %v135 = vsel %vm37, %v119, 0.0
  %136 = vadd.xlane.f32.xlu0 %v135
  %v137 = vpop.xlane.xlu0 %136
  %v138 = vsel %vm37, %v120, 0.0
  %139 = vadd.xlane.f32.xlu0 %v138
  %v140 = vpop.xlane.xlu0 %139
  %v141 = vsel %vm37, %v121, 0.0
  %142 = vadd.xlane.f32.xlu0 %v141
  %v143 = vpop.xlane.xlu0 %142
  %v144 = vsel %vm37, %v122, 0.0
  %145 = vadd.xlane.f32.xlu0 %v144
  %v146 = vpop.xlane.xlu0 %145
  %v147 = vsel %vm37, %v123, 0.0
  %148 = vadd.xlane.f32.xlu0 %v147
  %v149 = vpop.xlane.xlu0 %148
  %v150 = vsel %vm37, %v124, 0.0
  %151 = vadd.xlane.f32.xlu0 %v150
  %v152 = vpop.xlane.xlu0 %151
  %v153 = vsel %vm37, %v125, 0.0
  %154 = vadd.xlane.f32.xlu0 %v153
  %v155 = vpop.xlane.xlu0 %154
  %v156 = vsel %vm37, %v126, 0.0
  %157 = vadd.xlane.f32.xlu0 %v156
  %v158 = vpop.xlane.xlu0 %157
  %v159 = vsel %vm37, %v127, 0.0
  %160 = vadd.xlane.f32.xlu0 %v159
  %v161 = vpop.xlane.xlu0 %160
  %v162 = vsel %vm37, %v128, 0.0
  %163 = vadd.xlane.f32.xlu0 %v162
  %v164 = vpop.xlane.xlu0 %163
  %v165 = vsel %vm37, %v129, 0.0
  %166 = vadd.xlane.f32.xlu0 %v165
  %v167 = vpop.xlane.xlu0 %166
  %v168 = vsel %vm37, %v130, 0.0
  %169 = vadd.xlane.f32.xlu0 %v168
  %v170 = vpop.xlane.xlu0 %169
  %v171 = vsel %vm37, %v131, 0.0
  %172 = vadd.xlane.f32.xlu0 %v171
  %v173 = vpop.xlane.xlu0 %172
  %v174 = vsel %vm37, %v132, 0.0
  %175 = vadd.xlane.f32.xlu0 %v174
  %v176 = vpop.xlane.xlu0 %175
  %v177 = vsel %vm37, %v133, 0.0
  %178 = vadd.xlane.f32.xlu0 %v177
  %v179 = vpop.xlane.xlu0 %178
  %v180 = vsel %vm37, %v134, 0.0
  %181 = vadd.xlane.f32.xlu0 %v180
  %v182 = vpop.xlane.xlu0 %181
  %v183 = vmul.f32 %v137, %v86
  %v184 = vmul.f32 %v140, %v86
  %v185 = vmul.f32 %v143, %v86
  %v186 = vmul.f32 %v146, %v86
  %v187 = vmul.f32 %v149, %v86
  %v188 = vmul.f32 %v152, %v86
  %v189 = vmul.f32 %v155, %v86
  %v190 = vmul.f32 %v158, %v86
  %v191 = vmul.f32 %v161, %v86
  %v192 = vmul.f32 %v164, %v86
  %v193 = vmul.f32 %v167, %v86
  %v194 = vmul.f32 %v170, %v86
  %v195 = vmul.f32 %v173, %v86
  %v196 = vmul.f32 %v176, %v86
  %v197 = vmul.f32 %v179, %v86
  %v198 = vmul.f32 %v182, %v86
  %v199 = vadd.f32 %v183, 1e-05
  %v200 = vadd.f32 %v184, 1e-05
  %v201 = vadd.f32 %v185, 1e-05
  %v202 = vadd.f32 %v186, 1e-05
  %v203 = vadd.f32 %v187, 1e-05
  %v204 = vadd.f32 %v188, 1e-05
  %v205 = vadd.f32 %v189, 1e-05
  %v206 = vadd.f32 %v190, 1e-05
  %v207 = vadd.f32 %v191, 1e-05
  %v208 = vadd.f32 %v192, 1e-05
  %v209 = vadd.f32 %v193, 1e-05
  %v210 = vadd.f32 %v194, 1e-05
  %v211 = vadd.f32 %v195, 1e-05
  %v212 = vadd.f32 %v196, 1e-05
  %v213 = vadd.f32 %v197, 1e-05
  %v214 = vadd.f32 %v198, 1e-05
  %v215 = vrsqrt.pop %v199
  %v216 = vrsqrt.pop %v200
  %v217 = vrsqrt.pop %v201
  %v218 = vrsqrt.pop %v202
  %v219 = vrsqrt.pop %v203
  %v220 = vrsqrt.pop %v204
  %v221 = vrsqrt.pop %v205
  %v222 = vrsqrt.pop %v206
  %v223 = vrsqrt.pop %v207
  %v224 = vrsqrt.pop %v208
  %v225 = vrsqrt.pop %v209
  %v226 = vrsqrt.pop %v210
  %v227 = vrsqrt.pop %v211
  %v228 = vrsqrt.pop %v212
  %v229 = vrsqrt.pop %v213
  %v230 = vrsqrt.pop %v214
  %v231 = vmul.f32 %v103, %v215
  %v232 = vmul.f32 %v104, %v216
  %v233 = vmul.f32 %v105, %v217
  %v234 = vmul.f32 %v106, %v218
  %v235 = vmul.f32 %v107, %v219
  %v236 = vmul.f32 %v108, %v220
  %v237 = vmul.f32 %v109, %v221
  %v238 = vmul.f32 %v110, %v222
  %v239 = vmul.f32 %v111, %v223
  %v240 = vmul.f32 %v112, %v224
  %v241 = vmul.f32 %v113, %v225
  %v242 = vmul.f32 %v114, %v226
  %v243 = vmul.f32 %v115, %v227
  %v244 = vmul.f32 %v116, %v228
  %v245 = vmul.f32 %v117, %v229
  %v246 = vmul.f32 %v118, %v230
  %v247 = vld [vmem:[%s1] sm:$0x1]
  %v249 = vlaneseq
  %v250 = vshrl.u32 %v249, 7
  %v251 = vsub.s32 0, %v250
  %v252 = vrot.slane %v247, %v251
  %v254 = vmul.f32 %v231, %v252
  %v255 = vmul.f32 %v232, %v252
  %v256 = vmul.f32 %v233, %v252
  %v257 = vmul.f32 %v234, %v252
  %v258 = vmul.f32 %v235, %v252
  %v259 = vmul.f32 %v236, %v252
  %v260 = vmul.f32 %v237, %v252
  %v261 = vmul.f32 %v238, %v252
  %v262 = vmul.f32 %v239, %v252
  %v263 = vmul.f32 %v240, %v252
  %v264 = vmul.f32 %v241, %v252
  %v265 = vmul.f32 %v242, %v252
  %v266 = vmul.f32 %v243, %v252
  %v267 = vmul.f32 %v244, %v252
  %v268 = vmul.f32 %v245, %v252
  %v269 = vmul.f32 %v246, %v252
  %v270 = vld [vmem:[%s2] sm:$0x1]
  %v272 = vlaneseq
  %v273 = vshrl.u32 %v272, 7
  %v274 = vsub.s32 0, %v273
  %v275 = vrot.slane %v270, %v274
  %v277 = vadd.f32 %v254, %v275
  %v278 = vadd.f32 %v255, %v275
  %v279 = vadd.f32 %v256, %v275
  %v280 = vadd.f32 %v257, %v275
  %v281 = vadd.f32 %v258, %v275
  %v282 = vadd.f32 %v259, %v275
  %v283 = vadd.f32 %v260, %v275
  %v284 = vadd.f32 %v261, %v275
  %v285 = vadd.f32 %v262, %v275
  %v286 = vadd.f32 %v263, %v275
  %v287 = vadd.f32 %v264, %v275
  %v288 = vadd.f32 %v265, %v275
  %v289 = vadd.f32 %v266, %v275
  %v290 = vadd.f32 %v267, %v275
  %v291 = vadd.f32 %v268, %v275
  %v292 = vadd.f32 %v269, %v275
  %v293 = vpack.c.bf16 %v278, %v277
  %v294 = vpack.c.bf16 %v280, %v279
  %v295 = vpack.c.bf16 %v282, %v281
  %v296 = vpack.c.bf16 %v284, %v283
  %v297 = vpack.c.bf16 %v286, %v285
  %v298 = vpack.c.bf16 %v288, %v287
  %v299 = vpack.c.bf16 %v290, %v289
  %v300 = vpack.c.bf16 %v292, %v291
  %v301 = vld [vmem:[%s3] sm:$0xf]
  %v302 = vld [vmem:[%s3 + $0x4] sm:$0xf]
  %v303 = vld [vmem:[%s4] sm:$0x1]
  %v305 = vlaneseq
  %v306 = vshrl.u32 %v305, 7
  %v307 = vsub.s32 0, %v306
  %v308 = vrot.slane %v303, %v307
  %v312 = vunpack.c.l.b16 %v301
  %v313 = vunpack.c.l.b16 %v302
  %v314 = vpack.c.b16 %v313, %v312
  %v317 = vsel %vm37, %v293, 0
  %v320 = vsel %vm37, %v294, 0
  %v323 = vsel %vm37, %v295, 0
  %v326 = vsel %vm37, %v296, 0
  %v329 = vsel %vm37, %v297, 0
  %v332 = vsel %vm37, %v298, 0
  %v335 = vsel %vm37, %v299, 0
  %v338 = vsel %vm37, %v300, 0
  %340 = vmatprep.subr.bf16.mxu0 0
  %341 = vmatpush1.bf16.msra.mxu0 0
  %342 = vmatprep.subr.bf16.mxu0 0
  %343 = vmatpush1.bf16.msra.mxu0 0
  %344 = vmatprep.subr.bf16.mxu0 0
  %345 = vmatpush1.bf16.msra.mxu0 0
  %346 = vmatprep.subr.bf16.mxu0 0
  %347 = vmatpush1.bf16.msra.mxu0 0
  %348 = vmatprep.subr.bf16.mxu0 0
  %349 = vmatpush1.bf16.msra.mxu0 0
  %350 = vmatprep.subr.bf16.mxu0 0
  %351 = vmatpush1.bf16.msra.mxu0 0
  %352 = vmatprep.subr.bf16.mxu0 0
  %353 = vmatpush1.bf16.msra.mxu0 0
  %354 = vmatprep.subr.bf16.mxu0 0
  %355 = vmatpush1.bf16.msra.mxu0 %v314
  %356 = vmatprep.subr.bf16.mxu0 0
  %357 = vmatpush2.bf16.msra.mxu0 0
  %358 = vmatprep.subr.bf16.mxu0 0
  %359 = vmatpush2.bf16.msra.mxu0 0
  %360 = vmatprep.subr.bf16.mxu0 0
  %361 = vmatpush2.bf16.msra.mxu0 0
  %362 = vmatprep.subr.bf16.mxu0 0
  %363 = vmatpush2.bf16.msra.mxu0 0
  %364 = vmatprep.subr.bf16.mxu0 0
  %365 = vmatpush2.bf16.msra.mxu0 0
  %366 = vmatprep.subr.bf16.mxu0 0
  %367 = vmatpush2.bf16.msra.mxu0 0
  %368 = vmatprep.subr.bf16.mxu0 0
  %369 = vmatpush2.bf16.msra.mxu0 0
  %370 = vmatprep.subr.bf16.mxu0 0
  %371 = vmatpush2.bf16.msra.mxu0 0
  %372 = vmatprep.mubr.bf16.mxu0 0
  %373 = vmatmul.mubr.bf16.gmra.mxu0 %v317
  %v374 = vpop.f32.mrf.mxu0
  %v375 = vadd.f32 %v308, %v374
  %v376 = vpop.f32.mrf.mxu0
  %v377 = vpop.f32.mrf.mxu0
  %v378 = vadd.f32 %v308, %v377
  %v379 = vpop.f32.mrf.mxu0
  %380 = vmatprep.mubr.bf16.mxu0 0
  %381 = vmatmul.mubr.bf16.gmra.mxu0 %v320
  %v382 = vpop.f32.mrf.mxu0
  %v383 = vadd.f32 %v308, %v382
  %v384 = vpop.f32.mrf.mxu0
  %v385 = vpop.f32.mrf.mxu0
  %v386 = vadd.f32 %v308, %v385
  %v387 = vpop.f32.mrf.mxu0
  %388 = vmatprep.mubr.bf16.mxu0 0
  %389 = vmatmul.mubr.bf16.gmra.mxu0 %v323
  %v390 = vpop.f32.mrf.mxu0
  %v391 = vadd.f32 %v308, %v390
  %v392 = vpop.f32.mrf.mxu0
  %v393 = vpop.f32.mrf.mxu0
  %v394 = vadd.f32 %v308, %v393
  %v395 = vpop.f32.mrf.mxu0
  %396 = vmatprep.mubr.bf16.mxu0 0
  %397 = vmatmul.mubr.bf16.gmra.mxu0 %v326
  %v398 = vpop.f32.mrf.mxu0
  %v399 = vadd.f32 %v308, %v398
  %v400 = vpop.f32.mrf.mxu0
  %v401 = vpop.f32.mrf.mxu0
  %v402 = vadd.f32 %v308, %v401
  %v403 = vpop.f32.mrf.mxu0
  %404 = vmatprep.mubr.bf16.mxu0 0
  %405 = vmatmul.mubr.bf16.gmra.mxu0 %v329
  %v406 = vpop.f32.mrf.mxu0
  %v407 = vadd.f32 %v308, %v406
  %v408 = vpop.f32.mrf.mxu0
  %v409 = vpop.f32.mrf.mxu0
  %v410 = vadd.f32 %v308, %v409
  %v411 = vpop.f32.mrf.mxu0
  %412 = vmatprep.mubr.bf16.mxu0 0
  %413 = vmatmul.mubr.bf16.gmra.mxu0 %v332
  %v414 = vpop.f32.mrf.mxu0
  %v415 = vadd.f32 %v308, %v414
  %v416 = vpop.f32.mrf.mxu0
  %v417 = vpop.f32.mrf.mxu0
  %v418 = vadd.f32 %v308, %v417
  %v419 = vpop.f32.mrf.mxu0
  %420 = vmatprep.mubr.bf16.mxu0 0
  %421 = vmatmul.mubr.bf16.gmra.mxu0 %v335
  %v422 = vpop.f32.mrf.mxu0
  %v423 = vadd.f32 %v308, %v422
  %v424 = vpop.f32.mrf.mxu0
  %v425 = vpop.f32.mrf.mxu0
  %v426 = vadd.f32 %v308, %v425
  %v427 = vpop.f32.mrf.mxu0
  %428 = vmatprep.mubr.bf16.mxu0 0
  %429 = vmatmul.mubr.bf16.gmra.mxu0 %v338
  %v430 = vpop.f32.mrf.mxu0
  %v431 = vadd.f32 %v308, %v430
  %v432 = vpop.f32.mrf.mxu0
  %v433 = vpop.f32.mrf.mxu0
  %v434 = vadd.f32 %v308, %v433
  %v435 = vpop.f32.mrf.mxu0
  %436 = vdwg.mxu0
  %v437 = vpack.c.bf16 %v378, %v375
  %v438 = vpack.c.bf16 %v386, %v383
  %v439 = vpack.c.bf16 %v394, %v391
  %v440 = vpack.c.bf16 %v402, %v399
  %v441 = vpack.c.bf16 %v410, %v407
  %v442 = vpack.c.bf16 %v418, %v415
  %v443 = vpack.c.bf16 %v426, %v423
  %v444 = vpack.c.bf16 %v434, %v431
  %v453 = vunpack.c.l.b16 %v437
  %v454 = vunpack.c.h.b16 %v437
  %v455 = vunpack.c.l.b16 %v438
  %v456 = vunpack.c.h.b16 %v438
  %v457 = vunpack.c.l.b16 %v439
  %v458 = vunpack.c.h.b16 %v439
  %v459 = vunpack.c.l.b16 %v440
  %v460 = vunpack.c.h.b16 %v440
  %v461 = vunpack.c.l.b16 %v441
  %v462 = vunpack.c.h.b16 %v441
  %v463 = vunpack.c.l.b16 %v442
  %v464 = vunpack.c.h.b16 %v442
  %v465 = vunpack.c.l.b16 %v443
  %v466 = vunpack.c.h.b16 %v443
  %v467 = vunpack.c.l.b16 %v444
  %v468 = vunpack.c.h.b16 %v444
  %v469 = vpack.c.b16 %v453, %v453
  %v470 = vpack.c.b16 %v454, %v454
  %v471 = vpack.c.b16 %v455, %v455
  %v472 = vpack.c.b16 %v456, %v456
  %v473 = vpack.c.b16 %v457, %v457
  %v474 = vpack.c.b16 %v458, %v458
  %v475 = vpack.c.b16 %v459, %v459
  %v476 = vpack.c.b16 %v460, %v460
  %v477 = vpack.c.b16 %v461, %v461
  %v478 = vpack.c.b16 %v462, %v462
  %v479 = vpack.c.b16 %v463, %v463
  %v480 = vpack.c.b16 %v464, %v464
  %v481 = vpack.c.b16 %v465, %v465
  %v482 = vpack.c.b16 %v466, %v466
  %v483 = vpack.c.b16 %v467, %v467
  %v484 = vpack.c.b16 %v468, %v468
  %vm501 = vcmask 683008
  %502 = vst.msk [vmem:[%s5] sm:$0xf] %vm501, %v469
  %503 = vst.msk [vmem:[%s5 + $0x4] sm:$0xf] %vm501, %v470
  %504 = vst.msk [vmem:[%s5 + $0x8] sm:$0xf] %vm501, %v471
  %505 = vst.msk [vmem:[%s5 + $0xc] sm:$0xf] %vm501, %v472
  %506 = vst.msk [vmem:[%s5 + $0x10] sm:$0xf] %vm501, %v473
  %507 = vst.msk [vmem:[%s5 + $0x14] sm:$0xf] %vm501, %v474
  %508 = vst.msk [vmem:[%s5 + $0x18] sm:$0xf] %vm501, %v475
  %509 = vst.msk [vmem:[%s5 + $0x1c] sm:$0xf] %vm501, %v476
  %510 = vst.msk [vmem:[%s5 + $0x20] sm:$0xf] %vm501, %v477
  %511 = vst.msk [vmem:[%s5 + $0x24] sm:$0xf] %vm501, %v478
  %512 = vst.msk [vmem:[%s5 + $0x28] sm:$0xf] %vm501, %v479
  %513 = vst.msk [vmem:[%s5 + $0x2c] sm:$0xf] %vm501, %v480
  %514 = vst.msk [vmem:[%s5 + $0x30] sm:$0xf] %vm501, %v481
  %515 = vst.msk [vmem:[%s5 + $0x34] sm:$0xf] %vm501, %v482
  %516 = vst.msk [vmem:[%s5 + $0x38] sm:$0xf] %vm501, %v483
  %517 = vst.msk [vmem:[%s5 + $0x3c] sm:$0xf] %vm501, %v484
  // Predicated region
  $region22: #{transformer_block_1.36} parent=0 // pred_check
    _
  $region23: #{transformer_block_1.36} parent=0 // pred_check_branch
    %519 = sbr.rel (0) target = $region25
  $region24: #{transformer_block_1.36} parent=0 // pred_region
    _
  $region25: #{transformer_block_1.36} parent=0 // pred_fallthru
    _
  // Predicated region
  $region26: #{transformer_block_1.36} parent=0 // pred_check
    _
  $region27: #{transformer_block_1.36} parent=0 // pred_check_branch
    %521 = sbr.rel (0) target = $region29
  $region28: #{transformer_block_1.36} parent=0 // pred_region
    _
  $region29: #{transformer_block_1.36} parent=0 // pred_fallthru
    _

// kernel: transformer_block_1.38
$region0: #{transformer_block_1.38}
  #allocation0 [shape = 'u32[]', space=smem, size = 0x4, offset = 0x4, fixed_abs, tag = 'smem constant byte address 0x4 - core index']
  #allocation1 [shape = 'u32[144,128]{1,0:T(1,128)}', space=vmem, size = 0x12000, scoped, tag = 'internal scratch']
  %s0 = inlined_call_operand.vmem [shape: bf16[128,84], index: 0, kind: input, shape index: {}]
  %s1 = inlined_call_operand.vmem [shape: bf16[42,16], index: 1, kind: input, shape index: {}]
  %s2 = inlined_call_operand.vmem [shape: f32[1,16], index: 2, kind: input, shape index: {}]
  %s3 = inlined_call_operand.vmem [shape: f32[128,16], index: 3, kind: output, shape index: {}]
  %s4 = sld [smem:[#allocation0]]
  $region22: #{transformer_block_1.38} parent=0
    _
  %s6 = ssub.s32 1, %s4
  %s7 = scalar_select 0, %s6, %s4
  // Predicated region
  $region2: #{transformer_block_1.38} parent=0 // pred_check
    _
  $region3: #{transformer_block_1.38} parent=0 // pred_check_branch
    %9 = sbr.rel (0) target = $region5
  $region4: #{transformer_block_1.38} parent=0 // pred_region
    _
  $region5: #{transformer_block_1.38} parent=0 // pred_fallthru
    _
  // Predicated region
  $region6: #{transformer_block_1.38} parent=0 // pred_check
    _
  $region7: #{transformer_block_1.38} parent=0 // pred_check_branch
    %11 = sbr.rel (0) target = $region9
  $region8: #{transformer_block_1.38} parent=0 // pred_region
    _
  $region9: #{transformer_block_1.38} parent=0 // pred_fallthru
    _
  // Predicated region
  $region10: #{transformer_block_1.38} parent=0 // pred_check
    _
  $region11: #{transformer_block_1.38} parent=0 // pred_check_branch
    %13 = sbr.rel (0) target = $region13
  $region12: #{transformer_block_1.38} parent=0 // pred_region
    _
  $region13: #{transformer_block_1.38} parent=0 // pred_fallthru
    _
  %v15 = vld [vmem:[%s0] sm:$0xf]
  %v16 = vld [vmem:[%s0 + $0x4] sm:$0xf]
  %v17 = vld [vmem:[%s0 + $0x8] sm:$0xf]
  %v18 = vld [vmem:[%s0 + $0xc] sm:$0xf]
  %v19 = vld [vmem:[%s0 + $0x10] sm:$0xf]
  %v20 = vld [vmem:[%s0 + $0x14] sm:$0xf]
  %v21 = vld [vmem:[%s0 + $0x18] sm:$0xf]
  %v22 = vld [vmem:[%s0 + $0x1c] sm:$0xf]
  %v23 = vld [vmem:[%s0 + $0x20] sm:$0xf]
  %v24 = vld [vmem:[%s0 + $0x24] sm:$0xf]
  %v25 = vld [vmem:[%s0 + $0x28] sm:$0xf]
  %v26 = vld [vmem:[%s0 + $0x2c] sm:$0xf]
  %v27 = vld [vmem:[%s0 + $0x30] sm:$0xf]
  %v28 = vld [vmem:[%s0 + $0x34] sm:$0xf]
  %v29 = vld [vmem:[%s0 + $0x38] sm:$0xf]
  %v30 = vld [vmem:[%s0 + $0x3c] sm:$0xf]
  %v31 = vunpack.c.l.bf16 %v15
  %v32 = vunpack.c.l.bf16 %v16
  %v33 = vunpack.c.l.bf16 %v17
  %v34 = vunpack.c.l.bf16 %v18
  %v35 = vunpack.c.l.bf16 %v19
  %v36 = vunpack.c.l.bf16 %v20
  %v37 = vunpack.c.l.bf16 %v21
  %v38 = vunpack.c.l.bf16 %v22
  %v39 = vunpack.c.l.bf16 %v23
  %v40 = vunpack.c.l.bf16 %v24
  %v41 = vunpack.c.l.bf16 %v25
  %v42 = vunpack.c.l.bf16 %v26
  %v43 = vunpack.c.l.bf16 %v27
  %v44 = vunpack.c.l.bf16 %v28
  %v45 = vunpack.c.l.bf16 %v29
  %v46 = vunpack.c.l.bf16 %v30
  %v47 = vmul.f32 %v31, 0.5
  %v48 = vmul.f32 %v32, 0.5
  %v49 = vmul.f32 %v33, 0.5
  %v50 = vmul.f32 %v34, 0.5
  %v51 = vmul.f32 %v35, 0.5
  %v52 = vmul.f32 %v36, 0.5
  %v53 = vmul.f32 %v37, 0.5
  %v54 = vmul.f32 %v38, 0.5
  %v55 = vmul.f32 %v39, 0.5
  %v56 = vmul.f32 %v40, 0.5
  %v57 = vmul.f32 %v41, 0.5
  %v58 = vmul.f32 %v42, 0.5
  %v59 = vmul.f32 %v43, 0.5
  %v60 = vmul.f32 %v44, 0.5
  %v61 = vmul.f32 %v45, 0.5
  %v62 = vmul.f32 %v46, 0.5
  %v63 = vrcp.pop 1.4142135
  %v64 = vmul.f32 %v31, %v63
  %v65 = vmul.f32 %v32, %v63
  %v66 = vmul.f32 %v33, %v63
  %v67 = vmul.f32 %v34, %v63
  %v68 = vmul.f32 %v35, %v63
  %v69 = vmul.f32 %v36, %v63
  %v70 = vmul.f32 %v37, %v63
  %v71 = vmul.f32 %v38, %v63
  %v72 = vmul.f32 %v39, %v63
  %v73 = vmul.f32 %v40, %v63
  %v74 = vmul.f32 %v41, %v63
  %v75 = vmul.f32 %v42, %v63
  %v76 = vmul.f32 %v43, %v63
  %v77 = vmul.f32 %v44, %v63
  %v78 = vmul.f32 %v45, %v63
  %v79 = vmul.f32 %v46, %v63
  %v80 = verf.f32.pop %v64
  %v81 = verf.f32.pop %v65
  %v82 = verf.f32.pop %v66
  %v83 = verf.f32.pop %v67
  %v84 = verf.f32.pop %v68
  %v85 = verf.f32.pop %v69
  %v86 = verf.f32.pop %v70
  %v87 = verf.f32.pop %v71
  %v88 = verf.f32.pop %v72
  %v89 = verf.f32.pop %v73
  %v90 = verf.f32.pop %v74
  %v91 = verf.f32.pop %v75
  %v92 = verf.f32.pop %v76
  %v93 = verf.f32.pop %v77
  %v94 = verf.f32.pop %v78
  %v95 = verf.f32.pop %v79
  %v96 = vadd.f32 %v80, 1.0
  %v97 = vadd.f32 %v81, 1.0
  %v98 = vadd.f32 %v82, 1.0
  %v99 = vadd.f32 %v83, 1.0
  %v100 = vadd.f32 %v84, 1.0
  %v101 = vadd.f32 %v85, 1.0
  %v102 = vadd.f32 %v86, 1.0
  %v103 = vadd.f32 %v87, 1.0
  %v104 = vadd.f32 %v88, 1.0
  %v105 = vadd.f32 %v89, 1.0
  %v106 = vadd.f32 %v90, 1.0
  %v107 = vadd.f32 %v91, 1.0
  %v108 = vadd.f32 %v92, 1.0
  %v109 = vadd.f32 %v93, 1.0
  %v110 = vadd.f32 %v94, 1.0
  %v111 = vadd.f32 %v95, 1.0
  %v112 = vmul.f32 %v47, %v96
  %v113 = vmul.f32 %v48, %v97
  %v114 = vmul.f32 %v49, %v98
  %v115 = vmul.f32 %v50, %v99
  %v116 = vmul.f32 %v51, %v100
  %v117 = vmul.f32 %v52, %v101
  %v118 = vmul.f32 %v53, %v102
  %v119 = vmul.f32 %v54, %v103
  %v120 = vmul.f32 %v55, %v104
  %v121 = vmul.f32 %v56, %v105
  %v122 = vmul.f32 %v57, %v106
  %v123 = vmul.f32 %v58, %v107
  %v124 = vmul.f32 %v59, %v108
  %v125 = vmul.f32 %v60, %v109
  %v126 = vmul.f32 %v61, %v110
  %v127 = vmul.f32 %v62, %v111
  %144 = vrot.lane.b32.xlu0 %v31, 86
  %v145 = vpop.permute.xlu0 %144
  %146 = vrot.lane.b32.xlu0 %v32, 86
  %v147 = vpop.permute.xlu0 %146
  %148 = vrot.lane.b32.xlu0 %v33, 86
  %v149 = vpop.permute.xlu0 %148
  %150 = vrot.lane.b32.xlu0 %v34, 86
  %v151 = vpop.permute.xlu0 %150
  %152 = vrot.lane.b32.xlu0 %v35, 86
  %v153 = vpop.permute.xlu0 %152
  %154 = vrot.lane.b32.xlu0 %v36, 86
  %v155 = vpop.permute.xlu0 %154
  %156 = vrot.lane.b32.xlu0 %v37, 86
  %v157 = vpop.permute.xlu0 %156
  %158 = vrot.lane.b32.xlu0 %v38, 86
  %v159 = vpop.permute.xlu0 %158
  %160 = vrot.lane.b32.xlu0 %v39, 86
  %v161 = vpop.permute.xlu0 %160
  %162 = vrot.lane.b32.xlu0 %v40, 86
  %v163 = vpop.permute.xlu0 %162
  %164 = vrot.lane.b32.xlu0 %v41, 86
  %v165 = vpop.permute.xlu0 %164
  %166 = vrot.lane.b32.xlu0 %v42, 86
  %v167 = vpop.permute.xlu0 %166
  %168 = vrot.lane.b32.xlu0 %v43, 86
  %v169 = vpop.permute.xlu0 %168
  %170 = vrot.lane.b32.xlu0 %v44, 86
  %v171 = vpop.permute.xlu0 %170
  %172 = vrot.lane.b32.xlu0 %v45, 86
  %v173 = vpop.permute.xlu0 %172
  %174 = vrot.lane.b32.xlu0 %v46, 86
  %v175 = vpop.permute.xlu0 %174
  %v192 = vmul.f32 %v112, %v145
  %v193 = vmul.f32 %v113, %v147
  %v194 = vmul.f32 %v114, %v149
  %v195 = vmul.f32 %v115, %v151
  %v196 = vmul.f32 %v116, %v153
  %v197 = vmul.f32 %v117, %v155
  %v198 = vmul.f32 %v118, %v157
  %v199 = vmul.f32 %v119, %v159
  %v200 = vmul.f32 %v120, %v161
  %v201 = vmul.f32 %v121, %v163
  %v202 = vmul.f32 %v122, %v165
  %v203 = vmul.f32 %v123, %v167
  %v204 = vmul.f32 %v124, %v169
  %v205 = vmul.f32 %v125, %v171
  %v206 = vmul.f32 %v126, %v173
  %v207 = vmul.f32 %v127, %v175
  %v208 = vpack.c.bf16 %v193, %v192
  %v209 = vpack.c.bf16 %v195, %v194
  %v210 = vpack.c.bf16 %v197, %v196
  %v211 = vpack.c.bf16 %v199, %v198
  %v212 = vpack.c.bf16 %v201, %v200
  %v213 = vpack.c.bf16 %v203, %v202
  %v214 = vpack.c.bf16 %v205, %v204
  %v215 = vpack.c.bf16 %v207, %v206
  %v216 = vld [vmem:[%s1] sm:$0xf]
  %v217 = vld [vmem:[%s1 + $0x4] sm:$0xf]
  %v218 = vld [vmem:[%s1 + $0x8] sm:$0xf]
  %v219 = vld [vmem:[%s1 + $0xc] sm:$0xf]
  %v220 = vld [vmem:[%s1 + $0x10] sm:$0xf]
  %v221 = vld [vmem:[%s1 + $0x14] sm:$0x1]
  %v222 = vld [vmem:[%s2] sm:$0x1]
  %v224 = vlaneseq
  %v225 = vshrl.u32 %v224, 7
  %v226 = vsub.s32 0, %v225
  %v227 = vrot.slane %v222, %v226
  %v235 = vunpack.c.l.b16 %v216
  %v236 = vunpack.c.l.b16 %v217
  %v237 = vunpack.c.l.b16 %v218
  %v238 = vunpack.c.l.b16 %v219
  %v239 = vunpack.c.l.b16 %v220
  %v240 = vunpack.c.l.b16 %v221
  %v241 = vpack.c.b16 %v236, %v235
  %v242 = vpack.c.b16 %v238, %v237
  %v243 = vpack.c.b16 %v240, %v239
  %vm246 = vcmask 343040
  %v248 = vsel %vm246, %v208, 0
  %v251 = vsel %vm246, %v209, 0
  %v254 = vsel %vm246, %v210, 0
  %v257 = vsel %vm246, %v211, 0
  %v260 = vsel %vm246, %v212, 0
  %v263 = vsel %vm246, %v213, 0
  %v266 = vsel %vm246, %v214, 0
  %v269 = vsel %vm246, %v215, 0
  %vm271 = vcmask 1044480
  %v273 = vsel %vm271, %v243, 0
  %275 = vmatprep.subr.bf16.mxu0 0
  %276 = vmatpush1.bf16.msra.mxu0 0
  %277 = vmatprep.subr.bf16.mxu0 0
  %278 = vmatpush1.bf16.msra.mxu0 0
  %279 = vmatprep.subr.bf16.mxu0 0
  %280 = vmatpush1.bf16.msra.mxu0 0
  %281 = vmatprep.subr.bf16.mxu0 0
  %282 = vmatpush1.bf16.msra.mxu0 0
  %283 = vmatprep.subr.bf16.mxu0 0
  %284 = vmatpush1.bf16.msra.mxu0 0
  %285 = vmatprep.subr.bf16.mxu0 0
  %286 = vmatpush1.bf16.msra.mxu0 %v273
  %287 = vmatprep.subr.bf16.mxu0 0
  %288 = vmatpush1.bf16.msra.mxu0 %v242
  %289 = vmatprep.subr.bf16.mxu0 0
  %290 = vmatpush1.bf16.msra.mxu0 %v241
  %291 = vmatprep.subr.bf16.mxu0 0
  %292 = vmatpush2.bf16.msra.mxu0 0
  %293 = vmatprep.subr.bf16.mxu0 0
  %294 = vmatpush2.bf16.msra.mxu0 0
  %295 = vmatprep.subr.bf16.mxu0 0
  %296 = vmatpush2.bf16.msra.mxu0 0
  %297 = vmatprep.subr.bf16.mxu0 0
  %298 = vmatpush2.bf16.msra.mxu0 0
  %299 = vmatprep.subr.bf16.mxu0 0
  %300 = vmatpush2.bf16.msra.mxu0 0
  %301 = vmatprep.subr.bf16.mxu0 0
  %302 = vmatpush2.bf16.msra.mxu0 0
  %303 = vmatprep.subr.bf16.mxu0 0
  %304 = vmatpush2.bf16.msra.mxu0 0
  %305 = vmatprep.subr.bf16.mxu0 0
  %306 = vmatpush2.bf16.msra.mxu0 0
  %307 = vmatprep.mubr.bf16.mxu0 0
  %308 = vmatmul.mubr.bf16.gmra.mxu0 %v248
  %v309 = vpop.f32.mrf.mxu0
  %v310 = vadd.f32 %v227, %v309
  %v311 = vpop.f32.mrf.mxu0
  %v312 = vpop.f32.mrf.mxu0
  %v313 = vadd.f32 %v227, %v312
  %v314 = vpop.f32.mrf.mxu0
  %315 = vmatprep.mubr.bf16.mxu0 0
  %316 = vmatmul.mubr.bf16.gmra.mxu0 %v251
  %v317 = vpop.f32.mrf.mxu0
  %v318 = vadd.f32 %v227, %v317
  %v319 = vpop.f32.mrf.mxu0
  %v320 = vpop.f32.mrf.mxu0
  %v321 = vadd.f32 %v227, %v320
  %v322 = vpop.f32.mrf.mxu0
  %323 = vmatprep.mubr.bf16.mxu0 0
  %324 = vmatmul.mubr.bf16.gmra.mxu0 %v254
  %v325 = vpop.f32.mrf.mxu0
  %v326 = vadd.f32 %v227, %v325
  %v327 = vpop.f32.mrf.mxu0
  %v328 = vpop.f32.mrf.mxu0
  %v329 = vadd.f32 %v227, %v328
  %v330 = vpop.f32.mrf.mxu0
  %331 = vmatprep.mubr.bf16.mxu0 0
  %332 = vmatmul.mubr.bf16.gmra.mxu0 %v257
  %v333 = vpop.f32.mrf.mxu0
  %v334 = vadd.f32 %v227, %v333
  %v335 = vpop.f32.mrf.mxu0
  %v336 = vpop.f32.mrf.mxu0
  %v337 = vadd.f32 %v227, %v336
  %v338 = vpop.f32.mrf.mxu0
  %339 = vmatprep.mubr.bf16.mxu0 0
  %340 = vmatmul.mubr.bf16.gmra.mxu0 %v260
  %v341 = vpop.f32.mrf.mxu0
  %v342 = vadd.f32 %v227, %v341
  %v343 = vpop.f32.mrf.mxu0
  %v344 = vpop.f32.mrf.mxu0
  %v345 = vadd.f32 %v227, %v344
  %v346 = vpop.f32.mrf.mxu0
  %347 = vmatprep.mubr.bf16.mxu0 0
  %348 = vmatmul.mubr.bf16.gmra.mxu0 %v263
  %v349 = vpop.f32.mrf.mxu0
  %v350 = vadd.f32 %v227, %v349
  %v351 = vpop.f32.mrf.mxu0
  %v352 = vpop.f32.mrf.mxu0
  %v353 = vadd.f32 %v227, %v352
  %v354 = vpop.f32.mrf.mxu0
  %355 = vmatprep.mubr.bf16.mxu0 0
  %356 = vmatmul.mubr.bf16.gmra.mxu0 %v266
  %v357 = vpop.f32.mrf.mxu0
  %v358 = vadd.f32 %v227, %v357
  %v359 = vpop.f32.mrf.mxu0
  %v360 = vpop.f32.mrf.mxu0
  %v361 = vadd.f32 %v227, %v360
  %v362 = vpop.f32.mrf.mxu0
  %363 = vmatprep.mubr.bf16.mxu0 0
  %364 = vmatmul.mubr.bf16.gmra.mxu0 %v269
  %v365 = vpop.f32.mrf.mxu0
  %v366 = vadd.f32 %v227, %v365
  %v367 = vpop.f32.mrf.mxu0
  %v368 = vpop.f32.mrf.mxu0
  %v369 = vadd.f32 %v227, %v368
  %v370 = vpop.f32.mrf.mxu0
  %371 = vdwg.mxu0
  %vm372 = vcmask 130048
  %373 = vst.msk [vmem:[%s3] sm:$0xff] %vm372, %v310
  %374 = vst.msk [vmem:[%s3 + $0x8] sm:$0xff] %vm372, %v313
  %375 = vst.msk [vmem:[%s3 + $0x10] sm:$0xff] %vm372, %v318
  %376 = vst.msk [vmem:[%s3 + $0x18] sm:$0xff] %vm372, %v321
  %377 = vst.msk [vmem:[%s3 + $0x20] sm:$0xff] %vm372, %v326
  %378 = vst.msk [vmem:[%s3 + $0x28] sm:$0xff] %vm372, %v329
  %379 = vst.msk [vmem:[%s3 + $0x30] sm:$0xff] %vm372, %v334
  %380 = vst.msk [vmem:[%s3 + $0x38] sm:$0xff] %vm372, %v337
  %381 = vst.msk [vmem:[%s3 + $0x40] sm:$0xff] %vm372, %v342
  %382 = vst.msk [vmem:[%s3 + $0x48] sm:$0xff] %vm372, %v345
  %383 = vst.msk [vmem:[%s3 + $0x50] sm:$0xff] %vm372, %v350
  %384 = vst.msk [vmem:[%s3 + $0x58] sm:$0xff] %vm372, %v353
  %385 = vst.msk [vmem:[%s3 + $0x60] sm:$0xff] %vm372, %v358
  %386 = vst.msk [vmem:[%s3 + $0x68] sm:$0xff] %vm372, %v361
  %387 = vst.msk [vmem:[%s3 + $0x70] sm:$0xff] %vm372, %v366
  %388 = vst.msk [vmem:[%s3 + $0x78] sm:$0xff] %vm372, %v369
  // Predicated region
  $region14: #{transformer_block_1.38} parent=0 // pred_check
    _
  $region15: #{transformer_block_1.38} parent=0 // pred_check_branch
    %390 = sbr.rel (0) target = $region17
  $region16: #{transformer_block_1.38} parent=0 // pred_region
    _
  $region17: #{transformer_block_1.38} parent=0 // pred_fallthru
    _
  // Predicated region
  $region18: #{transformer_block_1.38} parent=0 // pred_check
    _
  $region19: #{transformer_block_1.38} parent=0 // pred_check_branch
    %392 = sbr.rel (0) target = $region21
  $region20: #{transformer_block_1.38} parent=0 // pred_region
    _
  $region21: #{transformer_block_1.38} parent=0 // pred_fallthru
    _

// kernel: transformer_block_1.37
$region0: #{transformer_block_1.37}
  #allocation0 [shape = 'u32[]', space=smem, size = 0x4, offset = 0x4, fixed_abs, tag = 'smem constant byte address 0x4 - core index']
  #allocation1 [shape = 'u32[144,128]{1,0:T(1,128)}', space=vmem, size = 0x12000, scoped, tag = 'internal scratch']
  %s0 = inlined_call_operand.vmem [shape: bf16[2,10,10,84], index: 0, kind: input, shape index: {}]
  %s1 = inlined_call_operand.vmem [shape: f32[3,3,84], index: 1, kind: input, shape index: {}]
  %s2 = inlined_call_operand.vmem [shape: f32[1,1,84], index: 2, kind: input, shape index: {}]
  %s3 = inlined_call_operand.vmem [shape: bf16[2,8,8,84], index: 3, kind: output, shape index: {}]
  %s4 = sld [smem:[#allocation0]]
  $region45: #{transformer_block_1.37} parent=0
    _
  %s6 = ssub.s32 1, %s4
  %s7 = scalar_select 0, %s6, %s4
  loop: start=0, step=1, limit=4
  $region2: #{transformer_block_1.37} parent=0 // loop_pre_header
    _
  $region3: #{transformer_block_1.37} parent=0 // loop_header
    %s9 = sphi 0, %s13
    %p10 = scmp.ge.s32.totalorder %s9, 4
    %s16 = sphi 0, %s28
    %s17 = sphi 0, %s24
    %s18 = sphi 0, %s16
    %s19 = sphi 0, %s17
    %s20 = sphi 0, %s18
    %s21 = sphi 0, %s19
    %s33 = sphi 0, %s35
    %s36 = sphi 0, %s33
    %s37 = sphi 0, %s36
    %s53 = sphi 0, %s37
    %s59 = sphi 0, %s61
    %s62 = sphi 0, %s59
    %s63 = sphi 0, %s62
    %s79 = sphi 0, %s63
    %s85 = sphi 0, %s87
    %s88 = sphi 0, %s85
    %s89 = sphi 0, %s88
    %s105 = sphi 0, %s89
    %s113 = sphi 0, %s115
    %s116 = sphi 0, %s113
    %s117 = sphi 0, %s116
    %s133 = sphi 0, %s117
  $region4: #{transformer_block_1.37} parent=0 // loop_header_branch
    %12 = sbr.rel (%p10) target = $region8
  $region5: #{transformer_block_1.37} parent=0 // loop_body
    %s14 = ssub.s32 %s9, 1
    %s15 = ssub.s32 %s9, 2
    %s22 = sadd.s32 1, %s17
    %p23 = scmp.ge.s32.totalorder %s22, 1
    %s24 = scalar_select %p23, 0, %s22
    %s25 = sadd.s32 1, %s16
    %s26 = scalar_select %p23, %s25, %s16
    %p27 = scmp.ge.s32.totalorder %s26, 2
    %s28 = scalar_select %p27, 0, %s26
    %s29 = ssub.s32 %s16, %s28
    %s30 = ssub.s32 %s17, %s24
    %s31 = sor.u32 %s29, %s30
    %p32 = scmp.eq.s32.totalorder %s31, 0
    %s34 = sadd.s32 %s33, 1
    %s35 = scalar_select %p32, %s33, %s34
    %p38 = pneg %p32
    %p39 = scmp.eq.s32.totalorder %s9, 1
    %p40 = por %p38, %p39
    %p41 = scmp.ne.s32.totalorder %s33, %s36
    %p42 = scmp.eq.s32.totalorder %s9, 0
    %p43 = por %p41, %p42
    %p44 = scmp.ne.s32.totalorder %s33, %s36
    %p45 = scmp.eq.s32.totalorder %s14, 1
    %p46 = por %p44, %p45
    %p47 = scmp.ne.s32.totalorder %s36, %s37
    %p48 = scmp.eq.s32.totalorder %s14, 0
    %p49 = por %p47, %p48
    %p50 = scmp.ne.s32.totalorder %s36, %s37
    %p51 = scmp.eq.s32.totalorder %s15, 1
    %p52 = por %p50, %p51
    %p54 = scmp.ne.s32.totalorder %s37, %s53
    %p55 = scmp.eq.s32.totalorder %s15, 0
    %p56 = por %p54, %p55
    %s57 = ssub.s32 %s17, %s24
    %p58 = scmp.eq.s32.totalorder %s57, 0
    %s60 = sadd.s32 %s59, 1
    %s61 = scalar_select %p58, %s59, %s60
    %p64 = pneg %p58
    %p65 = scmp.eq.s32.totalorder %s9, 1
    %p66 = por %p64, %p65
    %p67 = scmp.ne.s32.totalorder %s59, %s62
    %p68 = scmp.eq.s32.totalorder %s9, 0
    %p69 = por %p67, %p68
    %p70 = scmp.ne.s32.totalorder %s59, %s62
    %p71 = scmp.eq.s32.totalorder %s14, 1
    %p72 = por %p70, %p71
    %p73 = scmp.ne.s32.totalorder %s62, %s63
    %p74 = scmp.eq.s32.totalorder %s14, 0
    %p75 = por %p73, %p74
    %p76 = scmp.ne.s32.totalorder %s62, %s63
    %p77 = scmp.eq.s32.totalorder %s15, 1
    %p78 = por %p76, %p77
    %p80 = scmp.ne.s32.totalorder %s63, %s79
    %p81 = scmp.eq.s32.totalorder %s15, 0
    %p82 = por %p80, %p81
    %s83 = ssub.s32 %s17, %s24
    %p84 = scmp.eq.s32.totalorder %s83, 0
    %s86 = sadd.s32 %s85, 1
    %s87 = scalar_select %p84, %s85, %s86
    %p90 = pneg %p84
    %p91 = scmp.eq.s32.totalorder %s9, 1
    %p92 = por %p90, %p91
    %p93 = scmp.ne.s32.totalorder %s85, %s88
    %p94 = scmp.eq.s32.totalorder %s9, 0
    %p95 = por %p93, %p94
    %p96 = scmp.ne.s32.totalorder %s85, %s88
    %p97 = scmp.eq.s32.totalorder %s14, 1
    %p98 = por %p96, %p97
    %p99 = scmp.ne.s32.totalorder %s88, %s89
    %p100 = scmp.eq.s32.totalorder %s14, 0
    %p101 = por %p99, %p100
    %p102 = scmp.ne.s32.totalorder %s88, %s89
    %p103 = scmp.eq.s32.totalorder %s15, 1
    %p104 = por %p102, %p103
    %p106 = scmp.ne.s32.totalorder %s89, %s105
    %p107 = scmp.eq.s32.totalorder %s15, 0
    %p108 = por %p106, %p107
    %s109 = ssub.s32 %s16, %s28
    %s110 = ssub.s32 %s17, %s24
    %s111 = sor.u32 %s109, %s110
    %p112 = scmp.eq.s32.totalorder %s111, 0
    %s114 = sadd.s32 %s113, 1
    %s115 = scalar_select %p112, %s113, %s114
    %p118 = pneg %p112
    %p119 = scmp.eq.s32.totalorder %s9, 1
    %p120 = por %p118, %p119
    %p121 = scmp.ne.s32.totalorder %s113, %s116
    %p122 = scmp.eq.s32.totalorder %s9, 0
    %p123 = por %p121, %p122
    %p124 = scmp.ne.s32.totalorder %s113, %s116
    %p125 = scmp.eq.s32.totalorder %s14, 1
    %p126 = por %p124, %p125
    %p127 = scmp.ne.s32.totalorder %s116, %s117
    %p128 = scmp.eq.s32.totalorder %s14, 0
    %p129 = por %p127, %p128
    %p130 = scmp.ne.s32.totalorder %s116, %s117
    %p131 = scmp.eq.s32.totalorder %s15, 1
    %p132 = por %p130, %p131
    %p134 = scmp.ne.s32.totalorder %s117, %s133
    %p135 = scmp.eq.s32.totalorder %s15, 0
    %p136 = por %p134, %p135
    %p137 = scmp.le.s32.totalorder 1, %s9
    %p138 = scmp.lt.s32.totalorder %s9, 3
    %p139 = pnand %p137, %p138
    %p140 = pneg %p139
    // Predicated region
    $region9: #{transformer_block_1.37} parent=5 // pred_check
      _
    $region10: #{transformer_block_1.37} parent=5 // pred_check_branch
      %142 = sbr.rel (%p139) target = $region12
    $region11: #{transformer_block_1.37} parent=5 // pred_region
      %s143 = ssub.s32 %s9, 1
      // Predicated region
      $region13: #{transformer_block_1.37} parent=11 // pred_check
        %p144 = pneg %p75
      $region14: #{transformer_block_1.37} parent=11 // pred_check_branch
        %146 = sbr.rel (%p144) target = $region16
      $region15: #{transformer_block_1.37} parent=11 // pred_region
        %p147 = scmp.lt.s32.totalorder %s19, 0
        %s148 = scalar_select %p147, %s19, 0
        %s149 = smul.addr %s148, 4
        %s150 = scalar_lea.vmem %s1, %s149
      $region16: #{transformer_block_1.37} parent=11 // pred_fallthru
        _
      // Predicated region
      $region17: #{transformer_block_1.37} parent=11 // pred_check
        %p151 = pneg %p101
      $region18: #{transformer_block_1.37} parent=11 // pred_check_branch
        %153 = sbr.rel (%p151) target = $region20
      $region19: #{transformer_block_1.37} parent=11 // pred_region
        %p154 = scmp.lt.s32.totalorder %s19, 0
        %s155 = scalar_select %p154, %s19, 0
        %s156 = scalar_lea.vmem %s2, %s155
      $region20: #{transformer_block_1.37} parent=11 // pred_fallthru
        _
    $region12: #{transformer_block_1.37} parent=5 // pred_fallthru
      _
    %p157 = scmp.lt.s32.totalorder %s9, 2
    // Predicated region
    $region21: #{transformer_block_1.37} parent=5 // pred_check
      %p158 = pneg %p157
    $region22: #{transformer_block_1.37} parent=5 // pred_check_branch
      %160 = sbr.rel (%p158) target = $region24
    $region23: #{transformer_block_1.37} parent=5 // pred_region
      // Predicated region
      $region25: #{transformer_block_1.37} parent=23 // pred_check
        %p161 = pneg %p43
      $region26: #{transformer_block_1.37} parent=23 // pred_check_branch
        %163 = sbr.rel (%p161) target = $region28
      $region27: #{transformer_block_1.37} parent=23 // pred_region
        %p164 = scmp.lt.s32.totalorder %s16, 1
        %s165 = scalar_select %p164, %s16, 1
        %p166 = scmp.lt.s32.totalorder %s17, 0
        %s167 = scalar_select %p166, %s17, 0
        %s168 = smul.addr %s165, 20
        %s169 = sadd.s32 %s167, %s168
        %s170 = smul.addr %s169, 4
        %s171 = scalar_lea.vmem %s0, %s170
      $region28: #{transformer_block_1.37} parent=23 // pred_fallthru
        _
    $region24: #{transformer_block_1.37} parent=5 // pred_fallthru
      _
    %p172 = scmp.le.s32.totalorder 1, %s9
    %p173 = scmp.lt.s32.totalorder %s9, 3
    %p174 = pnand %p172, %p173
    %p175 = pneg %p174
    // Predicated region
    $region29: #{transformer_block_1.37} parent=5 // pred_check
      _
    $region30: #{transformer_block_1.37} parent=5 // pred_check_branch
      %177 = sbr.rel (%p174) target = $region32
    $region31: #{transformer_block_1.37} parent=5 // pred_region
      %s178 = ssub.s32 %s9, 1
      %p179 = scmp.lt.s32.totalorder %s18, 1
      %s180 = scalar_select %p179, %s18, 1
      %p181 = scmp.lt.s32.totalorder %s19, 0
      %s182 = scalar_select %p181, %s19, 0
      %s183 = smul.addr %s180, 20
      %s184 = sadd.s32 %s182, %s183
      %s185 = smul.addr %s184, 4
      %s186 = scalar_lea.vmem %s0, %s185
      %p187 = pneg %p49
      %p188 = pneg %p46
      %p189 = scmp.lt.s32.totalorder %s19, 0
      %s190 = scalar_select %p189, %s19, 0
      %s191 = smul.addr %s190, 4
      %s192 = scalar_lea.vmem %s1, %s191
      %p193 = pneg %p75
      %p194 = pneg %p72
      %p195 = scmp.lt.s32.totalorder %s19, 0
      %s196 = scalar_select %p195, %s19, 0
      %s197 = scalar_lea.vmem %s2, %s196
      %p198 = pneg %p101
      %p199 = pneg %p98
      %p200 = pneg %p129
      %p201 = pneg %p126
      %p202 = scmp.lt.s32.totalorder %s18, 1
      %s203 = scalar_select %p202, %s18, 1
      %p204 = scmp.lt.s32.totalorder %s19, 0
      %s205 = scalar_select %p204, %s19, 0
      %s206 = smul.addr %s203, 8
      %s207 = sadd.s32 %s205, %s206
      %s208 = smul.addr %s207, 4
      %s209 = scalar_lea.vmem %s3, %s208
      %p210 = scmp.lt.s32.totalorder %s18, 1
      %s211 = scalar_select %p210, %s18, 1
      %p212 = scmp.lt.s32.totalorder %s19, 0
      %s213 = scalar_select %p212, %s19, 0
      %s214 = smul.addr %s211, 20
      %s215 = sadd.s32 %s213, %s214
      %s216 = smul.addr %s215, 4
      %s217 = scalar_lea.vmem %s0, %s216
      %p218 = scmp.lt.s32.totalorder %s19, 0
      %s219 = scalar_select %p218, %s19, 0
      %s220 = smul.addr %s219, 4
      %s221 = scalar_lea.vmem %s1, %s220
      %p222 = scmp.lt.s32.totalorder %s19, 0
      %s223 = scalar_select %p222, %s19, 0
      %s224 = scalar_lea.vmem %s2, %s223
      %p225 = scmp.lt.s32.totalorder %s18, 1
      %s226 = scalar_select %p225, %s18, 1
      %p227 = scmp.lt.s32.totalorder %s19, 0
      %s228 = scalar_select %p227, %s19, 0
      %s229 = smul.addr %s226, 8
      %s230 = sadd.s32 %s228, %s229
      %s231 = smul.addr %s230, 4
      %s232 = scalar_lea.vmem %s3, %s231
      %v233 = vld [vmem:[%s221] sm:$0x7]
      %v234 = vld [vmem:[%s221 + $0x4] sm:$0x7]
      %v235 = vld [vmem:[%s221 + $0x8] sm:$0x7]
      %v236 = vld [vmem:[%s217] sm:$0xf]
      %v237 = vld [vmem:[%s217 + $0x8] sm:$0xf]
      %v238 = vld [vmem:[%s217 + $0x10] sm:$0xf]
      %v239 = vld [vmem:[%s217 + $0x18] sm:$0xf]
      %v240 = vld [vmem:[%s217 + $0x20] sm:$0xf]
      %v241 = vld [vmem:[%s217 + $0x28] sm:$0xf]
      %v242 = vld [vmem:[%s217 + $0x30] sm:$0xf]
      %v243 = vld [vmem:[%s217 + $0x38] sm:$0xf]
      %v244 = vunpack.c.l.bf16 %v236
      %v245 = vunpack.c.l.bf16 %v237
      %v246 = vunpack.c.l.bf16 %v238
      %v247 = vunpack.c.l.bf16 %v239
      %v248 = vunpack.c.l.bf16 %v240
      %v249 = vunpack.c.l.bf16 %v241
      %v250 = vunpack.c.l.bf16 %v242
      %v251 = vunpack.c.l.bf16 %v243
      %v252 = vlaneseq
      %v253 = vshrl.u32 %v252, 7
      %v254 = vsub.s32 0, %v253
      %v255 = vrot.slane %v233, %v254
      %v256 = vmul.f32 %v244, %v255
      %v257 = vmul.f32 %v245, %v255
      %v258 = vmul.f32 %v246, %v255
      %v259 = vmul.f32 %v247, %v255
      %v260 = vmul.f32 %v248, %v255
      %v261 = vmul.f32 %v249, %v255
      %v262 = vmul.f32 %v250, %v255
      %v263 = vmul.f32 %v251, %v255
      %v264 = vld [vmem:[%s217 + $0x4] sm:$0x1]
      %v265 = vld [vmem:[%s217 + $0xc] sm:$0x1]
      %v266 = vld [vmem:[%s217 + $0x14] sm:$0x1]
      %v267 = vld [vmem:[%s217 + $0x1c] sm:$0x1]
      %v268 = vld [vmem:[%s217 + $0x24] sm:$0x1]
      %v269 = vld [vmem:[%s217 + $0x2c] sm:$0x1]
      %v270 = vld [vmem:[%s217 + $0x34] sm:$0x1]
      %v271 = vld [vmem:[%s217 + $0x3c] sm:$0x1]
      %v272 = vunpack.c.l.bf16 %v264
      %v273 = vunpack.c.l.bf16 %v265
      %v274 = vunpack.c.l.bf16 %v266
      %v275 = vunpack.c.l.bf16 %v267
      %v276 = vunpack.c.l.bf16 %v268
      %v277 = vunpack.c.l.bf16 %v269
      %v278 = vunpack.c.l.bf16 %v270
      %v279 = vunpack.c.l.bf16 %v271
      %v280 = vlaneseq
      %v281 = vshrl.u32 %v280, 7
      %v282 = vsub.s32 1, %v281
      %v283 = vrot.slane %v233, %v282
      %v284 = vmul.f32 %v244, %v283
      %v285 = vmul.f32 %v272, %v283
      %v286 = vmul.f32 %v245, %v283
      %v287 = vmul.f32 %v273, %v283
      %v288 = vmul.f32 %v246, %v283
      %v289 = vmul.f32 %v274, %v283
      %v290 = vmul.f32 %v247, %v283
      %v291 = vmul.f32 %v275, %v283
      %v292 = vmul.f32 %v248, %v283
      %v293 = vmul.f32 %v276, %v283
      %v294 = vmul.f32 %v249, %v283
      %v295 = vmul.f32 %v277, %v283
      %v296 = vmul.f32 %v250, %v283
      %v297 = vmul.f32 %v278, %v283
      %v298 = vmul.f32 %v251, %v283
      %v299 = vmul.f32 %v279, %v283
      %vm316 = vcmask 1046528
      %v317 = vrot.slane %v284, 1
      %v318 = vrot.slane %v285, 1
      %v319 = vsel %vm316, %v317, %v318
      %v320 = vrot.slane %v286, 1
      %v321 = vrot.slane %v287, 1
      %v322 = vsel %vm316, %v320, %v321
      %v323 = vrot.slane %v288, 1
      %v324 = vrot.slane %v289, 1
      %v325 = vsel %vm316, %v323, %v324
      %v326 = vrot.slane %v290, 1
      %v327 = vrot.slane %v291, 1
      %v328 = vsel %vm316, %v326, %v327
      %v329 = vrot.slane %v292, 1
      %v330 = vrot.slane %v293, 1
      %v331 = vsel %vm316, %v329, %v330
      %v332 = vrot.slane %v294, 1
      %v333 = vrot.slane %v295, 1
      %v334 = vsel %vm316, %v332, %v333
      %v335 = vrot.slane %v296, 1
      %v336 = vrot.slane %v297, 1
      %v337 = vsel %vm316, %v335, %v336
      %v338 = vrot.slane %v298, 1
      %v339 = vrot.slane %v299, 1
      %v340 = vsel %vm316, %v338, %v339
      %v349 = vadd.f32 %v256, %v319
      %v350 = vadd.f32 %v257, %v322
      %v351 = vadd.f32 %v258, %v325
      %v352 = vadd.f32 %v259, %v328
      %v353 = vadd.f32 %v260, %v331
      %v354 = vadd.f32 %v261, %v334
      %v355 = vadd.f32 %v262, %v337
      %v356 = vadd.f32 %v263, %v340
      %v357 = vld [vmem:[%s217] sm:$0xe]
      %v358 = vld [vmem:[%s217 + $0x8] sm:$0xe]
      %v359 = vld [vmem:[%s217 + $0x10] sm:$0xe]
      %v360 = vld [vmem:[%s217 + $0x18] sm:$0xe]
      %v361 = vld [vmem:[%s217 + $0x20] sm:$0xe]
      %v362 = vld [vmem:[%s217 + $0x28] sm:$0xe]
      %v363 = vld [vmem:[%s217 + $0x30] sm:$0xe]
      %v364 = vld [vmem:[%s217 + $0x38] sm:$0xe]
      %v365 = vunpack.c.l.bf16 %v357
      %v366 = vunpack.c.l.bf16 %v358
      %v367 = vunpack.c.l.bf16 %v359
      %v368 = vunpack.c.l.bf16 %v360
      %v369 = vunpack.c.l.bf16 %v361
      %v370 = vunpack.c.l.bf16 %v362
      %v371 = vunpack.c.l.bf16 %v363
      %v372 = vunpack.c.l.bf16 %v364
      %v373 = vlaneseq
      %v374 = vshrl.u32 %v373, 7
      %v375 = vsub.s32 2, %v374
      %v376 = vrot.slane %v233, %v375
      %v377 = vmul.f32 %v365, %v376
      %v378 = vmul.f32 %v272, %v376
      %v379 = vmul.f32 %v366, %v376
      %v380 = vmul.f32 %v273, %v376
      %v381 = vmul.f32 %v367, %v376
      %v382 = vmul.f32 %v274, %v376
      %v383 = vmul.f32 %v368, %v376
      %v384 = vmul.f32 %v275, %v376
      %v385 = vmul.f32 %v369, %v376
      %v386 = vmul.f32 %v276, %v376
      %v387 = vmul.f32 %v370, %v376
      %v388 = vmul.f32 %v277, %v376
      %v389 = vmul.f32 %v371, %v376
      %v390 = vmul.f32 %v278, %v376
      %v391 = vmul.f32 %v372, %v376
      %v392 = vmul.f32 %v279, %v376
      %vm409 = vcmask 1045504
      %v410 = vrot.slane %v377, 2
      %v411 = vrot.slane %v378, 2
      %v412 = vsel %vm409, %v410, %v411
      %v413 = vrot.slane %v379, 2
      %v414 = vrot.slane %v380, 2
      %v415 = vsel %vm409, %v413, %v414
      %v416 = vrot.slane %v381, 2
      %v417 = vrot.slane %v382, 2
      %v418 = vsel %vm409, %v416, %v417
      %v419 = vrot.slane %v383, 2
      %v420 = vrot.slane %v384, 2
      %v421 = vsel %vm409, %v419, %v420
      %v422 = vrot.slane %v385, 2
      %v423 = vrot.slane %v386, 2
      %v424 = vsel %vm409, %v422, %v423
      %v425 = vrot.slane %v387, 2
      %v426 = vrot.slane %v388, 2
      %v427 = vsel %vm409, %v425, %v426
      %v428 = vrot.slane %v389, 2
      %v429 = vrot.slane %v390, 2
      %v430 = vsel %vm409, %v428, %v429
      %v431 = vrot.slane %v391, 2
      %v432 = vrot.slane %v392, 2
      %v433 = vsel %vm409, %v431, %v432
      %v442 = vadd.f32 %v349, %v412
      %v443 = vadd.f32 %v350, %v415
      %v444 = vadd.f32 %v351, %v418
      %v445 = vadd.f32 %v352, %v421
      %v446 = vadd.f32 %v353, %v424
      %v447 = vadd.f32 %v354, %v427
      %v448 = vadd.f32 %v355, %v430
      %v449 = vadd.f32 %v356, %v433
      %s450 = scalar_lea.vmem %s217, 8
      %v451 = vld [vmem:[%s450] sm:$0xf]
      %v452 = vld [vmem:[%s450 + $0x8] sm:$0xf]
      %v453 = vld [vmem:[%s450 + $0x10] sm:$0xf]
      %v454 = vld [vmem:[%s450 + $0x18] sm:$0xf]
      %v455 = vld [vmem:[%s450 + $0x20] sm:$0xf]
      %v456 = vld [vmem:[%s450 + $0x28] sm:$0xf]
      %v457 = vld [vmem:[%s450 + $0x30] sm:$0xf]
      %v458 = vld [vmem:[%s450 + $0x38] sm:$0xf]
      %v459 = vunpack.c.l.bf16 %v451
      %v460 = vunpack.c.l.bf16 %v452
      %v461 = vunpack.c.l.bf16 %v453
      %v462 = vunpack.c.l.bf16 %v454
      %v463 = vunpack.c.l.bf16 %v455
      %v464 = vunpack.c.l.bf16 %v456
      %v465 = vunpack.c.l.bf16 %v457
      %v466 = vunpack.c.l.bf16 %v458
      %v467 = vlaneseq
      %v468 = vshrl.u32 %v467, 7
      %v469 = vsub.s32 0, %v468
      %v470 = vrot.slane %v234, %v469
      %v471 = vmul.f32 %v459, %v470
      %v472 = vmul.f32 %v460, %v470
      %v473 = vmul.f32 %v461, %v470
      %v474 = vmul.f32 %v462, %v470
      %v475 = vmul.f32 %v463, %v470
      %v476 = vmul.f32 %v464, %v470
      %v477 = vmul.f32 %v465, %v470
      %v478 = vmul.f32 %v466, %v470
      %v479 = vadd.f32 %v442, %v471
      %v480 = vadd.f32 %v443, %v472
      %v481 = vadd.f32 %v444, %v473
      %v482 = vadd.f32 %v445, %v474
      %v483 = vadd.f32 %v446, %v475
      %v484 = vadd.f32 %v447, %v476
      %v485 = vadd.f32 %v448, %v477
      %v486 = vadd.f32 %v449, %v478
      %v487 = vld [vmem:[%s450 + $0x4] sm:$0x1]
      %v488 = vld [vmem:[%s450 + $0xc] sm:$0x1]
      %v489 = vld [vmem:[%s450 + $0x14] sm:$0x1]
      %v490 = vld [vmem:[%s450 + $0x1c] sm:$0x1]
      %v491 = vld [vmem:[%s450 + $0x24] sm:$0x1]
      %v492 = vld [vmem:[%s450 + $0x2c] sm:$0x1]
      %v493 = vld [vmem:[%s450 + $0x34] sm:$0x1]
      %v494 = vld [vmem:[%s450 + $0x3c] sm:$0x1]
      %v495 = vunpack.c.l.bf16 %v487
      %v496 = vunpack.c.l.bf16 %v488
      %v497 = vunpack.c.l.bf16 %v489
      %v498 = vunpack.c.l.bf16 %v490
      %v499 = vunpack.c.l.bf16 %v491
      %v500 = vunpack.c.l.bf16 %v492
      %v501 = vunpack.c.l.bf16 %v493
      %v502 = vunpack.c.l.bf16 %v494
      %v503 = vlaneseq
      %v504 = vshrl.u32 %v503, 7
      %v505 = vsub.s32 1, %v504
      %v506 = vrot.slane %v234, %v505
      %v507 = vmul.f32 %v459, %v506
      %v508 = vmul.f32 %v495, %v506
      %v509 = vmul.f32 %v460, %v506
      %v510 = vmul.f32 %v496, %v506
      %v511 = vmul.f32 %v461, %v506
      %v512 = vmul.f32 %v497, %v506
      %v513 = vmul.f32 %v462, %v506
      %v514 = vmul.f32 %v498, %v506
      %v515 = vmul.f32 %v463, %v506
      %v516 = vmul.f32 %v499, %v506
      %v517 = vmul.f32 %v464, %v506
      %v518 = vmul.f32 %v500, %v506
      %v519 = vmul.f32 %v465, %v506
      %v520 = vmul.f32 %v501, %v506
      %v521 = vmul.f32 %v466, %v506
      %v522 = vmul.f32 %v502, %v506
      %v539 = vrot.slane %v507, 1
      %v540 = vrot.slane %v508, 1
      %v541 = vsel %vm316, %v539, %v540
      %v542 = vrot.slane %v509, 1
      %v543 = vrot.slane %v510, 1
      %v544 = vsel %vm316, %v542, %v543
      %v545 = vrot.slane %v511, 1
      %v546 = vrot.slane %v512, 1
      %v547 = vsel %vm316, %v545, %v546
      %v548 = vrot.slane %v513, 1
      %v549 = vrot.slane %v514, 1
      %v550 = vsel %vm316, %v548, %v549
      %v551 = vrot.slane %v515, 1
      %v552 = vrot.slane %v516, 1
      %v553 = vsel %vm316, %v551, %v552
      %v554 = vrot.slane %v517, 1
      %v555 = vrot.slane %v518, 1
      %v556 = vsel %vm316, %v554, %v555
      %v557 = vrot.slane %v519, 1
      %v558 = vrot.slane %v520, 1
      %v559 = vsel %vm316, %v557, %v558
      %v560 = vrot.slane %v521, 1
      %v561 = vrot.slane %v522, 1
      %v562 = vsel %vm316, %v560, %v561
      %v571 = vadd.f32 %v479, %v541
      %v572 = vadd.f32 %v480, %v544
      %v573 = vadd.f32 %v481, %v547
      %v574 = vadd.f32 %v482, %v550
      %v575 = vadd.f32 %v483, %v553
      %v576 = vadd.f32 %v484, %v556
      %v577 = vadd.f32 %v485, %v559
      %v578 = vadd.f32 %v486, %v562
      %v579 = vld [vmem:[%s450] sm:$0xe]
      %v580 = vld [vmem:[%s450 + $0x8] sm:$0xe]
      %v581 = vld [vmem:[%s450 + $0x10] sm:$0xe]
      %v582 = vld [vmem:[%s450 + $0x18] sm:$0xe]
      %v583 = vld [vmem:[%s450 + $0x20] sm:$0xe]
      %v584 = vld [vmem:[%s450 + $0x28] sm:$0xe]
      %v585 = vld [vmem:[%s450 + $0x30] sm:$0xe]
      %v586 = vld [vmem:[%s450 + $0x38] sm:$0xe]
      %v587 = vunpack.c.l.bf16 %v579
      %v588 = vunpack.c.l.bf16 %v580
      %v589 = vunpack.c.l.bf16 %v581
      %v590 = vunpack.c.l.bf16 %v582
      %v591 = vunpack.c.l.bf16 %v583
      %v592 = vunpack.c.l.bf16 %v584
      %v593 = vunpack.c.l.bf16 %v585
      %v594 = vunpack.c.l.bf16 %v586
      %v595 = vlaneseq
      %v596 = vshrl.u32 %v595, 7
      %v597 = vsub.s32 2, %v596
      %v598 = vrot.slane %v234, %v597
      %v599 = vmul.f32 %v587, %v598
      %v600 = vmul.f32 %v495, %v598
      %v601 = vmul.f32 %v588, %v598
      %v602 = vmul.f32 %v496, %v598
      %v603 = vmul.f32 %v589, %v598
      %v604 = vmul.f32 %v497, %v598
      %v605 = vmul.f32 %v590, %v598
      %v606 = vmul.f32 %v498, %v598
      %v607 = vmul.f32 %v591, %v598
      %v608 = vmul.f32 %v499, %v598
      %v609 = vmul.f32 %v592, %v598
      %v610 = vmul.f32 %v500, %v598
      %v611 = vmul.f32 %v593, %v598
      %v612 = vmul.f32 %v501, %v598
      %v613 = vmul.f32 %v594, %v598
      %v614 = vmul.f32 %v502, %v598
      %v631 = vrot.slane %v599, 2
      %v632 = vrot.slane %v600, 2
      %v633 = vsel %vm409, %v631, %v632
      %v634 = vrot.slane %v601, 2
      %v635 = vrot.slane %v602, 2
      %v636 = vsel %vm409, %v634, %v635
      %v637 = vrot.slane %v603, 2
      %v638 = vrot.slane %v604, 2
      %v639 = vsel %vm409, %v637, %v638
      %v640 = vrot.slane %v605, 2
      %v641 = vrot.slane %v606, 2
      %v642 = vsel %vm409, %v640, %v641
      %v643 = vrot.slane %v607, 2
      %v644 = vrot.slane %v608, 2
      %v645 = vsel %vm409, %v643, %v644
      %v646 = vrot.slane %v609, 2
      %v647 = vrot.slane %v610, 2
      %v648 = vsel %vm409, %v646, %v647
      %v649 = vrot.slane %v611, 2
      %v650 = vrot.slane %v612, 2
      %v651 = vsel %vm409, %v649, %v650
      %v652 = vrot.slane %v613, 2
      %v653 = vrot.slane %v614, 2
      %v654 = vsel %vm409, %v652, %v653
      %v663 = vadd.f32 %v571, %v633
      %v664 = vadd.f32 %v572, %v636
      %v665 = vadd.f32 %v573, %v639
      %v666 = vadd.f32 %v574, %v642
      %v667 = vadd.f32 %v575, %v645
      %v668 = vadd.f32 %v576, %v648
      %v669 = vadd.f32 %v577, %v651
      %v670 = vadd.f32 %v578, %v654
      %s671 = scalar_lea.vmem %s217, 16
      %v672 = vld [vmem:[%s671] sm:$0xf]
      %v673 = vld [vmem:[%s671 + $0x8] sm:$0xf]
      %v674 = vld [vmem:[%s671 + $0x10] sm:$0xf]
      %v675 = vld [vmem:[%s671 + $0x18] sm:$0xf]
      %v676 = vld [vmem:[%s671 + $0x20] sm:$0xf]
      %v677 = vld [vmem:[%s671 + $0x28] sm:$0xf]
      %v678 = vld [vmem:[%s671 + $0x30] sm:$0xf]
      %v679 = vld [vmem:[%s671 + $0x38] sm:$0xf]
      %v680 = vunpack.c.l.bf16 %v672
      %v681 = vunpack.c.l.bf16 %v673
      %v682 = vunpack.c.l.bf16 %v674
      %v683 = vunpack.c.l.bf16 %v675
      %v684 = vunpack.c.l.bf16 %v676
      %v685 = vunpack.c.l.bf16 %v677
      %v686 = vunpack.c.l.bf16 %v678
      %v687 = vunpack.c.l.bf16 %v679
      %v688 = vlaneseq
      %v689 = vshrl.u32 %v688, 7
      %v690 = vsub.s32 0, %v689
      %v691 = vrot.slane %v235, %v690
      %v692 = vmul.f32 %v680, %v691
      %v693 = vmul.f32 %v681, %v691
      %v694 = vmul.f32 %v682, %v691
      %v695 = vmul.f32 %v683, %v691
      %v696 = vmul.f32 %v684, %v691
      %v697 = vmul.f32 %v685, %v691
      %v698 = vmul.f32 %v686, %v691
      %v699 = vmul.f32 %v687, %v691
      %v700 = vadd.f32 %v663, %v692
      %v701 = vadd.f32 %v664, %v693
      %v702 = vadd.f32 %v665, %v694
      %v703 = vadd.f32 %v666, %v695
      %v704 = vadd.f32 %v667, %v696
      %v705 = vadd.f32 %v668, %v697
      %v706 = vadd.f32 %v669, %v698
      %v707 = vadd.f32 %v670, %v699
      %v708 = vld [vmem:[%s671 + $0x4] sm:$0x1]
      %v709 = vld [vmem:[%s671 + $0xc] sm:$0x1]
      %v710 = vld [vmem:[%s671 + $0x14] sm:$0x1]
      %v711 = vld [vmem:[%s671 + $0x1c] sm:$0x1]
      %v712 = vld [vmem:[%s671 + $0x24] sm:$0x1]
      %v713 = vld [vmem:[%s671 + $0x2c] sm:$0x1]
      %v714 = vld [vmem:[%s671 + $0x34] sm:$0x1]
      %v715 = vld [vmem:[%s671 + $0x3c] sm:$0x1]
      %v716 = vunpack.c.l.bf16 %v708
      %v717 = vunpack.c.l.bf16 %v709
      %v718 = vunpack.c.l.bf16 %v710
      %v719 = vunpack.c.l.bf16 %v711
      %v720 = vunpack.c.l.bf16 %v712
      %v721 = vunpack.c.l.bf16 %v713
      %v722 = vunpack.c.l.bf16 %v714
      %v723 = vunpack.c.l.bf16 %v715
      %v724 = vlaneseq
      %v725 = vshrl.u32 %v724, 7
      %v726 = vsub.s32 1, %v725
      %v727 = vrot.slane %v235, %v726
      %v728 = vmul.f32 %v680, %v727
      %v729 = vmul.f32 %v716, %v727
      %v730 = vmul.f32 %v681, %v727
      %v731 = vmul.f32 %v717, %v727
      %v732 = vmul.f32 %v682, %v727
      %v733 = vmul.f32 %v718, %v727
      %v734 = vmul.f32 %v683, %v727
      %v735 = vmul.f32 %v719, %v727
      %v736 = vmul.f32 %v684, %v727
      %v737 = vmul.f32 %v720, %v727
      %v738 = vmul.f32 %v685, %v727
      %v739 = vmul.f32 %v721, %v727
      %v740 = vmul.f32 %v686, %v727
      %v741 = vmul.f32 %v722, %v727
      %v742 = vmul.f32 %v687, %v727
      %v743 = vmul.f32 %v723, %v727
      %v760 = vrot.slane %v728, 1
      %v761 = vrot.slane %v729, 1
      %v762 = vsel %vm316, %v760, %v761
      %v763 = vrot.slane %v730, 1
      %v764 = vrot.slane %v731, 1
      %v765 = vsel %vm316, %v763, %v764
      %v766 = vrot.slane %v732, 1
      %v767 = vrot.slane %v733, 1
      %v768 = vsel %vm316, %v766, %v767
      %v769 = vrot.slane %v734, 1
      %v770 = vrot.slane %v735, 1
      %v771 = vsel %vm316, %v769, %v770
      %v772 = vrot.slane %v736, 1
      %v773 = vrot.slane %v737, 1
      %v774 = vsel %vm316, %v772, %v773
      %v775 = vrot.slane %v738, 1
      %v776 = vrot.slane %v739, 1
      %v777 = vsel %vm316, %v775, %v776
      %v778 = vrot.slane %v740, 1
      %v779 = vrot.slane %v741, 1
      %v780 = vsel %vm316, %v778, %v779
      %v781 = vrot.slane %v742, 1
      %v782 = vrot.slane %v743, 1
      %v783 = vsel %vm316, %v781, %v782
      %v792 = vadd.f32 %v700, %v762
      %v793 = vadd.f32 %v701, %v765
      %v794 = vadd.f32 %v702, %v768
      %v795 = vadd.f32 %v703, %v771
      %v796 = vadd.f32 %v704, %v774
      %v797 = vadd.f32 %v705, %v777
      %v798 = vadd.f32 %v706, %v780
      %v799 = vadd.f32 %v707, %v783
      %v800 = vld [vmem:[%s671] sm:$0xe]
      %v801 = vld [vmem:[%s671 + $0x8] sm:$0xe]
      %v802 = vld [vmem:[%s671 + $0x10] sm:$0xe]
      %v803 = vld [vmem:[%s671 + $0x18] sm:$0xe]
      %v804 = vld [vmem:[%s671 + $0x20] sm:$0xe]
      %v805 = vld [vmem:[%s671 + $0x28] sm:$0xe]
      %v806 = vld [vmem:[%s671 + $0x30] sm:$0xe]
      %v807 = vld [vmem:[%s671 + $0x38] sm:$0xe]
      %v808 = vunpack.c.l.bf16 %v800
      %v809 = vunpack.c.l.bf16 %v801
      %v810 = vunpack.c.l.bf16 %v802
      %v811 = vunpack.c.l.bf16 %v803
      %v812 = vunpack.c.l.bf16 %v804
      %v813 = vunpack.c.l.bf16 %v805
      %v814 = vunpack.c.l.bf16 %v806
      %v815 = vunpack.c.l.bf16 %v807
      %v816 = vlaneseq
      %v817 = vshrl.u32 %v816, 7
      %v818 = vsub.s32 2, %v817
      %v819 = vrot.slane %v235, %v818
      %v820 = vmul.f32 %v808, %v819
      %v821 = vmul.f32 %v716, %v819
      %v822 = vmul.f32 %v809, %v819
      %v823 = vmul.f32 %v717, %v819
      %v824 = vmul.f32 %v810, %v819
      %v825 = vmul.f32 %v718, %v819
      %v826 = vmul.f32 %v811, %v819
      %v827 = vmul.f32 %v719, %v819
      %v828 = vmul.f32 %v812, %v819
      %v829 = vmul.f32 %v720, %v819
      %v830 = vmul.f32 %v813, %v819
      %v831 = vmul.f32 %v721, %v819
      %v832 = vmul.f32 %v814, %v819
      %v833 = vmul.f32 %v722, %v819
      %v834 = vmul.f32 %v815, %v819
      %v835 = vmul.f32 %v723, %v819
      %v852 = vrot.slane %v820, 2
      %v853 = vrot.slane %v821, 2
      %v854 = vsel %vm409, %v852, %v853
      %v855 = vrot.slane %v822, 2
      %v856 = vrot.slane %v823, 2
      %v857 = vsel %vm409, %v855, %v856
      %v858 = vrot.slane %v824, 2
      %v859 = vrot.slane %v825, 2
      %v860 = vsel %vm409, %v858, %v859
      %v861 = vrot.slane %v826, 2
      %v862 = vrot.slane %v827, 2
      %v863 = vsel %vm409, %v861, %v862
      %v864 = vrot.slane %v828, 2
      %v865 = vrot.slane %v829, 2
      %v866 = vsel %vm409, %v864, %v865
      %v867 = vrot.slane %v830, 2
      %v868 = vrot.slane %v831, 2
      %v869 = vsel %vm409, %v867, %v868
      %v870 = vrot.slane %v832, 2
      %v871 = vrot.slane %v833, 2
      %v872 = vsel %vm409, %v870, %v871
      %v873 = vrot.slane %v834, 2
      %v874 = vrot.slane %v835, 2
      %v875 = vsel %vm409, %v873, %v874
      %v884 = vadd.f32 %v792, %v854
      %v885 = vadd.f32 %v793, %v857
      %v886 = vadd.f32 %v794, %v860
      %v887 = vadd.f32 %v795, %v863
      %v888 = vadd.f32 %v796, %v866
      %v889 = vadd.f32 %v797, %v869
      %v890 = vadd.f32 %v798, %v872
      %v891 = vadd.f32 %v799, %v875
      %v892 = vld [vmem:[%s224] sm:$0x1]
      %v894 = vlaneseq
      %v895 = vshrl.u32 %v894, 7
      %v896 = vsub.s32 0, %v895
      %v897 = vrot.slane %v892, %v896
      %v899 = vadd.f32 %v884, %v897
      %v900 = vadd.f32 %v885, %v897
      %v901 = vadd.f32 %v886, %v897
      %v902 = vadd.f32 %v887, %v897
      %v903 = vadd.f32 %v888, %v897
      %v904 = vadd.f32 %v889, %v897
      %v905 = vadd.f32 %v890, %v897
      %v906 = vadd.f32 %v891, %v897
      %v907 = vpack.c.bf16 %v899, %v899
      %v908 = vpack.c.bf16 %v900, %v900
      %v909 = vpack.c.bf16 %v901, %v901
      %v910 = vpack.c.bf16 %v902, %v902
      %v911 = vpack.c.bf16 %v903, %v903
      %v912 = vpack.c.bf16 %v904, %v904
      %v913 = vpack.c.bf16 %v905, %v905
      %v914 = vpack.c.bf16 %v906, %v906
      %vm915 = vcmask 683008
      %916 = vst.msk [vmem:[%s232] sm:$0xf] %vm915, %v907
      %917 = vst.msk [vmem:[%s232 + $0x4] sm:$0xf] %vm915, %v908
      %918 = vst.msk [vmem:[%s232 + $0x8] sm:$0xf] %vm915, %v909
      %919 = vst.msk [vmem:[%s232 + $0xc] sm:$0xf] %vm915, %v910
      %920 = vst.msk [vmem:[%s232 + $0x10] sm:$0xf] %vm915, %v911
      %921 = vst.msk [vmem:[%s232 + $0x14] sm:$0xf] %vm915, %v912
      %922 = vst.msk [vmem:[%s232 + $0x18] sm:$0xf] %vm915, %v913
      %923 = vst.msk [vmem:[%s232 + $0x1c] sm:$0xf] %vm915, %v914
      %p924 = scmp.lt.s32.totalorder %s18, 1
      %s925 = scalar_select %p924, %s18, 1
      %p926 = scmp.lt.s32.totalorder %s19, 0
      %s927 = scalar_select %p926, %s19, 0
      %s928 = smul.addr %s925, 8
      %s929 = sadd.s32 %s927, %s928
      %s930 = smul.addr %s929, 4
      %s931 = scalar_lea.vmem %s3, %s930
      // Predicated region
      $region33: #{transformer_block_1.37} parent=31 // pred_check
        %p932 = pneg %p126
      $region34: #{transformer_block_1.37} parent=31 // pred_check_branch
        %934 = sbr.rel (%p932) target = $region36
      $region35: #{transformer_block_1.37} parent=31 // pred_region
        _
      $region36: #{transformer_block_1.37} parent=31 // pred_fallthru
        _
    $region32: #{transformer_block_1.37} parent=5 // pred_fallthru
      _
    %p935 = scmp.le.s32.totalorder 2, %s9
    // Predicated region
    $region37: #{transformer_block_1.37} parent=5 // pred_check
      %p936 = pneg %p935
    $region38: #{transformer_block_1.37} parent=5 // pred_check_branch
      %938 = sbr.rel (%p936) target = $region40
    $region39: #{transformer_block_1.37} parent=5 // pred_region
      %s939 = ssub.s32 %s9, 2
      // Predicated region
      $region41: #{transformer_block_1.37} parent=39 // pred_check
        %p940 = pneg %p132
      $region42: #{transformer_block_1.37} parent=39 // pred_check_branch
        %942 = sbr.rel (%p940) target = $region44
      $region43: #{transformer_block_1.37} parent=39 // pred_region
        %p943 = scmp.lt.s32.totalorder %s20, 1
        %s944 = scalar_select %p943, %s20, 1
        %p945 = scmp.lt.s32.totalorder %s21, 0
        %s946 = scalar_select %p945, %s21, 0
        %s947 = smul.addr %s944, 8
        %s948 = sadd.s32 %s946, %s947
        %s949 = smul.addr %s948, 4
        %s950 = scalar_lea.vmem %s3, %s949
      $region44: #{transformer_block_1.37} parent=39 // pred_fallthru
        _
    $region40: #{transformer_block_1.37} parent=5 // pred_fallthru
      _
  $region6: #{transformer_block_1.37} parent=0 // loop_footer
    %s13 = sadd.s32 1, %s9
  $region7: #{transformer_block_1.37} parent=0 // loop_footer_branch
    %8 = sbr.rel target = $region3
  $region8: #{transformer_block_1.37} parent=0 // loop_exit
    _

</llo_original>
